<compile_context>
chip_gen: v6e
topology: v6e:2x2x1
jax: 0.10.0
libtpu: 0.0.40
codegen_flags: <defaults>
</compile_context>

<pallas_src>
import functools

import jax
import jax.numpy as jnp
import numpy as np
from jax.experimental import pallas as pl
from jax.experimental.pallas import tpu as pltpu

# torch.nn.functional.rms_norm(x, ..., eps=None) uses torch.finfo(f32).eps
F32_EPS = float(jnp.finfo(jnp.float32).eps)
_MASK_VALUE = -1e30  # large negative causal mask (avoids -inf - -inf NaNs)


# ----------------------------- tiled matmul --------------------------------

def _matmul_kernel(x_ref, w_ref, o_ref, acc_ref):
    """One (tm, tn) output tile; K tiles accumulate into f32 VMEM scratch."""
    @pl.when(pl.program_id(2) == 0)
    def _():
        acc_ref[...] = jnp.zeros(acc_ref.shape, acc_ref.dtype)

    acc_ref[...] += jnp.dot(x_ref[...], w_ref[...],
                            preferred_element_type=jnp.float32)

    @pl.when(pl.program_id(2) == pl.num_programs(2) - 1)
    def _():
        o_ref[...] = acc_ref[...].astype(o_ref.dtype)


def _pick_tile(dim, preferred):
    for t in (preferred, 128):
        if dim % t == 0:
            return t
    return dim  # full extent is always a legal block


def matmul(x, w, *, tm=128, tn=256, tk=256):
    """x (M, K) @ w (K, N) -> (M, N) f32; bf16 MXU inputs, f32 accumulation."""
    M, K = x.shape
    K2, N = w.shape
    assert K == K2
    tm, tn, tk = _pick_tile(M, tm), _pick_tile(N, tn), _pick_tile(K, tk)
    xb = x.astype(jnp.bfloat16)
    wb = w.astype(jnp.bfloat16)
    return pl.pallas_call(
        _matmul_kernel,
        out_shape=jax.ShapeDtypeStruct((M, N), jnp.float32),
        grid_spec=pltpu.PrefetchScalarGridSpec(
            num_scalar_prefetch=0,
            grid=(M // tm, N // tn, K // tk),
            in_specs=[pl.BlockSpec((tm, tk), lambda i, j, k: (i, k)),
                      pl.BlockSpec((tk, tn), lambda i, j, k: (k, j))],
            out_specs=pl.BlockSpec((tm, tn), lambda i, j, k: (i, j)),
            scratch_shapes=[pltpu.VMEM((tm, tn), jnp.float32)]),
        compiler_params=pltpu.CompilerParams(
            dimension_semantics=("parallel", "parallel", "arbitrary")),
    )(xb, wb)


# ---------------------- flash-style causal attention -----------------------

def _flash_attn_kernel(cosq_ref, sinq_ref, cosk_ref, sink_ref,
                       q_ref, k_ref, v_ref, o_ref,
                       m_sc, l_sc, acc_sc, q_sc, *, n_head):
    qi = pl.program_id(1)
    kj = pl.program_id(2)

    tq, C = q_ref.shape[1], q_ref.shape[2]
    tkv = k_ref.shape[1]
    H = n_head
    D = C // H
    d2 = D // 2

    def _prep(z, cos, sin):
        # Per-head F.rms_norm over the head dim followed by rotary embedding.
        ms = jnp.mean(z * z, axis=-1, keepdims=True)
        z = z * jax.lax.rsqrt(ms + F32_EPS)
        z1, z2 = z[:, :d2], z[:, d2:]
        # TODO(synk): a pltpu.roll-based rotation (XLU slot) would avoid this
        # lane-dim concatenate at large head_dim.
        return jnp.concatenate([z1 * cos + z2 * sin, -z1 * sin + z2 * cos],
                               axis=-1)

    # ---- per (batch, q-block) init: reset softmax state, prep the q tile ----
    @pl.when(kj == 0)
    def _():
        m_sc[...] = jnp.full(m_sc.shape, _MASK_VALUE, m_sc.dtype)
        l_sc[...] = jnp.zeros(l_sc.shape, l_sc.dtype)
        acc_sc[...] = jnp.zeros(acc_sc.shape, acc_sc.dtype)
        q2 = q_ref[0]                                   # (tq, C) f32
        cos_q, sin_q = cosq_ref[...], sinq_ref[...]
        scale = 1.0 / jnp.sqrt(jnp.float32(D))          # fold 1/sqrt(D) into q
        for h in range(H):                              # static unroll
            qh = _prep(q2[:, h * D:(h + 1) * D], cos_q, sin_q) * scale
            q_sc[h] = qh.astype(q_sc.dtype)

    q_start = qi * tq
    kv_start = kj * tkv

    # ---- online-softmax update; skip kv blocks fully above the diagonal ----
    # tq == tkv, so every processed block has >= 1 unmasked column per row.
    @pl.when(kv_start <= q_start + tq - 1)
    def _():
        k2 = k_ref[0]                                   # (tkv, C) f32
        v2 = v_ref[0]
        cos_k, sin_k = cosk_ref[...], sink_ref[...]
        row = q_start + jax.lax.broadcasted_iota(jnp.int32, (tq, tkv), 0)
        col = kv_start + jax.lax.broadcasted_iota(jnp.int32, (tq, tkv), 1)
        causal = col <= row
        for h in range(H):                              # static unroll
            kh = _prep(k2[:, h * D:(h + 1) * D], cos_k, sin_k)
            vh = v2[:, h * D:(h + 1) * D]
            s = jax.lax.dot_general(                    # (tq, tkv) = q @ k^T
                q_sc[h], kh.astype(jnp.bfloat16),
                (((1,), (1,)), ((), ())),
                preferred_element_type=jnp.float32)
            s = jnp.where(causal, s, _MASK_VALUE)
            m_prev = m_sc[h]                            # (tq, 1)
            m_new = jnp.maximum(m_prev, jnp.max(s, axis=-1, keepdims=True))
            alpha = jnp.exp(m_prev - m_new)
            p = jnp.exp(s - m_new)
            l_sc[h] = alpha * l_sc[h] + jnp.sum(p, axis=-1, keepdims=True)
            acc_sc[h] = alpha * acc_sc[h] + jnp.dot(
                p.astype(jnp.bfloat16), vh.astype(jnp.bfloat16),
                preferred_element_type=jnp.float32)
            m_sc[h] = m_new

    # ---- finalize: normalize and emit the lane-dense (tq, C) output tile ----
    @pl.when(kj == pl.num_programs(2) - 1)
    def _():
        for h in range(H):
            inv = pl.reciprocal(l_sc[h], approx=True)   # EUP slot, ~free
            o_ref[0, :, h * D:(h + 1) * D] = (acc_sc[h] * inv).astype(o_ref.dtype)


def flash_attention(q, k, v, cos, sin, *, n_head, block_q=64):
    """q, k, v: (B, T, C) f32 -> (B, T, C) f32 causal attention with fused
    per-head rms_norm + rotary on q and k."""
    B, T, C = q.shape
    D = C // n_head
    tq = block_q if T % block_q == 0 else T
    tkv = tq                        # equal tiles keep the causal-skip logic safe
    nq, nkv = T // tq, T // tkv

    q_spec = pl.BlockSpec((1, tq, C), lambda b, i, j: (b, i, 0))
    kv_spec = pl.BlockSpec((1, tkv, C), lambda b, i, j: (b, j, 0))
    cq_spec = pl.BlockSpec((tq, D // 2), lambda b, i, j: (i, 0))
    ck_spec = pl.BlockSpec((tkv, D // 2), lambda b, i, j: (j, 0))

    return pl.pallas_call(
        functools.partial(_flash_attn_kernel, n_head=n_head),
        out_shape=jax.ShapeDtypeStruct((B, T, C), jnp.float32),
        grid_spec=pltpu.PrefetchScalarGridSpec(
            num_scalar_prefetch=0,
            grid=(B, nq, nkv),
            in_specs=[cq_spec, cq_spec, ck_spec, ck_spec,
                      q_spec, kv_spec, kv_spec],
            out_specs=pl.BlockSpec((1, tq, C), lambda b, i, j: (b, i, 0)),
            scratch_shapes=[pltpu.VMEM((n_head, tq, 1), jnp.float32),    # m
                            pltpu.VMEM((n_head, tq, 1), jnp.float32),    # l
                            pltpu.VMEM((n_head, tq, D), jnp.float32),    # acc
                            pltpu.VMEM((n_head, tq, D), jnp.bfloat16)]), # q prep
        compiler_params=pltpu.CompilerParams(
            dimension_semantics=("parallel", "parallel", "arbitrary")),
    )(cos, sin, cos, sin, q, k, v)


# ------------------------------- module glue -------------------------------

def rotary_tables(T, head_dim):
    # Matches Rotary: inv_freq over arange(0, dim, 2); cos/sin cached in bf16
    # and then promoted to f32 in the rotary math (torch type promotion).
    inv_freq = 1.0 / (10000.0 ** (jnp.arange(0, head_dim, 2, dtype=jnp.float32)
                                  / head_dim))
    t = jnp.arange(T, dtype=jnp.float32)
    freqs = jnp.outer(t, inv_freq)                       # (T, head_dim // 2)
    cos = jnp.cos(freqs).astype(jnp.bfloat16).astype(jnp.float32)
    sin = jnp.sin(freqs).astype(jnp.bfloat16).astype(jnp.float32)
    return cos, sin


def init_params(key, n_embd):
    kq, kk, kv, ko = jax.random.split(key, 4)

    def w(k):
        return 0.02 * jax.random.normal(k, (n_embd, n_embd), jnp.float32)

    wq, wk_, wv = w(kq), w(kk), w(kv)
    # NOTE: the reference zero-inits c_proj.weight; small random values are
    # used here so the kernels compute a non-trivial, checkable output.
    wo = w(ko)
    # Weights pre-fused (q|k|v), pre-transposed to (K, N) and pre-cast to bf16
    # once at init -> no per-call transpose/cast pass over the weights in HBM.
    wqkv_t = jnp.concatenate([wq, wk_, wv], axis=0).T    # (C, 3C)
    return {"wqkv_t": wqkv_t.astype(jnp.bfloat16),
            "wo_t": wo.T.astype(jnp.bfloat16)}


def causal_self_attention(x, params, *, n_head):
    B, T, C = x.shape
    assert C % n_head == 0
    D = C // n_head
    cos, sin = rotary_tables(T, D)
    qkv = matmul(x.reshape(B * T, C), params["wqkv_t"]).reshape(B, T, 3 * C)
    q, k, v = qkv[..., :C], qkv[..., C:2 * C], qkv[..., 2 * C:]
    y = flash_attention(q, k, v, cos, sin, n_head=n_head)       # (B, T, C)
    return matmul(y.reshape(B * T, C), params["wo_t"]).reshape(B, T, C)


# --------------------------- pure-JAX reference ----------------------------

def causal_self_attention_ref(x, params, *, n_head):
    B, T, C = x.shape
    D = C // n_head
    wqkv = params["wqkv_t"].astype(jnp.float32)
    wo = params["wo_t"].astype(jnp.float32)
    qkv = x @ wqkv
    q, k, v = qkv[..., :C], qkv[..., C:2 * C], qkv[..., 2 * C:]
    q = q.reshape(B, T, n_head, D)
    k = k.reshape(B, T, n_head, D)
    v = v.reshape(B, T, n_head, D)
    cos, sin = rotary_tables(T, D)
    cosb, sinb = cos[None, :, None, :], sin[None, :, None, :]

    def rms(z):
        return z * jax.lax.rsqrt(jnp.mean(z * z, axis=-1, keepdims=True) + F32_EPS)

    def rope(z):
        z1, z2 = z[..., :D // 2], z[..., D // 2:]
        return jnp.concatenate([z1 * cosb + z2 * sinb, -z1 * sinb + z2 * cosb], -1)

    q, k = rope(rms(q)), rope(rms(k))
    q, k, v = (t.transpose(0, 2, 1, 3) for t in (q, k, v))       # (B, H, T, D)
    s = jnp.einsum("bhqd,bhkd->bhqk", q, k) / jnp.sqrt(jnp.float32(D))
    mask = jnp.tril(jnp.ones((T, T), dtype=bool))
    s = jnp.where(mask, s, -jnp.inf)
    p = jax.nn.softmax(s, axis=-1)
    y = jnp.einsum("bhqk,bhkd->bhqd", p, v).transpose(0, 2, 1, 3).reshape(B, T, C)
    return y @ wo


# ---------------------------------- main -----------------------------------

if __name__ == "__main__":
    B, T, C, n_head = 2, 128, 128, 4          # head_dim = 32
    key = jax.random.PRNGKey(0)
    kp, kx = jax.random.split(key)
    params = init_params(kp, C)
    x = jax.random.normal(kx, (B, T, C), jnp.float32)

    fwd = jax.jit(functools.partial(causal_self_attention, n_head=n_head))
    y = jax.block_until_ready(fwd(x, params))

    assert y.shape == (B, T, C)
    assert y.dtype == jnp.float32

    y_ref = causal_self_attention_ref(x, params, n_head=n_head)
    np.testing.assert_allclose(np.asarray(y), np.asarray(y_ref),
                               atol=3e-3, rtol=3e-2)

    print("KERNEL_OK")
</pallas_src>

<mosaic_0001>
module attributes {stable_mosaic.version = 11 : i64} {
  func.func @_matmul_kernel(%arg0: i32, %arg1: i32, %arg2: i32, %arg3: memref<128x128xbf16, #tpu.memory_space<vmem>>, %arg4: memref<128x128xbf16, #tpu.memory_space<vmem>>, %arg5: memref<128x128xf32, #tpu.memory_space<vmem>>, %arg6: memref<128x128xf32, #tpu.memory_space<vmem>>) attributes {dimension_semantics = [#tpu.dimension_semantics<parallel>, #tpu.dimension_semantics<parallel>, #tpu.dimension_semantics<arbitrary>], iteration_bounds = array<i64: 2, 3, 1>, scalar_prefetch = 0 : i64, scratch_operands = 1 : i64, tpu.core_type = #tpu.core_type<tc>, window_params = [{transform_indices = @transform_0, window_bounds = array<i64: 128, 128>}, {transform_indices = @transform_1, window_bounds = array<i64: 128, 128>}, {transform_indices = @transform_2, window_bounds = array<i64: 128, 128>}]} {
    %c0_i32 = arith.constant 0 : i32
    %0 = arith.cmpi eq, %arg2, %c0_i32 : i32
    %1 = arith.extui %0 : i1 to i32
    %c0_i32_0 = arith.constant 0 : i32
    %2 = arith.cmpi ne, %1, %c0_i32_0 : i32
    scf.if %2 {
      %cst_10 = arith.constant 0.000000e+00 : f32
      %12 = vector.broadcast %cst_10 : f32 to vector<128x128xf32>
      %c0_11 = arith.constant 0 : index
      %c0_12 = arith.constant 0 : index
      %13 = vector.load %arg6[%c0_11, %c0_12] : memref<128x128xf32, #tpu.memory_space<vmem>>, vector<128x128xf32>
      tpu.vector_store %arg6[%c0_11, %c0_12], %12 {strides = array<i32>} : memref<128x128xf32, #tpu.memory_space<vmem>>, vector<128x128xf32>,
    } else {
    }
    %c0 = arith.constant 0 : index
    %c0_1 = arith.constant 0 : index
    %3 = vector.load %arg6[%c0, %c0_1] : memref<128x128xf32, #tpu.memory_space<vmem>>, vector<128x128xf32>
    %c0_2 = arith.constant 0 : index
    %c0_3 = arith.constant 0 : index
    %4 = vector.load %arg3[%c0_2, %c0_3] : memref<128x128xbf16, #tpu.memory_space<vmem>>, vector<128x128xbf16>
    %c0_4 = arith.constant 0 : index
    %c0_5 = arith.constant 0 : index
    %5 = vector.load %arg4[%c0_4, %c0_5] : memref<128x128xbf16, #tpu.memory_space<vmem>>, vector<128x128xbf16>
    %cst = arith.constant dense<0.000000e+00> : vector<128x128xf32>
    %6 = tpu.matmul %4, %5, %cst {dimension_numbers = #tpu.dot_dimension_numbers<[1], [0], [0], [1], [0, 0, 1, 1], [], []>} : vector<128x128xbf16>, vector<128x128xbf16>, vector<128x128xf32> -> vector<128x128xf32>
    %7 = arith.addf %3, %6 : vector<128x128xf32>
    %c0_6 = arith.constant 0 : index
    %c0_7 = arith.constant 0 : index
    %8 = vector.load %arg6[%c0_6, %c0_7] : memref<128x128xf32, #tpu.memory_space<vmem>>, vector<128x128xf32>
    tpu.vector_store %arg6[%c0_6, %c0_7], %7 {strides = array<i32>} : memref<128x128xf32, #tpu.memory_space<vmem>>, vector<128x128xf32>,
    %c0_i32_8 = arith.constant 0 : i32
    %9 = arith.cmpi eq, %arg2, %c0_i32_8 : i32
    %10 = arith.extui %9 : i1 to i32
    %c0_i32_9 = arith.constant 0 : i32
    %11 = arith.cmpi ne, %10, %c0_i32_9 : i32
    scf.if %11 {
      %c0_10 = arith.constant 0 : index
      %c0_11 = arith.constant 0 : index
      %12 = vector.load %arg6[%c0_10, %c0_11] : memref<128x128xf32, #tpu.memory_space<vmem>>, vector<128x128xf32>
      %c0_12 = arith.constant 0 : index
      %c0_13 = arith.constant 0 : index
      %13 = vector.load %arg5[%c0_12, %c0_13] : memref<128x128xf32, #tpu.memory_space<vmem>>, vector<128x128xf32>
      tpu.vector_store %arg5[%c0_12, %c0_13], %12 {strides = array<i32>} : memref<128x128xf32, #tpu.memory_space<vmem>>, vector<128x128xf32>,
    } else {
    }
    return
  }
  func.func @transform_0(%arg0: i32, %arg1: i32, %arg2: i32) -> (i32, i32) {
    %c0_i32 = arith.constant 0 : i32
    return %arg0, %arg2 : i32, i32
  }
  func.func @transform_1(%arg0: i32, %arg1: i32, %arg2: i32) -> (i32, i32) {
    %c0_i32 = arith.constant 0 : i32
    return %arg2, %arg1 : i32, i32
  }
  func.func @transform_2(%arg0: i32, %arg1: i32, %arg2: i32) -> (i32, i32) {
    %c0_i32 = arith.constant 0 : i32
    return %arg0, %arg1 : i32, i32
  }
}

module attributes {stable_mosaic.version = 11 : i64} {
  func.func @_matmul_kernel(%arg0: i32, %arg1: i32, %arg2: i32, %arg3: memref<128x128xbf16, #tpu.memory_space<vmem>>, %arg4: memref<128x128xbf16, #tpu.memory_space<vmem>>, %arg5: memref<128x128xf32, #tpu.memory_space<vmem>>, %arg6: memref<128x128xf32, #tpu.memory_space<vmem>>) attributes {dimension_semantics = [#tpu.dimension_semantics<parallel>, #tpu.dimension_semantics<parallel>, #tpu.dimension_semantics<arbitrary>], iteration_bounds = array<i64: 2, 1, 1>, scalar_prefetch = 0 : i64, scratch_operands = 1 : i64, tpu.core_type = #tpu.core_type<tc>, window_params = [{transform_indices = @transform_0, window_bounds = array<i64: 128, 128>}, {transform_indices = @transform_1, window_bounds = array<i64: 128, 128>}, {transform_indices = @transform_2, window_bounds = array<i64: 128, 128>}]} {
    %c0_i32 = arith.constant 0 : i32
    %0 = arith.cmpi eq, %arg2, %c0_i32 : i32
    %1 = arith.extui %0 : i1 to i32
    %c0_i32_0 = arith.constant 0 : i32
    %2 = arith.cmpi ne, %1, %c0_i32_0 : i32
    scf.if %2 {
      %cst_10 = arith.constant 0.000000e+00 : f32
      %12 = vector.broadcast %cst_10 : f32 to vector<128x128xf32>
      %c0_11 = arith.constant 0 : index
      %c0_12 = arith.constant 0 : index
      %13 = vector.load %arg6[%c0_11, %c0_12] : memref<128x128xf32, #tpu.memory_space<vmem>>, vector<128x128xf32>
      tpu.vector_store %arg6[%c0_11, %c0_12], %12 {strides = array<i32>} : memref<128x128xf32, #tpu.memory_space<vmem>>, vector<128x128xf32>,
    } else {
    }
    %c0 = arith.constant 0 : index
    %c0_1 = arith.constant 0 : index
    %3 = vector.load %arg6[%c0, %c0_1] : memref<128x128xf32, #tpu.memory_space<vmem>>, vector<128x128xf32>
    %c0_2 = arith.constant 0 : index
    %c0_3 = arith.constant 0 : index
    %4 = vector.load %arg3[%c0_2, %c0_3] : memref<128x128xbf16, #tpu.memory_space<vmem>>, vector<128x128xbf16>
    %c0_4 = arith.constant 0 : index
    %c0_5 = arith.constant 0 : index
    %5 = vector.load %arg4[%c0_4, %c0_5] : memref<128x128xbf16, #tpu.memory_space<vmem>>, vector<128x128xbf16>
    %cst = arith.constant dense<0.000000e+00> : vector<128x128xf32>
    %6 = tpu.matmul %4, %5, %cst {dimension_numbers = #tpu.dot_dimension_numbers<[1], [0], [0], [1], [0, 0, 1, 1], [], []>} : vector<128x128xbf16>, vector<128x128xbf16>, vector<128x128xf32> -> vector<128x128xf32>
    %7 = arith.addf %3, %6 : vector<128x128xf32>
    %c0_6 = arith.constant 0 : index
    %c0_7 = arith.constant 0 : index
    %8 = vector.load %arg6[%c0_6, %c0_7] : memref<128x128xf32, #tpu.memory_space<vmem>>, vector<128x128xf32>
    tpu.vector_store %arg6[%c0_6, %c0_7], %7 {strides = array<i32>} : memref<128x128xf32, #tpu.memory_space<vmem>>, vector<128x128xf32>,
    %c0_i32_8 = arith.constant 0 : i32
    %9 = arith.cmpi eq, %arg2, %c0_i32_8 : i32
    %10 = arith.extui %9 : i1 to i32
    %c0_i32_9 = arith.constant 0 : i32
    %11 = arith.cmpi ne, %10, %c0_i32_9 : i32
    scf.if %11 {
      %c0_10 = arith.constant 0 : index
      %c0_11 = arith.constant 0 : index
      %12 = vector.load %arg6[%c0_10, %c0_11] : memref<128x128xf32, #tpu.memory_space<vmem>>, vector<128x128xf32>
      %c0_12 = arith.constant 0 : index
      %c0_13 = arith.constant 0 : index
      %13 = vector.load %arg5[%c0_12, %c0_13] : memref<128x128xf32, #tpu.memory_space<vmem>>, vector<128x128xf32>
      tpu.vector_store %arg5[%c0_12, %c0_13], %12 {strides = array<i32>} : memref<128x128xf32, #tpu.memory_space<vmem>>, vector<128x128xf32>,
    } else {
    }
    return
  }
  func.func @transform_0(%arg0: i32, %arg1: i32, %arg2: i32) -> (i32, i32) {
    %c0_i32 = arith.constant 0 : i32
    return %arg0, %arg2 : i32, i32
  }
  func.func @transform_1(%arg0: i32, %arg1: i32, %arg2: i32) -> (i32, i32) {
    %c0_i32 = arith.constant 0 : i32
    return %arg2, %arg1 : i32, i32
  }
  func.func @transform_2(%arg0: i32, %arg1: i32, %arg2: i32) -> (i32, i32) {
    %c0_i32 = arith.constant 0 : i32
    return %arg0, %arg1 : i32, i32
  }
}

module attributes {stable_mosaic.version = 11 : i64} {
  func.func @_flash_attn_kernel(%arg0: i32, %arg1: i32, %arg2: i32, %arg3: memref<64x16xf32, #tpu.memory_space<vmem>>, %arg4: memref<64x16xf32, #tpu.memory_space<vmem>>, %arg5: memref<64x16xf32, #tpu.memory_space<vmem>>, %arg6: memref<64x16xf32, #tpu.memory_space<vmem>>, %arg7: memref<1x64x128xf32, #tpu.memory_space<vmem>>, %arg8: memref<1x64x128xf32, #tpu.memory_space<vmem>>, %arg9: memref<1x64x128xf32, #tpu.memory_space<vmem>>, %arg10: memref<1x64x128xf32, #tpu.memory_space<vmem>>, %arg11: memref<4x64x1xf32, #tpu.memory_space<vmem>>, %arg12: memref<4x64x1xf32, #tpu.memory_space<vmem>>, %arg13: memref<4x64x32xf32, #tpu.memory_space<vmem>>, %arg14: memref<4x64x32xbf16, #tpu.memory_space<vmem>>) attributes {dimension_semantics = [#tpu.dimension_semantics<parallel>, #tpu.dimension_semantics<parallel>, #tpu.dimension_semantics<arbitrary>], iteration_bounds = array<i64: 2, 2, 2>, scalar_prefetch = 0 : i64, scratch_operands = 4 : i64, tpu.core_type = #tpu.core_type<tc>, window_params = [{transform_indices = @transform_0, window_bounds = array<i64: 64, 16>}, {transform_indices = @transform_1, window_bounds = array<i64: 64, 16>}, {transform_indices = @transform_2, window_bounds = array<i64: 64, 16>}, {transform_indices = @transform_3, window_bounds = array<i64: 64, 16>}, {transform_indices = @transform_4, window_bounds = array<i64: 1, 64, 128>}, {transform_indices = @transform_5, window_bounds = array<i64: 1, 64, 128>}, {transform_indices = @transform_6, window_bounds = array<i64: 1, 64, 128>}, {transform_indices = @transform_7, window_bounds = array<i64: 1, 64, 128>}]} {
    %c0_i32 = arith.constant 0 : i32
    %0 = arith.cmpi eq, %arg2, %c0_i32 : i32
    %1 = arith.extui %0 : i1 to i32
    %c0_i32_0 = arith.constant 0 : i32
    %2 = arith.cmpi ne, %1, %c0_i32_0 : i32
    scf.if %2 {
      %cst = arith.constant -1.000000e+30 : f32
      %13 = vector.broadcast %cst : f32 to vector<4x64x1xf32>
      %c0 = arith.constant 0 : index
      %c0_6 = arith.constant 0 : index
      %c0_7 = arith.constant 0 : index
      %14 = vector.load %arg11[%c0, %c0_6, %c0_7] : memref<4x64x1xf32, #tpu.memory_space<vmem>>, vector<4x64x1xf32>
      tpu.vector_store %arg11[%c0, %c0_6, %c0_7], %13 {strides = array<i32>} : memref<4x64x1xf32, #tpu.memory_space<vmem>>, vector<4x64x1xf32>,
      %cst_8 = arith.constant 0.000000e+00 : f32
      %15 = vector.broadcast %cst_8 : f32 to vector<4x64x1xf32>
      %c0_9 = arith.constant 0 : index
      %c0_10 = arith.constant 0 : index
      %c0_11 = arith.constant 0 : index
      %16 = vector.load %arg12[%c0_9, %c0_10, %c0_11] : memref<4x64x1xf32, #tpu.memory_space<vmem>>, vector<4x64x1xf32>
      tpu.vector_store %arg12[%c0_9, %c0_10, %c0_11], %15 {strides = array<i32>} : memref<4x64x1xf32, #tpu.memory_space<vmem>>, vector<4x64x1xf32>,
      %cst_12 = arith.constant 0.000000e+00 : f32
      %17 = vector.broadcast %cst_12 : f32 to vector<4x64x32xf32>
      %c0_13 = arith.constant 0 : index
      %c0_14 = arith.constant 0 : index
      %c0_15 = arith.constant 0 : index
      %18 = vector.load %arg13[%c0_13, %c0_14, %c0_15] : memref<4x64x32xf32, #tpu.memory_space<vmem>>, vector<4x64x32xf32>
      tpu.vector_store %arg13[%c0_13, %c0_14, %c0_15], %17 {strides = array<i32>} : memref<4x64x32xf32, #tpu.memory_space<vmem>>, vector<4x64x32xf32>,
      %c0_16 = arith.constant 0 : index
      %c0_17 = arith.constant 0 : index
      %c0_18 = arith.constant 0 : index
      %19 = vector.load %arg7[%c0_16, %c0_17, %c0_18] : memref<1x64x128xf32, #tpu.memory_space<vmem>>, vector<1x64x128xf32>
      %20 = vector.shape_cast %19 : vector<1x64x128xf32> to vector<64x128xf32>
      %c0_19 = arith.constant 0 : index
      %c0_20 = arith.constant 0 : index
      %21 = vector.load %arg3[%c0_19, %c0_20] : memref<64x16xf32, #tpu.memory_space<vmem>>, vector<64x16xf32>
      %c0_21 = arith.constant 0 : index
      %c0_22 = arith.constant 0 : index
      %22 = vector.load %arg4[%c0_21, %c0_22] : memref<64x16xf32, #tpu.memory_space<vmem>>, vector<64x16xf32>
      %cst_23 = arith.constant 3.200000e+01 : f32
      %23 = math.sqrt %cst_23 : f32
      %cst_24 = arith.constant 1.000000e+00 : f32
      %24 = arith.divf %cst_24, %23 : f32
      %25 = vector.extract_strided_slice %20 {offsets = [0, 0], sizes = [64, 32], strides = [1, 1]} : vector<64x128xf32> to vector<64x32xf32>
      %26 = arith.mulf %25, %25 : vector<64x32xf32>
      %cst_25 = arith.constant dense<0.000000e+00> : vector<64xf32>
      %27 = vector.multi_reduction <add>, %26, %cst_25 [1] : vector<64x32xf32> to vector<64xf32>
      %28 = vector.shape_cast %27 : vector<64xf32> to vector<64x1xf32>
      %cst_26 = arith.constant 3.200000e+01 : f32
      %29 = vector.broadcast %cst_26 : f32 to vector<64x1xf32>
      %30 = arith.divf %28, %29 : vector<64x1xf32>
      %cst_27 = arith.constant 1.1920929E-7 : f32
      %31 = vector.broadcast %cst_27 : f32 to vector<64x1xf32>
      %32 = arith.addf %30, %31 : vector<64x1xf32>
      %33 = math.rsqrt %32 : vector<64x1xf32>
      %34 = vector.broadcast %33 : vector<64x1xf32> to vector<64x32xf32>
      %35 = arith.mulf %25, %34 : vector<64x32xf32>
      %36 = vector.extract_strided_slice %35 {offsets = [0, 0], sizes = [64, 16], strides = [1, 1]} : vector<64x32xf32> to vector<64x16xf32>
      %37 = vector.extract_strided_slice %35 {offsets = [0, 16], sizes = [64, 16], strides = [1, 1]} : vector<64x32xf32> to vector<64x16xf32>
      %38 = arith.mulf %36, %21 : vector<64x16xf32>
      %39 = arith.mulf %37, %22 : vector<64x16xf32>
      %40 = arith.addf %38, %39 : vector<64x16xf32>
      %cst_28 = arith.constant 0.000000e+00 : f32
      %41 = vector.broadcast %cst_28 : f32 to vector<64x16xf32>
      %42 = arith.subf %41, %36 : vector<64x16xf32>
      %43 = arith.mulf %42, %22 : vector<64x16xf32>
      %44 = arith.mulf %37, %21 : vector<64x16xf32>
      %45 = arith.addf %43, %44 : vector<64x16xf32>
      %46 = tpu.concatenate %40, %45 in 1 : vector<64x16xf32>, vector<64x16xf32> -> vector<64x32xf32>
      %47 = vector.broadcast %24 : f32 to vector<64x32xf32>
      %48 = arith.mulf %46, %47 : vector<64x32xf32>
      %49 = arith.truncf %48 : vector<64x32xf32> to vector<64x32xbf16>
      %c0_29 = arith.constant 0 : index
      %c0_30 = arith.constant 0 : index
      %c0_31 = arith.constant 0 : index
      %50 = vector.load %arg14[%c0_29, %c0_30, %c0_31] : memref<4x64x32xbf16, #tpu.memory_space<vmem>>, vector<1x64x32xbf16>
      %51 = vector.shape_cast %50 : vector<1x64x32xbf16> to vector<64x32xbf16>
      %52 = vector.shape_cast %49 : vector<64x32xbf16> to vector<1x64x32xbf16>
      tpu.vector_store %arg14[%c0_29, %c0_30, %c0_31], %52 {strides = array<i32>} : memref<4x64x32xbf16, #tpu.memory_space<vmem>>, vector<1x64x32xbf16>,
      %53 = vector.extract_strided_slice %20 {offsets = [0, 32], sizes = [64, 32], strides = [1, 1]} : vector<64x128xf32> to vector<64x32xf32>
      %54 = arith.mulf %53, %53 : vector<64x32xf32>
      %cst_32 = arith.constant dense<0.000000e+00> : vector<64xf32>
      %55 = vector.multi_reduction <add>, %54, %cst_32 [1] : vector<64x32xf32> to vector<64xf32>
      %56 = vector.shape_cast %55 : vector<64xf32> to vector<64x1xf32>
      %cst_33 = arith.constant 3.200000e+01 : f32
      %57 = vector.broadcast %cst_33 : f32 to vector<64x1xf32>
      %58 = arith.divf %56, %57 : vector<64x1xf32>
      %cst_34 = arith.constant 1.1920929E-7 : f32
      %59 = vector.broadcast %cst_34 : f32 to vector<64x1xf32>
      %60 = arith.addf %58, %59 : vector<64x1xf32>
      %61 = math.rsqrt %60 : vector<64x1xf32>
      %62 = vector.broadcast %61 : vector<64x1xf32> to vector<64x32xf32>
      %63 = arith.mulf %53, %62 : vector<64x32xf32>
      %64 = vector.extract_strided_slice %63 {offsets = [0, 0], sizes = [64, 16], strides = [1, 1]} : vector<64x32xf32> to vector<64x16xf32>
      %65 = vector.extract_strided_slice %63 {offsets = [0, 16], sizes = [64, 16], strides = [1, 1]} : vector<64x32xf32> to vector<64x16xf32>
      %66 = arith.mulf %64, %21 : vector<64x16xf32>
      %67 = arith.mulf %65, %22 : vector<64x16xf32>
      %68 = arith.addf %66, %67 : vector<64x16xf32>
      %cst_35 = arith.constant 0.000000e+00 : f32
      %69 = vector.broadcast %cst_35 : f32 to vector<64x16xf32>
      %70 = arith.subf %69, %64 : vector<64x16xf32>
      %71 = arith.mulf %70, %22 : vector<64x16xf32>
      %72 = arith.mulf %65, %21 : vector<64x16xf32>
      %73 = arith.addf %71, %72 : vector<64x16xf32>
      %74 = tpu.concatenate %68, %73 in 1 : vector<64x16xf32>, vector<64x16xf32> -> vector<64x32xf32>
      %75 = vector.broadcast %24 : f32 to vector<64x32xf32>
      %76 = arith.mulf %74, %75 : vector<64x32xf32>
      %77 = arith.truncf %76 : vector<64x32xf32> to vector<64x32xbf16>
      %c1 = arith.constant 1 : index
      %c0_36 = arith.constant 0 : index
      %c0_37 = arith.constant 0 : index
      %78 = vector.load %arg14[%c1, %c0_36, %c0_37] : memref<4x64x32xbf16, #tpu.memory_space<vmem>>, vector<1x64x32xbf16>
      %79 = vector.shape_cast %78 : vector<1x64x32xbf16> to vector<64x32xbf16>
      %80 = vector.shape_cast %77 : vector<64x32xbf16> to vector<1x64x32xbf16>
      tpu.vector_store %arg14[%c1, %c0_36, %c0_37], %80 {strides = array<i32>} : memref<4x64x32xbf16, #tpu.memory_space<vmem>>, vector<1x64x32xbf16>,
      %81 = vector.extract_strided_slice %20 {offsets = [0, 64], sizes = [64, 32], strides = [1, 1]} : vector<64x128xf32> to vector<64x32xf32>
      %82 = arith.mulf %81, %81 : vector<64x32xf32>
      %cst_38 = arith.constant dense<0.000000e+00> : vector<64xf32>
      %83 = vector.multi_reduction <add>, %82, %cst_38 [1] : vector<64x32xf32> to vector<64xf32>
      %84 = vector.shape_cast %83 : vector<64xf32> to vector<64x1xf32>
      %cst_39 = arith.constant 3.200000e+01 : f32
      %85 = vector.broadcast %cst_39 : f32 to vector<64x1xf32>
      %86 = arith.divf %84, %85 : vector<64x1xf32>
      %cst_40 = arith.constant 1.1920929E-7 : f32
      %87 = vector.broadcast %cst_40 : f32 to vector<64x1xf32>
      %88 = arith.addf %86, %87 : vector<64x1xf32>
      %89 = math.rsqrt %88 : vector<64x1xf32>
      %90 = vector.broadcast %89 : vector<64x1xf32> to vector<64x32xf32>
      %91 = arith.mulf %81, %90 : vector<64x32xf32>
      %92 = vector.extract_strided_slice %91 {offsets = [0, 0], sizes = [64, 16], strides = [1, 1]} : vector<64x32xf32> to vector<64x16xf32>
      %93 = vector.extract_strided_slice %91 {offsets = [0, 16], sizes = [64, 16], strides = [1, 1]} : vector<64x32xf32> to vector<64x16xf32>
      %94 = arith.mulf %92, %21 : vector<64x16xf32>
      %95 = arith.mulf %93, %22 : vector<64x16xf32>
      %96 = arith.addf %94, %95 : vector<64x16xf32>
      %cst_41 = arith.constant 0.000000e+00 : f32
      %97 = vector.broadcast %cst_41 : f32 to vector<64x16xf32>
      %98 = arith.subf %97, %92 : vector<64x16xf32>
      %99 = arith.mulf %98, %22 : vector<64x16xf32>
      %100 = arith.mulf %93, %21 : vector<64x16xf32>
      %101 = arith.addf %99, %100 : vector<64x16xf32>
      %102 = tpu.concatenate %96, %101 in 1 : vector<64x16xf32>, vector<64x16xf32> -> vector<64x32xf32>
      %103 = vector.broadcast %24 : f32 to vector<64x32xf32>
      %104 = arith.mulf %102, %103 : vector<64x32xf32>
      %105 = arith.truncf %104 : vector<64x32xf32> to vector<64x32xbf16>
      %c2 = arith.constant 2 : index
      %c0_42 = arith.constant 0 : index
      %c0_43 = arith.constant 0 : index
      %106 = vector.load %arg14[%c2, %c0_42, %c0_43] : memref<4x64x32xbf16, #tpu.memory_space<vmem>>, vector<1x64x32xbf16>
      %107 = vector.shape_cast %106 : vector<1x64x32xbf16> to vector<64x32xbf16>
      %108 = vector.shape_cast %105 : vector<64x32xbf16> to vector<1x64x32xbf16>
      tpu.vector_store %arg14[%c2, %c0_42, %c0_43], %108 {strides = array<i32>} : memref<4x64x32xbf16, #tpu.memory_space<vmem>>, vector<1x64x32xbf16>,
      %109 = vector.extract_strided_slice %20 {offsets = [0, 96], sizes = [64, 32], strides = [1, 1]} : vector<64x128xf32> to vector<64x32xf32>
      %110 = arith.mulf %109, %109 : vector<64x32xf32>
      %cst_44 = arith.constant dense<0.000000e+00> : vector<64xf32>
      %111 = vector.multi_reduction <add>, %110, %cst_44 [1] : vector<64x32xf32> to vector<64xf32>
      %112 = vector.shape_cast %111 : vector<64xf32> to vector<64x1xf32>
      %cst_45 = arith.constant 3.200000e+01 : f32
      %113 = vector.broadcast %cst_45 : f32 to vector<64x1xf32>
      %114 = arith.divf %112, %113 : vector<64x1xf32>
      %cst_46 = arith.constant 1.1920929E-7 : f32
      %115 = vector.broadcast %cst_46 : f32 to vector<64x1xf32>
      %116 = arith.addf %114, %115 : vector<64x1xf32>
      %117 = math.rsqrt %116 : vector<64x1xf32>
      %118 = vector.broadcast %117 : vector<64x1xf32> to vector<64x32xf32>
      %119 = arith.mulf %109, %118 : vector<64x32xf32>
      %120 = vector.extract_strided_slice %119 {offsets = [0, 0], sizes = [64, 16], strides = [1, 1]} : vector<64x32xf32> to vector<64x16xf32>
      %121 = vector.extract_strided_slice %119 {offsets = [0, 16], sizes = [64, 16], strides = [1, 1]} : vector<64x32xf32> to vector<64x16xf32>
      %122 = arith.mulf %120, %21 : vector<64x16xf32>
      %123 = arith.mulf %121, %22 : vector<64x16xf32>
      %124 = arith.addf %122, %123 : vector<64x16xf32>
      %cst_47 = arith.constant 0.000000e+00 : f32
      %125 = vector.broadcast %cst_47 : f32 to vector<64x16xf32>
      %126 = arith.subf %125, %120 : vector<64x16xf32>
      %127 = arith.mulf %126, %22 : vector<64x16xf32>
      %128 = arith.mulf %121, %21 : vector<64x16xf32>
      %129 = arith.addf %127, %128 : vector<64x16xf32>
      %130 = tpu.concatenate %124, %129 in 1 : vector<64x16xf32>, vector<64x16xf32> -> vector<64x32xf32>
      %131 = vector.broadcast %24 : f32 to vector<64x32xf32>
      %132 = arith.mulf %130, %131 : vector<64x32xf32>
      %133 = arith.truncf %132 : vector<64x32xf32> to vector<64x32xbf16>
      %c3 = arith.constant 3 : index
      %c0_48 = arith.constant 0 : index
      %c0_49 = arith.constant 0 : index
      %134 = vector.load %arg14[%c3, %c0_48, %c0_49] : memref<4x64x32xbf16, #tpu.memory_space<vmem>>, vector<1x64x32xbf16>
      %135 = vector.shape_cast %134 : vector<1x64x32xbf16> to vector<64x32xbf16>
      %136 = vector.shape_cast %133 : vector<64x32xbf16> to vector<1x64x32xbf16>
      tpu.vector_store %arg14[%c3, %c0_48, %c0_49], %136 {strides = array<i32>} : memref<4x64x32xbf16, #tpu.memory_space<vmem>>, vector<1x64x32xbf16>,
    } else {
    }
    %c64_i32 = arith.constant 64 : i32
    %3 = arith.muli %arg1, %c64_i32 : i32
    %c64_i32_1 = arith.constant 64 : i32
    %4 = arith.muli %arg2, %c64_i32_1 : i32
    %c64_i32_2 = arith.constant 64 : i32
    %5 = arith.addi %3, %c64_i32_2 : i32
    %c1_i32 = arith.constant 1 : i32
    %6 = arith.subi %5, %c1_i32 : i32
    %7 = arith.cmpi sle, %4, %6 : i32
    %8 = arith.extui %7 : i1 to i32
    %c0_i32_3 = arith.constant 0 : i32
    %9 = arith.cmpi ne, %8, %c0_i32_3 : i32
    scf.if %9 {
      %c0 = arith.constant 0 : index
      %c0_6 = arith.constant 0 : index
      %c0_7 = arith.constant 0 : index
      %13 = vector.load %arg8[%c0, %c0_6, %c0_7] : memref<1x64x128xf32, #tpu.memory_space<vmem>>, vector<1x64x128xf32>
      %14 = vector.shape_cast %13 : vector<1x64x128xf32> to vector<64x128xf32>
      %c0_8 = arith.constant 0 : index
      %c0_9 = arith.constant 0 : index
      %c0_10 = arith.constant 0 : index
      %15 = vector.load %arg9[%c0_8, %c0_9, %c0_10] : memref<1x64x128xf32, #tpu.memory_space<vmem>>, vector<1x64x128xf32>
      %16 = vector.shape_cast %15 : vector<1x64x128xf32> to vector<64x128xf32>
      %c0_11 = arith.constant 0 : index
      %c0_12 = arith.constant 0 : index
      %17 = vector.load %arg5[%c0_11, %c0_12] : memref<64x16xf32, #tpu.memory_space<vmem>>, vector<64x16xf32>
      %c0_13 = arith.constant 0 : index
      %c0_14 = arith.constant 0 : index
      %18 = vector.load %arg6[%c0_13, %c0_14] : memref<64x16xf32, #tpu.memory_space<vmem>>, vector<64x16xf32>
      %19 = tpu.iota {dimensions = array<i32: 0>} : vector<64x64xi32>
      %20 = vector.broadcast %3 : i32 to vector<64x64xi32>
      %21 = arith.addi %20, %19 : vector<64x64xi32>
      %22 = tpu.iota {dimensions = array<i32: 1>} : vector<64x64xi32>
      %23 = vector.broadcast %4 : i32 to vector<64x64xi32>
      %24 = arith.addi %23, %22 : vector<64x64xi32>
      %25 = arith.cmpi sle, %24, %21 : vector<64x64xi32>
      %26 = vector.extract_strided_slice %14 {offsets = [0, 0], sizes = [64, 32], strides = [1, 1]} : vector<64x128xf32> to vector<64x32xf32>
      %27 = arith.mulf %26, %26 : vector<64x32xf32>
      %cst = arith.constant dense<0.000000e+00> : vector<64xf32>
      %28 = vector.multi_reduction <add>, %27, %cst [1] : vector<64x32xf32> to vector<64xf32>
      %29 = vector.shape_cast %28 : vector<64xf32> to vector<64x1xf32>
      %cst_15 = arith.constant 3.200000e+01 : f32
      %30 = vector.broadcast %cst_15 : f32 to vector<64x1xf32>
      %31 = arith.divf %29, %30 : vector<64x1xf32>
      %cst_16 = arith.constant 1.1920929E-7 : f32
      %32 = vector.broadcast %cst_16 : f32 to vector<64x1xf32>
      %33 = arith.addf %31, %32 : vector<64x1xf32>
      %34 = math.rsqrt %33 : vector<64x1xf32>
      %35 = vector.broadcast %34 : vector<64x1xf32> to vector<64x32xf32>
      %36 = arith.mulf %26, %35 : vector<64x32xf32>
      %37 = vector.extract_strided_slice %36 {offsets = [0, 0], sizes = [64, 16], strides = [1, 1]} : vector<64x32xf32> to vector<64x16xf32>
      %38 = vector.extract_strided_slice %36 {offsets = [0, 16], sizes = [64, 16], strides = [1, 1]} : vector<64x32xf32> to vector<64x16xf32>
      %39 = arith.mulf %37, %17 : vector<64x16xf32>
      %40 = arith.mulf %38, %18 : vector<64x16xf32>
      %41 = arith.addf %39, %40 : vector<64x16xf32>
      %cst_17 = arith.constant 0.000000e+00 : f32
      %42 = vector.broadcast %cst_17 : f32 to vector<64x16xf32>
      %43 = arith.subf %42, %37 : vector<64x16xf32>
      %44 = arith.mulf %43, %18 : vector<64x16xf32>
      %45 = arith.mulf %38, %17 : vector<64x16xf32>
      %46 = arith.addf %44, %45 : vector<64x16xf32>
      %47 = tpu.concatenate %41, %46 in 1 : vector<64x16xf32>, vector<64x16xf32> -> vector<64x32xf32>
      %48 = vector.extract_strided_slice %16 {offsets = [0, 0], sizes = [64, 32], strides = [1, 1]} : vector<64x128xf32> to vector<64x32xf32>
      %c0_18 = arith.constant 0 : index
      %c0_19 = arith.constant 0 : index
      %c0_20 = arith.constant 0 : index
      %49 = vector.load %arg14[%c0_18, %c0_19, %c0_20] : memref<4x64x32xbf16, #tpu.memory_space<vmem>>, vector<1x64x32xbf16>
      %50 = vector.shape_cast %49 : vector<1x64x32xbf16> to vector<64x32xbf16>
      %51 = arith.truncf %47 : vector<64x32xf32> to vector<64x32xbf16>
      %cst_21 = arith.constant dense<0.000000e+00> : vector<64x64xf32>
      %52 = tpu.matmul %50, %51, %cst_21 {dimension_numbers = #tpu.dot_dimension_numbers<[1], [1], [0], [0], [0, 0, 1, 0], [], []>} : vector<64x32xbf16>, vector<64x32xbf16>, vector<64x64xf32> -> vector<64x64xf32>
      %cst_22 = arith.constant -1.000000e+30 : f32
      %53 = vector.broadcast %cst_22 : f32 to vector<64x64xf32>
      %54 = arith.select %25, %52, %53 : vector<64x64xi1>, vector<64x64xf32>
      %c0_23 = arith.constant 0 : index
      %c0_24 = arith.constant 0 : index
      %c0_25 = arith.constant 0 : index
      %55 = vector.load %arg11[%c0_23, %c0_24, %c0_25] : memref<4x64x1xf32, #tpu.memory_space<vmem>>, vector<1x64x1xf32>
      %56 = vector.shape_cast %55 : vector<1x64x1xf32> to vector<64x1xf32>
      %cst_26 = arith.constant dense<0xFF800000> : vector<64xf32>
      %57 = vector.multi_reduction <maximumf>, %54, %cst_26 [1] : vector<64x64xf32> to vector<64xf32>
      %58 = vector.shape_cast %57 : vector<64xf32> to vector<64x1xf32>
      %59 = arith.maximumf %56, %58 : vector<64x1xf32>
      %60 = arith.subf %56, %59 : vector<64x1xf32>
      %61 = math.exp %60 : vector<64x1xf32>
      %62 = vector.broadcast %59 : vector<64x1xf32> to vector<64x64xf32>
      %63 = arith.subf %54, %62 : vector<64x64xf32>
      %64 = math.exp %63 : vector<64x64xf32>
      %c0_27 = arith.constant 0 : index
      %c0_28 = arith.constant 0 : index
      %c0_29 = arith.constant 0 : index
      %65 = vector.load %arg12[%c0_27, %c0_28, %c0_29] : memref<4x64x1xf32, #tpu.memory_space<vmem>>, vector<1x64x1xf32>
      %66 = vector.shape_cast %65 : vector<1x64x1xf32> to vector<64x1xf32>
      %67 = arith.mulf %61, %66 : vector<64x1xf32>
      %cst_30 = arith.constant dense<0.000000e+00> : vector<64xf32>
      %68 = vector.multi_reduction <add>, %64, %cst_30 [1] : vector<64x64xf32> to vector<64xf32>
      %69 = vector.shape_cast %68 : vector<64xf32> to vector<64x1xf32>
      %70 = arith.addf %67, %69 : vector<64x1xf32>
      %c0_31 = arith.constant 0 : index
      %c0_32 = arith.constant 0 : index
      %c0_33 = arith.constant 0 : index
      %71 = vector.load %arg12[%c0_31, %c0_32, %c0_33] : memref<4x64x1xf32, #tpu.memory_space<vmem>>, vector<1x64x1xf32>
      %72 = vector.shape_cast %71 : vector<1x64x1xf32> to vector<64x1xf32>
      %73 = vector.shape_cast %70 : vector<64x1xf32> to vector<1x64x1xf32>
      tpu.vector_store %arg12[%c0_31, %c0_32, %c0_33], %73 {strides = array<i32>} : memref<4x64x1xf32, #tpu.memory_space<vmem>>, vector<1x64x1xf32>,
      %c0_34 = arith.constant 0 : index
      %c0_35 = arith.constant 0 : index
      %c0_36 = arith.constant 0 : index
      %74 = vector.load %arg13[%c0_34, %c0_35, %c0_36] : memref<4x64x32xf32, #tpu.memory_space<vmem>>, vector<1x64x32xf32>
      %75 = vector.shape_cast %74 : vector<1x64x32xf32> to vector<64x32xf32>
      %76 = vector.broadcast %61 : vector<64x1xf32> to vector<64x32xf32>
      %77 = arith.mulf %76, %75 : vector<64x32xf32>
      %78 = arith.truncf %64 : vector<64x64xf32> to vector<64x64xbf16>
      %79 = arith.truncf %48 : vector<64x32xf32> to vector<64x32xbf16>
      %cst_37 = arith.constant dense<0.000000e+00> : vector<64x32xf32>
      %80 = tpu.matmul %78, %79, %cst_37 {dimension_numbers = #tpu.dot_dimension_numbers<[1], [0], [0], [1], [0, 0, 1, 1], [], []>} : vector<64x64xbf16>, vector<64x32xbf16>, vector<64x32xf32> -> vector<64x32xf32>
      %81 = arith.addf %77, %80 : vector<64x32xf32>
      %c0_38 = arith.constant 0 : index
      %c0_39 = arith.constant 0 : index
      %c0_40 = arith.constant 0 : index
      %82 = vector.load %arg13[%c0_38, %c0_39, %c0_40] : memref<4x64x32xf32, #tpu.memory_space<vmem>>, vector<1x64x32xf32>
      %83 = vector.shape_cast %82 : vector<1x64x32xf32> to vector<64x32xf32>
      %84 = vector.shape_cast %81 : vector<64x32xf32> to vector<1x64x32xf32>
      tpu.vector_store %arg13[%c0_38, %c0_39, %c0_40], %84 {strides = array<i32>} : memref<4x64x32xf32, #tpu.memory_space<vmem>>, vector<1x64x32xf32>,
      %c0_41 = arith.constant 0 : index
      %c0_42 = arith.constant 0 : index
      %c0_43 = arith.constant 0 : index
      %85 = vector.load %arg11[%c0_41, %c0_42, %c0_43] : memref<4x64x1xf32, #tpu.memory_space<vmem>>, vector<1x64x1xf32>
      %86 = vector.shape_cast %85 : vector<1x64x1xf32> to vector<64x1xf32>
      %87 = vector.shape_cast %59 : vector<64x1xf32> to vector<1x64x1xf32>
      tpu.vector_store %arg11[%c0_41, %c0_42, %c0_43], %87 {strides = array<i32>} : memref<4x64x1xf32, #tpu.memory_space<vmem>>, vector<1x64x1xf32>,
      %88 = vector.extract_strided_slice %14 {offsets = [0, 32], sizes = [64, 32], strides = [1, 1]} : vector<64x128xf32> to vector<64x32xf32>
      %89 = arith.mulf %88, %88 : vector<64x32xf32>
      %cst_44 = arith.constant dense<0.000000e+00> : vector<64xf32>
      %90 = vector.multi_reduction <add>, %89, %cst_44 [1] : vector<64x32xf32> to vector<64xf32>
      %91 = vector.shape_cast %90 : vector<64xf32> to vector<64x1xf32>
      %cst_45 = arith.constant 3.200000e+01 : f32
      %92 = vector.broadcast %cst_45 : f32 to vector<64x1xf32>
      %93 = arith.divf %91, %92 : vector<64x1xf32>
      %cst_46 = arith.constant 1.1920929E-7 : f32
      %94 = vector.broadcast %cst_46 : f32 to vector<64x1xf32>
      %95 = arith.addf %93, %94 : vector<64x1xf32>
      %96 = math.rsqrt %95 : vector<64x1xf32>
      %97 = vector.broadcast %96 : vector<64x1xf32> to vector<64x32xf32>
      %98 = arith.mulf %88, %97 : vector<64x32xf32>
      %99 = vector.extract_strided_slice %98 {offsets = [0, 0], sizes = [64, 16], strides = [1, 1]} : vector<64x32xf32> to vector<64x16xf32>
      %100 = vector.extract_strided_slice %98 {offsets = [0, 16], sizes = [64, 16], strides = [1, 1]} : vector<64x32xf32> to vector<64x16xf32>
      %101 = arith.mulf %99, %17 : vector<64x16xf32>
      %102 = arith.mulf %100, %18 : vector<64x16xf32>
      %103 = arith.addf %101, %102 : vector<64x16xf32>
      %cst_47 = arith.constant 0.000000e+00 : f32
      %104 = vector.broadcast %cst_47 : f32 to vector<64x16xf32>
      %105 = arith.subf %104, %99 : vector<64x16xf32>
      %106 = arith.mulf %105, %18 : vector<64x16xf32>
      %107 = arith.mulf %100, %17 : vector<64x16xf32>
      %108 = arith.addf %106, %107 : vector<64x16xf32>
      %109 = tpu.concatenate %103, %108 in 1 : vector<64x16xf32>, vector<64x16xf32> -> vector<64x32xf32>
      %110 = vector.extract_strided_slice %16 {offsets = [0, 32], sizes = [64, 32], strides = [1, 1]} : vector<64x128xf32> to vector<64x32xf32>
      %c1 = arith.constant 1 : index
      %c0_48 = arith.constant 0 : index
      %c0_49 = arith.constant 0 : index
      %111 = vector.load %arg14[%c1, %c0_48, %c0_49] : memref<4x64x32xbf16, #tpu.memory_space<vmem>>, vector<1x64x32xbf16>
      %112 = vector.shape_cast %111 : vector<1x64x32xbf16> to vector<64x32xbf16>
      %113 = arith.truncf %109 : vector<64x32xf32> to vector<64x32xbf16>
      %cst_50 = arith.constant dense<0.000000e+00> : vector<64x64xf32>
      %114 = tpu.matmul %112, %113, %cst_50 {dimension_numbers = #tpu.dot_dimension_numbers<[1], [1], [0], [0], [0, 0, 1, 0], [], []>} : vector<64x32xbf16>, vector<64x32xbf16>, vector<64x64xf32> -> vector<64x64xf32>
      %cst_51 = arith.constant -1.000000e+30 : f32
      %115 = vector.broadcast %cst_51 : f32 to vector<64x64xf32>
      %116 = arith.select %25, %114, %115 : vector<64x64xi1>, vector<64x64xf32>
      %c1_52 = arith.constant 1 : index
      %c0_53 = arith.constant 0 : index
      %c0_54 = arith.constant 0 : index
      %117 = vector.load %arg11[%c1_52, %c0_53, %c0_54] : memref<4x64x1xf32, #tpu.memory_space<vmem>>, vector<1x64x1xf32>
      %118 = vector.shape_cast %117 : vector<1x64x1xf32> to vector<64x1xf32>
      %cst_55 = arith.constant dense<0xFF800000> : vector<64xf32>
      %119 = vector.multi_reduction <maximumf>, %116, %cst_55 [1] : vector<64x64xf32> to vector<64xf32>
      %120 = vector.shape_cast %119 : vector<64xf32> to vector<64x1xf32>
      %121 = arith.maximumf %118, %120 : vector<64x1xf32>
      %122 = arith.subf %118, %121 : vector<64x1xf32>
      %123 = math.exp %122 : vector<64x1xf32>
      %124 = vector.broadcast %121 : vector<64x1xf32> to vector<64x64xf32>
      %125 = arith.subf %116, %124 : vector<64x64xf32>
      %126 = math.exp %125 : vector<64x64xf32>
      %c1_56 = arith.constant 1 : index
      %c0_57 = arith.constant 0 : index
      %c0_58 = arith.constant 0 : index
      %127 = vector.load %arg12[%c1_56, %c0_57, %c0_58] : memref<4x64x1xf32, #tpu.memory_space<vmem>>, vector<1x64x1xf32>
      %128 = vector.shape_cast %127 : vector<1x64x1xf32> to vector<64x1xf32>
      %129 = arith.mulf %123, %128 : vector<64x1xf32>
      %cst_59 = arith.constant dense<0.000000e+00> : vector<64xf32>
      %130 = vector.multi_reduction <add>, %126, %cst_59 [1] : vector<64x64xf32> to vector<64xf32>
      %131 = vector.shape_cast %130 : vector<64xf32> to vector<64x1xf32>
      %132 = arith.addf %129, %131 : vector<64x1xf32>
      %c1_60 = arith.constant 1 : index
      %c0_61 = arith.constant 0 : index
      %c0_62 = arith.constant 0 : index
      %133 = vector.load %arg12[%c1_60, %c0_61, %c0_62] : memref<4x64x1xf32, #tpu.memory_space<vmem>>, vector<1x64x1xf32>
      %134 = vector.shape_cast %133 : vector<1x64x1xf32> to vector<64x1xf32>
      %135 = vector.shape_cast %132 : vector<64x1xf32> to vector<1x64x1xf32>
      tpu.vector_store %arg12[%c1_60, %c0_61, %c0_62], %135 {strides = array<i32>} : memref<4x64x1xf32, #tpu.memory_space<vmem>>, vector<1x64x1xf32>,
      %c1_63 = arith.constant 1 : index
      %c0_64 = arith.constant 0 : index
      %c0_65 = arith.constant 0 : index
      %136 = vector.load %arg13[%c1_63, %c0_64, %c0_65] : memref<4x64x32xf32, #tpu.memory_space<vmem>>, vector<1x64x32xf32>
      %137 = vector.shape_cast %136 : vector<1x64x32xf32> to vector<64x32xf32>
      %138 = vector.broadcast %123 : vector<64x1xf32> to vector<64x32xf32>
      %139 = arith.mulf %138, %137 : vector<64x32xf32>
      %140 = arith.truncf %126 : vector<64x64xf32> to vector<64x64xbf16>
      %141 = arith.truncf %110 : vector<64x32xf32> to vector<64x32xbf16>
      %cst_66 = arith.constant dense<0.000000e+00> : vector<64x32xf32>
      %142 = tpu.matmul %140, %141, %cst_66 {dimension_numbers = #tpu.dot_dimension_numbers<[1], [0], [0], [1], [0, 0, 1, 1], [], []>} : vector<64x64xbf16>, vector<64x32xbf16>, vector<64x32xf32> -> vector<64x32xf32>
      %143 = arith.addf %139, %142 : vector<64x32xf32>
      %c1_67 = arith.constant 1 : index
      %c0_68 = arith.constant 0 : index
      %c0_69 = arith.constant 0 : index
      %144 = vector.load %arg13[%c1_67, %c0_68, %c0_69] : memref<4x64x32xf32, #tpu.memory_space<vmem>>, vector<1x64x32xf32>
      %145 = vector.shape_cast %144 : vector<1x64x32xf32> to vector<64x32xf32>
      %146 = vector.shape_cast %143 : vector<64x32xf32> to vector<1x64x32xf32>
      tpu.vector_store %arg13[%c1_67, %c0_68, %c0_69], %146 {strides = array<i32>} : memref<4x64x32xf32, #tpu.memory_space<vmem>>, vector<1x64x32xf32>,
      %c1_70 = arith.constant 1 : index
      %c0_71 = arith.constant 0 : index
      %c0_72 = arith.constant 0 : index
      %147 = vector.load %arg11[%c1_70, %c0_71, %c0_72] : memref<4x64x1xf32, #tpu.memory_space<vmem>>, vector<1x64x1xf32>
      %148 = vector.shape_cast %147 : vector<1x64x1xf32> to vector<64x1xf32>
      %149 = vector.shape_cast %121 : vector<64x1xf32> to vector<1x64x1xf32>
      tpu.vector_store %arg11[%c1_70, %c0_71, %c0_72], %149 {strides = array<i32>} : memref<4x64x1xf32, #tpu.memory_space<vmem>>, vector<1x64x1xf32>,
      %150 = vector.extract_strided_slice %14 {offsets = [0, 64], sizes = [64, 32], strides = [1, 1]} : vector<64x128xf32> to vector<64x32xf32>
      %151 = arith.mulf %150, %150 : vector<64x32xf32>
      %cst_73 = arith.constant dense<0.000000e+00> : vector<64xf32>
      %152 = vector.multi_reduction <add>, %151, %cst_73 [1] : vector<64x32xf32> to vector<64xf32>
      %153 = vector.shape_cast %152 : vector<64xf32> to vector<64x1xf32>
      %cst_74 = arith.constant 3.200000e+01 : f32
      %154 = vector.broadcast %cst_74 : f32 to vector<64x1xf32>
      %155 = arith.divf %153, %154 : vector<64x1xf32>
      %cst_75 = arith.constant 1.1920929E-7 : f32
      %156 = vector.broadcast %cst_75 : f32 to vector<64x1xf32>
      %157 = arith.addf %155, %156 : vector<64x1xf32>
      %158 = math.rsqrt %157 : vector<64x1xf32>
      %159 = vector.broadcast %158 : vector<64x1xf32> to vector<64x32xf32>
      %160 = arith.mulf %150, %159 : vector<64x32xf32>
      %161 = vector.extract_strided_slice %160 {offsets = [0, 0], sizes = [64, 16], strides = [1, 1]} : vector<64x32xf32> to vector<64x16xf32>
      %162 = vector.extract_strided_slice %160 {offsets = [0, 16], sizes = [64, 16], strides = [1, 1]} : vector<64x32xf32> to vector<64x16xf32>
      %163 = arith.mulf %161, %17 : vector<64x16xf32>
      %164 = arith.mulf %162, %18 : vector<64x16xf32>
      %165 = arith.addf %163, %164 : vector<64x16xf32>
      %cst_76 = arith.constant 0.000000e+00 : f32
      %166 = vector.broadcast %cst_76 : f32 to vector<64x16xf32>
      %167 = arith.subf %166, %161 : vector<64x16xf32>
      %168 = arith.mulf %167, %18 : vector<64x16xf32>
      %169 = arith.mulf %162, %17 : vector<64x16xf32>
      %170 = arith.addf %168, %169 : vector<64x16xf32>
      %171 = tpu.concatenate %165, %170 in 1 : vector<64x16xf32>, vector<64x16xf32> -> vector<64x32xf32>
      %172 = vector.extract_strided_slice %16 {offsets = [0, 64], sizes = [64, 32], strides = [1, 1]} : vector<64x128xf32> to vector<64x32xf32>
      %c2 = arith.constant 2 : index
      %c0_77 = arith.constant 0 : index
      %c0_78 = arith.constant 0 : index
      %173 = vector.load %arg14[%c2, %c0_77, %c0_78] : memref<4x64x32xbf16, #tpu.memory_space<vmem>>, vector<1x64x32xbf16>
      %174 = vector.shape_cast %173 : vector<1x64x32xbf16> to vector<64x32xbf16>
      %175 = arith.truncf %171 : vector<64x32xf32> to vector<64x32xbf16>
      %cst_79 = arith.constant dense<0.000000e+00> : vector<64x64xf32>
      %176 = tpu.matmul %174, %175, %cst_79 {dimension_numbers = #tpu.dot_dimension_numbers<[1], [1], [0], [0], [0, 0, 1, 0], [], []>} : vector<64x32xbf16>, vector<64x32xbf16>, vector<64x64xf32> -> vector<64x64xf32>
      %cst_80 = arith.constant -1.000000e+30 : f32
      %177 = vector.broadcast %cst_80 : f32 to vector<64x64xf32>
      %178 = arith.select %25, %176, %177 : vector<64x64xi1>, vector<64x64xf32>
      %c2_81 = arith.constant 2 : index
      %c0_82 = arith.constant 0 : index
      %c0_83 = arith.constant 0 : index
      %179 = vector.load %arg11[%c2_81, %c0_82, %c0_83] : memref<4x64x1xf32, #tpu.memory_space<vmem>>, vector<1x64x1xf32>
      %180 = vector.shape_cast %179 : vector<1x64x1xf32> to vector<64x1xf32>
      %cst_84 = arith.constant dense<0xFF800000> : vector<64xf32>
      %181 = vector.multi_reduction <maximumf>, %178, %cst_84 [1] : vector<64x64xf32> to vector<64xf32>
      %182 = vector.shape_cast %181 : vector<64xf32> to vector<64x1xf32>
      %183 = arith.maximumf %180, %182 : vector<64x1xf32>
      %184 = arith.subf %180, %183 : vector<64x1xf32>
      %185 = math.exp %184 : vector<64x1xf32>
      %186 = vector.broadcast %183 : vector<64x1xf32> to vector<64x64xf32>
      %187 = arith.subf %178, %186 : vector<64x64xf32>
      %188 = math.exp %187 : vector<64x64xf32>
      %c2_85 = arith.constant 2 : index
      %c0_86 = arith.constant 0 : index
      %c0_87 = arith.constant 0 : index
      %189 = vector.load %arg12[%c2_85, %c0_86, %c0_87] : memref<4x64x1xf32, #tpu.memory_space<vmem>>, vector<1x64x1xf32>
      %190 = vector.shape_cast %189 : vector<1x64x1xf32> to vector<64x1xf32>
      %191 = arith.mulf %185, %190 : vector<64x1xf32>
      %cst_88 = arith.constant dense<0.000000e+00> : vector<64xf32>
      %192 = vector.multi_reduction <add>, %188, %cst_88 [1] : vector<64x64xf32> to vector<64xf32>
      %193 = vector.shape_cast %192 : vector<64xf32> to vector<64x1xf32>
      %194 = arith.addf %191, %193 : vector<64x1xf32>
      %c2_89 = arith.constant 2 : index
      %c0_90 = arith.constant 0 : index
      %c0_91 = arith.constant 0 : index
      %195 = vector.load %arg12[%c2_89, %c0_90, %c0_91] : memref<4x64x1xf32, #tpu.memory_space<vmem>>, vector<1x64x1xf32>
      %196 = vector.shape_cast %195 : vector<1x64x1xf32> to vector<64x1xf32>
      %197 = vector.shape_cast %194 : vector<64x1xf32> to vector<1x64x1xf32>
      tpu.vector_store %arg12[%c2_89, %c0_90, %c0_91], %197 {strides = array<i32>} : memref<4x64x1xf32, #tpu.memory_space<vmem>>, vector<1x64x1xf32>,
      %c2_92 = arith.constant 2 : index
      %c0_93 = arith.constant 0 : index
      %c0_94 = arith.constant 0 : index
      %198 = vector.load %arg13[%c2_92, %c0_93, %c0_94] : memref<4x64x32xf32, #tpu.memory_space<vmem>>, vector<1x64x32xf32>
      %199 = vector.shape_cast %198 : vector<1x64x32xf32> to vector<64x32xf32>
      %200 = vector.broadcast %185 : vector<64x1xf32> to vector<64x32xf32>
      %201 = arith.mulf %200, %199 : vector<64x32xf32>
      %202 = arith.truncf %188 : vector<64x64xf32> to vector<64x64xbf16>
      %203 = arith.truncf %172 : vector<64x32xf32> to vector<64x32xbf16>
      %cst_95 = arith.constant dense<0.000000e+00> : vector<64x32xf32>
      %204 = tpu.matmul %202, %203, %cst_95 {dimension_numbers = #tpu.dot_dimension_numbers<[1], [0], [0], [1], [0, 0, 1, 1], [], []>} : vector<64x64xbf16>, vector<64x32xbf16>, vector<64x32xf32> -> vector<64x32xf32>
      %205 = arith.addf %201, %204 : vector<64x32xf32>
      %c2_96 = arith.constant 2 : index
      %c0_97 = arith.constant 0 : index
      %c0_98 = arith.constant 0 : index
      %206 = vector.load %arg13[%c2_96, %c0_97, %c0_98] : memref<4x64x32xf32, #tpu.memory_space<vmem>>, vector<1x64x32xf32>
      %207 = vector.shape_cast %206 : vector<1x64x32xf32> to vector<64x32xf32>
      %208 = vector.shape_cast %205 : vector<64x32xf32> to vector<1x64x32xf32>
      tpu.vector_store %arg13[%c2_96, %c0_97, %c0_98], %208 {strides = array<i32>} : memref<4x64x32xf32, #tpu.memory_space<vmem>>, vector<1x64x32xf32>,
      %c2_99 = arith.constant 2 : index
      %c0_100 = arith.constant 0 : index
      %c0_101 = arith.constant 0 : index
      %209 = vector.load %arg11[%c2_99, %c0_100, %c0_101] : memref<4x64x1xf32, #tpu.memory_space<vmem>>, vector<1x64x1xf32>
      %210 = vector.shape_cast %209 : vector<1x64x1xf32> to vector<64x1xf32>
      %211 = vector.shape_cast %183 : vector<64x1xf32> to vector<1x64x1xf32>
      tpu.vector_store %arg11[%c2_99, %c0_100, %c0_101], %211 {strides = array<i32>} : memref<4x64x1xf32, #tpu.memory_space<vmem>>, vector<1x64x1xf32>,
      %212 = vector.extract_strided_slice %14 {offsets = [0, 96], sizes = [64, 32], strides = [1, 1]} : vector<64x128xf32> to vector<64x32xf32>
      %213 = arith.mulf %212, %212 : vector<64x32xf32>
      %cst_102 = arith.constant dense<0.000000e+00> : vector<64xf32>
      %214 = vector.multi_reduction <add>, %213, %cst_102 [1] : vector<64x32xf32> to vector<64xf32>
      %215 = vector.shape_cast %214 : vector<64xf32> to vector<64x1xf32>
      %cst_103 = arith.constant 3.200000e+01 : f32
      %216 = vector.broadcast %cst_103 : f32 to vector<64x1xf32>
      %217 = arith.divf %215, %216 : vector<64x1xf32>
      %cst_104 = arith.constant 1.1920929E-7 : f32
      %218 = vector.broadcast %cst_104 : f32 to vector<64x1xf32>
      %219 = arith.addf %217, %218 : vector<64x1xf32>
      %220 = math.rsqrt %219 : vector<64x1xf32>
      %221 = vector.broadcast %220 : vector<64x1xf32> to vector<64x32xf32>
      %222 = arith.mulf %212, %221 : vector<64x32xf32>
      %223 = vector.extract_strided_slice %222 {offsets = [0, 0], sizes = [64, 16], strides = [1, 1]} : vector<64x32xf32> to vector<64x16xf32>
      %224 = vector.extract_strided_slice %222 {offsets = [0, 16], sizes = [64, 16], strides = [1, 1]} : vector<64x32xf32> to vector<64x16xf32>
      %225 = arith.mulf %223, %17 : vector<64x16xf32>
      %226 = arith.mulf %224, %18 : vector<64x16xf32>
      %227 = arith.addf %225, %226 : vector<64x16xf32>
      %cst_105 = arith.constant 0.000000e+00 : f32
      %228 = vector.broadcast %cst_105 : f32 to vector<64x16xf32>
      %229 = arith.subf %228, %223 : vector<64x16xf32>
      %230 = arith.mulf %229, %18 : vector<64x16xf32>
      %231 = arith.mulf %224, %17 : vector<64x16xf32>
      %232 = arith.addf %230, %231 : vector<64x16xf32>
      %233 = tpu.concatenate %227, %232 in 1 : vector<64x16xf32>, vector<64x16xf32> -> vector<64x32xf32>
      %234 = vector.extract_strided_slice %16 {offsets = [0, 96], sizes = [64, 32], strides = [1, 1]} : vector<64x128xf32> to vector<64x32xf32>
      %c3 = arith.constant 3 : index
      %c0_106 = arith.constant 0 : index
      %c0_107 = arith.constant 0 : index
      %235 = vector.load %arg14[%c3, %c0_106, %c0_107] : memref<4x64x32xbf16, #tpu.memory_space<vmem>>, vector<1x64x32xbf16>
      %236 = vector.shape_cast %235 : vector<1x64x32xbf16> to vector<64x32xbf16>
      %237 = arith.truncf %233 : vector<64x32xf32> to vector<64x32xbf16>
      %cst_108 = arith.constant dense<0.000000e+00> : vector<64x64xf32>
      %238 = tpu.matmul %236, %237, %cst_108 {dimension_numbers = #tpu.dot_dimension_numbers<[1], [1], [0], [0], [0, 0, 1, 0], [], []>} : vector<64x32xbf16>, vector<64x32xbf16>, vector<64x64xf32> -> vector<64x64xf32>
      %cst_109 = arith.constant -1.000000e+30 : f32
      %239 = vector.broadcast %cst_109 : f32 to vector<64x64xf32>
      %240 = arith.select %25, %238, %239 : vector<64x64xi1>, vector<64x64xf32>
      %c3_110 = arith.constant 3 : index
      %c0_111 = arith.constant 0 : index
      %c0_112 = arith.constant 0 : index
      %241 = vector.load %arg11[%c3_110, %c0_111, %c0_112] : memref<4x64x1xf32, #tpu.memory_space<vmem>>, vector<1x64x1xf32>
      %242 = vector.shape_cast %241 : vector<1x64x1xf32> to vector<64x1xf32>
      %cst_113 = arith.constant dense<0xFF800000> : vector<64xf32>
      %243 = vector.multi_reduction <maximumf>, %240, %cst_113 [1] : vector<64x64xf32> to vector<64xf32>
      %244 = vector.shape_cast %243 : vector<64xf32> to vector<64x1xf32>
      %245 = arith.maximumf %242, %244 : vector<64x1xf32>
      %246 = arith.subf %242, %245 : vector<64x1xf32>
      %247 = math.exp %246 : vector<64x1xf32>
      %248 = vector.broadcast %245 : vector<64x1xf32> to vector<64x64xf32>
      %249 = arith.subf %240, %248 : vector<64x64xf32>
      %250 = math.exp %249 : vector<64x64xf32>
      %c3_114 = arith.constant 3 : index
      %c0_115 = arith.constant 0 : index
      %c0_116 = arith.constant 0 : index
      %251 = vector.load %arg12[%c3_114, %c0_115, %c0_116] : memref<4x64x1xf32, #tpu.memory_space<vmem>>, vector<1x64x1xf32>
      %252 = vector.shape_cast %251 : vector<1x64x1xf32> to vector<64x1xf32>
      %253 = arith.mulf %247, %252 : vector<64x1xf32>
      %cst_117 = arith.constant dense<0.000000e+00> : vector<64xf32>
      %254 = vector.multi_reduction <add>, %250, %cst_117 [1] : vector<64x64xf32> to vector<64xf32>
      %255 = vector.shape_cast %254 : vector<64xf32> to vector<64x1xf32>
      %256 = arith.addf %253, %255 : vector<64x1xf32>
      %c3_118 = arith.constant 3 : index
      %c0_119 = arith.constant 0 : index
      %c0_120 = arith.constant 0 : index
      %257 = vector.load %arg12[%c3_118, %c0_119, %c0_120] : memref<4x64x1xf32, #tpu.memory_space<vmem>>, vector<1x64x1xf32>
      %258 = vector.shape_cast %257 : vector<1x64x1xf32> to vector<64x1xf32>
      %259 = vector.shape_cast %256 : vector<64x1xf32> to vector<1x64x1xf32>
      tpu.vector_store %arg12[%c3_118, %c0_119, %c0_120], %259 {strides = array<i32>} : memref<4x64x1xf32, #tpu.memory_space<vmem>>, vector<1x64x1xf32>,
      %c3_121 = arith.constant 3 : index
      %c0_122 = arith.constant 0 : index
      %c0_123 = arith.constant 0 : index
      %260 = vector.load %arg13[%c3_121, %c0_122, %c0_123] : memref<4x64x32xf32, #tpu.memory_space<vmem>>, vector<1x64x32xf32>
      %261 = vector.shape_cast %260 : vector<1x64x32xf32> to vector<64x32xf32>
      %262 = vector.broadcast %247 : vector<64x1xf32> to vector<64x32xf32>
      %263 = arith.mulf %262, %261 : vector<64x32xf32>
      %264 = arith.truncf %250 : vector<64x64xf32> to vector<64x64xbf16>
      %265 = arith.truncf %234 : vector<64x32xf32> to vector<64x32xbf16>
      %cst_124 = arith.constant dense<0.000000e+00> : vector<64x32xf32>
      %266 = tpu.matmul %264, %265, %cst_124 {dimension_numbers = #tpu.dot_dimension_numbers<[1], [0], [0], [1], [0, 0, 1, 1], [], []>} : vector<64x64xbf16>, vector<64x32xbf16>, vector<64x32xf32> -> vector<64x32xf32>
      %267 = arith.addf %263, %266 : vector<64x32xf32>
      %c3_125 = arith.constant 3 : index
      %c0_126 = arith.constant 0 : index
      %c0_127 = arith.constant 0 : index
      %268 = vector.load %arg13[%c3_125, %c0_126, %c0_127] : memref<4x64x32xf32, #tpu.memory_space<vmem>>, vector<1x64x32xf32>
      %269 = vector.shape_cast %268 : vector<1x64x32xf32> to vector<64x32xf32>
      %270 = vector.shape_cast %267 : vector<64x32xf32> to vector<1x64x32xf32>
      tpu.vector_store %arg13[%c3_125, %c0_126, %c0_127], %270 {strides = array<i32>} : memref<4x64x32xf32, #tpu.memory_space<vmem>>, vector<1x64x32xf32>,
      %c3_128 = arith.constant 3 : index
      %c0_129 = arith.constant 0 : index
      %c0_130 = arith.constant 0 : index
      %271 = vector.load %arg11[%c3_128, %c0_129, %c0_130] : memref<4x64x1xf32, #tpu.memory_space<vmem>>, vector<1x64x1xf32>
      %272 = vector.shape_cast %271 : vector<1x64x1xf32> to vector<64x1xf32>
      %273 = vector.shape_cast %245 : vector<64x1xf32> to vector<1x64x1xf32>
      tpu.vector_store %arg11[%c3_128, %c0_129, %c0_130], %273 {strides = array<i32>} : memref<4x64x1xf32, #tpu.memory_space<vmem>>, vector<1x64x1xf32>,
    } else {
    }
    %c1_i32_4 = arith.constant 1 : i32
    %10 = arith.cmpi eq, %arg2, %c1_i32_4 : i32
    %11 = arith.extui %10 : i1 to i32
    %c0_i32_5 = arith.constant 0 : i32
    %12 = arith.cmpi ne, %11, %c0_i32_5 : i32
    scf.if %12 {
      %c0 = arith.constant 0 : index
      %c0_6 = arith.constant 0 : index
      %c0_7 = arith.constant 0 : index
      %13 = vector.load %arg12[%c0, %c0_6, %c0_7] : memref<4x64x1xf32, #tpu.memory_space<vmem>>, vector<1x64x1xf32>
      %14 = vector.shape_cast %13 : vector<1x64x1xf32> to vector<64x1xf32>
      %15 = tpu.reciprocal %14 {approx = true} : vector<64x1xf32> -> vector<64x1xf32>
      %c0_8 = arith.constant 0 : index
      %c0_9 = arith.constant 0 : index
      %c0_10 = arith.constant 0 : index
      %16 = vector.load %arg13[%c0_8, %c0_9, %c0_10] : memref<4x64x32xf32, #tpu.memory_space<vmem>>, vector<1x64x32xf32>
      %17 = vector.shape_cast %16 : vector<1x64x32xf32> to vector<64x32xf32>
      %18 = vector.broadcast %15 : vector<64x1xf32> to vector<64x32xf32>
      %19 = arith.mulf %17, %18 : vector<64x32xf32>
      %c0_11 = arith.constant 0 : index
      %c0_12 = arith.constant 0 : index
      %c0_13 = arith.constant 0 : index
      %20 = vector.load %arg10[%c0_11, %c0_12, %c0_13] : memref<1x64x128xf32, #tpu.memory_space<vmem>>, vector<1x64x32xf32>
      %21 = vector.shape_cast %20 : vector<1x64x32xf32> to vector<64x32xf32>
      %22 = vector.shape_cast %19 : vector<64x32xf32> to vector<1x64x32xf32>
      tpu.vector_store %arg10[%c0_11, %c0_12, %c0_13], %22 {strides = array<i32>} : memref<1x64x128xf32, #tpu.memory_space<vmem>>, vector<1x64x32xf32>,
      %c1 = arith.constant 1 : index
      %c0_14 = arith.constant 0 : index
      %c0_15 = arith.constant 0 : index
      %23 = vector.load %arg12[%c1, %c0_14, %c0_15] : memref<4x64x1xf32, #tpu.memory_space<vmem>>, vector<1x64x1xf32>
      %24 = vector.shape_cast %23 : vector<1x64x1xf32> to vector<64x1xf32>
      %25 = tpu.reciprocal %24 {approx = true} : vector<64x1xf32> -> vector<64x1xf32>
      %c1_16 = arith.constant 1 : index
      %c0_17 = arith.constant 0 : index
      %c0_18 = arith.constant 0 : index
      %26 = vector.load %arg13[%c1_16, %c0_17, %c0_18] : memref<4x64x32xf32, #tpu.memory_space<vmem>>, vector<1x64x32xf32>
      %27 = vector.shape_cast %26 : vector<1x64x32xf32> to vector<64x32xf32>
      %28 = vector.broadcast %25 : vector<64x1xf32> to vector<64x32xf32>
      %29 = arith.mulf %27, %28 : vector<64x32xf32>
      %c0_19 = arith.constant 0 : index
      %c0_20 = arith.constant 0 : index
      %c32 = arith.constant 32 : index
      %30 = vector.load %arg10[%c0_19, %c0_20, %c32] : memref<1x64x128xf32, #tpu.memory_space<vmem>>, vector<1x64x32xf32>
      %31 = vector.shape_cast %30 : vector<1x64x32xf32> to vector<64x32xf32>
      %32 = vector.shape_cast %29 : vector<64x32xf32> to vector<1x64x32xf32>
      tpu.vector_store %arg10[%c0_19, %c0_20, %c32], %32 {strides = array<i32>} : memref<1x64x128xf32, #tpu.memory_space<vmem>>, vector<1x64x32xf32>,
      %c2 = arith.constant 2 : index
      %c0_21 = arith.constant 0 : index
      %c0_22 = arith.constant 0 : index
      %33 = vector.load %arg12[%c2, %c0_21, %c0_22] : memref<4x64x1xf32, #tpu.memory_space<vmem>>, vector<1x64x1xf32>
      %34 = vector.shape_cast %33 : vector<1x64x1xf32> to vector<64x1xf32>
      %35 = tpu.reciprocal %34 {approx = true} : vector<64x1xf32> -> vector<64x1xf32>
      %c2_23 = arith.constant 2 : index
      %c0_24 = arith.constant 0 : index
      %c0_25 = arith.constant 0 : index
      %36 = vector.load %arg13[%c2_23, %c0_24, %c0_25] : memref<4x64x32xf32, #tpu.memory_space<vmem>>, vector<1x64x32xf32>
      %37 = vector.shape_cast %36 : vector<1x64x32xf32> to vector<64x32xf32>
      %38 = vector.broadcast %35 : vector<64x1xf32> to vector<64x32xf32>
      %39 = arith.mulf %37, %38 : vector<64x32xf32>
      %c0_26 = arith.constant 0 : index
      %c0_27 = arith.constant 0 : index
      %c64 = arith.constant 64 : index
      %40 = vector.load %arg10[%c0_26, %c0_27, %c64] : memref<1x64x128xf32, #tpu.memory_space<vmem>>, vector<1x64x32xf32>
      %41 = vector.shape_cast %40 : vector<1x64x32xf32> to vector<64x32xf32>
      %42 = vector.shape_cast %39 : vector<64x32xf32> to vector<1x64x32xf32>
      tpu.vector_store %arg10[%c0_26, %c0_27, %c64], %42 {strides = array<i32>} : memref<1x64x128xf32, #tpu.memory_space<vmem>>, vector<1x64x32xf32>,
      %c3 = arith.constant 3 : index
      %c0_28 = arith.constant 0 : index
      %c0_29 = arith.constant 0 : index
      %43 = vector.load %arg12[%c3, %c0_28, %c0_29] : memref<4x64x1xf32, #tpu.memory_space<vmem>>, vector<1x64x1xf32>
      %44 = vector.shape_cast %43 : vector<1x64x1xf32> to vector<64x1xf32>
      %45 = tpu.reciprocal %44 {approx = true} : vector<64x1xf32> -> vector<64x1xf32>
      %c3_30 = arith.constant 3 : index
      %c0_31 = arith.constant 0 : index
      %c0_32 = arith.constant 0 : index
      %46 = vector.load %arg13[%c3_30, %c0_31, %c0_32] : memref<4x64x32xf32, #tpu.memory_space<vmem>>, vector<1x64x32xf32>
      %47 = vector.shape_cast %46 : vector<1x64x32xf32> to vector<64x32xf32>
      %48 = vector.broadcast %45 : vector<64x1xf32> to vector<64x32xf32>
      %49 = arith.mulf %47, %48 : vector<64x32xf32>
      %c0_33 = arith.constant 0 : index
      %c0_34 = arith.constant 0 : index
      %c96 = arith.constant 96 : index
      %50 = vector.load %arg10[%c0_33, %c0_34, %c96] : memref<1x64x128xf32, #tpu.memory_space<vmem>>, vector<1x64x32xf32>
      %51 = vector.shape_cast %50 : vector<1x64x32xf32> to vector<64x32xf32>
      %52 = vector.shape_cast %49 : vector<64x32xf32> to vector<1x64x32xf32>
      tpu.vector_store %arg10[%c0_33, %c0_34, %c96], %52 {strides = array<i32>} : memref<1x64x128xf32, #tpu.memory_space<vmem>>, vector<1x64x32xf32>,
    } else {
    }
    return
  }
  func.func @transform_0(%arg0: i32, %arg1: i32, %arg2: i32) -> (i32, i32) {
    %c0_i32 = arith.constant 0 : i32
    %c0_i32_0 = arith.constant 0 : i32
    return %arg1, %c0_i32 : i32, i32
  }
  func.func @transform_1(%arg0: i32, %arg1: i32, %arg2: i32) -> (i32, i32) {
    %c0_i32 = arith.constant 0 : i32
    %c0_i32_0 = arith.constant 0 : i32
    return %arg1, %c0_i32 : i32, i32
  }
  func.func @transform_2(%arg0: i32, %arg1: i32, %arg2: i32) -> (i32, i32) {
    %c0_i32 = arith.constant 0 : i32
    %c0_i32_0 = arith.constant 0 : i32
    return %arg2, %c0_i32 : i32, i32
  }
  func.func @transform_3(%arg0: i32, %arg1: i32, %arg2: i32) -> (i32, i32) {
    %c0_i32 = arith.constant 0 : i32
    %c0_i32_0 = arith.constant 0 : i32
    return %arg2, %c0_i32 : i32, i32
  }
  func.func @transform_4(%arg0: i32, %arg1: i32, %arg2: i32) -> (i32, i32, i32) {
    %c0_i32 = arith.constant 0 : i32
    %c0_i32_0 = arith.constant 0 : i32
    return %arg0, %arg1, %c0_i32 : i32, i32, i32
  }
  func.func @transform_5(%arg0: i32, %arg1: i32, %arg2: i32) -> (i32, i32, i32) {
    %c0_i32 = arith.constant 0 : i32
    %c0_i32_0 = arith.constant 0 : i32
    return %arg0, %arg2, %c0_i32 : i32, i32, i32
  }
  func.func @transform_6(%arg0: i32, %arg1: i32, %arg2: i32) -> (i32, i32, i32) {
    %c0_i32 = arith.constant 0 : i32
    %c0_i32_0 = arith.constant 0 : i32
    return %arg0, %arg2, %c0_i32 : i32, i32, i32
  }
  func.func @transform_7(%arg0: i32, %arg1: i32, %arg2: i32) -> (i32, i32, i32) {
    %c0_i32 = arith.constant 0 : i32
    %c0_i32_0 = arith.constant 0 : i32
    return %arg0, %arg1, %c0_i32 : i32, i32, i32
  }
}

</mosaic_0001>

<llo_original>
// kernel: causal_self_attention.3
$region0: #{causal_self_attention.3}
  #allocation0 [shape = 'u32[]', space=smem, size = 0x4, offset = 0x4, fixed_abs, tag = 'smem constant byte address 0x4 - core index']
  #allocation1 [shape = 'u32[144,128]{1,0:T(1,128)}', space=vmem, size = 0x12000, scoped, tag = 'internal scratch']
  #allocation2 [shape = 'f32[128,128]{1,0:T(8,128)}', space=vmem, size = 0x10000, scoped, tag = 'scratch operand']
  %s0 = inlined_call_operand.vmem [shape: bf16[256,128], index: 0, kind: input, shape index: {}]
  %s1 = inlined_call_operand.vmem [shape: bf16[128,384], index: 1, kind: input, shape index: {}]
  %s2 = inlined_call_operand.vmem [shape: f32[256,384], index: 2, kind: output, shape index: {}]
  %s3 = sld [smem:[#allocation0]]
  $region124: #{causal_self_attention.3} parent=0
    _
  %s5 = ssub.s32 1, %s3
  %s6 = scalar_select 0, %s5, %s3
  $region1: #{causal_self_attention.3} parent=0
    #allocation3 [shape = 'u8[65536]{0}', space=vmem, size = 0x10000, scoped, tag = 'input window, operand 1']
    #allocation4 [shape = 'u8[131072]{0}', space=vmem, size = 0x20000, scoped, tag = 'output window, operand 0']
    loop: start=0, step=1, limit=8
    $region2: #{causal_self_attention.3} parent=1 // loop_pre_header
      _
    $region3: #{causal_self_attention.3} parent=1 // loop_header
      %s8 = sphi 0, %s12
      %p9 = scmp.ge.s32.totalorder %s8, 8
      %s15 = sphi 0, %s34
      %s16 = sphi 0, %s30
      %s17 = sphi 0, %s26
      %s18 = sphi 0, %s15
      %s19 = sphi 0, %s16
      %s20 = sphi 0, %s17
      %s21 = sphi 0, %s18
      %s22 = sphi 0, %s19
      %s23 = sphi 0, %s20
      %s39 = sphi 0, %s41
      %s42 = sphi 0, %s39
      %s43 = sphi 0, %s42
      %s59 = sphi 0, %s43
      %s67 = sphi 0, %s69
      %s70 = sphi 0, %s67
      %s71 = sphi 0, %s70
      %s87 = sphi 0, %s71
      %s95 = sphi 0, %s97
      %s98 = sphi 0, %s95
      %s99 = sphi 0, %s98
      %s115 = sphi 0, %s99
    $region4: #{causal_self_attention.3} parent=1 // loop_header_branch
      %11 = sbr.rel (%p9) target = $region8
    $region5: #{causal_self_attention.3} parent=1 // loop_body
      %s13 = ssub.s32 %s8, 1
      %s14 = ssub.s32 %s8, 2
      %s24 = sadd.s32 1, %s17
      %p25 = scmp.ge.s32.totalorder %s24, 1
      %s26 = scalar_select %p25, 0, %s24
      %s27 = sadd.s32 1, %s16
      %s28 = scalar_select %p25, %s27, %s16
      %p29 = scmp.ge.s32.totalorder %s28, 3
      %s30 = scalar_select %p29, 0, %s28
      %s31 = sadd.s32 1, %s15
      %s32 = scalar_select %p29, %s31, %s15
      %p33 = scmp.ge.s32.totalorder %s32, 2
      %s34 = scalar_select %p33, 0, %s32
      %s35 = ssub.s32 %s15, %s34
      %s36 = ssub.s32 %s17, %s26
      %s37 = sor.u32 %s35, %s36
      %p38 = scmp.eq.s32.totalorder %s37, 0
      %s40 = sadd.s32 %s39, 1
      %s41 = scalar_select %p38, %s39, %s40
      %p44 = pneg %p38
      %p45 = scmp.eq.s32.totalorder %s8, 5
      %p46 = por %p44, %p45
      %p47 = scmp.ne.s32.totalorder %s39, %s42
      %p48 = scmp.eq.s32.totalorder %s8, 0
      %p49 = por %p47, %p48
      %p50 = scmp.ne.s32.totalorder %s39, %s42
      %p51 = scmp.eq.s32.totalorder %s13, 5
      %p52 = por %p50, %p51
      %p53 = scmp.ne.s32.totalorder %s42, %s43
      %p54 = scmp.eq.s32.totalorder %s13, 0
      %p55 = por %p53, %p54
      %p56 = scmp.ne.s32.totalorder %s42, %s43
      %p57 = scmp.eq.s32.totalorder %s14, 5
      %p58 = por %p56, %p57
      %p60 = scmp.ne.s32.totalorder %s43, %s59
      %p61 = scmp.eq.s32.totalorder %s14, 0
      %p62 = por %p60, %p61
      %s63 = ssub.s32 %s17, %s26
      %s64 = ssub.s32 %s16, %s30
      %s65 = sor.u32 %s63, %s64
      %p66 = scmp.eq.s32.totalorder %s65, 0
      %s68 = sadd.s32 %s67, 1
      %s69 = scalar_select %p66, %s67, %s68
      %p72 = pneg %p66
      %p73 = scmp.eq.s32.totalorder %s8, 5
      %p74 = por %p72, %p73
      %p75 = scmp.ne.s32.totalorder %s67, %s70
      %p76 = scmp.eq.s32.totalorder %s8, 0
      %p77 = por %p75, %p76
      %p78 = scmp.ne.s32.totalorder %s67, %s70
      %p79 = scmp.eq.s32.totalorder %s13, 5
      %p80 = por %p78, %p79
      %p81 = scmp.ne.s32.totalorder %s70, %s71
      %p82 = scmp.eq.s32.totalorder %s13, 0
      %p83 = por %p81, %p82
      %p84 = scmp.ne.s32.totalorder %s70, %s71
      %p85 = scmp.eq.s32.totalorder %s14, 5
      %p86 = por %p84, %p85
      %p88 = scmp.ne.s32.totalorder %s71, %s87
      %p89 = scmp.eq.s32.totalorder %s14, 0
      %p90 = por %p88, %p89
      %s91 = ssub.s32 %s15, %s34
      %s92 = ssub.s32 %s16, %s30
      %s93 = sor.u32 %s91, %s92
      %p94 = scmp.eq.s32.totalorder %s93, 0
      %s96 = sadd.s32 %s95, 1
      %s97 = scalar_select %p94, %s95, %s96
      %p100 = pneg %p94
      %p101 = scmp.eq.s32.totalorder %s8, 5
      %p102 = por %p100, %p101
      %p103 = scmp.ne.s32.totalorder %s95, %s98
      %p104 = scmp.eq.s32.totalorder %s8, 0
      %p105 = por %p103, %p104
      %p106 = scmp.ne.s32.totalorder %s95, %s98
      %p107 = scmp.eq.s32.totalorder %s13, 5
      %p108 = por %p106, %p107
      %p109 = scmp.ne.s32.totalorder %s98, %s99
      %p110 = scmp.eq.s32.totalorder %s13, 0
      %p111 = por %p109, %p110
      %p112 = scmp.ne.s32.totalorder %s98, %s99
      %p113 = scmp.eq.s32.totalorder %s14, 5
      %p114 = por %p112, %p113
      %p116 = scmp.ne.s32.totalorder %s99, %s115
      %p117 = scmp.eq.s32.totalorder %s14, 0
      %p118 = por %p116, %p117
      %p119 = scmp.le.s32.totalorder 1, %s8
      %p120 = scmp.lt.s32.totalorder %s8, 7
      %p121 = pnand %p119, %p120
      %p122 = pneg %p121
      // Predicated region
      $region9: #{causal_self_attention.3} parent=5 // pred_check
        _
      $region10: #{causal_self_attention.3} parent=5 // pred_check_branch
        %124 = sbr.rel (%p121) target = $region12
      $region11: #{causal_self_attention.3} parent=5 // pred_region
        %s125 = ssub.s32 %s8, 1
      $region12: #{causal_self_attention.3} parent=5 // pred_fallthru
        _
      %p126 = scmp.lt.s32.totalorder %s8, 6
      // Predicated region
      $region13: #{causal_self_attention.3} parent=5 // pred_check
        %p127 = pneg %p126
      $region14: #{causal_self_attention.3} parent=5 // pred_check_branch
        %129 = sbr.rel (%p127) target = $region16
      $region15: #{causal_self_attention.3} parent=5 // pred_region
        // Predicated region
        $region17: #{causal_self_attention.3} parent=15 // pred_check
          %p130 = pneg %p49
        $region18: #{causal_self_attention.3} parent=15 // pred_check_branch
          %132 = sbr.rel (%p130) target = $region20
        $region19: #{causal_self_attention.3} parent=15 // pred_region
          %s133 = smul.u32 16, %s15
          %p134 = scmp.lt.s32.totalorder %s133, 31
          %s135 = scalar_select %p134, %s133, 31
          %p136 = scmp.lt.s32.totalorder %s17, 0
          %s137 = scalar_select %p136, %s17, 0
          %s138 = sadd.s32 %s137, %s135
          %s139 = smul.addr %s138, 4
          %s140 = scalar_lea.vmem %s0, %s139
          %s141 = smul.u32 16, %s15
        $region20: #{causal_self_attention.3} parent=15 // pred_fallthru
          _
        // Predicated region
        $region21: #{causal_self_attention.3} parent=15 // pred_check
          %p142 = pneg %p77
        $region22: #{causal_self_attention.3} parent=15 // pred_check_branch
          %144 = sbr.rel (%p142) target = $region24
        $region23: #{causal_self_attention.3} parent=15 // pred_region
          %s145 = sand.u32 %s67, 1
          %s146 = sand.u32 %s67, 1
          %s147 = smul.addr %s146, 64
          %s148 = scalar_lea.vmem [#allocation3], %s147
          %s149 = smul.u32 16, %s17
          %s150 = smul.addr %s149, 3
          %s151 = sadd.s32 %s16, %s150
          %s152 = smul.addr %s151, 4
          %s153 = scalar_lea.vmem %s1, %s152
          // Predicated region
          $region25: #{causal_self_attention.3} parent=23 // pred_check
            _
          $region26: #{causal_self_attention.3} parent=23 // pred_check_branch
            %155 = sbr.rel (0) target = $region28
          $region27: #{causal_self_attention.3} parent=23 // pred_region
            // Predicated region
            $region29: #{causal_self_attention.3} parent=27 // pred_check
              _
            $region30: #{causal_self_attention.3} parent=27 // pred_check_branch
              %157 = sbr.rel target = $region32
            $region31: #{causal_self_attention.3} parent=27 // pred_region
              // Predicated region
              $region44: #{causal_self_attention.3} parent=31 // pred_check
                _
              $region45: #{causal_self_attention.3} parent=31 // pred_check_branch
                %203 = sbr.rel (0) target = $region47
              $region46: #{causal_self_attention.3} parent=31 // pred_region
                loop: start=0, step=1, limit=1
                $region48: #{causal_self_attention.3} parent=46 // loop_pre_header
                  _
                $region49: #{causal_self_attention.3} parent=46 // loop_header
                  %s205 = sphi 0, %s209
                  %p206 = scmp.ge.s32.totalorder %s205, 1
                  %s210 = sphi %s153, %s153
                  %s211 = sphi %s148, %s148
                $region50: #{causal_self_attention.3} parent=46 // loop_header_branch
                  %208 = sbr.rel (%p206) target = $region54
                $region51: #{causal_self_attention.3} parent=46 // loop_body
                  _
                $region52: #{causal_self_attention.3} parent=46 // loop_footer
                  %s209 = sadd.s32 1, %s205
                $region53: #{causal_self_attention.3} parent=46 // loop_footer_branch
                  %204 = sbr.rel target = $region49
                $region54: #{causal_self_attention.3} parent=46 // loop_exit
                  _
                %s213 = ssub.s32 16, 1
                loop: start=0, step=1, limit=1
                $region55: #{causal_self_attention.3} parent=46 // loop_pre_header
                  _
                $region56: #{causal_self_attention.3} parent=46 // loop_header
                  %s215 = sphi 0, %s219
                  %p216 = scmp.ge.s32.totalorder %s215, 1
                  %s220 = sphi %s153, %s153
                  %s221 = sphi %s148, %s148
                $region57: #{causal_self_attention.3} parent=46 // loop_header_branch
                  %218 = sbr.rel (%p216) target = $region61
                $region58: #{causal_self_attention.3} parent=46 // loop_body
                  %v222 = vld [vmem:[%s220] sm:%s213]
                  %223 = vst [vmem:[%s221] sm:%s213] %v222
                  %v224 = vld [vmem:[%s220 + $0xc] sm:%s213]
                  %225 = vst [vmem:[%s221 + $0x4] sm:%s213] %v224
                  %v226 = vld [vmem:[%s220 + $0x18] sm:%s213]
                  %227 = vst [vmem:[%s221 + $0x8] sm:%s213] %v226
                  %v228 = vld [vmem:[%s220 + $0x24] sm:%s213]
                  %229 = vst [vmem:[%s221 + $0xc] sm:%s213] %v228
                  %v230 = vld [vmem:[%s220 + $0x30] sm:%s213]
                  %231 = vst [vmem:[%s221 + $0x10] sm:%s213] %v230
                  %v232 = vld [vmem:[%s220 + $0x3c] sm:%s213]
                  %233 = vst [vmem:[%s221 + $0x14] sm:%s213] %v232
                  %v234 = vld [vmem:[%s220 + $0x48] sm:%s213]
                  %235 = vst [vmem:[%s221 + $0x18] sm:%s213] %v234
                  %v236 = vld [vmem:[%s220 + $0x54] sm:%s213]
                  %237 = vst [vmem:[%s221 + $0x1c] sm:%s213] %v236
                  %v238 = vld [vmem:[%s220 + $0x60] sm:%s213]
                  %239 = vst [vmem:[%s221 + $0x20] sm:%s213] %v238
                  %v240 = vld [vmem:[%s220 + $0x6c] sm:%s213]
                  %241 = vst [vmem:[%s221 + $0x24] sm:%s213] %v240
                  %v242 = vld [vmem:[%s220 + $0x78] sm:%s213]
                  %243 = vst [vmem:[%s221 + $0x28] sm:%s213] %v242
                  %v244 = vld [vmem:[%s220 + $0x84] sm:%s213]
                  %245 = vst [vmem:[%s221 + $0x2c] sm:%s213] %v244
                  %v246 = vld [vmem:[%s220 + $0x90] sm:%s213]
                  %247 = vst [vmem:[%s221 + $0x30] sm:%s213] %v246
                  %v248 = vld [vmem:[%s220 + $0x9c] sm:%s213]
                  %249 = vst [vmem:[%s221 + $0x34] sm:%s213] %v248
                  %v250 = vld [vmem:[%s220 + $0xa8] sm:%s213]
                  %251 = vst [vmem:[%s221 + $0x38] sm:%s213] %v250
                  %v252 = vld [vmem:[%s220 + $0xb4] sm:%s213]
                  %253 = vst [vmem:[%s221 + $0x3c] sm:%s213] %v252
                $region59: #{causal_self_attention.3} parent=46 // loop_footer
                  %s219 = sadd.s32 1, %s215
                $region60: #{causal_self_attention.3} parent=46 // loop_footer_branch
                  %214 = sbr.rel target = $region56
                $region61: #{causal_self_attention.3} parent=46 // loop_exit
                  _
              $region47: #{causal_self_attention.3} parent=31 // pred_fallthru
                _
            $region32: #{causal_self_attention.3} parent=27 // pred_fallthru
              _
            // Predicated region
            $region33: #{causal_self_attention.3} parent=27 // pred_check
              _
            $region34: #{causal_self_attention.3} parent=27 // pred_check_branch
              %159 = sbr.rel (0) target = $region36
            $region35: #{causal_self_attention.3} parent=27 // pred_region
              %s161 = ssub.s32 16, 1
              loop: start=0, step=1, limit=1
              $region37: #{causal_self_attention.3} parent=35 // loop_pre_header
                _
              $region38: #{causal_self_attention.3} parent=35 // loop_header
                %s163 = sphi 0, %s167
                %p164 = scmp.ge.s32.totalorder %s163, 1
                %s168 = sphi %s153, %s153
                %s169 = sphi %s148, %s148
              $region39: #{causal_self_attention.3} parent=35 // loop_header_branch
                %166 = sbr.rel (%p164) target = $region43
              $region40: #{causal_self_attention.3} parent=35 // loop_body
                %v170 = vld [vmem:[%s168] sm:%s161]
                %171 = vst [vmem:[%s169] sm:%s161] %v170
                %v172 = vld [vmem:[%s168 + $0xc] sm:%s161]
                %173 = vst [vmem:[%s169 + $0x4] sm:%s161] %v172
                %v174 = vld [vmem:[%s168 + $0x18] sm:%s161]
                %175 = vst [vmem:[%s169 + $0x8] sm:%s161] %v174
                %v176 = vld [vmem:[%s168 + $0x24] sm:%s161]
                %177 = vst [vmem:[%s169 + $0xc] sm:%s161] %v176
                %v178 = vld [vmem:[%s168 + $0x30] sm:%s161]
                %179 = vst [vmem:[%s169 + $0x10] sm:%s161] %v178
                %v180 = vld [vmem:[%s168 + $0x3c] sm:%s161]
                %181 = vst [vmem:[%s169 + $0x14] sm:%s161] %v180
                %v182 = vld [vmem:[%s168 + $0x48] sm:%s161]
                %183 = vst [vmem:[%s169 + $0x18] sm:%s161] %v182
                %v184 = vld [vmem:[%s168 + $0x54] sm:%s161]
                %185 = vst [vmem:[%s169 + $0x1c] sm:%s161] %v184
                %v186 = vld [vmem:[%s168 + $0x60] sm:%s161]
                %187 = vst [vmem:[%s169 + $0x20] sm:%s161] %v186
                %v188 = vld [vmem:[%s168 + $0x6c] sm:%s161]
                %189 = vst [vmem:[%s169 + $0x24] sm:%s161] %v188
                %v190 = vld [vmem:[%s168 + $0x78] sm:%s161]
                %191 = vst [vmem:[%s169 + $0x28] sm:%s161] %v190
                %v192 = vld [vmem:[%s168 + $0x84] sm:%s161]
                %193 = vst [vmem:[%s169 + $0x2c] sm:%s161] %v192
                %v194 = vld [vmem:[%s168 + $0x90] sm:%s161]
                %195 = vst [vmem:[%s169 + $0x30] sm:%s161] %v194
                %v196 = vld [vmem:[%s168 + $0x9c] sm:%s161]
                %197 = vst [vmem:[%s169 + $0x34] sm:%s161] %v196
                %v198 = vld [vmem:[%s168 + $0xa8] sm:%s161]
                %199 = vst [vmem:[%s169 + $0x38] sm:%s161] %v198
                %v200 = vld [vmem:[%s168 + $0xb4] sm:%s161]
                %201 = vst [vmem:[%s169 + $0x3c] sm:%s161] %v200
              $region41: #{causal_self_attention.3} parent=35 // loop_footer
                %s167 = sadd.s32 1, %s163
              $region42: #{causal_self_attention.3} parent=35 // loop_footer_branch
                %162 = sbr.rel target = $region38
              $region43: #{causal_self_attention.3} parent=35 // loop_exit
                _
            $region36: #{causal_self_attention.3} parent=27 // pred_fallthru
              _
          $region28: #{causal_self_attention.3} parent=23 // pred_fallthru
            _
          %254 = vnop
        $region24: #{causal_self_attention.3} parent=15 // pred_fallthru
          _
      $region16: #{causal_self_attention.3} parent=5 // pred_fallthru
        _
      %p255 = scmp.le.s32.totalorder 1, %s8
      %p256 = scmp.lt.s32.totalorder %s8, 7
      %p257 = pnand %p255, %p256
      %p258 = pneg %p257
      // Predicated region
      $region62: #{causal_self_attention.3} parent=5 // pred_check
        _
      $region63: #{causal_self_attention.3} parent=5 // pred_check_branch
        %260 = sbr.rel (%p257) target = $region65
      $region64: #{causal_self_attention.3} parent=5 // pred_region
        %s261 = ssub.s32 %s8, 1
        %s262 = sand.u32 %s70, 1
        %s263 = sand.u32 %s70, 1
        %s264 = smul.addr %s263, 64
        %s265 = scalar_lea.vmem [#allocation3], %s264
        // Predicated region
        $region66: #{causal_self_attention.3} parent=64 // pred_check
          %p266 = pneg %p83
        $region67: #{causal_self_attention.3} parent=64 // pred_check_branch
          %268 = sbr.rel (%p266) target = $region69
        $region68: #{causal_self_attention.3} parent=64 // pred_region
          _
        $region69: #{causal_self_attention.3} parent=64 // pred_fallthru
          _
        %s269 = smul.u32 16, %s18
        %p270 = scmp.lt.s32.totalorder %s269, 31
        %s271 = scalar_select %p270, %s269, 31
        %p272 = scmp.lt.s32.totalorder %s20, 0
        %s273 = scalar_select %p272, %s20, 0
        %s274 = sadd.s32 %s273, %s271
        %s275 = smul.addr %s274, 4
        %s276 = scalar_lea.vmem %s0, %s275
        %p277 = pneg %p55
        %p278 = pneg %p52
        %s279 = sand.u32 %s70, 1
        %s280 = sand.u32 %s70, 1
        %s281 = smul.addr %s280, 64
        %s282 = scalar_lea.vmem [#allocation3], %s281
        %p283 = pneg %p83
        %p284 = pneg %p80
        %p285 = pneg %p111
        %p286 = pneg %p108
        %s287 = sand.u32 %s98, 1
        %s288 = sand.u32 %s98, 1
        %s289 = smul.addr %s288, 128
        %s290 = scalar_lea.vmem [#allocation4], %s289
        %s291 = smul.u32 16, %s18
        %p292 = scmp.lt.s32.totalorder %s291, 31
        %s293 = scalar_select %p292, %s291, 31
        %p294 = scmp.lt.s32.totalorder %s20, 0
        %s295 = scalar_select %p294, %s20, 0
        %s296 = sadd.s32 %s295, %s293
        %s297 = smul.addr %s296, 4
        %s298 = scalar_lea.vmem %s0, %s297
        %s299 = smul.u32 16, %s18
        %s300 = smul.u32 16, %s20
        %s301 = smul.u32 16, %s18
        %p303 = scmp.eq.s32.totalorder %s20, 0
        // Predicated region
        $region70: #{causal_self_attention.3} parent=64 // pred_check
          %p304 = pneg %p303
        $region71: #{causal_self_attention.3} parent=64 // pred_check_branch
          %306 = sbr.rel (%p304) target = $region73
        $region72: #{causal_self_attention.3} parent=64 // pred_region
          %307 = vst [vmem:[#allocation2] sm:$0xff] 0.0
          %308 = vst [vmem:[#allocation2 + $0x8] sm:$0xff] 0.0
          %309 = vst [vmem:[#allocation2 + $0x10] sm:$0xff] 0.0
          %310 = vst [vmem:[#allocation2 + $0x18] sm:$0xff] 0.0
          %311 = vst [vmem:[#allocation2 + $0x20] sm:$0xff] 0.0
          %312 = vst [vmem:[#allocation2 + $0x28] sm:$0xff] 0.0
          %313 = vst [vmem:[#allocation2 + $0x30] sm:$0xff] 0.0
          %314 = vst [vmem:[#allocation2 + $0x38] sm:$0xff] 0.0
          %315 = vst [vmem:[#allocation2 + $0x40] sm:$0xff] 0.0
          %316 = vst [vmem:[#allocation2 + $0x48] sm:$0xff] 0.0
          %317 = vst [vmem:[#allocation2 + $0x50] sm:$0xff] 0.0
          %318 = vst [vmem:[#allocation2 + $0x58] sm:$0xff] 0.0
          %319 = vst [vmem:[#allocation2 + $0x60] sm:$0xff] 0.0
          %320 = vst [vmem:[#allocation2 + $0x68] sm:$0xff] 0.0
          %321 = vst [vmem:[#allocation2 + $0x70] sm:$0xff] 0.0
          %322 = vst [vmem:[#allocation2 + $0x78] sm:$0xff] 0.0
        $region73: #{causal_self_attention.3} parent=64 // pred_fallthru
          _
        %v323 = vld [vmem:[#allocation2] sm:$0xff]
        %v324 = vld [vmem:[#allocation2 + $0x8] sm:$0xff]
        %v325 = vld [vmem:[#allocation2 + $0x10] sm:$0xff]
        %v326 = vld [vmem:[#allocation2 + $0x18] sm:$0xff]
        %v327 = vld [vmem:[#allocation2 + $0x20] sm:$0xff]
        %v328 = vld [vmem:[#allocation2 + $0x28] sm:$0xff]
        %v329 = vld [vmem:[#allocation2 + $0x30] sm:$0xff]
        %v330 = vld [vmem:[#allocation2 + $0x38] sm:$0xff]
        %v331 = vld [vmem:[#allocation2 + $0x40] sm:$0xff]
        %v332 = vld [vmem:[#allocation2 + $0x48] sm:$0xff]
        %v333 = vld [vmem:[#allocation2 + $0x50] sm:$0xff]
        %v334 = vld [vmem:[#allocation2 + $0x58] sm:$0xff]
        %v335 = vld [vmem:[#allocation2 + $0x60] sm:$0xff]
        %v336 = vld [vmem:[#allocation2 + $0x68] sm:$0xff]
        %v337 = vld [vmem:[#allocation2 + $0x70] sm:$0xff]
        %v338 = vld [vmem:[#allocation2 + $0x78] sm:$0xff]
        %v339 = vld [vmem:[%s298] sm:$0xf]
        %v340 = vld [vmem:[%s298 + $0x4] sm:$0xf]
        %v341 = vld [vmem:[%s298 + $0x8] sm:$0xf]
        %v342 = vld [vmem:[%s298 + $0xc] sm:$0xf]
        %v343 = vld [vmem:[%s298 + $0x10] sm:$0xf]
        %v344 = vld [vmem:[%s298 + $0x14] sm:$0xf]
        %v345 = vld [vmem:[%s298 + $0x18] sm:$0xf]
        %v346 = vld [vmem:[%s298 + $0x1c] sm:$0xf]
        %v347 = vld [vmem:[%s298 + $0x20] sm:$0xf]
        %v348 = vld [vmem:[%s298 + $0x24] sm:$0xf]
        %v349 = vld [vmem:[%s298 + $0x28] sm:$0xf]
        %v350 = vld [vmem:[%s298 + $0x2c] sm:$0xf]
        %v351 = vld [vmem:[%s298 + $0x30] sm:$0xf]
        %v352 = vld [vmem:[%s298 + $0x34] sm:$0xf]
        %v353 = vld [vmem:[%s298 + $0x38] sm:$0xf]
        %v354 = vld [vmem:[%s298 + $0x3c] sm:$0xf]
        %v355 = vld [vmem:[%s265] sm:$0xf]
        %v356 = vld [vmem:[%s265 + $0x4] sm:$0xf]
        %v357 = vld [vmem:[%s265 + $0x8] sm:$0xf]
        %v358 = vld [vmem:[%s265 + $0xc] sm:$0xf]
        %v359 = vld [vmem:[%s265 + $0x10] sm:$0xf]
        %v360 = vld [vmem:[%s265 + $0x14] sm:$0xf]
        %v361 = vld [vmem:[%s265 + $0x18] sm:$0xf]
        %v362 = vld [vmem:[%s265 + $0x1c] sm:$0xf]
        %v363 = vld [vmem:[%s265 + $0x20] sm:$0xf]
        %v364 = vld [vmem:[%s265 + $0x24] sm:$0xf]
        %v365 = vld [vmem:[%s265 + $0x28] sm:$0xf]
        %v366 = vld [vmem:[%s265 + $0x2c] sm:$0xf]
        %v367 = vld [vmem:[%s265 + $0x30] sm:$0xf]
        %v368 = vld [vmem:[%s265 + $0x34] sm:$0xf]
        %v369 = vld [vmem:[%s265 + $0x38] sm:$0xf]
        %v370 = vld [vmem:[%s265 + $0x3c] sm:$0xf]
        %v387 = vunpack.c.l.b16 %v339
        %v388 = vunpack.c.l.b16 %v340
        %v389 = vunpack.c.l.b16 %v341
        %v390 = vunpack.c.l.b16 %v342
        %v391 = vunpack.c.l.b16 %v343
        %v392 = vunpack.c.l.b16 %v344
        %v393 = vunpack.c.l.b16 %v345
        %v394 = vunpack.c.l.b16 %v346
        %v395 = vunpack.c.l.b16 %v347
        %v396 = vunpack.c.l.b16 %v348
        %v397 = vunpack.c.l.b16 %v349
        %v398 = vunpack.c.l.b16 %v350
        %v399 = vunpack.c.l.b16 %v351
        %v400 = vunpack.c.l.b16 %v352
        %v401 = vunpack.c.l.b16 %v353
        %v402 = vunpack.c.l.b16 %v354
        %v403 = vpack.c.b16 %v388, %v387
        %v404 = vpack.c.b16 %v390, %v389
        %v405 = vpack.c.b16 %v392, %v391
        %v406 = vpack.c.b16 %v394, %v393
        %v407 = vpack.c.b16 %v396, %v395
        %v408 = vpack.c.b16 %v398, %v397
        %v409 = vpack.c.b16 %v400, %v399
        %v410 = vpack.c.b16 %v402, %v401
        %v435 = vunpack.c.l.b16 %v355
        %v436 = vunpack.c.l.b16 %v356
        %v437 = vunpack.c.l.b16 %v357
        %v438 = vunpack.c.l.b16 %v358
        %v439 = vunpack.c.l.b16 %v359
        %v440 = vunpack.c.l.b16 %v360
        %v441 = vunpack.c.l.b16 %v361
        %v442 = vunpack.c.l.b16 %v362
        %v443 = vunpack.c.l.b16 %v363
        %v444 = vunpack.c.l.b16 %v364
        %v445 = vunpack.c.l.b16 %v365
        %v446 = vunpack.c.l.b16 %v366
        %v447 = vunpack.c.l.b16 %v367
        %v448 = vunpack.c.l.b16 %v368
        %v449 = vunpack.c.l.b16 %v369
        %v450 = vunpack.c.l.b16 %v370
        %v451 = vpack.c.b16 %v436, %v435
        %v452 = vpack.c.b16 %v438, %v437
        %v453 = vpack.c.b16 %v440, %v439
        %v454 = vpack.c.b16 %v442, %v441
        %v455 = vpack.c.b16 %v444, %v443
        %v456 = vpack.c.b16 %v446, %v445
        %v457 = vpack.c.b16 %v448, %v447
        %v458 = vpack.c.b16 %v450, %v449
        %467 = vmatprep.subr.bf16.mxu0 0
        %468 = vmatpush1.bf16.msra.mxu0 %v458
        %469 = vmatprep.subr.bf16.mxu0 0
        %470 = vmatpush1.bf16.msra.mxu0 %v457
        %471 = vmatprep.subr.bf16.mxu0 0
        %472 = vmatpush1.bf16.msra.mxu0 %v456
        %473 = vmatprep.subr.bf16.mxu0 0
        %474 = vmatpush1.bf16.msra.mxu0 %v455
        %475 = vmatprep.subr.bf16.mxu0 0
        %476 = vmatpush1.bf16.msra.mxu0 %v454
        %477 = vmatprep.subr.bf16.mxu0 0
        %478 = vmatpush1.bf16.msra.mxu0 %v453
        %479 = vmatprep.subr.bf16.mxu0 0
        %480 = vmatpush1.bf16.msra.mxu0 %v452
        %481 = vmatprep.subr.bf16.mxu0 0
        %482 = vmatpush1.bf16.msra.mxu0 %v451
        %483 = vmatprep.subr.bf16.mxu0 0
        %484 = vmatpush2.bf16.msra.mxu0 0
        %485 = vmatprep.subr.bf16.mxu0 0
        %486 = vmatpush2.bf16.msra.mxu0 0
        %487 = vmatprep.subr.bf16.mxu0 0
        %488 = vmatpush2.bf16.msra.mxu0 0
        %489 = vmatprep.subr.bf16.mxu0 0
        %490 = vmatpush2.bf16.msra.mxu0 0
        %491 = vmatprep.subr.bf16.mxu0 0
        %492 = vmatpush2.bf16.msra.mxu0 0
        %493 = vmatprep.subr.bf16.mxu0 0
        %494 = vmatpush2.bf16.msra.mxu0 0
        %495 = vmatprep.subr.bf16.mxu0 0
        %496 = vmatpush2.bf16.msra.mxu0 0
        %497 = vmatprep.subr.bf16.mxu0 0
        %498 = vmatpush2.bf16.msra.mxu0 0
        %499 = vmatprep.mubr.bf16.mxu0 0
        %500 = vmatmul.mubr.bf16.gmra.mxu0 %v403
        %v501 = vpop.f32.mrf.mxu0
        %v502 = vadd.f32 0.0, %v501
        %v503 = vpop.f32.mrf.mxu0
        %v504 = vpop.f32.mrf.mxu0
        %v505 = vadd.f32 0.0, %v504
        %v506 = vpop.f32.mrf.mxu0
        %507 = vmatprep.mubr.bf16.mxu0 0
        %508 = vmatmul.mubr.bf16.gmra.mxu0 %v404
        %v509 = vpop.f32.mrf.mxu0
        %v510 = vadd.f32 0.0, %v509
        %v511 = vpop.f32.mrf.mxu0
        %v512 = vpop.f32.mrf.mxu0
        %v513 = vadd.f32 0.0, %v512
        %v514 = vpop.f32.mrf.mxu0
        %515 = vmatprep.mubr.bf16.mxu0 0
        %516 = vmatmul.mubr.bf16.gmra.mxu0 %v405
        %v517 = vpop.f32.mrf.mxu0
        %v518 = vadd.f32 0.0, %v517
        %v519 = vpop.f32.mrf.mxu0
        %v520 = vpop.f32.mrf.mxu0
        %v521 = vadd.f32 0.0, %v520
        %v522 = vpop.f32.mrf.mxu0
        %523 = vmatprep.mubr.bf16.mxu0 0
        %524 = vmatmul.mubr.bf16.gmra.mxu0 %v406
        %v525 = vpop.f32.mrf.mxu0
        %v526 = vadd.f32 0.0, %v525
        %v527 = vpop.f32.mrf.mxu0
        %v528 = vpop.f32.mrf.mxu0
        %v529 = vadd.f32 0.0, %v528
        %v530 = vpop.f32.mrf.mxu0
        %531 = vmatprep.mubr.bf16.mxu0 0
        %532 = vmatmul.mubr.bf16.gmra.mxu0 %v407
        %v533 = vpop.f32.mrf.mxu0
        %v534 = vadd.f32 0.0, %v533
        %v535 = vpop.f32.mrf.mxu0
        %v536 = vpop.f32.mrf.mxu0
        %v537 = vadd.f32 0.0, %v536
        %v538 = vpop.f32.mrf.mxu0
        %539 = vmatprep.mubr.bf16.mxu0 0
        %540 = vmatmul.mubr.bf16.gmra.mxu0 %v408
        %v541 = vpop.f32.mrf.mxu0
        %v542 = vadd.f32 0.0, %v541
        %v543 = vpop.f32.mrf.mxu0
        %v544 = vpop.f32.mrf.mxu0
        %v545 = vadd.f32 0.0, %v544
        %v546 = vpop.f32.mrf.mxu0
        %547 = vmatprep.mubr.bf16.mxu0 0
        %548 = vmatmul.mubr.bf16.gmra.mxu0 %v409
        %v549 = vpop.f32.mrf.mxu0
        %v550 = vadd.f32 0.0, %v549
        %v551 = vpop.f32.mrf.mxu0
        %v552 = vpop.f32.mrf.mxu0
        %v553 = vadd.f32 0.0, %v552
        %v554 = vpop.f32.mrf.mxu0
        %555 = vmatprep.mubr.bf16.mxu0 0
        %556 = vmatmul.mubr.bf16.gmra.mxu0 %v410
        %v557 = vpop.f32.mrf.mxu0
        %v558 = vadd.f32 0.0, %v557
        %v559 = vpop.f32.mrf.mxu0
        %v560 = vpop.f32.mrf.mxu0
        %v561 = vadd.f32 0.0, %v560
        %v562 = vpop.f32.mrf.mxu0
        %563 = vdwg.mxu0
        %v564 = vadd.f32 %v323, %v502
        %v565 = vadd.f32 %v324, %v505
        %v566 = vadd.f32 %v325, %v510
        %v567 = vadd.f32 %v326, %v513
        %v568 = vadd.f32 %v327, %v518
        %v569 = vadd.f32 %v328, %v521
        %v570 = vadd.f32 %v329, %v526
        %v571 = vadd.f32 %v330, %v529
        %v572 = vadd.f32 %v331, %v534
        %v573 = vadd.f32 %v332, %v537
        %v574 = vadd.f32 %v333, %v542
        %v575 = vadd.f32 %v334, %v545
        %v576 = vadd.f32 %v335, %v550
        %v577 = vadd.f32 %v336, %v553
        %v578 = vadd.f32 %v337, %v558
        %v579 = vadd.f32 %v338, %v561
        %580 = vst [vmem:[#allocation2] sm:$0xff] %v564
        %581 = vst [vmem:[#allocation2 + $0x8] sm:$0xff] %v565
        %582 = vst [vmem:[#allocation2 + $0x10] sm:$0xff] %v566
        %583 = vst [vmem:[#allocation2 + $0x18] sm:$0xff] %v567
        %584 = vst [vmem:[#allocation2 + $0x20] sm:$0xff] %v568
        %585 = vst [vmem:[#allocation2 + $0x28] sm:$0xff] %v569
        %586 = vst [vmem:[#allocation2 + $0x30] sm:$0xff] %v570
        %587 = vst [vmem:[#allocation2 + $0x38] sm:$0xff] %v571
        %588 = vst [vmem:[#allocation2 + $0x40] sm:$0xff] %v572
        %589 = vst [vmem:[#allocation2 + $0x48] sm:$0xff] %v573
        %590 = vst [vmem:[#allocation2 + $0x50] sm:$0xff] %v574
        %591 = vst [vmem:[#allocation2 + $0x58] sm:$0xff] %v575
        %592 = vst [vmem:[#allocation2 + $0x60] sm:$0xff] %v576
        %593 = vst [vmem:[#allocation2 + $0x68] sm:$0xff] %v577
        %594 = vst [vmem:[#allocation2 + $0x70] sm:$0xff] %v578
        %595 = vst [vmem:[#allocation2 + $0x78] sm:$0xff] %v579
        // Predicated region
        $region74: #{causal_self_attention.3} parent=64 // pred_check
          %p596 = pneg %p303
        $region75: #{causal_self_attention.3} parent=64 // pred_check_branch
          %598 = sbr.rel (%p596) target = $region77
        $region76: #{causal_self_attention.3} parent=64 // pred_region
          %v599 = vld [vmem:[#allocation2] sm:$0xff]
          %v600 = vld [vmem:[#allocation2 + $0x8] sm:$0xff]
          %v601 = vld [vmem:[#allocation2 + $0x10] sm:$0xff]
          %v602 = vld [vmem:[#allocation2 + $0x18] sm:$0xff]
          %v603 = vld [vmem:[#allocation2 + $0x20] sm:$0xff]
          %v604 = vld [vmem:[#allocation2 + $0x28] sm:$0xff]
          %v605 = vld [vmem:[#allocation2 + $0x30] sm:$0xff]
          %v606 = vld [vmem:[#allocation2 + $0x38] sm:$0xff]
          %v607 = vld [vmem:[#allocation2 + $0x40] sm:$0xff]
          %v608 = vld [vmem:[#allocation2 + $0x48] sm:$0xff]
          %v609 = vld [vmem:[#allocation2 + $0x50] sm:$0xff]
          %v610 = vld [vmem:[#allocation2 + $0x58] sm:$0xff]
          %v611 = vld [vmem:[#allocation2 + $0x60] sm:$0xff]
          %v612 = vld [vmem:[#allocation2 + $0x68] sm:$0xff]
          %v613 = vld [vmem:[#allocation2 + $0x70] sm:$0xff]
          %v614 = vld [vmem:[#allocation2 + $0x78] sm:$0xff]
          %615 = vst [vmem:[%s290] sm:$0xff] %v599
          %616 = vst [vmem:[%s290 + $0x8] sm:$0xff] %v600
          %617 = vst [vmem:[%s290 + $0x10] sm:$0xff] %v601
          %618 = vst [vmem:[%s290 + $0x18] sm:$0xff] %v602
          %619 = vst [vmem:[%s290 + $0x20] sm:$0xff] %v603
          %620 = vst [vmem:[%s290 + $0x28] sm:$0xff] %v604
          %621 = vst [vmem:[%s290 + $0x30] sm:$0xff] %v605
          %622 = vst [vmem:[%s290 + $0x38] sm:$0xff] %v606
          %623 = vst [vmem:[%s290 + $0x40] sm:$0xff] %v607
          %624 = vst [vmem:[%s290 + $0x48] sm:$0xff] %v608
          %625 = vst [vmem:[%s290 + $0x50] sm:$0xff] %v609
          %626 = vst [vmem:[%s290 + $0x58] sm:$0xff] %v610
          %627 = vst [vmem:[%s290 + $0x60] sm:$0xff] %v611
          %628 = vst [vmem:[%s290 + $0x68] sm:$0xff] %v612
          %629 = vst [vmem:[%s290 + $0x70] sm:$0xff] %v613
          %630 = vst [vmem:[%s290 + $0x78] sm:$0xff] %v614
        $region77: #{causal_self_attention.3} parent=64 // pred_fallthru
          _
        %s631 = sand.u32 %s98, 1
        %s632 = sand.u32 %s98, 1
        %s633 = smul.addr %s632, 128
        %s634 = scalar_lea.vmem [#allocation4], %s633
        // Predicated region
        $region78: #{causal_self_attention.3} parent=64 // pred_check
          %p635 = pneg %p108
        $region79: #{causal_self_attention.3} parent=64 // pred_check_branch
          %637 = sbr.rel (%p635) target = $region81
        $region80: #{causal_self_attention.3} parent=64 // pred_region
          %s638 = smul.u32 16, %s18
          %s639 = smul.addr %s638, 3
          %s640 = sadd.s32 %s19, %s639
          %s641 = smul.addr %s640, 8
          %s642 = scalar_lea.vmem %s2, %s641
          // Predicated region
          $region82: #{causal_self_attention.3} parent=80 // pred_check
            _
          $region83: #{causal_self_attention.3} parent=80 // pred_check_branch
            %644 = sbr.rel (0) target = $region85
          $region84: #{causal_self_attention.3} parent=80 // pred_region
            // Predicated region
            $region86: #{causal_self_attention.3} parent=84 // pred_check
              _
            $region87: #{causal_self_attention.3} parent=84 // pred_check_branch
              %646 = sbr.rel (0) target = $region89
            $region88: #{causal_self_attention.3} parent=84 // pred_region
              // Predicated region
              $region101: #{causal_self_attention.3} parent=88 // pred_check
                _
              $region102: #{causal_self_attention.3} parent=88 // pred_check_branch
                %692 = sbr.rel (0) target = $region104
              $region103: #{causal_self_attention.3} parent=88 // pred_region
                loop: start=0, step=1, limit=1
                $region105: #{causal_self_attention.3} parent=103 // loop_pre_header
                  _
                $region106: #{causal_self_attention.3} parent=103 // loop_header
                  %s694 = sphi 0, %s698
                  %p695 = scmp.ge.s32.totalorder %s694, 1
                  %s699 = sphi %s634, %s634
                  %s700 = sphi %s642, %s642
                $region107: #{causal_self_attention.3} parent=103 // loop_header_branch
                  %697 = sbr.rel (%p695) target = $region111
                $region108: #{causal_self_attention.3} parent=103 // loop_body
                  %v701 = vld [vmem:[%s699] sm:$0xff]
                  %702 = vst [vmem:[%s700] sm:$0xff] %v701
                  %v703 = vld [vmem:[%s699 + $0x8] sm:$0xff]
                  %704 = vst [vmem:[%s700 + $0x18] sm:$0xff] %v703
                  %v705 = vld [vmem:[%s699 + $0x10] sm:$0xff]
                  %706 = vst [vmem:[%s700 + $0x30] sm:$0xff] %v705
                  %v707 = vld [vmem:[%s699 + $0x18] sm:$0xff]
                  %708 = vst [vmem:[%s700 + $0x48] sm:$0xff] %v707
                  %v709 = vld [vmem:[%s699 + $0x20] sm:$0xff]
                  %710 = vst [vmem:[%s700 + $0x60] sm:$0xff] %v709
                  %v711 = vld [vmem:[%s699 + $0x28] sm:$0xff]
                  %712 = vst [vmem:[%s700 + $0x78] sm:$0xff] %v711
                  %v713 = vld [vmem:[%s699 + $0x30] sm:$0xff]
                  %714 = vst [vmem:[%s700 + $0x90] sm:$0xff] %v713
                  %v715 = vld [vmem:[%s699 + $0x38] sm:$0xff]
                  %716 = vst [vmem:[%s700 + $0xa8] sm:$0xff] %v715
                  %v717 = vld [vmem:[%s699 + $0x40] sm:$0xff]
                  %718 = vst [vmem:[%s700 + $0xc0] sm:$0xff] %v717
                  %v719 = vld [vmem:[%s699 + $0x48] sm:$0xff]
                  %720 = vst [vmem:[%s700 + $0xd8] sm:$0xff] %v719
                  %v721 = vld [vmem:[%s699 + $0x50] sm:$0xff]
                  %722 = vst [vmem:[%s700 + $0xf0] sm:$0xff] %v721
                  %v723 = vld [vmem:[%s699 + $0x58] sm:$0xff]
                  %724 = vst [vmem:[%s700 + $0x108] sm:$0xff] %v723
                  %v725 = vld [vmem:[%s699 + $0x60] sm:$0xff]
                  %726 = vst [vmem:[%s700 + $0x120] sm:$0xff] %v725
                  %v727 = vld [vmem:[%s699 + $0x68] sm:$0xff]
                  %728 = vst [vmem:[%s700 + $0x138] sm:$0xff] %v727
                  %v729 = vld [vmem:[%s699 + $0x70] sm:$0xff]
                  %730 = vst [vmem:[%s700 + $0x150] sm:$0xff] %v729
                  %v731 = vld [vmem:[%s699 + $0x78] sm:$0xff]
                  %732 = vst [vmem:[%s700 + $0x168] sm:$0xff] %v731
                $region109: #{causal_self_attention.3} parent=103 // loop_footer
                  %s698 = sadd.s32 1, %s694
                $region110: #{causal_self_attention.3} parent=103 // loop_footer_branch
                  %693 = sbr.rel target = $region106
                $region111: #{causal_self_attention.3} parent=103 // loop_exit
                  _
              $region104: #{causal_self_attention.3} parent=88 // pred_fallthru
                _
              // Predicated region
              $region112: #{causal_self_attention.3} parent=88 // pred_check
                _
              $region113: #{causal_self_attention.3} parent=88 // pred_check_branch
                %734 = sbr.rel target = $region115
              $region114: #{causal_self_attention.3} parent=88 // pred_region
                _
              $region115: #{causal_self_attention.3} parent=88 // pred_fallthru
                _
            $region89: #{causal_self_attention.3} parent=84 // pred_fallthru
              _
            // Predicated region
            $region90: #{causal_self_attention.3} parent=84 // pred_check
              _
            $region91: #{causal_self_attention.3} parent=84 // pred_check_branch
              %648 = sbr.rel target = $region93
            $region92: #{causal_self_attention.3} parent=84 // pred_region
              %s650 = ssub.s32 256, 1
              loop: start=0, step=1, limit=1
              $region94: #{causal_self_attention.3} parent=92 // loop_pre_header
                _
              $region95: #{causal_self_attention.3} parent=92 // loop_header
                %s652 = sphi 0, %s656
                %p653 = scmp.ge.s32.totalorder %s652, 1
                %s657 = sphi %s634, %s634
                %s658 = sphi %s642, %s642
              $region96: #{causal_self_attention.3} parent=92 // loop_header_branch
                %655 = sbr.rel (%p653) target = $region100
              $region97: #{causal_self_attention.3} parent=92 // loop_body
                %v659 = vld [vmem:[%s657] sm:%s650]
                %660 = vst [vmem:[%s658] sm:%s650] %v659
                %v661 = vld [vmem:[%s657 + $0x8] sm:%s650]
                %662 = vst [vmem:[%s658 + $0x18] sm:%s650] %v661
                %v663 = vld [vmem:[%s657 + $0x10] sm:%s650]
                %664 = vst [vmem:[%s658 + $0x30] sm:%s650] %v663
                %v665 = vld [vmem:[%s657 + $0x18] sm:%s650]
                %666 = vst [vmem:[%s658 + $0x48] sm:%s650] %v665
                %v667 = vld [vmem:[%s657 + $0x20] sm:%s650]
                %668 = vst [vmem:[%s658 + $0x60] sm:%s650] %v667
                %v669 = vld [vmem:[%s657 + $0x28] sm:%s650]
                %670 = vst [vmem:[%s658 + $0x78] sm:%s650] %v669
                %v671 = vld [vmem:[%s657 + $0x30] sm:%s650]
                %672 = vst [vmem:[%s658 + $0x90] sm:%s650] %v671
                %v673 = vld [vmem:[%s657 + $0x38] sm:%s650]
                %674 = vst [vmem:[%s658 + $0xa8] sm:%s650] %v673
                %v675 = vld [vmem:[%s657 + $0x40] sm:%s650]
                %676 = vst [vmem:[%s658 + $0xc0] sm:%s650] %v675
                %v677 = vld [vmem:[%s657 + $0x48] sm:%s650]
                %678 = vst [vmem:[%s658 + $0xd8] sm:%s650] %v677
                %v679 = vld [vmem:[%s657 + $0x50] sm:%s650]
                %680 = vst [vmem:[%s658 + $0xf0] sm:%s650] %v679
                %v681 = vld [vmem:[%s657 + $0x58] sm:%s650]
                %682 = vst [vmem:[%s658 + $0x108] sm:%s650] %v681
                %v683 = vld [vmem:[%s657 + $0x60] sm:%s650]
                %684 = vst [vmem:[%s658 + $0x120] sm:%s650] %v683
                %v685 = vld [vmem:[%s657 + $0x68] sm:%s650]
                %686 = vst [vmem:[%s658 + $0x138] sm:%s650] %v685
                %v687 = vld [vmem:[%s657 + $0x70] sm:%s650]
                %688 = vst [vmem:[%s658 + $0x150] sm:%s650] %v687
                %v689 = vld [vmem:[%s657 + $0x78] sm:%s650]
                %690 = vst [vmem:[%s658 + $0x168] sm:%s650] %v689
              $region98: #{causal_self_attention.3} parent=92 // loop_footer
                %s656 = sadd.s32 1, %s652
              $region99: #{causal_self_attention.3} parent=92 // loop_footer_branch
                %651 = sbr.rel target = $region95
              $region100: #{causal_self_attention.3} parent=92 // loop_exit
                _
            $region93: #{causal_self_attention.3} parent=84 // pred_fallthru
              _
          $region85: #{causal_self_attention.3} parent=80 // pred_fallthru
            _
          %735 = vnop
        $region81: #{causal_self_attention.3} parent=64 // pred_fallthru
          _
      $region65: #{causal_self_attention.3} parent=5 // pred_fallthru
        _
      %p736 = scmp.le.s32.totalorder 2, %s8
      // Predicated region
      $region116: #{causal_self_attention.3} parent=5 // pred_check
        %p737 = pneg %p736
      $region117: #{causal_self_attention.3} parent=5 // pred_check_branch
        %739 = sbr.rel (%p737) target = $region119
      $region118: #{causal_self_attention.3} parent=5 // pred_region
        %s740 = ssub.s32 %s8, 2
        // Predicated region
        $region120: #{causal_self_attention.3} parent=118 // pred_check
          %p741 = pneg %p114
        $region121: #{causal_self_attention.3} parent=118 // pred_check_branch
          %743 = sbr.rel (%p741) target = $region123
        $region122: #{causal_self_attention.3} parent=118 // pred_region
          %s744 = sand.u32 %s99, 1
          %s745 = sand.u32 %s99, 1
          %s746 = smul.addr %s745, 128
          %s747 = scalar_lea.vmem [#allocation4], %s746
        $region123: #{causal_self_attention.3} parent=118 // pred_fallthru
          _
      $region119: #{causal_self_attention.3} parent=5 // pred_fallthru
        _
    $region6: #{causal_self_attention.3} parent=1 // loop_footer
      %s12 = sadd.s32 1, %s8
    $region7: #{causal_self_attention.3} parent=1 // loop_footer_branch
      %7 = sbr.rel target = $region3
    $region8: #{causal_self_attention.3} parent=1 // loop_exit
      _

// kernel: causal_self_attention.5
$region0: #{causal_self_attention.5}
  #allocation0 [shape = 'u32[]', space=smem, size = 0x4, offset = 0x4, fixed_abs, tag = 'smem constant byte address 0x4 - core index']
  #allocation1 [shape = 'u32[144,128]{1,0:T(1,128)}', space=vmem, size = 0x12000, scoped, tag = 'internal scratch']
  #allocation2 [shape = 'f32[128,128]{1,0:T(8,128)}', space=vmem, size = 0x10000, scoped, tag = 'scratch operand']
  %s0 = inlined_call_operand.vmem [shape: bf16[256,128], index: 0, kind: input, shape index: {}]
  %s1 = inlined_call_operand.vmem [shape: bf16[128,128], index: 1, kind: input, shape index: {}]
  %s2 = inlined_call_operand.hbm [shape: f32[256,128], index: 2, kind: output, shape index: {}]
  %s3 = sld [smem:[#allocation0]]
  $region49: #{causal_self_attention.5} parent=0
    _
  %s5 = ssub.s32 1, %s3
  %s6 = scalar_select 0, %s5, %s3
  $region1: #{causal_self_attention.5} parent=0
    #allocation3 [shape = 'u8[131072]{0}', space=vmem, size = 0x20000, scoped, tag = 'output window, operand 0']
    #allocation4 [shape = 's32[2]{0}', space=sflag, size = 0x8, scoped, tag = 'scoped memory for causal_self_attention.5']
    %7 = vsyncpa [#allocation4], 0
    %s8 = scalar_lea.sflag [#allocation4], 1
    %9 = vsyncpa %s8, 0
    loop: start=0, step=1, limit=4
    $region2: #{causal_self_attention.5} parent=1 // loop_pre_header
      _
    $region3: #{causal_self_attention.5} parent=1 // loop_header
      %s11 = sphi 0, %s15
      %p12 = scmp.ge.s32.totalorder %s11, 4
      %s18 = sphi 0, %s37
      %s19 = sphi 0, %s33
      %s20 = sphi 0, %s29
      %s21 = sphi 0, %s18
      %s22 = sphi 0, %s19
      %s23 = sphi 0, %s20
      %s24 = sphi 0, %s21
      %s25 = sphi 0, %s22
      %s26 = sphi 0, %s23
      %s42 = sphi 0, %s44
      %s45 = sphi 0, %s42
      %s46 = sphi 0, %s45
      %s62 = sphi 0, %s46
      %s70 = sphi 0, %s72
      %s73 = sphi 0, %s70
      %s74 = sphi 0, %s73
      %s90 = sphi 0, %s74
      %s98 = sphi 0, %s100
      %s101 = sphi 0, %s98
      %s102 = sphi 0, %s101
      %s118 = sphi 0, %s102
    $region4: #{causal_self_attention.5} parent=1 // loop_header_branch
      %14 = sbr.rel (%p12) target = $region8
    $region5: #{causal_self_attention.5} parent=1 // loop_body
      %s16 = ssub.s32 %s11, 1
      %s17 = ssub.s32 %s11, 2
      %s27 = sadd.s32 1, %s20
      %p28 = scmp.ge.s32.totalorder %s27, 1
      %s29 = scalar_select %p28, 0, %s27
      %s30 = sadd.s32 1, %s19
      %s31 = scalar_select %p28, %s30, %s19
      %p32 = scmp.ge.s32.totalorder %s31, 1
      %s33 = scalar_select %p32, 0, %s31
      %s34 = sadd.s32 1, %s18
      %s35 = scalar_select %p32, %s34, %s18
      %p36 = scmp.ge.s32.totalorder %s35, 2
      %s37 = scalar_select %p36, 0, %s35
      %s38 = ssub.s32 %s18, %s37
      %s39 = ssub.s32 %s20, %s29
      %s40 = sor.u32 %s38, %s39
      %p41 = scmp.eq.s32.totalorder %s40, 0
      %s43 = sadd.s32 %s42, 1
      %s44 = scalar_select %p41, %s42, %s43
      %p47 = pneg %p41
      %p48 = scmp.eq.s32.totalorder %s11, 1
      %p49 = por %p47, %p48
      %p50 = scmp.ne.s32.totalorder %s42, %s45
      %p51 = scmp.eq.s32.totalorder %s11, 0
      %p52 = por %p50, %p51
      %p53 = scmp.ne.s32.totalorder %s42, %s45
      %p54 = scmp.eq.s32.totalorder %s16, 1
      %p55 = por %p53, %p54
      %p56 = scmp.ne.s32.totalorder %s45, %s46
      %p57 = scmp.eq.s32.totalorder %s16, 0
      %p58 = por %p56, %p57
      %p59 = scmp.ne.s32.totalorder %s45, %s46
      %p60 = scmp.eq.s32.totalorder %s17, 1
      %p61 = por %p59, %p60
      %p63 = scmp.ne.s32.totalorder %s46, %s62
      %p64 = scmp.eq.s32.totalorder %s17, 0
      %p65 = por %p63, %p64
      %s66 = ssub.s32 %s20, %s29
      %s67 = ssub.s32 %s19, %s33
      %s68 = sor.u32 %s66, %s67
      %p69 = scmp.eq.s32.totalorder %s68, 0
      %s71 = sadd.s32 %s70, 1
      %s72 = scalar_select %p69, %s70, %s71
      %p75 = pneg %p69
      %p76 = scmp.eq.s32.totalorder %s11, 1
      %p77 = por %p75, %p76
      %p78 = scmp.ne.s32.totalorder %s70, %s73
      %p79 = scmp.eq.s32.totalorder %s11, 0
      %p80 = por %p78, %p79
      %p81 = scmp.ne.s32.totalorder %s70, %s73
      %p82 = scmp.eq.s32.totalorder %s16, 1
      %p83 = por %p81, %p82
      %p84 = scmp.ne.s32.totalorder %s73, %s74
      %p85 = scmp.eq.s32.totalorder %s16, 0
      %p86 = por %p84, %p85
      %p87 = scmp.ne.s32.totalorder %s73, %s74
      %p88 = scmp.eq.s32.totalorder %s17, 1
      %p89 = por %p87, %p88
      %p91 = scmp.ne.s32.totalorder %s74, %s90
      %p92 = scmp.eq.s32.totalorder %s17, 0
      %p93 = por %p91, %p92
      %s94 = ssub.s32 %s18, %s37
      %s95 = ssub.s32 %s19, %s33
      %s96 = sor.u32 %s94, %s95
      %p97 = scmp.eq.s32.totalorder %s96, 0
      %s99 = sadd.s32 %s98, 1
      %s100 = scalar_select %p97, %s98, %s99
      %p103 = pneg %p97
      %p104 = scmp.eq.s32.totalorder %s11, 1
      %p105 = por %p103, %p104
      %p106 = scmp.ne.s32.totalorder %s98, %s101
      %p107 = scmp.eq.s32.totalorder %s11, 0
      %p108 = por %p106, %p107
      %p109 = scmp.ne.s32.totalorder %s98, %s101
      %p110 = scmp.eq.s32.totalorder %s16, 1
      %p111 = por %p109, %p110
      %p112 = scmp.ne.s32.totalorder %s101, %s102
      %p113 = scmp.eq.s32.totalorder %s16, 0
      %p114 = por %p112, %p113
      %p115 = scmp.ne.s32.totalorder %s101, %s102
      %p116 = scmp.eq.s32.totalorder %s17, 1
      %p117 = por %p115, %p116
      %p119 = scmp.ne.s32.totalorder %s102, %s118
      %p120 = scmp.eq.s32.totalorder %s17, 0
      %p121 = por %p119, %p120
      %p122 = scmp.le.s32.totalorder 1, %s11
      %p123 = scmp.lt.s32.totalorder %s11, 3
      %p124 = pnand %p122, %p123
      %p125 = pneg %p124
      // Predicated region
      $region9: #{causal_self_attention.5} parent=5 // pred_check
        _
      $region10: #{causal_self_attention.5} parent=5 // pred_check_branch
        %127 = sbr.rel (%p124) target = $region12
      $region11: #{causal_self_attention.5} parent=5 // pred_region
        %s128 = ssub.s32 %s11, 1
        // Predicated region
        $region13: #{causal_self_attention.5} parent=11 // pred_check
          %p129 = pneg %p86
        $region14: #{causal_self_attention.5} parent=11 // pred_check_branch
          %131 = sbr.rel (%p129) target = $region16
        $region15: #{causal_self_attention.5} parent=11 // pred_region
          %s132 = smul.u32 16, %s23
          %p133 = scmp.lt.s32.totalorder %s132, 15
          %s134 = scalar_select %p133, %s132, 15
          %p135 = scmp.lt.s32.totalorder %s22, 0
          %s136 = scalar_select %p135, %s22, 0
          %s137 = sadd.s32 %s136, %s134
          %s138 = smul.addr %s137, 4
          %s139 = scalar_lea.vmem %s1, %s138
          %s140 = smul.u32 16, %s23
        $region16: #{causal_self_attention.5} parent=11 // pred_fallthru
          _
      $region12: #{causal_self_attention.5} parent=5 // pred_fallthru
        _
      %p141 = scmp.lt.s32.totalorder %s11, 2
      // Predicated region
      $region17: #{causal_self_attention.5} parent=5 // pred_check
        %p142 = pneg %p141
      $region18: #{causal_self_attention.5} parent=5 // pred_check_branch
        %144 = sbr.rel (%p142) target = $region20
      $region19: #{causal_self_attention.5} parent=5 // pred_region
        // Predicated region
        $region21: #{causal_self_attention.5} parent=19 // pred_check
          %p145 = pneg %p52
        $region22: #{causal_self_attention.5} parent=19 // pred_check_branch
          %147 = sbr.rel (%p145) target = $region24
        $region23: #{causal_self_attention.5} parent=19 // pred_region
          %s148 = smul.u32 16, %s18
          %p149 = scmp.lt.s32.totalorder %s148, 31
          %s150 = scalar_select %p149, %s148, 31
          %p151 = scmp.lt.s32.totalorder %s20, 0
          %s152 = scalar_select %p151, %s20, 0
          %s153 = sadd.s32 %s152, %s150
          %s154 = smul.addr %s153, 4
          %s155 = scalar_lea.vmem %s0, %s154
          %s156 = smul.u32 16, %s18
        $region24: #{causal_self_attention.5} parent=19 // pred_fallthru
          _
      $region20: #{causal_self_attention.5} parent=5 // pred_fallthru
        _
      %p157 = scmp.le.s32.totalorder 1, %s11
      %p158 = scmp.lt.s32.totalorder %s11, 3
      %p159 = pnand %p157, %p158
      %p160 = pneg %p159
      // Predicated region
      $region25: #{causal_self_attention.5} parent=5 // pred_check
        _
      $region26: #{causal_self_attention.5} parent=5 // pred_check_branch
        %162 = sbr.rel (%p159) target = $region28
      $region27: #{causal_self_attention.5} parent=5 // pred_region
        %s163 = ssub.s32 %s11, 1
        %s164 = smul.u32 16, %s21
        %p165 = scmp.lt.s32.totalorder %s164, 31
        %s166 = scalar_select %p165, %s164, 31
        %p167 = scmp.lt.s32.totalorder %s23, 0
        %s168 = scalar_select %p167, %s23, 0
        %s169 = sadd.s32 %s168, %s166
        %s170 = smul.addr %s169, 4
        %s171 = scalar_lea.vmem %s0, %s170
        %p172 = pneg %p58
        %p173 = pneg %p55
        %s174 = smul.u32 16, %s23
        %p175 = scmp.lt.s32.totalorder %s174, 15
        %s176 = scalar_select %p175, %s174, 15
        %p177 = scmp.lt.s32.totalorder %s22, 0
        %s178 = scalar_select %p177, %s22, 0
        %s179 = sadd.s32 %s178, %s176
        %s180 = smul.addr %s179, 4
        %s181 = scalar_lea.vmem %s1, %s180
        %p182 = pneg %p86
        %p183 = pneg %p83
        %p184 = pneg %p114
        %p185 = pneg %p111
        %s186 = sand.u32 %s101, 1
        %s187 = scalar_lea.sflag [#allocation4], %s186
        %s188 = sand.u32 %s101, 1
        %s189 = smul.addr %s188, 128
        %s190 = scalar_lea.vmem [#allocation3], %s189
        %s191 = smul.u32 16, %s21
        %p192 = scmp.lt.s32.totalorder %s191, 31
        %s193 = scalar_select %p192, %s191, 31
        %p194 = scmp.lt.s32.totalorder %s23, 0
        %s195 = scalar_select %p194, %s23, 0
        %s196 = sadd.s32 %s195, %s193
        %s197 = smul.addr %s196, 4
        %s198 = scalar_lea.vmem %s0, %s197
        %s199 = smul.u32 16, %s21
        %s200 = smul.u32 16, %s23
        %p201 = scmp.lt.s32.totalorder %s200, 15
        %s202 = scalar_select %p201, %s200, 15
        %p203 = scmp.lt.s32.totalorder %s22, 0
        %s204 = scalar_select %p203, %s22, 0
        %s205 = sadd.s32 %s204, %s202
        %s206 = smul.addr %s205, 4
        %s207 = scalar_lea.vmem %s1, %s206
        %s208 = smul.u32 16, %s23
        %s209 = smul.u32 16, %s21
        %p211 = scmp.eq.s32.totalorder %s23, 0
        // Predicated region
        $region29: #{causal_self_attention.5} parent=27 // pred_check
          %p212 = pneg %p211
        $region30: #{causal_self_attention.5} parent=27 // pred_check_branch
          %214 = sbr.rel (%p212) target = $region32
        $region31: #{causal_self_attention.5} parent=27 // pred_region
          %215 = vst [vmem:[#allocation2] sm:$0xff] 0.0
          %216 = vst [vmem:[#allocation2 + $0x8] sm:$0xff] 0.0
          %217 = vst [vmem:[#allocation2 + $0x10] sm:$0xff] 0.0
          %218 = vst [vmem:[#allocation2 + $0x18] sm:$0xff] 0.0
          %219 = vst [vmem:[#allocation2 + $0x20] sm:$0xff] 0.0
          %220 = vst [vmem:[#allocation2 + $0x28] sm:$0xff] 0.0
          %221 = vst [vmem:[#allocation2 + $0x30] sm:$0xff] 0.0
          %222 = vst [vmem:[#allocation2 + $0x38] sm:$0xff] 0.0
          %223 = vst [vmem:[#allocation2 + $0x40] sm:$0xff] 0.0
          %224 = vst [vmem:[#allocation2 + $0x48] sm:$0xff] 0.0
          %225 = vst [vmem:[#allocation2 + $0x50] sm:$0xff] 0.0
          %226 = vst [vmem:[#allocation2 + $0x58] sm:$0xff] 0.0
          %227 = vst [vmem:[#allocation2 + $0x60] sm:$0xff] 0.0
          %228 = vst [vmem:[#allocation2 + $0x68] sm:$0xff] 0.0
          %229 = vst [vmem:[#allocation2 + $0x70] sm:$0xff] 0.0
          %230 = vst [vmem:[#allocation2 + $0x78] sm:$0xff] 0.0
        $region32: #{causal_self_attention.5} parent=27 // pred_fallthru
          _
        %v231 = vld [vmem:[#allocation2] sm:$0xff]
        %v232 = vld [vmem:[#allocation2 + $0x8] sm:$0xff]
        %v233 = vld [vmem:[#allocation2 + $0x10] sm:$0xff]
        %v234 = vld [vmem:[#allocation2 + $0x18] sm:$0xff]
        %v235 = vld [vmem:[#allocation2 + $0x20] sm:$0xff]
        %v236 = vld [vmem:[#allocation2 + $0x28] sm:$0xff]
        %v237 = vld [vmem:[#allocation2 + $0x30] sm:$0xff]
        %v238 = vld [vmem:[#allocation2 + $0x38] sm:$0xff]
        %v239 = vld [vmem:[#allocation2 + $0x40] sm:$0xff]
        %v240 = vld [vmem:[#allocation2 + $0x48] sm:$0xff]
        %v241 = vld [vmem:[#allocation2 + $0x50] sm:$0xff]
        %v242 = vld [vmem:[#allocation2 + $0x58] sm:$0xff]
        %v243 = vld [vmem:[#allocation2 + $0x60] sm:$0xff]
        %v244 = vld [vmem:[#allocation2 + $0x68] sm:$0xff]
        %v245 = vld [vmem:[#allocation2 + $0x70] sm:$0xff]
        %v246 = vld [vmem:[#allocation2 + $0x78] sm:$0xff]
        %v247 = vld [vmem:[%s198] sm:$0xf]
        %v248 = vld [vmem:[%s198 + $0x4] sm:$0xf]
        %v249 = vld [vmem:[%s198 + $0x8] sm:$0xf]
        %v250 = vld [vmem:[%s198 + $0xc] sm:$0xf]
        %v251 = vld [vmem:[%s198 + $0x10] sm:$0xf]
        %v252 = vld [vmem:[%s198 + $0x14] sm:$0xf]
        %v253 = vld [vmem:[%s198 + $0x18] sm:$0xf]
        %v254 = vld [vmem:[%s198 + $0x1c] sm:$0xf]
        %v255 = vld [vmem:[%s198 + $0x20] sm:$0xf]
        %v256 = vld [vmem:[%s198 + $0x24] sm:$0xf]
        %v257 = vld [vmem:[%s198 + $0x28] sm:$0xf]
        %v258 = vld [vmem:[%s198 + $0x2c] sm:$0xf]
        %v259 = vld [vmem:[%s198 + $0x30] sm:$0xf]
        %v260 = vld [vmem:[%s198 + $0x34] sm:$0xf]
        %v261 = vld [vmem:[%s198 + $0x38] sm:$0xf]
        %v262 = vld [vmem:[%s198 + $0x3c] sm:$0xf]
        %v263 = vld [vmem:[%s207] sm:$0xf]
        %v264 = vld [vmem:[%s207 + $0x4] sm:$0xf]
        %v265 = vld [vmem:[%s207 + $0x8] sm:$0xf]
        %v266 = vld [vmem:[%s207 + $0xc] sm:$0xf]
        %v267 = vld [vmem:[%s207 + $0x10] sm:$0xf]
        %v268 = vld [vmem:[%s207 + $0x14] sm:$0xf]
        %v269 = vld [vmem:[%s207 + $0x18] sm:$0xf]
        %v270 = vld [vmem:[%s207 + $0x1c] sm:$0xf]
        %v271 = vld [vmem:[%s207 + $0x20] sm:$0xf]
        %v272 = vld [vmem:[%s207 + $0x24] sm:$0xf]
        %v273 = vld [vmem:[%s207 + $0x28] sm:$0xf]
        %v274 = vld [vmem:[%s207 + $0x2c] sm:$0xf]
        %v275 = vld [vmem:[%s207 + $0x30] sm:$0xf]
        %v276 = vld [vmem:[%s207 + $0x34] sm:$0xf]
        %v277 = vld [vmem:[%s207 + $0x38] sm:$0xf]
        %v278 = vld [vmem:[%s207 + $0x3c] sm:$0xf]
        %v295 = vunpack.c.l.b16 %v247
        %v296 = vunpack.c.l.b16 %v248
        %v297 = vunpack.c.l.b16 %v249
        %v298 = vunpack.c.l.b16 %v250
        %v299 = vunpack.c.l.b16 %v251
        %v300 = vunpack.c.l.b16 %v252
        %v301 = vunpack.c.l.b16 %v253
        %v302 = vunpack.c.l.b16 %v254
        %v303 = vunpack.c.l.b16 %v255
        %v304 = vunpack.c.l.b16 %v256
        %v305 = vunpack.c.l.b16 %v257
        %v306 = vunpack.c.l.b16 %v258
        %v307 = vunpack.c.l.b16 %v259
        %v308 = vunpack.c.l.b16 %v260
        %v309 = vunpack.c.l.b16 %v261
        %v310 = vunpack.c.l.b16 %v262
        %v311 = vpack.c.b16 %v296, %v295
        %v312 = vpack.c.b16 %v298, %v297
        %v313 = vpack.c.b16 %v300, %v299
        %v314 = vpack.c.b16 %v302, %v301
        %v315 = vpack.c.b16 %v304, %v303
        %v316 = vpack.c.b16 %v306, %v305
        %v317 = vpack.c.b16 %v308, %v307
        %v318 = vpack.c.b16 %v310, %v309
        %v343 = vunpack.c.l.b16 %v263
        %v344 = vunpack.c.l.b16 %v264
        %v345 = vunpack.c.l.b16 %v265
        %v346 = vunpack.c.l.b16 %v266
        %v347 = vunpack.c.l.b16 %v267
        %v348 = vunpack.c.l.b16 %v268
        %v349 = vunpack.c.l.b16 %v269
        %v350 = vunpack.c.l.b16 %v270
        %v351 = vunpack.c.l.b16 %v271
        %v352 = vunpack.c.l.b16 %v272
        %v353 = vunpack.c.l.b16 %v273
        %v354 = vunpack.c.l.b16 %v274
        %v355 = vunpack.c.l.b16 %v275
        %v356 = vunpack.c.l.b16 %v276
        %v357 = vunpack.c.l.b16 %v277
        %v358 = vunpack.c.l.b16 %v278
        %v359 = vpack.c.b16 %v344, %v343
        %v360 = vpack.c.b16 %v346, %v345
        %v361 = vpack.c.b16 %v348, %v347
        %v362 = vpack.c.b16 %v350, %v349
        %v363 = vpack.c.b16 %v352, %v351
        %v364 = vpack.c.b16 %v354, %v353
        %v365 = vpack.c.b16 %v356, %v355
        %v366 = vpack.c.b16 %v358, %v357
        %375 = vmatprep.subr.bf16.mxu0 0
        %376 = vmatpush1.bf16.msra.mxu0 %v366
        %377 = vmatprep.subr.bf16.mxu0 0
        %378 = vmatpush1.bf16.msra.mxu0 %v365
        %379 = vmatprep.subr.bf16.mxu0 0
        %380 = vmatpush1.bf16.msra.mxu0 %v364
        %381 = vmatprep.subr.bf16.mxu0 0
        %382 = vmatpush1.bf16.msra.mxu0 %v363
        %383 = vmatprep.subr.bf16.mxu0 0
        %384 = vmatpush1.bf16.msra.mxu0 %v362
        %385 = vmatprep.subr.bf16.mxu0 0
        %386 = vmatpush1.bf16.msra.mxu0 %v361
        %387 = vmatprep.subr.bf16.mxu0 0
        %388 = vmatpush1.bf16.msra.mxu0 %v360
        %389 = vmatprep.subr.bf16.mxu0 0
        %390 = vmatpush1.bf16.msra.mxu0 %v359
        %391 = vmatprep.subr.bf16.mxu0 0
        %392 = vmatpush2.bf16.msra.mxu0 0
        %393 = vmatprep.subr.bf16.mxu0 0
        %394 = vmatpush2.bf16.msra.mxu0 0
        %395 = vmatprep.subr.bf16.mxu0 0
        %396 = vmatpush2.bf16.msra.mxu0 0
        %397 = vmatprep.subr.bf16.mxu0 0
        %398 = vmatpush2.bf16.msra.mxu0 0
        %399 = vmatprep.subr.bf16.mxu0 0
        %400 = vmatpush2.bf16.msra.mxu0 0
        %401 = vmatprep.subr.bf16.mxu0 0
        %402 = vmatpush2.bf16.msra.mxu0 0
        %403 = vmatprep.subr.bf16.mxu0 0
        %404 = vmatpush2.bf16.msra.mxu0 0
        %405 = vmatprep.subr.bf16.mxu0 0
        %406 = vmatpush2.bf16.msra.mxu0 0
        %407 = vmatprep.mubr.bf16.mxu0 0
        %408 = vmatmul.mubr.bf16.gmra.mxu0 %v311
        %v409 = vpop.f32.mrf.mxu0
        %v410 = vadd.f32 0.0, %v409
        %v411 = vpop.f32.mrf.mxu0
        %v412 = vpop.f32.mrf.mxu0
        %v413 = vadd.f32 0.0, %v412
        %v414 = vpop.f32.mrf.mxu0
        %415 = vmatprep.mubr.bf16.mxu0 0
        %416 = vmatmul.mubr.bf16.gmra.mxu0 %v312
        %v417 = vpop.f32.mrf.mxu0
        %v418 = vadd.f32 0.0, %v417
        %v419 = vpop.f32.mrf.mxu0
        %v420 = vpop.f32.mrf.mxu0
        %v421 = vadd.f32 0.0, %v420
        %v422 = vpop.f32.mrf.mxu0
        %423 = vmatprep.mubr.bf16.mxu0 0
        %424 = vmatmul.mubr.bf16.gmra.mxu0 %v313
        %v425 = vpop.f32.mrf.mxu0
        %v426 = vadd.f32 0.0, %v425
        %v427 = vpop.f32.mrf.mxu0
        %v428 = vpop.f32.mrf.mxu0
        %v429 = vadd.f32 0.0, %v428
        %v430 = vpop.f32.mrf.mxu0
        %431 = vmatprep.mubr.bf16.mxu0 0
        %432 = vmatmul.mubr.bf16.gmra.mxu0 %v314
        %v433 = vpop.f32.mrf.mxu0
        %v434 = vadd.f32 0.0, %v433
        %v435 = vpop.f32.mrf.mxu0
        %v436 = vpop.f32.mrf.mxu0
        %v437 = vadd.f32 0.0, %v436
        %v438 = vpop.f32.mrf.mxu0
        %439 = vmatprep.mubr.bf16.mxu0 0
        %440 = vmatmul.mubr.bf16.gmra.mxu0 %v315
        %v441 = vpop.f32.mrf.mxu0
        %v442 = vadd.f32 0.0, %v441
        %v443 = vpop.f32.mrf.mxu0
        %v444 = vpop.f32.mrf.mxu0
        %v445 = vadd.f32 0.0, %v444
        %v446 = vpop.f32.mrf.mxu0
        %447 = vmatprep.mubr.bf16.mxu0 0
        %448 = vmatmul.mubr.bf16.gmra.mxu0 %v316
        %v449 = vpop.f32.mrf.mxu0
        %v450 = vadd.f32 0.0, %v449
        %v451 = vpop.f32.mrf.mxu0
        %v452 = vpop.f32.mrf.mxu0
        %v453 = vadd.f32 0.0, %v452
        %v454 = vpop.f32.mrf.mxu0
        %455 = vmatprep.mubr.bf16.mxu0 0
        %456 = vmatmul.mubr.bf16.gmra.mxu0 %v317
        %v457 = vpop.f32.mrf.mxu0
        %v458 = vadd.f32 0.0, %v457
        %v459 = vpop.f32.mrf.mxu0
        %v460 = vpop.f32.mrf.mxu0
        %v461 = vadd.f32 0.0, %v460
        %v462 = vpop.f32.mrf.mxu0
        %463 = vmatprep.mubr.bf16.mxu0 0
        %464 = vmatmul.mubr.bf16.gmra.mxu0 %v318
        %v465 = vpop.f32.mrf.mxu0
        %v466 = vadd.f32 0.0, %v465
        %v467 = vpop.f32.mrf.mxu0
        %v468 = vpop.f32.mrf.mxu0
        %v469 = vadd.f32 0.0, %v468
        %v470 = vpop.f32.mrf.mxu0
        %471 = vdwg.mxu0
        %v472 = vadd.f32 %v231, %v410
        %v473 = vadd.f32 %v232, %v413
        %v474 = vadd.f32 %v233, %v418
        %v475 = vadd.f32 %v234, %v421
        %v476 = vadd.f32 %v235, %v426
        %v477 = vadd.f32 %v236, %v429
        %v478 = vadd.f32 %v237, %v434
        %v479 = vadd.f32 %v238, %v437
        %v480 = vadd.f32 %v239, %v442
        %v481 = vadd.f32 %v240, %v445
        %v482 = vadd.f32 %v241, %v450
        %v483 = vadd.f32 %v242, %v453
        %v484 = vadd.f32 %v243, %v458
        %v485 = vadd.f32 %v244, %v461
        %v486 = vadd.f32 %v245, %v466
        %v487 = vadd.f32 %v246, %v469
        %488 = vst [vmem:[#allocation2] sm:$0xff] %v472
        %489 = vst [vmem:[#allocation2 + $0x8] sm:$0xff] %v473
        %490 = vst [vmem:[#allocation2 + $0x10] sm:$0xff] %v474
        %491 = vst [vmem:[#allocation2 + $0x18] sm:$0xff] %v475
        %492 = vst [vmem:[#allocation2 + $0x20] sm:$0xff] %v476
        %493 = vst [vmem:[#allocation2 + $0x28] sm:$0xff] %v477
        %494 = vst [vmem:[#allocation2 + $0x30] sm:$0xff] %v478
        %495 = vst [vmem:[#allocation2 + $0x38] sm:$0xff] %v479
        %496 = vst [vmem:[#allocation2 + $0x40] sm:$0xff] %v480
        %497 = vst [vmem:[#allocation2 + $0x48] sm:$0xff] %v481
        %498 = vst [vmem:[#allocation2 + $0x50] sm:$0xff] %v482
        %499 = vst [vmem:[#allocation2 + $0x58] sm:$0xff] %v483
        %500 = vst [vmem:[#allocation2 + $0x60] sm:$0xff] %v484
        %501 = vst [vmem:[#allocation2 + $0x68] sm:$0xff] %v485
        %502 = vst [vmem:[#allocation2 + $0x70] sm:$0xff] %v486
        %503 = vst [vmem:[#allocation2 + $0x78] sm:$0xff] %v487
        // Predicated region
        $region33: #{causal_self_attention.5} parent=27 // pred_check
          %p504 = pneg %p211
        $region34: #{causal_self_attention.5} parent=27 // pred_check_branch
          %506 = sbr.rel (%p504) target = $region36
        $region35: #{causal_self_attention.5} parent=27 // pred_region
          %v507 = vld [vmem:[#allocation2] sm:$0xff]
          %v508 = vld [vmem:[#allocation2 + $0x8] sm:$0xff]
          %v509 = vld [vmem:[#allocation2 + $0x10] sm:$0xff]
          %v510 = vld [vmem:[#allocation2 + $0x18] sm:$0xff]
          %v511 = vld [vmem:[#allocation2 + $0x20] sm:$0xff]
          %v512 = vld [vmem:[#allocation2 + $0x28] sm:$0xff]
          %v513 = vld [vmem:[#allocation2 + $0x30] sm:$0xff]
          %v514 = vld [vmem:[#allocation2 + $0x38] sm:$0xff]
          %v515 = vld [vmem:[#allocation2 + $0x40] sm:$0xff]
          %v516 = vld [vmem:[#allocation2 + $0x48] sm:$0xff]
          %v517 = vld [vmem:[#allocation2 + $0x50] sm:$0xff]
          %v518 = vld [vmem:[#allocation2 + $0x58] sm:$0xff]
          %v519 = vld [vmem:[#allocation2 + $0x60] sm:$0xff]
          %v520 = vld [vmem:[#allocation2 + $0x68] sm:$0xff]
          %v521 = vld [vmem:[#allocation2 + $0x70] sm:$0xff]
          %v522 = vld [vmem:[#allocation2 + $0x78] sm:$0xff]
          %523 = vst [vmem:[%s190] sm:$0xff] %v507
          %524 = vst [vmem:[%s190 + $0x8] sm:$0xff] %v508
          %525 = vst [vmem:[%s190 + $0x10] sm:$0xff] %v509
          %526 = vst [vmem:[%s190 + $0x18] sm:$0xff] %v510
          %527 = vst [vmem:[%s190 + $0x20] sm:$0xff] %v511
          %528 = vst [vmem:[%s190 + $0x28] sm:$0xff] %v512
          %529 = vst [vmem:[%s190 + $0x30] sm:$0xff] %v513
          %530 = vst [vmem:[%s190 + $0x38] sm:$0xff] %v514
          %531 = vst [vmem:[%s190 + $0x40] sm:$0xff] %v515
          %532 = vst [vmem:[%s190 + $0x48] sm:$0xff] %v516
          %533 = vst [vmem:[%s190 + $0x50] sm:$0xff] %v517
          %534 = vst [vmem:[%s190 + $0x58] sm:$0xff] %v518
          %535 = vst [vmem:[%s190 + $0x60] sm:$0xff] %v519
          %536 = vst [vmem:[%s190 + $0x68] sm:$0xff] %v520
          %537 = vst [vmem:[%s190 + $0x70] sm:$0xff] %v521
          %538 = vst [vmem:[%s190 + $0x78] sm:$0xff] %v522
        $region36: #{causal_self_attention.5} parent=27 // pred_fallthru
          _
        %s539 = sand.u32 %s101, 1
        %s540 = scalar_lea.sflag [#allocation4], %s539
        %s541 = sand.u32 %s101, 1
        %s542 = smul.addr %s541, 128
        %s543 = scalar_lea.vmem [#allocation3], %s542
        // Predicated region
        $region37: #{causal_self_attention.5} parent=27 // pred_check
          %p544 = pneg %p111
        $region38: #{causal_self_attention.5} parent=27 // pred_check_branch
          %546 = sbr.rel (%p544) target = $region40
        $region39: #{causal_self_attention.5} parent=27 // pred_region
          %s547 = smul.u32 16, %s21
          %s549 = ssub.s32 2048, 2048
          %550 = vsyncadd %s540, %s549
          %s551 = sadd.s32 %s22, %s547
          %s552 = smul.addr %s551, 128
          %s553 = scalar_lea.hbm %s2, %s552
          %s554 = sshll.u32 %s543, 4
          %s555 = int_to_ptr.vmem [resolvable:$true] %s554
          %560 = dma.vmem_to_hbm [thread:$0]  %s555, 2048, %s553, %s540, 128, 128, 8
        $region40: #{causal_self_attention.5} parent=27 // pred_fallthru
          _
      $region28: #{causal_self_attention.5} parent=5 // pred_fallthru
        _
      %p561 = scmp.le.s32.totalorder 2, %s11
      // Predicated region
      $region41: #{causal_self_attention.5} parent=5 // pred_check
        %p562 = pneg %p561
      $region42: #{causal_self_attention.5} parent=5 // pred_check_branch
        %564 = sbr.rel (%p562) target = $region44
      $region43: #{causal_self_attention.5} parent=5 // pred_region
        %s565 = ssub.s32 %s11, 2
        // Predicated region
        $region45: #{causal_self_attention.5} parent=43 // pred_check
          %p566 = pneg %p117
        $region46: #{causal_self_attention.5} parent=43 // pred_check_branch
          %568 = sbr.rel (%p566) target = $region48
        $region47: #{causal_self_attention.5} parent=43 // pred_region
          %s569 = sand.u32 %s102, 1
          %s570 = scalar_lea.sflag [#allocation4], %s569
          %s571 = sand.u32 %s102, 1
          %s572 = smul.addr %s571, 128
          %s573 = scalar_lea.vmem [#allocation3], %s572
          %574 = dma.done %s570, 2048
        $region48: #{causal_self_attention.5} parent=43 // pred_fallthru
          _
      $region44: #{causal_self_attention.5} parent=5 // pred_fallthru
        _
    $region6: #{causal_self_attention.5} parent=1 // loop_footer
      %s15 = sadd.s32 1, %s11
    $region7: #{causal_self_attention.5} parent=1 // loop_footer_branch
      %10 = sbr.rel target = $region3
    $region8: #{causal_self_attention.5} parent=1 // loop_exit
      _
    %575 = vsyncpa [#allocation4], 1
    %s576 = scalar_lea.sflag [#allocation4], 1
    %577 = vsyncpa %s576, 1

// kernel: causal_self_attention.4
$region0: #{causal_self_attention.4}
  #allocation0 [shape = 'u32[]', space=smem, size = 0x4, offset = 0x4, fixed_abs, tag = 'smem constant byte address 0x4 - core index']
  #allocation1 [shape = 'u32[144,128]{1,0:T(1,128)}', space=vmem, size = 0x12000, scoped, tag = 'internal scratch']
  #allocation2 [shape = 'f32[4,64,1]{2,1,0:T(8,128)}', space=vmem, size = 0x20000, scoped, tag = 'scratch operand']
  #allocation3 [shape = 'f32[4,64,1]{2,1,0:T(8,128)}', space=vmem, size = 0x20000, scoped, tag = 'scratch operand']
  #allocation4 [shape = 'f32[4,64,32]{2,1,0:T(8,128)}', space=vmem, size = 0x20000, scoped, tag = 'scratch operand']
  #allocation5 [shape = 'bf16[4,64,32]{2,1,0:T(8,128)(2,1)}', space=vmem, size = 0x10000, scoped, tag = 'scratch operand']
  %s0 = inlined_call_operand.vmem [shape: f32[128,16], index: 0, kind: input, shape index: {}, may-alias: {0,2}]
  %s1 = inlined_call_operand.vmem [shape: f32[128,16], index: 1, kind: input, shape index: {}, may-alias: {1,3}]
  %s2 = inlined_call_operand.vmem [shape: f32[128,16], index: 2, kind: input, shape index: {}, may-alias: {0,2}]
  %s3 = inlined_call_operand.vmem [shape: f32[128,16], index: 3, kind: input, shape index: {}, may-alias: {1,3}]
  %s4 = inlined_call_operand.vmem [shape: f32[2,128,128], index: 4, kind: input, shape index: {}]
  %s5 = inlined_call_operand.vmem [shape: f32[2,128,128], index: 5, kind: input, shape index: {}]
  %s6 = inlined_call_operand.vmem [shape: f32[2,128,128], index: 6, kind: input, shape index: {}]
  %s7 = inlined_call_operand.vmem [shape: f32[2,128,128], index: 7, kind: output, shape index: {}]
  %s8 = sld [smem:[#allocation0]]
  $region73: #{causal_self_attention.4} parent=0
    _
  %s10 = ssub.s32 1, %s8
  %s11 = scalar_select 0, %s10, %s8
  loop: start=0, step=1, limit=10
  $region2: #{causal_self_attention.4} parent=0 // loop_pre_header
    _
  $region3: #{causal_self_attention.4} parent=0 // loop_header
    %s13 = sphi 0, %s17
    %p14 = scmp.ge.s32.totalorder %s13, 10
    %s20 = sphi 0, %s39
    %s21 = sphi 0, %s35
    %s22 = sphi 0, %s31
    %s23 = sphi 0, %s20
    %s24 = sphi 0, %s21
    %s25 = sphi 0, %s22
    %s26 = sphi 0, %s23
    %s27 = sphi 0, %s24
    %s28 = sphi 0, %s25
    %s42 = sphi 0, %s44
    %s45 = sphi 0, %s42
    %s46 = sphi 0, %s45
    %s62 = sphi 0, %s46
    %s68 = sphi 0, %s70
    %s71 = sphi 0, %s68
    %s72 = sphi 0, %s71
    %s88 = sphi 0, %s72
    %s94 = sphi 0, %s96
    %s97 = sphi 0, %s94
    %s98 = sphi 0, %s97
    %s114 = sphi 0, %s98
    %s120 = sphi 0, %s122
    %s123 = sphi 0, %s120
    %s124 = sphi 0, %s123
    %s140 = sphi 0, %s124
    %s148 = sphi 0, %s150
    %s151 = sphi 0, %s148
    %s152 = sphi 0, %s151
    %s168 = sphi 0, %s152
    %s176 = sphi 0, %s178
    %s179 = sphi 0, %s176
    %s180 = sphi 0, %s179
    %s196 = sphi 0, %s180
    %s204 = sphi 0, %s206
    %s207 = sphi 0, %s204
    %s208 = sphi 0, %s207
    %s224 = sphi 0, %s208
    %s232 = sphi 0, %s234
    %s235 = sphi 0, %s232
    %s236 = sphi 0, %s235
    %s252 = sphi 0, %s236
  $region4: #{causal_self_attention.4} parent=0 // loop_header_branch
    %16 = sbr.rel (%p14) target = $region8
  $region5: #{causal_self_attention.4} parent=0 // loop_body
    %s18 = ssub.s32 %s13, 1
    %s19 = ssub.s32 %s13, 2
    %s29 = sadd.s32 1, %s22
    %p30 = scmp.ge.s32.totalorder %s29, 2
    %s31 = scalar_select %p30, 0, %s29
    %s32 = sadd.s32 1, %s21
    %s33 = scalar_select %p30, %s32, %s21
    %p34 = scmp.ge.s32.totalorder %s33, 2
    %s35 = scalar_select %p34, 0, %s33
    %s36 = sadd.s32 1, %s20
    %s37 = scalar_select %p34, %s36, %s20
    %p38 = scmp.ge.s32.totalorder %s37, 2
    %s39 = scalar_select %p38, 0, %s37
    %s40 = ssub.s32 %s21, %s35
    %p41 = scmp.eq.s32.totalorder %s40, 0
    %s43 = sadd.s32 %s42, 1
    %s44 = scalar_select %p41, %s42, %s43
    %p47 = pneg %p41
    %p48 = scmp.eq.s32.totalorder %s13, 7
    %p49 = por %p47, %p48
    %p50 = scmp.ne.s32.totalorder %s42, %s45
    %p51 = scmp.eq.s32.totalorder %s13, 0
    %p52 = por %p50, %p51
    %p53 = scmp.ne.s32.totalorder %s42, %s45
    %p54 = scmp.eq.s32.totalorder %s18, 7
    %p55 = por %p53, %p54
    %p56 = scmp.ne.s32.totalorder %s45, %s46
    %p57 = scmp.eq.s32.totalorder %s18, 0
    %p58 = por %p56, %p57
    %p59 = scmp.ne.s32.totalorder %s45, %s46
    %p60 = scmp.eq.s32.totalorder %s19, 7
    %p61 = por %p59, %p60
    %p63 = scmp.ne.s32.totalorder %s46, %s62
    %p64 = scmp.eq.s32.totalorder %s19, 0
    %p65 = por %p63, %p64
    %s66 = ssub.s32 %s21, %s35
    %p67 = scmp.eq.s32.totalorder %s66, 0
    %s69 = sadd.s32 %s68, 1
    %s70 = scalar_select %p67, %s68, %s69
    %p73 = pneg %p67
    %p74 = scmp.eq.s32.totalorder %s13, 7
    %p75 = por %p73, %p74
    %p76 = scmp.ne.s32.totalorder %s68, %s71
    %p77 = scmp.eq.s32.totalorder %s13, 0
    %p78 = por %p76, %p77
    %p79 = scmp.ne.s32.totalorder %s68, %s71
    %p80 = scmp.eq.s32.totalorder %s18, 7
    %p81 = por %p79, %p80
    %p82 = scmp.ne.s32.totalorder %s71, %s72
    %p83 = scmp.eq.s32.totalorder %s18, 0
    %p84 = por %p82, %p83
    %p85 = scmp.ne.s32.totalorder %s71, %s72
    %p86 = scmp.eq.s32.totalorder %s19, 7
    %p87 = por %p85, %p86
    %p89 = scmp.ne.s32.totalorder %s72, %s88
    %p90 = scmp.eq.s32.totalorder %s19, 0
    %p91 = por %p89, %p90
    %s92 = ssub.s32 %s22, %s31
    %p93 = scmp.eq.s32.totalorder %s92, 0
    %s95 = sadd.s32 %s94, 1
    %s96 = scalar_select %p93, %s94, %s95
    %p99 = pneg %p93
    %p100 = scmp.eq.s32.totalorder %s13, 7
    %p101 = por %p99, %p100
    %p102 = scmp.ne.s32.totalorder %s94, %s97
    %p103 = scmp.eq.s32.totalorder %s13, 0
    %p104 = por %p102, %p103
    %p105 = scmp.ne.s32.totalorder %s94, %s97
    %p106 = scmp.eq.s32.totalorder %s18, 7
    %p107 = por %p105, %p106
    %p108 = scmp.ne.s32.totalorder %s97, %s98
    %p109 = scmp.eq.s32.totalorder %s18, 0
    %p110 = por %p108, %p109
    %p111 = scmp.ne.s32.totalorder %s97, %s98
    %p112 = scmp.eq.s32.totalorder %s19, 7
    %p113 = por %p111, %p112
    %p115 = scmp.ne.s32.totalorder %s98, %s114
    %p116 = scmp.eq.s32.totalorder %s19, 0
    %p117 = por %p115, %p116
    %s118 = ssub.s32 %s22, %s31
    %p119 = scmp.eq.s32.totalorder %s118, 0
    %s121 = sadd.s32 %s120, 1
    %s122 = scalar_select %p119, %s120, %s121
    %p125 = pneg %p119
    %p126 = scmp.eq.s32.totalorder %s13, 7
    %p127 = por %p125, %p126
    %p128 = scmp.ne.s32.totalorder %s120, %s123
    %p129 = scmp.eq.s32.totalorder %s13, 0
    %p130 = por %p128, %p129
    %p131 = scmp.ne.s32.totalorder %s120, %s123
    %p132 = scmp.eq.s32.totalorder %s18, 7
    %p133 = por %p131, %p132
    %p134 = scmp.ne.s32.totalorder %s123, %s124
    %p135 = scmp.eq.s32.totalorder %s18, 0
    %p136 = por %p134, %p135
    %p137 = scmp.ne.s32.totalorder %s123, %s124
    %p138 = scmp.eq.s32.totalorder %s19, 7
    %p139 = por %p137, %p138
    %p141 = scmp.ne.s32.totalorder %s124, %s140
    %p142 = scmp.eq.s32.totalorder %s19, 0
    %p143 = por %p141, %p142
    %s144 = ssub.s32 %s20, %s39
    %s145 = ssub.s32 %s21, %s35
    %s146 = sor.u32 %s144, %s145
    %p147 = scmp.eq.s32.totalorder %s146, 0
    %s149 = sadd.s32 %s148, 1
    %s150 = scalar_select %p147, %s148, %s149
    %p153 = pneg %p147
    %p154 = scmp.eq.s32.totalorder %s13, 7
    %p155 = por %p153, %p154
    %p156 = scmp.ne.s32.totalorder %s148, %s151
    %p157 = scmp.eq.s32.totalorder %s13, 0
    %p158 = por %p156, %p157
    %p159 = scmp.ne.s32.totalorder %s148, %s151
    %p160 = scmp.eq.s32.totalorder %s18, 7
    %p161 = por %p159, %p160
    %p162 = scmp.ne.s32.totalorder %s151, %s152
    %p163 = scmp.eq.s32.totalorder %s18, 0
    %p164 = por %p162, %p163
    %p165 = scmp.ne.s32.totalorder %s151, %s152
    %p166 = scmp.eq.s32.totalorder %s19, 7
    %p167 = por %p165, %p166
    %p169 = scmp.ne.s32.totalorder %s152, %s168
    %p170 = scmp.eq.s32.totalorder %s19, 0
    %p171 = por %p169, %p170
    %s172 = ssub.s32 %s20, %s39
    %s173 = ssub.s32 %s22, %s31
    %s174 = sor.u32 %s172, %s173
    %p175 = scmp.eq.s32.totalorder %s174, 0
    %s177 = sadd.s32 %s176, 1
    %s178 = scalar_select %p175, %s176, %s177
    %p181 = pneg %p175
    %p182 = scmp.eq.s32.totalorder %s13, 7
    %p183 = por %p181, %p182
    %p184 = scmp.ne.s32.totalorder %s176, %s179
    %p185 = scmp.eq.s32.totalorder %s13, 0
    %p186 = por %p184, %p185
    %p187 = scmp.ne.s32.totalorder %s176, %s179
    %p188 = scmp.eq.s32.totalorder %s18, 7
    %p189 = por %p187, %p188
    %p190 = scmp.ne.s32.totalorder %s179, %s180
    %p191 = scmp.eq.s32.totalorder %s18, 0
    %p192 = por %p190, %p191
    %p193 = scmp.ne.s32.totalorder %s179, %s180
    %p194 = scmp.eq.s32.totalorder %s19, 7
    %p195 = por %p193, %p194
    %p197 = scmp.ne.s32.totalorder %s180, %s196
    %p198 = scmp.eq.s32.totalorder %s19, 0
    %p199 = por %p197, %p198
    %s200 = ssub.s32 %s20, %s39
    %s201 = ssub.s32 %s22, %s31
    %s202 = sor.u32 %s200, %s201
    %p203 = scmp.eq.s32.totalorder %s202, 0
    %s205 = sadd.s32 %s204, 1
    %s206 = scalar_select %p203, %s204, %s205
    %p209 = pneg %p203
    %p210 = scmp.eq.s32.totalorder %s13, 7
    %p211 = por %p209, %p210
    %p212 = scmp.ne.s32.totalorder %s204, %s207
    %p213 = scmp.eq.s32.totalorder %s13, 0
    %p214 = por %p212, %p213
    %p215 = scmp.ne.s32.totalorder %s204, %s207
    %p216 = scmp.eq.s32.totalorder %s18, 7
    %p217 = por %p215, %p216
    %p218 = scmp.ne.s32.totalorder %s207, %s208
    %p219 = scmp.eq.s32.totalorder %s18, 0
    %p220 = por %p218, %p219
    %p221 = scmp.ne.s32.totalorder %s207, %s208
    %p222 = scmp.eq.s32.totalorder %s19, 7
    %p223 = por %p221, %p222
    %p225 = scmp.ne.s32.totalorder %s208, %s224
    %p226 = scmp.eq.s32.totalorder %s19, 0
    %p227 = por %p225, %p226
    %s228 = ssub.s32 %s20, %s39
    %s229 = ssub.s32 %s21, %s35
    %s230 = sor.u32 %s228, %s229
    %p231 = scmp.eq.s32.totalorder %s230, 0
    %s233 = sadd.s32 %s232, 1
    %s234 = scalar_select %p231, %s232, %s233
    %p237 = pneg %p231
    %p238 = scmp.eq.s32.totalorder %s13, 7
    %p239 = por %p237, %p238
    %p240 = scmp.ne.s32.totalorder %s232, %s235
    %p241 = scmp.eq.s32.totalorder %s13, 0
    %p242 = por %p240, %p241
    %p243 = scmp.ne.s32.totalorder %s232, %s235
    %p244 = scmp.eq.s32.totalorder %s18, 7
    %p245 = por %p243, %p244
    %p246 = scmp.ne.s32.totalorder %s235, %s236
    %p247 = scmp.eq.s32.totalorder %s18, 0
    %p248 = por %p246, %p247
    %p249 = scmp.ne.s32.totalorder %s235, %s236
    %p250 = scmp.eq.s32.totalorder %s19, 7
    %p251 = por %p249, %p250
    %p253 = scmp.ne.s32.totalorder %s236, %s252
    %p254 = scmp.eq.s32.totalorder %s19, 0
    %p255 = por %p253, %p254
    %p256 = scmp.le.s32.totalorder 1, %s13
    %p257 = scmp.lt.s32.totalorder %s13, 9
    %p258 = pnand %p256, %p257
    %p259 = pneg %p258
    // Predicated region
    $region9: #{causal_self_attention.4} parent=5 // pred_check
      _
    $region10: #{causal_self_attention.4} parent=5 // pred_check_branch
      %261 = sbr.rel (%p258) target = $region12
    $region11: #{causal_self_attention.4} parent=5 // pred_region
      %s262 = ssub.s32 %s13, 1
    $region12: #{causal_self_attention.4} parent=5 // pred_fallthru
      _
    %p263 = scmp.lt.s32.totalorder %s13, 8
    // Predicated region
    $region13: #{causal_self_attention.4} parent=5 // pred_check
      %p264 = pneg %p263
    $region14: #{causal_self_attention.4} parent=5 // pred_check_branch
      %266 = sbr.rel (%p264) target = $region16
    $region15: #{causal_self_attention.4} parent=5 // pred_region
      // Predicated region
      $region17: #{causal_self_attention.4} parent=15 // pred_check
        %p267 = pneg %p52
      $region18: #{causal_self_attention.4} parent=15 // pred_check_branch
        %269 = sbr.rel (%p267) target = $region20
      $region19: #{causal_self_attention.4} parent=15 // pred_region
        %s270 = smul.u32 8, %s21
        %p271 = scmp.lt.s32.totalorder %s270, 15
        %s272 = scalar_select %p271, %s270, 15
        %s273 = smul.addr %s272, 8
        %s274 = scalar_lea.vmem %s0, %s273
        %s275 = smul.u32 8, %s21
      $region20: #{causal_self_attention.4} parent=15 // pred_fallthru
        _
      // Predicated region
      $region21: #{causal_self_attention.4} parent=15 // pred_check
        %p276 = pneg %p78
      $region22: #{causal_self_attention.4} parent=15 // pred_check_branch
        %278 = sbr.rel (%p276) target = $region24
      $region23: #{causal_self_attention.4} parent=15 // pred_region
        %s279 = smul.u32 8, %s21
        %p280 = scmp.lt.s32.totalorder %s279, 15
        %s281 = scalar_select %p280, %s279, 15
        %s282 = smul.addr %s281, 8
        %s283 = scalar_lea.vmem %s1, %s282
        %s284 = smul.u32 8, %s21
      $region24: #{causal_self_attention.4} parent=15 // pred_fallthru
        _
      // Predicated region
      $region25: #{causal_self_attention.4} parent=15 // pred_check
        %p285 = pneg %p104
      $region26: #{causal_self_attention.4} parent=15 // pred_check_branch
        %287 = sbr.rel (%p285) target = $region28
      $region27: #{causal_self_attention.4} parent=15 // pred_region
        %s288 = smul.u32 8, %s22
        %p289 = scmp.lt.s32.totalorder %s288, 15
        %s290 = scalar_select %p289, %s288, 15
        %s291 = smul.addr %s290, 8
        %s292 = scalar_lea.vmem %s2, %s291
        %s293 = smul.u32 8, %s22
      $region28: #{causal_self_attention.4} parent=15 // pred_fallthru
        _
      // Predicated region
      $region29: #{causal_self_attention.4} parent=15 // pred_check
        %p294 = pneg %p130
      $region30: #{causal_self_attention.4} parent=15 // pred_check_branch
        %296 = sbr.rel (%p294) target = $region32
      $region31: #{causal_self_attention.4} parent=15 // pred_region
        %s297 = smul.u32 8, %s22
        %p298 = scmp.lt.s32.totalorder %s297, 15
        %s299 = scalar_select %p298, %s297, 15
        %s300 = smul.addr %s299, 8
        %s301 = scalar_lea.vmem %s3, %s300
        %s302 = smul.u32 8, %s22
      $region32: #{causal_self_attention.4} parent=15 // pred_fallthru
        _
      // Predicated region
      $region33: #{causal_self_attention.4} parent=15 // pred_check
        %p303 = pneg %p158
      $region34: #{causal_self_attention.4} parent=15 // pred_check_branch
        %305 = sbr.rel (%p303) target = $region36
      $region35: #{causal_self_attention.4} parent=15 // pred_region
        %s306 = smul.u32 8, %s21
        %p307 = scmp.lt.s32.totalorder %s20, 1
        %s308 = scalar_select %p307, %s20, 1
        %p309 = scmp.lt.s32.totalorder %s306, 15
        %s310 = scalar_select %p309, %s306, 15
        %s311 = smul.addr %s308, 16
        %s312 = sadd.s32 %s310, %s311
        %s313 = smul.addr %s312, 8
        %s314 = scalar_lea.vmem %s4, %s313
        %s315 = smul.u32 8, %s21
      $region36: #{causal_self_attention.4} parent=15 // pred_fallthru
        _
      // Predicated region
      $region37: #{causal_self_attention.4} parent=15 // pred_check
        %p316 = pneg %p186
      $region38: #{causal_self_attention.4} parent=15 // pred_check_branch
        %318 = sbr.rel (%p316) target = $region40
      $region39: #{causal_self_attention.4} parent=15 // pred_region
        %s319 = smul.u32 8, %s22
        %p320 = scmp.lt.s32.totalorder %s20, 1
        %s321 = scalar_select %p320, %s20, 1
        %p322 = scmp.lt.s32.totalorder %s319, 15
        %s323 = scalar_select %p322, %s319, 15
        %s324 = smul.addr %s321, 16
        %s325 = sadd.s32 %s323, %s324
        %s326 = smul.addr %s325, 8
        %s327 = scalar_lea.vmem %s5, %s326
        %s328 = smul.u32 8, %s22
      $region40: #{causal_self_attention.4} parent=15 // pred_fallthru
        _
      // Predicated region
      $region41: #{causal_self_attention.4} parent=15 // pred_check
        %p329 = pneg %p214
      $region42: #{causal_self_attention.4} parent=15 // pred_check_branch
        %331 = sbr.rel (%p329) target = $region44
      $region43: #{causal_self_attention.4} parent=15 // pred_region
        %s332 = smul.u32 8, %s22
        %p333 = scmp.lt.s32.totalorder %s20, 1
        %s334 = scalar_select %p333, %s20, 1
        %p335 = scmp.lt.s32.totalorder %s332, 15
        %s336 = scalar_select %p335, %s332, 15
        %s337 = smul.addr %s334, 16
        %s338 = sadd.s32 %s336, %s337
        %s339 = smul.addr %s338, 8
        %s340 = scalar_lea.vmem %s6, %s339
        %s341 = smul.u32 8, %s22
      $region44: #{causal_self_attention.4} parent=15 // pred_fallthru
        _
    $region16: #{causal_self_attention.4} parent=5 // pred_fallthru
      _
    %p342 = scmp.le.s32.totalorder 1, %s13
    %p343 = scmp.lt.s32.totalorder %s13, 9
    %p344 = pnand %p342, %p343
    %p345 = pneg %p344
    // Predicated region
    $region45: #{causal_self_attention.4} parent=5 // pred_check
      _
    $region46: #{causal_self_attention.4} parent=5 // pred_check_branch
      %347 = sbr.rel (%p344) target = $region48
    $region47: #{causal_self_attention.4} parent=5 // pred_region
      %s348 = ssub.s32 %s13, 1
      %s349 = smul.u32 8, %s24
      %p350 = scmp.lt.s32.totalorder %s349, 15
      %s351 = scalar_select %p350, %s349, 15
      %s352 = smul.addr %s351, 8
      %s353 = scalar_lea.vmem %s0, %s352
      %p354 = pneg %p58
      %p355 = pneg %p55
      %s356 = smul.u32 8, %s24
      %p357 = scmp.lt.s32.totalorder %s356, 15
      %s358 = scalar_select %p357, %s356, 15
      %s359 = smul.addr %s358, 8
      %s360 = scalar_lea.vmem %s1, %s359
      %p361 = pneg %p84
      %p362 = pneg %p81
      %s363 = smul.u32 8, %s25
      %p364 = scmp.lt.s32.totalorder %s363, 15
      %s365 = scalar_select %p364, %s363, 15
      %s366 = smul.addr %s365, 8
      %s367 = scalar_lea.vmem %s2, %s366
      %p368 = pneg %p110
      %p369 = pneg %p107
      %s370 = smul.u32 8, %s25
      %p371 = scmp.lt.s32.totalorder %s370, 15
      %s372 = scalar_select %p371, %s370, 15
      %s373 = smul.addr %s372, 8
      %s374 = scalar_lea.vmem %s3, %s373
      %p375 = pneg %p136
      %p376 = pneg %p133
      %s377 = smul.u32 8, %s24
      %p378 = scmp.lt.s32.totalorder %s23, 1
      %s379 = scalar_select %p378, %s23, 1
      %p380 = scmp.lt.s32.totalorder %s377, 15
      %s381 = scalar_select %p380, %s377, 15
      %s382 = smul.addr %s379, 16
      %s383 = sadd.s32 %s381, %s382
      %s384 = smul.addr %s383, 8
      %s385 = scalar_lea.vmem %s4, %s384
      %p386 = pneg %p164
      %p387 = pneg %p161
      %s388 = smul.u32 8, %s25
      %p389 = scmp.lt.s32.totalorder %s23, 1
      %s390 = scalar_select %p389, %s23, 1
      %p391 = scmp.lt.s32.totalorder %s388, 15
      %s392 = scalar_select %p391, %s388, 15
      %s393 = smul.addr %s390, 16
      %s394 = sadd.s32 %s392, %s393
      %s395 = smul.addr %s394, 8
      %s396 = scalar_lea.vmem %s5, %s395
      %p397 = pneg %p192
      %p398 = pneg %p189
      %s399 = smul.u32 8, %s25
      %p400 = scmp.lt.s32.totalorder %s23, 1
      %s401 = scalar_select %p400, %s23, 1
      %p402 = scmp.lt.s32.totalorder %s399, 15
      %s403 = scalar_select %p402, %s399, 15
      %s404 = smul.addr %s401, 16
      %s405 = sadd.s32 %s403, %s404
      %s406 = smul.addr %s405, 8
      %s407 = scalar_lea.vmem %s6, %s406
      %p408 = pneg %p220
      %p409 = pneg %p217
      %p410 = pneg %p248
      %p411 = pneg %p245
      %s412 = smul.u32 8, %s24
      %p413 = scmp.lt.s32.totalorder %s23, 1
      %s414 = scalar_select %p413, %s23, 1
      %p415 = scmp.lt.s32.totalorder %s412, 15
      %s416 = scalar_select %p415, %s412, 15
      %s417 = smul.addr %s414, 16
      %s418 = sadd.s32 %s416, %s417
      %s419 = smul.addr %s418, 8
      %s420 = scalar_lea.vmem %s7, %s419
      %s421 = smul.u32 8, %s24
      %p422 = scmp.lt.s32.totalorder %s421, 15
      %s423 = scalar_select %p422, %s421, 15
      %s424 = smul.addr %s423, 8
      %s425 = scalar_lea.vmem %s0, %s424
      %s426 = smul.u32 8, %s24
      %s427 = smul.u32 8, %s24
      %p428 = scmp.lt.s32.totalorder %s427, 15
      %s429 = scalar_select %p428, %s427, 15
      %s430 = smul.addr %s429, 8
      %s431 = scalar_lea.vmem %s1, %s430
      %s432 = smul.u32 8, %s24
      %s433 = smul.u32 8, %s25
      %p434 = scmp.lt.s32.totalorder %s433, 15
      %s435 = scalar_select %p434, %s433, 15
      %s436 = smul.addr %s435, 8
      %s437 = scalar_lea.vmem %s2, %s436
      %s438 = smul.u32 8, %s25
      %s439 = smul.u32 8, %s25
      %p440 = scmp.lt.s32.totalorder %s439, 15
      %s441 = scalar_select %p440, %s439, 15
      %s442 = smul.addr %s441, 8
      %s443 = scalar_lea.vmem %s3, %s442
      %s444 = smul.u32 8, %s25
      %s445 = smul.u32 8, %s24
      %p446 = scmp.lt.s32.totalorder %s23, 1
      %s447 = scalar_select %p446, %s23, 1
      %p448 = scmp.lt.s32.totalorder %s445, 15
      %s449 = scalar_select %p448, %s445, 15
      %s450 = smul.addr %s447, 16
      %s451 = sadd.s32 %s449, %s450
      %s452 = smul.addr %s451, 8
      %s453 = scalar_lea.vmem %s4, %s452
      %s454 = smul.u32 8, %s24
      %s455 = smul.u32 8, %s25
      %p456 = scmp.lt.s32.totalorder %s23, 1
      %s457 = scalar_select %p456, %s23, 1
      %p458 = scmp.lt.s32.totalorder %s455, 15
      %s459 = scalar_select %p458, %s455, 15
      %s460 = smul.addr %s457, 16
      %s461 = sadd.s32 %s459, %s460
      %s462 = smul.addr %s461, 8
      %s463 = scalar_lea.vmem %s5, %s462
      %s464 = smul.u32 8, %s25
      %s465 = smul.u32 8, %s25
      %p466 = scmp.lt.s32.totalorder %s23, 1
      %s467 = scalar_select %p466, %s23, 1
      %p468 = scmp.lt.s32.totalorder %s465, 15
      %s469 = scalar_select %p468, %s465, 15
      %s470 = smul.addr %s467, 16
      %s471 = sadd.s32 %s469, %s470
      %s472 = smul.addr %s471, 8
      %s473 = scalar_lea.vmem %s6, %s472
      %s474 = smul.u32 8, %s25
      %s475 = smul.u32 8, %s24
      %p476 = scmp.lt.s32.totalorder %s23, 1
      %s477 = scalar_select %p476, %s23, 1
      %p478 = scmp.lt.s32.totalorder %s475, 15
      %s479 = scalar_select %p478, %s475, 15
      %s480 = smul.addr %s477, 16
      %s481 = sadd.s32 %s479, %s480
      %s482 = smul.addr %s481, 8
      %s483 = scalar_lea.vmem %s7, %s482
      %s484 = smul.u32 8, %s24
      %p486 = scmp.eq.s32.totalorder %s25, 0
      // Predicated region
      $region49: #{causal_self_attention.4} parent=47 // pred_check
        %p487 = pneg %p486
      $region50: #{causal_self_attention.4} parent=47 // pred_check_branch
        %489 = sbr.rel (%p487) target = $region52
      $region51: #{causal_self_attention.4} parent=47 // pred_region
        %vm490 = vcmask 7168
        %491 = vst.msk [vmem:[#allocation2] sm:$0xff] %vm490, -1e+30
        %492 = vst.msk [vmem:[#allocation2 + $0x8] sm:$0xff] %vm490, -1e+30
        %493 = vst.msk [vmem:[#allocation2 + $0x10] sm:$0xff] %vm490, -1e+30
        %494 = vst.msk [vmem:[#allocation2 + $0x18] sm:$0xff] %vm490, -1e+30
        %495 = vst.msk [vmem:[#allocation2 + $0x20] sm:$0xff] %vm490, -1e+30
        %496 = vst.msk [vmem:[#allocation2 + $0x28] sm:$0xff] %vm490, -1e+30
        %497 = vst.msk [vmem:[#allocation2 + $0x30] sm:$0xff] %vm490, -1e+30
        %498 = vst.msk [vmem:[#allocation2 + $0x38] sm:$0xff] %vm490, -1e+30
        %499 = vst.msk [vmem:[#allocation2 + $0x40] sm:$0xff] %vm490, -1e+30
        %500 = vst.msk [vmem:[#allocation2 + $0x48] sm:$0xff] %vm490, -1e+30
        %501 = vst.msk [vmem:[#allocation2 + $0x50] sm:$0xff] %vm490, -1e+30
        %502 = vst.msk [vmem:[#allocation2 + $0x58] sm:$0xff] %vm490, -1e+30
        %503 = vst.msk [vmem:[#allocation2 + $0x60] sm:$0xff] %vm490, -1e+30
        %504 = vst.msk [vmem:[#allocation2 + $0x68] sm:$0xff] %vm490, -1e+30
        %505 = vst.msk [vmem:[#allocation2 + $0x70] sm:$0xff] %vm490, -1e+30
        %506 = vst.msk [vmem:[#allocation2 + $0x78] sm:$0xff] %vm490, -1e+30
        %507 = vst.msk [vmem:[#allocation2 + $0x80] sm:$0xff] %vm490, -1e+30
        %508 = vst.msk [vmem:[#allocation2 + $0x88] sm:$0xff] %vm490, -1e+30
        %509 = vst.msk [vmem:[#allocation2 + $0x90] sm:$0xff] %vm490, -1e+30
        %510 = vst.msk [vmem:[#allocation2 + $0x98] sm:$0xff] %vm490, -1e+30
        %511 = vst.msk [vmem:[#allocation2 + $0xa0] sm:$0xff] %vm490, -1e+30
        %512 = vst.msk [vmem:[#allocation2 + $0xa8] sm:$0xff] %vm490, -1e+30
        %513 = vst.msk [vmem:[#allocation2 + $0xb0] sm:$0xff] %vm490, -1e+30
        %514 = vst.msk [vmem:[#allocation2 + $0xb8] sm:$0xff] %vm490, -1e+30
        %515 = vst.msk [vmem:[#allocation2 + $0xc0] sm:$0xff] %vm490, -1e+30
        %516 = vst.msk [vmem:[#allocation2 + $0xc8] sm:$0xff] %vm490, -1e+30
        %517 = vst.msk [vmem:[#allocation2 + $0xd0] sm:$0xff] %vm490, -1e+30
        %518 = vst.msk [vmem:[#allocation2 + $0xd8] sm:$0xff] %vm490, -1e+30
        %519 = vst.msk [vmem:[#allocation2 + $0xe0] sm:$0xff] %vm490, -1e+30
        %520 = vst.msk [vmem:[#allocation2 + $0xe8] sm:$0xff] %vm490, -1e+30
        %521 = vst.msk [vmem:[#allocation2 + $0xf0] sm:$0xff] %vm490, -1e+30
        %522 = vst.msk [vmem:[#allocation2 + $0xf8] sm:$0xff] %vm490, -1e+30
        %523 = vst.msk [vmem:[#allocation3] sm:$0xff] %vm490, 0.0
        %524 = vst.msk [vmem:[#allocation3 + $0x8] sm:$0xff] %vm490, 0.0
        %525 = vst.msk [vmem:[#allocation3 + $0x10] sm:$0xff] %vm490, 0.0
        %526 = vst.msk [vmem:[#allocation3 + $0x18] sm:$0xff] %vm490, 0.0
        %527 = vst.msk [vmem:[#allocation3 + $0x20] sm:$0xff] %vm490, 0.0
        %528 = vst.msk [vmem:[#allocation3 + $0x28] sm:$0xff] %vm490, 0.0
        %529 = vst.msk [vmem:[#allocation3 + $0x30] sm:$0xff] %vm490, 0.0
        %530 = vst.msk [vmem:[#allocation3 + $0x38] sm:$0xff] %vm490, 0.0
        %531 = vst.msk [vmem:[#allocation3 + $0x40] sm:$0xff] %vm490, 0.0
        %532 = vst.msk [vmem:[#allocation3 + $0x48] sm:$0xff] %vm490, 0.0
        %533 = vst.msk [vmem:[#allocation3 + $0x50] sm:$0xff] %vm490, 0.0
        %534 = vst.msk [vmem:[#allocation3 + $0x58] sm:$0xff] %vm490, 0.0
        %535 = vst.msk [vmem:[#allocation3 + $0x60] sm:$0xff] %vm490, 0.0
        %536 = vst.msk [vmem:[#allocation3 + $0x68] sm:$0xff] %vm490, 0.0
        %537 = vst.msk [vmem:[#allocation3 + $0x70] sm:$0xff] %vm490, 0.0
        %538 = vst.msk [vmem:[#allocation3 + $0x78] sm:$0xff] %vm490, 0.0
        %539 = vst.msk [vmem:[#allocation3 + $0x80] sm:$0xff] %vm490, 0.0
        %540 = vst.msk [vmem:[#allocation3 + $0x88] sm:$0xff] %vm490, 0.0
        %541 = vst.msk [vmem:[#allocation3 + $0x90] sm:$0xff] %vm490, 0.0
        %542 = vst.msk [vmem:[#allocation3 + $0x98] sm:$0xff] %vm490, 0.0
        %543 = vst.msk [vmem:[#allocation3 + $0xa0] sm:$0xff] %vm490, 0.0
        %544 = vst.msk [vmem:[#allocation3 + $0xa8] sm:$0xff] %vm490, 0.0
        %545 = vst.msk [vmem:[#allocation3 + $0xb0] sm:$0xff] %vm490, 0.0
        %546 = vst.msk [vmem:[#allocation3 + $0xb8] sm:$0xff] %vm490, 0.0
        %547 = vst.msk [vmem:[#allocation3 + $0xc0] sm:$0xff] %vm490, 0.0
        %548 = vst.msk [vmem:[#allocation3 + $0xc8] sm:$0xff] %vm490, 0.0
        %549 = vst.msk [vmem:[#allocation3 + $0xd0] sm:$0xff] %vm490, 0.0
        %550 = vst.msk [vmem:[#allocation3 + $0xd8] sm:$0xff] %vm490, 0.0
        %551 = vst.msk [vmem:[#allocation3 + $0xe0] sm:$0xff] %vm490, 0.0
        %552 = vst.msk [vmem:[#allocation3 + $0xe8] sm:$0xff] %vm490, 0.0
        %553 = vst.msk [vmem:[#allocation3 + $0xf0] sm:$0xff] %vm490, 0.0
        %554 = vst.msk [vmem:[#allocation3 + $0xf8] sm:$0xff] %vm490, 0.0
        %vm555 = vcmask 261120
        %556 = vst.msk [vmem:[#allocation4] sm:$0xff] %vm555, 0.0
        %557 = vst.msk [vmem:[#allocation4 + $0x8] sm:$0xff] %vm555, 0.0
        %558 = vst.msk [vmem:[#allocation4 + $0x10] sm:$0xff] %vm555, 0.0
        %559 = vst.msk [vmem:[#allocation4 + $0x18] sm:$0xff] %vm555, 0.0
        %560 = vst.msk [vmem:[#allocation4 + $0x20] sm:$0xff] %vm555, 0.0
        %561 = vst.msk [vmem:[#allocation4 + $0x28] sm:$0xff] %vm555, 0.0
        %562 = vst.msk [vmem:[#allocation4 + $0x30] sm:$0xff] %vm555, 0.0
        %563 = vst.msk [vmem:[#allocation4 + $0x38] sm:$0xff] %vm555, 0.0
        %564 = vst.msk [vmem:[#allocation4 + $0x40] sm:$0xff] %vm555, 0.0
        %565 = vst.msk [vmem:[#allocation4 + $0x48] sm:$0xff] %vm555, 0.0
        %566 = vst.msk [vmem:[#allocation4 + $0x50] sm:$0xff] %vm555, 0.0
        %567 = vst.msk [vmem:[#allocation4 + $0x58] sm:$0xff] %vm555, 0.0
        %568 = vst.msk [vmem:[#allocation4 + $0x60] sm:$0xff] %vm555, 0.0
        %569 = vst.msk [vmem:[#allocation4 + $0x68] sm:$0xff] %vm555, 0.0
        %570 = vst.msk [vmem:[#allocation4 + $0x70] sm:$0xff] %vm555, 0.0
        %571 = vst.msk [vmem:[#allocation4 + $0x78] sm:$0xff] %vm555, 0.0
        %572 = vst.msk [vmem:[#allocation4 + $0x80] sm:$0xff] %vm555, 0.0
        %573 = vst.msk [vmem:[#allocation4 + $0x88] sm:$0xff] %vm555, 0.0
        %574 = vst.msk [vmem:[#allocation4 + $0x90] sm:$0xff] %vm555, 0.0
        %575 = vst.msk [vmem:[#allocation4 + $0x98] sm:$0xff] %vm555, 0.0
        %576 = vst.msk [vmem:[#allocation4 + $0xa0] sm:$0xff] %vm555, 0.0
        %577 = vst.msk [vmem:[#allocation4 + $0xa8] sm:$0xff] %vm555, 0.0
        %578 = vst.msk [vmem:[#allocation4 + $0xb0] sm:$0xff] %vm555, 0.0
        %579 = vst.msk [vmem:[#allocation4 + $0xb8] sm:$0xff] %vm555, 0.0
        %580 = vst.msk [vmem:[#allocation4 + $0xc0] sm:$0xff] %vm555, 0.0
        %581 = vst.msk [vmem:[#allocation4 + $0xc8] sm:$0xff] %vm555, 0.0
        %582 = vst.msk [vmem:[#allocation4 + $0xd0] sm:$0xff] %vm555, 0.0
        %583 = vst.msk [vmem:[#allocation4 + $0xd8] sm:$0xff] %vm555, 0.0
        %584 = vst.msk [vmem:[#allocation4 + $0xe0] sm:$0xff] %vm555, 0.0
        %585 = vst.msk [vmem:[#allocation4 + $0xe8] sm:$0xff] %vm555, 0.0
        %586 = vst.msk [vmem:[#allocation4 + $0xf0] sm:$0xff] %vm555, 0.0
        %587 = vst.msk [vmem:[#allocation4 + $0xf8] sm:$0xff] %vm555, 0.0
        %v588 = vld [vmem:[%s453] sm:$0xff]
        %v589 = vld [vmem:[%s453 + $0x8] sm:$0xff]
        %v590 = vld [vmem:[%s453 + $0x10] sm:$0xff]
        %v591 = vld [vmem:[%s453 + $0x18] sm:$0xff]
        %v592 = vld [vmem:[%s453 + $0x20] sm:$0xff]
        %v593 = vld [vmem:[%s453 + $0x28] sm:$0xff]
        %v594 = vld [vmem:[%s453 + $0x30] sm:$0xff]
        %v595 = vld [vmem:[%s453 + $0x38] sm:$0xff]
        %v596 = vld [vmem:[%s425] sm:$0xff]
        %v597 = vld [vmem:[%s425 + $0x8] sm:$0xff]
        %v598 = vld [vmem:[%s425 + $0x10] sm:$0xff]
        %v599 = vld [vmem:[%s425 + $0x18] sm:$0xff]
        %v600 = vld [vmem:[%s425 + $0x20] sm:$0xff]
        %v601 = vld [vmem:[%s425 + $0x28] sm:$0xff]
        %v602 = vld [vmem:[%s425 + $0x30] sm:$0xff]
        %v603 = vld [vmem:[%s425 + $0x38] sm:$0xff]
        %v604 = vld [vmem:[%s431] sm:$0xff]
        %v605 = vld [vmem:[%s431 + $0x8] sm:$0xff]
        %v606 = vld [vmem:[%s431 + $0x10] sm:$0xff]
        %v607 = vld [vmem:[%s431 + $0x18] sm:$0xff]
        %v608 = vld [vmem:[%s431 + $0x20] sm:$0xff]
        %v609 = vld [vmem:[%s431 + $0x28] sm:$0xff]
        %v610 = vld [vmem:[%s431 + $0x30] sm:$0xff]
        %v611 = vld [vmem:[%s431 + $0x38] sm:$0xff]
        %v612 = vmul.f32 %v588, %v588
        %v613 = vmul.f32 %v589, %v589
        %v614 = vmul.f32 %v590, %v590
        %v615 = vmul.f32 %v591, %v591
        %v616 = vmul.f32 %v592, %v592
        %v617 = vmul.f32 %v593, %v593
        %v618 = vmul.f32 %v594, %v594
        %v619 = vmul.f32 %v595, %v595
        %v620 = vsel %vm555, %v612, 0.0
        %621 = vadd.xlane.f32.xlu0 %v620
        %v622 = vpop.xlane.xlu0 %621
        %v623 = vsel %vm555, %v613, 0.0
        %624 = vadd.xlane.f32.xlu0 %v623
        %v625 = vpop.xlane.xlu0 %624
        %v626 = vsel %vm555, %v614, 0.0
        %627 = vadd.xlane.f32.xlu0 %v626
        %v628 = vpop.xlane.xlu0 %627
        %v629 = vsel %vm555, %v615, 0.0
        %630 = vadd.xlane.f32.xlu0 %v629
        %v631 = vpop.xlane.xlu0 %630
        %v632 = vsel %vm555, %v616, 0.0
        %633 = vadd.xlane.f32.xlu0 %v632
        %v634 = vpop.xlane.xlu0 %633
        %v635 = vsel %vm555, %v617, 0.0
        %636 = vadd.xlane.f32.xlu0 %v635
        %v637 = vpop.xlane.xlu0 %636
        %v638 = vsel %vm555, %v618, 0.0
        %639 = vadd.xlane.f32.xlu0 %v638
        %v640 = vpop.xlane.xlu0 %639
        %v641 = vsel %vm555, %v619, 0.0
        %642 = vadd.xlane.f32.xlu0 %v641
        %v643 = vpop.xlane.xlu0 %642
        %v644 = vrcp.pop 32.0
        %v645 = vmul.f32 %v622, %v644
        %v646 = vmul.f32 %v625, %v644
        %v647 = vmul.f32 %v628, %v644
        %v648 = vmul.f32 %v631, %v644
        %v649 = vmul.f32 %v634, %v644
        %v650 = vmul.f32 %v637, %v644
        %v651 = vmul.f32 %v640, %v644
        %v652 = vmul.f32 %v643, %v644
        %v653 = vadd.f32 %v645, 1.1920929e-07
        %v654 = vadd.f32 %v646, 1.1920929e-07
        %v655 = vadd.f32 %v647, 1.1920929e-07
        %v656 = vadd.f32 %v648, 1.1920929e-07
        %v657 = vadd.f32 %v649, 1.1920929e-07
        %v658 = vadd.f32 %v650, 1.1920929e-07
        %v659 = vadd.f32 %v651, 1.1920929e-07
        %v660 = vadd.f32 %v652, 1.1920929e-07
        %v661 = vrsqrt.pop %v653
        %v662 = vrsqrt.pop %v654
        %v663 = vrsqrt.pop %v655
        %v664 = vrsqrt.pop %v656
        %v665 = vrsqrt.pop %v657
        %v666 = vrsqrt.pop %v658
        %v667 = vrsqrt.pop %v659
        %v668 = vrsqrt.pop %v660
        %v669 = vmul.f32 %v588, %v661
        %v670 = vmul.f32 %v589, %v662
        %v671 = vmul.f32 %v590, %v663
        %v672 = vmul.f32 %v591, %v664
        %v673 = vmul.f32 %v592, %v665
        %v674 = vmul.f32 %v593, %v666
        %v675 = vmul.f32 %v594, %v667
        %v676 = vmul.f32 %v595, %v668
        %v677 = vmul.f32 %v669, %v596
        %v678 = vmul.f32 %v670, %v597
        %v679 = vmul.f32 %v671, %v598
        %v680 = vmul.f32 %v672, %v599
        %v681 = vmul.f32 %v673, %v600
        %v682 = vmul.f32 %v674, %v601
        %v683 = vmul.f32 %v675, %v602
        %v684 = vmul.f32 %v676, %v603
        %693 = vrot.lane.b32.xlu0 %v604, 16
        %v694 = vpop.permute.xlu0 %693
        %695 = vrot.lane.b32.xlu0 %v605, 16
        %v696 = vpop.permute.xlu0 %695
        %697 = vrot.lane.b32.xlu0 %v606, 16
        %v698 = vpop.permute.xlu0 %697
        %699 = vrot.lane.b32.xlu0 %v607, 16
        %v700 = vpop.permute.xlu0 %699
        %701 = vrot.lane.b32.xlu0 %v608, 16
        %v702 = vpop.permute.xlu0 %701
        %703 = vrot.lane.b32.xlu0 %v609, 16
        %v704 = vpop.permute.xlu0 %703
        %705 = vrot.lane.b32.xlu0 %v610, 16
        %v706 = vpop.permute.xlu0 %705
        %707 = vrot.lane.b32.xlu0 %v611, 16
        %v708 = vpop.permute.xlu0 %707
        %v717 = vmul.f32 %v669, %v694
        %v718 = vmul.f32 %v670, %v696
        %v719 = vmul.f32 %v671, %v698
        %v720 = vmul.f32 %v672, %v700
        %v721 = vmul.f32 %v673, %v702
        %v722 = vmul.f32 %v674, %v704
        %v723 = vmul.f32 %v675, %v706
        %v724 = vmul.f32 %v676, %v708
        %733 = vrot.lane.b32.xlu0 %v717, 112
        %v734 = vpop.permute.xlu0 %733
        %735 = vrot.lane.b32.xlu0 %v718, 112
        %v736 = vpop.permute.xlu0 %735
        %737 = vrot.lane.b32.xlu0 %v719, 112
        %v738 = vpop.permute.xlu0 %737
        %739 = vrot.lane.b32.xlu0 %v720, 112
        %v740 = vpop.permute.xlu0 %739
        %741 = vrot.lane.b32.xlu0 %v721, 112
        %v742 = vpop.permute.xlu0 %741
        %743 = vrot.lane.b32.xlu0 %v722, 112
        %v744 = vpop.permute.xlu0 %743
        %745 = vrot.lane.b32.xlu0 %v723, 112
        %v746 = vpop.permute.xlu0 %745
        %747 = vrot.lane.b32.xlu0 %v724, 112
        %v748 = vpop.permute.xlu0 %747
        %v757 = vadd.f32 %v677, %v734
        %v758 = vadd.f32 %v678, %v736
        %v759 = vadd.f32 %v679, %v738
        %v760 = vadd.f32 %v680, %v740
        %v761 = vadd.f32 %v681, %v742
        %v762 = vadd.f32 %v682, %v744
        %v763 = vadd.f32 %v683, %v746
        %v764 = vadd.f32 %v684, %v748
        %v765 = vsub.f32 0.0, %v669
        %v766 = vsub.f32 0.0, %v670
        %v767 = vsub.f32 0.0, %v671
        %v768 = vsub.f32 0.0, %v672
        %v769 = vsub.f32 0.0, %v673
        %v770 = vsub.f32 0.0, %v674
        %v771 = vsub.f32 0.0, %v675
        %v772 = vsub.f32 0.0, %v676
        %v773 = vmul.f32 %v765, %v604
        %v774 = vmul.f32 %v766, %v605
        %v775 = vmul.f32 %v767, %v606
        %v776 = vmul.f32 %v768, %v607
        %v777 = vmul.f32 %v769, %v608
        %v778 = vmul.f32 %v770, %v609
        %v779 = vmul.f32 %v771, %v610
        %v780 = vmul.f32 %v772, %v611
        %789 = vrot.lane.b32.xlu0 %v596, 16
        %v790 = vpop.permute.xlu0 %789
        %791 = vrot.lane.b32.xlu0 %v597, 16
        %v792 = vpop.permute.xlu0 %791
        %793 = vrot.lane.b32.xlu0 %v598, 16
        %v794 = vpop.permute.xlu0 %793
        %795 = vrot.lane.b32.xlu0 %v599, 16
        %v796 = vpop.permute.xlu0 %795
        %797 = vrot.lane.b32.xlu0 %v600, 16
        %v798 = vpop.permute.xlu0 %797
        %799 = vrot.lane.b32.xlu0 %v601, 16
        %v800 = vpop.permute.xlu0 %799
        %801 = vrot.lane.b32.xlu0 %v602, 16
        %v802 = vpop.permute.xlu0 %801
        %803 = vrot.lane.b32.xlu0 %v603, 16
        %v804 = vpop.permute.xlu0 %803
        %v813 = vmul.f32 %v669, %v790
        %v814 = vmul.f32 %v670, %v792
        %v815 = vmul.f32 %v671, %v794
        %v816 = vmul.f32 %v672, %v796
        %v817 = vmul.f32 %v673, %v798
        %v818 = vmul.f32 %v674, %v800
        %v819 = vmul.f32 %v675, %v802
        %v820 = vmul.f32 %v676, %v804
        %829 = vrot.lane.b32.xlu0 %v813, 112
        %v830 = vpop.permute.xlu0 %829
        %831 = vrot.lane.b32.xlu0 %v814, 112
        %v832 = vpop.permute.xlu0 %831
        %833 = vrot.lane.b32.xlu0 %v815, 112
        %v834 = vpop.permute.xlu0 %833
        %835 = vrot.lane.b32.xlu0 %v816, 112
        %v836 = vpop.permute.xlu0 %835
        %837 = vrot.lane.b32.xlu0 %v817, 112
        %v838 = vpop.permute.xlu0 %837
        %839 = vrot.lane.b32.xlu0 %v818, 112
        %v840 = vpop.permute.xlu0 %839
        %841 = vrot.lane.b32.xlu0 %v819, 112
        %v842 = vpop.permute.xlu0 %841
        %843 = vrot.lane.b32.xlu0 %v820, 112
        %v844 = vpop.permute.xlu0 %843
        %v853 = vadd.f32 %v773, %v830
        %v854 = vadd.f32 %v774, %v832
        %v855 = vadd.f32 %v775, %v834
        %v856 = vadd.f32 %v776, %v836
        %v857 = vadd.f32 %v777, %v838
        %v858 = vadd.f32 %v778, %v840
        %v859 = vadd.f32 %v779, %v842
        %v860 = vadd.f32 %v780, %v844
        %869 = vrot.lane.b32.xlu0 %v853, 16
        %v870 = vpop.permute.xlu0 %869
        %871 = vrot.lane.b32.xlu0 %v854, 16
        %v872 = vpop.permute.xlu0 %871
        %873 = vrot.lane.b32.xlu0 %v855, 16
        %v874 = vpop.permute.xlu0 %873
        %875 = vrot.lane.b32.xlu0 %v856, 16
        %v876 = vpop.permute.xlu0 %875
        %877 = vrot.lane.b32.xlu0 %v857, 16
        %v878 = vpop.permute.xlu0 %877
        %879 = vrot.lane.b32.xlu0 %v858, 16
        %v880 = vpop.permute.xlu0 %879
        %881 = vrot.lane.b32.xlu0 %v859, 16
        %v882 = vpop.permute.xlu0 %881
        %883 = vrot.lane.b32.xlu0 %v860, 16
        %v884 = vpop.permute.xlu0 %883
        %vm893 = vcmask 130048
        %v894 = vsel %vm893, %v757, %v870
        %v895 = vsel %vm893, %v758, %v872
        %v896 = vsel %vm893, %v759, %v874
        %v897 = vsel %vm893, %v760, %v876
        %v898 = vsel %vm893, %v761, %v878
        %v899 = vsel %vm893, %v762, %v880
        %v900 = vsel %vm893, %v763, %v882
        %v901 = vsel %vm893, %v764, %v884
        %v902 = vmul.f32 %v894, 0.17677669
        %v903 = vmul.f32 %v895, 0.17677669
        %v904 = vmul.f32 %v896, 0.17677669
        %v905 = vmul.f32 %v897, 0.17677669
        %v906 = vmul.f32 %v898, 0.17677669
        %v907 = vmul.f32 %v899, 0.17677669
        %v908 = vmul.f32 %v900, 0.17677669
        %v909 = vmul.f32 %v901, 0.17677669
        %v910 = vpack.c.bf16 %v903, %v902
        %v911 = vpack.c.bf16 %v905, %v904
        %v912 = vpack.c.bf16 %v907, %v906
        %v913 = vpack.c.bf16 %v909, %v908
        %v918 = vunpack.c.l.b16 %v910
        %v919 = vunpack.c.h.b16 %v910
        %v920 = vunpack.c.l.b16 %v911
        %v921 = vunpack.c.h.b16 %v911
        %v922 = vunpack.c.l.b16 %v912
        %v923 = vunpack.c.h.b16 %v912
        %v924 = vunpack.c.l.b16 %v913
        %v925 = vunpack.c.h.b16 %v913
        %v926 = vpack.c.b16 %v918, %v918
        %v927 = vpack.c.b16 %v919, %v919
        %v928 = vpack.c.b16 %v920, %v920
        %v929 = vpack.c.b16 %v921, %v921
        %v930 = vpack.c.b16 %v922, %v922
        %v931 = vpack.c.b16 %v923, %v923
        %v932 = vpack.c.b16 %v924, %v924
        %v933 = vpack.c.b16 %v925, %v925
        %vm942 = vcmask 257024
        %943 = vst.msk [vmem:[#allocation5] sm:$0xf] %vm942, %v926
        %944 = vst.msk [vmem:[#allocation5 + $0x4] sm:$0xf] %vm942, %v927
        %945 = vst.msk [vmem:[#allocation5 + $0x8] sm:$0xf] %vm942, %v928
        %946 = vst.msk [vmem:[#allocation5 + $0xc] sm:$0xf] %vm942, %v929
        %947 = vst.msk [vmem:[#allocation5 + $0x10] sm:$0xf] %vm942, %v930
        %948 = vst.msk [vmem:[#allocation5 + $0x14] sm:$0xf] %vm942, %v931
        %949 = vst.msk [vmem:[#allocation5 + $0x18] sm:$0xf] %vm942, %v932
        %950 = vst.msk [vmem:[#allocation5 + $0x1c] sm:$0xf] %vm942, %v933
        %959 = vrot.lane.b32.xlu0 %v612, 96
        %v960 = vpop.permute.xlu0 %959
        %961 = vrot.lane.b32.xlu0 %v613, 96
        %v962 = vpop.permute.xlu0 %961
        %963 = vrot.lane.b32.xlu0 %v614, 96
        %v964 = vpop.permute.xlu0 %963
        %965 = vrot.lane.b32.xlu0 %v615, 96
        %v966 = vpop.permute.xlu0 %965
        %967 = vrot.lane.b32.xlu0 %v616, 96
        %v968 = vpop.permute.xlu0 %967
        %969 = vrot.lane.b32.xlu0 %v617, 96
        %v970 = vpop.permute.xlu0 %969
        %971 = vrot.lane.b32.xlu0 %v618, 96
        %v972 = vpop.permute.xlu0 %971
        %973 = vrot.lane.b32.xlu0 %v619, 96
        %v974 = vpop.permute.xlu0 %973
        %v983 = vsel %vm555, %v960, 0.0
        %984 = vadd.xlane.f32.xlu0 %v983
        %v985 = vpop.xlane.xlu0 %984
        %v986 = vsel %vm555, %v962, 0.0
        %987 = vadd.xlane.f32.xlu0 %v986
        %v988 = vpop.xlane.xlu0 %987
        %v989 = vsel %vm555, %v964, 0.0
        %990 = vadd.xlane.f32.xlu0 %v989
        %v991 = vpop.xlane.xlu0 %990
        %v992 = vsel %vm555, %v966, 0.0
        %993 = vadd.xlane.f32.xlu0 %v992
        %v994 = vpop.xlane.xlu0 %993
        %v995 = vsel %vm555, %v968, 0.0
        %996 = vadd.xlane.f32.xlu0 %v995
        %v997 = vpop.xlane.xlu0 %996
        %v998 = vsel %vm555, %v970, 0.0
        %999 = vadd.xlane.f32.xlu0 %v998
        %v1000 = vpop.xlane.xlu0 %999
        %v1001 = vsel %vm555, %v972, 0.0
        %1002 = vadd.xlane.f32.xlu0 %v1001
        %v1003 = vpop.xlane.xlu0 %1002
        %v1004 = vsel %vm555, %v974, 0.0
        %1005 = vadd.xlane.f32.xlu0 %v1004
        %v1006 = vpop.xlane.xlu0 %1005
        %v1007 = vmul.f32 %v985, %v644
        %v1008 = vmul.f32 %v988, %v644
        %v1009 = vmul.f32 %v991, %v644
        %v1010 = vmul.f32 %v994, %v644
        %v1011 = vmul.f32 %v997, %v644
        %v1012 = vmul.f32 %v1000, %v644
        %v1013 = vmul.f32 %v1003, %v644
        %v1014 = vmul.f32 %v1006, %v644
        %v1015 = vadd.f32 %v1007, 1.1920929e-07
        %v1016 = vadd.f32 %v1008, 1.1920929e-07
        %v1017 = vadd.f32 %v1009, 1.1920929e-07
        %v1018 = vadd.f32 %v1010, 1.1920929e-07
        %v1019 = vadd.f32 %v1011, 1.1920929e-07
        %v1020 = vadd.f32 %v1012, 1.1920929e-07
        %v1021 = vadd.f32 %v1013, 1.1920929e-07
        %v1022 = vadd.f32 %v1014, 1.1920929e-07
        %v1023 = vrsqrt.pop %v1015
        %v1024 = vrsqrt.pop %v1016
        %v1025 = vrsqrt.pop %v1017
        %v1026 = vrsqrt.pop %v1018
        %v1027 = vrsqrt.pop %v1019
        %v1028 = vrsqrt.pop %v1020
        %v1029 = vrsqrt.pop %v1021
        %v1030 = vrsqrt.pop %v1022
        %v1031 = vmul.f32 %v588, %v1023
        %v1032 = vmul.f32 %v589, %v1024
        %v1033 = vmul.f32 %v590, %v1025
        %v1034 = vmul.f32 %v591, %v1026
        %v1035 = vmul.f32 %v592, %v1027
        %v1036 = vmul.f32 %v593, %v1028
        %v1037 = vmul.f32 %v594, %v1029
        %v1038 = vmul.f32 %v595, %v1030
        %1039 = vrot.lane.b32.xlu0 %v596, 32
        %v1040 = vpop.permute.xlu0 %1039
        %1041 = vrot.lane.b32.xlu0 %v597, 32
        %v1042 = vpop.permute.xlu0 %1041
        %1043 = vrot.lane.b32.xlu0 %v598, 32
        %v1044 = vpop.permute.xlu0 %1043
        %1045 = vrot.lane.b32.xlu0 %v599, 32
        %v1046 = vpop.permute.xlu0 %1045
        %1047 = vrot.lane.b32.xlu0 %v600, 32
        %v1048 = vpop.permute.xlu0 %1047
        %1049 = vrot.lane.b32.xlu0 %v601, 32
        %v1050 = vpop.permute.xlu0 %1049
        %1051 = vrot.lane.b32.xlu0 %v602, 32
        %v1052 = vpop.permute.xlu0 %1051
        %1053 = vrot.lane.b32.xlu0 %v603, 32
        %v1054 = vpop.permute.xlu0 %1053
        %v1063 = vmul.f32 %v1031, %v1040
        %v1064 = vmul.f32 %v1032, %v1042
        %v1065 = vmul.f32 %v1033, %v1044
        %v1066 = vmul.f32 %v1034, %v1046
        %v1067 = vmul.f32 %v1035, %v1048
        %v1068 = vmul.f32 %v1036, %v1050
        %v1069 = vmul.f32 %v1037, %v1052
        %v1070 = vmul.f32 %v1038, %v1054
        %1071 = vrot.lane.b32.xlu0 %v604, 48
        %v1072 = vpop.permute.xlu0 %1071
        %1073 = vrot.lane.b32.xlu0 %v605, 48
        %v1074 = vpop.permute.xlu0 %1073
        %1075 = vrot.lane.b32.xlu0 %v606, 48
        %v1076 = vpop.permute.xlu0 %1075
        %1077 = vrot.lane.b32.xlu0 %v607, 48
        %v1078 = vpop.permute.xlu0 %1077
        %1079 = vrot.lane.b32.xlu0 %v608, 48
        %v1080 = vpop.permute.xlu0 %1079
        %1081 = vrot.lane.b32.xlu0 %v609, 48
        %v1082 = vpop.permute.xlu0 %1081
        %1083 = vrot.lane.b32.xlu0 %v610, 48
        %v1084 = vpop.permute.xlu0 %1083
        %1085 = vrot.lane.b32.xlu0 %v611, 48
        %v1086 = vpop.permute.xlu0 %1085
        %v1095 = vmul.f32 %v1031, %v1072
        %v1096 = vmul.f32 %v1032, %v1074
        %v1097 = vmul.f32 %v1033, %v1076
        %v1098 = vmul.f32 %v1034, %v1078
        %v1099 = vmul.f32 %v1035, %v1080
        %v1100 = vmul.f32 %v1036, %v1082
        %v1101 = vmul.f32 %v1037, %v1084
        %v1102 = vmul.f32 %v1038, %v1086
        %1111 = vrot.lane.b32.xlu0 %v1095, 112
        %v1112 = vpop.permute.xlu0 %1111
        %1113 = vrot.lane.b32.xlu0 %v1096, 112
        %v1114 = vpop.permute.xlu0 %1113
        %1115 = vrot.lane.b32.xlu0 %v1097, 112
        %v1116 = vpop.permute.xlu0 %1115
        %1117 = vrot.lane.b32.xlu0 %v1098, 112
        %v1118 = vpop.permute.xlu0 %1117
        %1119 = vrot.lane.b32.xlu0 %v1099, 112
        %v1120 = vpop.permute.xlu0 %1119
        %1121 = vrot.lane.b32.xlu0 %v1100, 112
        %v1122 = vpop.permute.xlu0 %1121
        %1123 = vrot.lane.b32.xlu0 %v1101, 112
        %v1124 = vpop.permute.xlu0 %1123
        %1125 = vrot.lane.b32.xlu0 %v1102, 112
        %v1126 = vpop.permute.xlu0 %1125
        %v1135 = vadd.f32 %v1063, %v1112
        %v1136 = vadd.f32 %v1064, %v1114
        %v1137 = vadd.f32 %v1065, %v1116
        %v1138 = vadd.f32 %v1066, %v1118
        %v1139 = vadd.f32 %v1067, %v1120
        %v1140 = vadd.f32 %v1068, %v1122
        %v1141 = vadd.f32 %v1069, %v1124
        %v1142 = vadd.f32 %v1070, %v1126
        %v1143 = vsub.f32 0.0, %v1031
        %v1144 = vsub.f32 0.0, %v1032
        %v1145 = vsub.f32 0.0, %v1033
        %v1146 = vsub.f32 0.0, %v1034
        %v1147 = vsub.f32 0.0, %v1035
        %v1148 = vsub.f32 0.0, %v1036
        %v1149 = vsub.f32 0.0, %v1037
        %v1150 = vsub.f32 0.0, %v1038
        %1151 = vrot.lane.b32.xlu0 %v604, 32
        %v1152 = vpop.permute.xlu0 %1151
        %1153 = vrot.lane.b32.xlu0 %v605, 32
        %v1154 = vpop.permute.xlu0 %1153
        %1155 = vrot.lane.b32.xlu0 %v606, 32
        %v1156 = vpop.permute.xlu0 %1155
        %1157 = vrot.lane.b32.xlu0 %v607, 32
        %v1158 = vpop.permute.xlu0 %1157
        %1159 = vrot.lane.b32.xlu0 %v608, 32
        %v1160 = vpop.permute.xlu0 %1159
        %1161 = vrot.lane.b32.xlu0 %v609, 32
        %v1162 = vpop.permute.xlu0 %1161
        %1163 = vrot.lane.b32.xlu0 %v610, 32
        %v1164 = vpop.permute.xlu0 %1163
        %1165 = vrot.lane.b32.xlu0 %v611, 32
        %v1166 = vpop.permute.xlu0 %1165
        %v1175 = vmul.f32 %v1143, %v1152
        %v1176 = vmul.f32 %v1144, %v1154
        %v1177 = vmul.f32 %v1145, %v1156
        %v1178 = vmul.f32 %v1146, %v1158
        %v1179 = vmul.f32 %v1147, %v1160
        %v1180 = vmul.f32 %v1148, %v1162
        %v1181 = vmul.f32 %v1149, %v1164
        %v1182 = vmul.f32 %v1150, %v1166
        %1183 = vrot.lane.b32.xlu0 %v596, 48
        %v1184 = vpop.permute.xlu0 %1183
        %1185 = vrot.lane.b32.xlu0 %v597, 48
        %v1186 = vpop.permute.xlu0 %1185
        %1187 = vrot.lane.b32.xlu0 %v598, 48
        %v1188 = vpop.permute.xlu0 %1187
        %1189 = vrot.lane.b32.xlu0 %v599, 48
        %v1190 = vpop.permute.xlu0 %1189
        %1191 = vrot.lane.b32.xlu0 %v600, 48
        %v1192 = vpop.permute.xlu0 %1191
        %1193 = vrot.lane.b32.xlu0 %v601, 48
        %v1194 = vpop.permute.xlu0 %1193
        %1195 = vrot.lane.b32.xlu0 %v602, 48
        %v1196 = vpop.permute.xlu0 %1195
        %1197 = vrot.lane.b32.xlu0 %v603, 48
        %v1198 = vpop.permute.xlu0 %1197
        %v1207 = vmul.f32 %v1031, %v1184
        %v1208 = vmul.f32 %v1032, %v1186
        %v1209 = vmul.f32 %v1033, %v1188
        %v1210 = vmul.f32 %v1034, %v1190
        %v1211 = vmul.f32 %v1035, %v1192
        %v1212 = vmul.f32 %v1036, %v1194
        %v1213 = vmul.f32 %v1037, %v1196
        %v1214 = vmul.f32 %v1038, %v1198
        %1223 = vrot.lane.b32.xlu0 %v1207, 112
        %v1224 = vpop.permute.xlu0 %1223
        %1225 = vrot.lane.b32.xlu0 %v1208, 112
        %v1226 = vpop.permute.xlu0 %1225
        %1227 = vrot.lane.b32.xlu0 %v1209, 112
        %v1228 = vpop.permute.xlu0 %1227
        %1229 = vrot.lane.b32.xlu0 %v1210, 112
        %v1230 = vpop.permute.xlu0 %1229
        %1231 = vrot.lane.b32.xlu0 %v1211, 112
        %v1232 = vpop.permute.xlu0 %1231
        %1233 = vrot.lane.b32.xlu0 %v1212, 112
        %v1234 = vpop.permute.xlu0 %1233
        %1235 = vrot.lane.b32.xlu0 %v1213, 112
        %v1236 = vpop.permute.xlu0 %1235
        %1237 = vrot.lane.b32.xlu0 %v1214, 112
        %v1238 = vpop.permute.xlu0 %1237
        %v1247 = vadd.f32 %v1175, %v1224
        %v1248 = vadd.f32 %v1176, %v1226
        %v1249 = vadd.f32 %v1177, %v1228
        %v1250 = vadd.f32 %v1178, %v1230
        %v1251 = vadd.f32 %v1179, %v1232
        %v1252 = vadd.f32 %v1180, %v1234
        %v1253 = vadd.f32 %v1181, %v1236
        %v1254 = vadd.f32 %v1182, %v1238
        %1263 = vrot.lane.b32.xlu0 %v1135, 96
        %v1264 = vpop.permute.xlu0 %1263
        %1265 = vrot.lane.b32.xlu0 %v1136, 96
        %v1266 = vpop.permute.xlu0 %1265
        %1267 = vrot.lane.b32.xlu0 %v1137, 96
        %v1268 = vpop.permute.xlu0 %1267
        %1269 = vrot.lane.b32.xlu0 %v1138, 96
        %v1270 = vpop.permute.xlu0 %1269
        %1271 = vrot.lane.b32.xlu0 %v1139, 96
        %v1272 = vpop.permute.xlu0 %1271
        %1273 = vrot.lane.b32.xlu0 %v1140, 96
        %v1274 = vpop.permute.xlu0 %1273
        %1275 = vrot.lane.b32.xlu0 %v1141, 96
        %v1276 = vpop.permute.xlu0 %1275
        %1277 = vrot.lane.b32.xlu0 %v1142, 96
        %v1278 = vpop.permute.xlu0 %1277
        %1295 = vrot.lane.b32.xlu0 %v1247, 112
        %v1296 = vpop.permute.xlu0 %1295
        %1297 = vrot.lane.b32.xlu0 %v1248, 112
        %v1298 = vpop.permute.xlu0 %1297
        %1299 = vrot.lane.b32.xlu0 %v1249, 112
        %v1300 = vpop.permute.xlu0 %1299
        %1301 = vrot.lane.b32.xlu0 %v1250, 112
        %v1302 = vpop.permute.xlu0 %1301
        %1303 = vrot.lane.b32.xlu0 %v1251, 112
        %v1304 = vpop.permute.xlu0 %1303
        %1305 = vrot.lane.b32.xlu0 %v1252, 112
        %v1306 = vpop.permute.xlu0 %1305
        %1307 = vrot.lane.b32.xlu0 %v1253, 112
        %v1308 = vpop.permute.xlu0 %1307
        %1309 = vrot.lane.b32.xlu0 %v1254, 112
        %v1310 = vpop.permute.xlu0 %1309
        %v1319 = vsel %vm893, %v1264, %v1296
        %v1320 = vsel %vm893, %v1266, %v1298
        %v1321 = vsel %vm893, %v1268, %v1300
        %v1322 = vsel %vm893, %v1270, %v1302
        %v1323 = vsel %vm893, %v1272, %v1304
        %v1324 = vsel %vm893, %v1274, %v1306
        %v1325 = vsel %vm893, %v1276, %v1308
        %v1326 = vsel %vm893, %v1278, %v1310
        %v1327 = vmul.f32 %v1319, 0.17677669
        %v1328 = vmul.f32 %v1320, 0.17677669
        %v1329 = vmul.f32 %v1321, 0.17677669
        %v1330 = vmul.f32 %v1322, 0.17677669
        %v1331 = vmul.f32 %v1323, 0.17677669
        %v1332 = vmul.f32 %v1324, 0.17677669
        %v1333 = vmul.f32 %v1325, 0.17677669
        %v1334 = vmul.f32 %v1326, 0.17677669
        %v1335 = vpack.c.bf16 %v1328, %v1327
        %v1336 = vpack.c.bf16 %v1330, %v1329
        %v1337 = vpack.c.bf16 %v1332, %v1331
        %v1338 = vpack.c.bf16 %v1334, %v1333
        %v1343 = vunpack.c.l.b16 %v1335
        %v1344 = vunpack.c.h.b16 %v1335
        %v1345 = vunpack.c.l.b16 %v1336
        %v1346 = vunpack.c.h.b16 %v1336
        %v1347 = vunpack.c.l.b16 %v1337
        %v1348 = vunpack.c.h.b16 %v1337
        %v1349 = vunpack.c.l.b16 %v1338
        %v1350 = vunpack.c.h.b16 %v1338
        %v1351 = vpack.c.b16 %v1343, %v1343
        %v1352 = vpack.c.b16 %v1344, %v1344
        %v1353 = vpack.c.b16 %v1345, %v1345
        %v1354 = vpack.c.b16 %v1346, %v1346
        %v1355 = vpack.c.b16 %v1347, %v1347
        %v1356 = vpack.c.b16 %v1348, %v1348
        %v1357 = vpack.c.b16 %v1349, %v1349
        %v1358 = vpack.c.b16 %v1350, %v1350
        %s1367 = scalar_lea.vmem [#allocation5], 32
        %1368 = vst.msk [vmem:[%s1367] sm:$0xf] %vm942, %v1351
        %1369 = vst.msk [vmem:[%s1367 + $0x4] sm:$0xf] %vm942, %v1352
        %1370 = vst.msk [vmem:[%s1367 + $0x8] sm:$0xf] %vm942, %v1353
        %1371 = vst.msk [vmem:[%s1367 + $0xc] sm:$0xf] %vm942, %v1354
        %1372 = vst.msk [vmem:[%s1367 + $0x10] sm:$0xf] %vm942, %v1355
        %1373 = vst.msk [vmem:[%s1367 + $0x14] sm:$0xf] %vm942, %v1356
        %1374 = vst.msk [vmem:[%s1367 + $0x18] sm:$0xf] %vm942, %v1357
        %1375 = vst.msk [vmem:[%s1367 + $0x1c] sm:$0xf] %vm942, %v1358
        %1376 = vrot.lane.b32.xlu0 %v612, 64
        %v1377 = vpop.permute.xlu0 %1376
        %1378 = vrot.lane.b32.xlu0 %v613, 64
        %v1379 = vpop.permute.xlu0 %1378
        %1380 = vrot.lane.b32.xlu0 %v614, 64
        %v1381 = vpop.permute.xlu0 %1380
        %1382 = vrot.lane.b32.xlu0 %v615, 64
        %v1383 = vpop.permute.xlu0 %1382
        %1384 = vrot.lane.b32.xlu0 %v616, 64
        %v1385 = vpop.permute.xlu0 %1384
        %1386 = vrot.lane.b32.xlu0 %v617, 64
        %v1387 = vpop.permute.xlu0 %1386
        %1388 = vrot.lane.b32.xlu0 %v618, 64
        %v1389 = vpop.permute.xlu0 %1388
        %1390 = vrot.lane.b32.xlu0 %v619, 64
        %v1391 = vpop.permute.xlu0 %1390
        %v1400 = vsel %vm555, %v1377, 0.0
        %1401 = vadd.xlane.f32.xlu0 %v1400
        %v1402 = vpop.xlane.xlu0 %1401
        %v1403 = vsel %vm555, %v1379, 0.0
        %1404 = vadd.xlane.f32.xlu0 %v1403
        %v1405 = vpop.xlane.xlu0 %1404
        %v1406 = vsel %vm555, %v1381, 0.0
        %1407 = vadd.xlane.f32.xlu0 %v1406
        %v1408 = vpop.xlane.xlu0 %1407
        %v1409 = vsel %vm555, %v1383, 0.0
        %1410 = vadd.xlane.f32.xlu0 %v1409
        %v1411 = vpop.xlane.xlu0 %1410
        %v1412 = vsel %vm555, %v1385, 0.0
        %1413 = vadd.xlane.f32.xlu0 %v1412
        %v1414 = vpop.xlane.xlu0 %1413
        %v1415 = vsel %vm555, %v1387, 0.0
        %1416 = vadd.xlane.f32.xlu0 %v1415
        %v1417 = vpop.xlane.xlu0 %1416
        %v1418 = vsel %vm555, %v1389, 0.0
        %1419 = vadd.xlane.f32.xlu0 %v1418
        %v1420 = vpop.xlane.xlu0 %1419
        %v1421 = vsel %vm555, %v1391, 0.0
        %1422 = vadd.xlane.f32.xlu0 %v1421
        %v1423 = vpop.xlane.xlu0 %1422
        %v1424 = vmul.f32 %v1402, %v644
        %v1425 = vmul.f32 %v1405, %v644
        %v1426 = vmul.f32 %v1408, %v644
        %v1427 = vmul.f32 %v1411, %v644
        %v1428 = vmul.f32 %v1414, %v644
        %v1429 = vmul.f32 %v1417, %v644
        %v1430 = vmul.f32 %v1420, %v644
        %v1431 = vmul.f32 %v1423, %v644
        %v1432 = vadd.f32 %v1424, 1.1920929e-07
        %v1433 = vadd.f32 %v1425, 1.1920929e-07
        %v1434 = vadd.f32 %v1426, 1.1920929e-07
        %v1435 = vadd.f32 %v1427, 1.1920929e-07
        %v1436 = vadd.f32 %v1428, 1.1920929e-07
        %v1437 = vadd.f32 %v1429, 1.1920929e-07
        %v1438 = vadd.f32 %v1430, 1.1920929e-07
        %v1439 = vadd.f32 %v1431, 1.1920929e-07
        %v1440 = vrsqrt.pop %v1432
        %v1441 = vrsqrt.pop %v1433
        %v1442 = vrsqrt.pop %v1434
        %v1443 = vrsqrt.pop %v1435
        %v1444 = vrsqrt.pop %v1436
        %v1445 = vrsqrt.pop %v1437
        %v1446 = vrsqrt.pop %v1438
        %v1447 = vrsqrt.pop %v1439
        %v1448 = vmul.f32 %v588, %v1440
        %v1449 = vmul.f32 %v589, %v1441
        %v1450 = vmul.f32 %v590, %v1442
        %v1451 = vmul.f32 %v591, %v1443
        %v1452 = vmul.f32 %v592, %v1444
        %v1453 = vmul.f32 %v593, %v1445
        %v1454 = vmul.f32 %v594, %v1446
        %v1455 = vmul.f32 %v595, %v1447
        %1456 = vrot.lane.b32.xlu0 %v596, 64
        %v1457 = vpop.permute.xlu0 %1456
        %1458 = vrot.lane.b32.xlu0 %v597, 64
        %v1459 = vpop.permute.xlu0 %1458
        %1460 = vrot.lane.b32.xlu0 %v598, 64
        %v1461 = vpop.permute.xlu0 %1460
        %1462 = vrot.lane.b32.xlu0 %v599, 64
        %v1463 = vpop.permute.xlu0 %1462
        %1464 = vrot.lane.b32.xlu0 %v600, 64
        %v1465 = vpop.permute.xlu0 %1464
        %1466 = vrot.lane.b32.xlu0 %v601, 64
        %v1467 = vpop.permute.xlu0 %1466
        %1468 = vrot.lane.b32.xlu0 %v602, 64
        %v1469 = vpop.permute.xlu0 %1468
        %1470 = vrot.lane.b32.xlu0 %v603, 64
        %v1471 = vpop.permute.xlu0 %1470
        %v1480 = vmul.f32 %v1448, %v1457
        %v1481 = vmul.f32 %v1449, %v1459
        %v1482 = vmul.f32 %v1450, %v1461
        %v1483 = vmul.f32 %v1451, %v1463
        %v1484 = vmul.f32 %v1452, %v1465
        %v1485 = vmul.f32 %v1453, %v1467
        %v1486 = vmul.f32 %v1454, %v1469
        %v1487 = vmul.f32 %v1455, %v1471
        %1488 = vrot.lane.b32.xlu0 %v604, 80
        %v1489 = vpop.permute.xlu0 %1488
        %1490 = vrot.lane.b32.xlu0 %v605, 80
        %v1491 = vpop.permute.xlu0 %1490
        %1492 = vrot.lane.b32.xlu0 %v606, 80
        %v1493 = vpop.permute.xlu0 %1492
        %1494 = vrot.lane.b32.xlu0 %v607, 80
        %v1495 = vpop.permute.xlu0 %1494
        %1496 = vrot.lane.b32.xlu0 %v608, 80
        %v1497 = vpop.permute.xlu0 %1496
        %1498 = vrot.lane.b32.xlu0 %v609, 80
        %v1499 = vpop.permute.xlu0 %1498
        %1500 = vrot.lane.b32.xlu0 %v610, 80
        %v1501 = vpop.permute.xlu0 %1500
        %1502 = vrot.lane.b32.xlu0 %v611, 80
        %v1503 = vpop.permute.xlu0 %1502
        %v1512 = vmul.f32 %v1448, %v1489
        %v1513 = vmul.f32 %v1449, %v1491
        %v1514 = vmul.f32 %v1450, %v1493
        %v1515 = vmul.f32 %v1451, %v1495
        %v1516 = vmul.f32 %v1452, %v1497
        %v1517 = vmul.f32 %v1453, %v1499
        %v1518 = vmul.f32 %v1454, %v1501
        %v1519 = vmul.f32 %v1455, %v1503
        %1528 = vrot.lane.b32.xlu0 %v1512, 112
        %v1529 = vpop.permute.xlu0 %1528
        %1530 = vrot.lane.b32.xlu0 %v1513, 112
        %v1531 = vpop.permute.xlu0 %1530
        %1532 = vrot.lane.b32.xlu0 %v1514, 112
        %v1533 = vpop.permute.xlu0 %1532
        %1534 = vrot.lane.b32.xlu0 %v1515, 112
        %v1535 = vpop.permute.xlu0 %1534
        %1536 = vrot.lane.b32.xlu0 %v1516, 112
        %v1537 = vpop.permute.xlu0 %1536
        %1538 = vrot.lane.b32.xlu0 %v1517, 112
        %v1539 = vpop.permute.xlu0 %1538
        %1540 = vrot.lane.b32.xlu0 %v1518, 112
        %v1541 = vpop.permute.xlu0 %1540
        %1542 = vrot.lane.b32.xlu0 %v1519, 112
        %v1543 = vpop.permute.xlu0 %1542
        %v1552 = vadd.f32 %v1480, %v1529
        %v1553 = vadd.f32 %v1481, %v1531
        %v1554 = vadd.f32 %v1482, %v1533
        %v1555 = vadd.f32 %v1483, %v1535
        %v1556 = vadd.f32 %v1484, %v1537
        %v1557 = vadd.f32 %v1485, %v1539
        %v1558 = vadd.f32 %v1486, %v1541
        %v1559 = vadd.f32 %v1487, %v1543
        %v1560 = vsub.f32 0.0, %v1448
        %v1561 = vsub.f32 0.0, %v1449
        %v1562 = vsub.f32 0.0, %v1450
        %v1563 = vsub.f32 0.0, %v1451
        %v1564 = vsub.f32 0.0, %v1452
        %v1565 = vsub.f32 0.0, %v1453
        %v1566 = vsub.f32 0.0, %v1454
        %v1567 = vsub.f32 0.0, %v1455
        %1568 = vrot.lane.b32.xlu0 %v604, 64
        %v1569 = vpop.permute.xlu0 %1568
        %1570 = vrot.lane.b32.xlu0 %v605, 64
        %v1571 = vpop.permute.xlu0 %1570
        %1572 = vrot.lane.b32.xlu0 %v606, 64
        %v1573 = vpop.permute.xlu0 %1572
        %1574 = vrot.lane.b32.xlu0 %v607, 64
        %v1575 = vpop.permute.xlu0 %1574
        %1576 = vrot.lane.b32.xlu0 %v608, 64
        %v1577 = vpop.permute.xlu0 %1576
        %1578 = vrot.lane.b32.xlu0 %v609, 64
        %v1579 = vpop.permute.xlu0 %1578
        %1580 = vrot.lane.b32.xlu0 %v610, 64
        %v1581 = vpop.permute.xlu0 %1580
        %1582 = vrot.lane.b32.xlu0 %v611, 64
        %v1583 = vpop.permute.xlu0 %1582
        %v1592 = vmul.f32 %v1560, %v1569
        %v1593 = vmul.f32 %v1561, %v1571
        %v1594 = vmul.f32 %v1562, %v1573
        %v1595 = vmul.f32 %v1563, %v1575
        %v1596 = vmul.f32 %v1564, %v1577
        %v1597 = vmul.f32 %v1565, %v1579
        %v1598 = vmul.f32 %v1566, %v1581
        %v1599 = vmul.f32 %v1567, %v1583
        %1600 = vrot.lane.b32.xlu0 %v596, 80
        %v1601 = vpop.permute.xlu0 %1600
        %1602 = vrot.lane.b32.xlu0 %v597, 80
        %v1603 = vpop.permute.xlu0 %1602
        %1604 = vrot.lane.b32.xlu0 %v598, 80
        %v1605 = vpop.permute.xlu0 %1604
        %1606 = vrot.lane.b32.xlu0 %v599, 80
        %v1607 = vpop.permute.xlu0 %1606
        %1608 = vrot.lane.b32.xlu0 %v600, 80
        %v1609 = vpop.permute.xlu0 %1608
        %1610 = vrot.lane.b32.xlu0 %v601, 80
        %v1611 = vpop.permute.xlu0 %1610
        %1612 = vrot.lane.b32.xlu0 %v602, 80
        %v1613 = vpop.permute.xlu0 %1612
        %1614 = vrot.lane.b32.xlu0 %v603, 80
        %v1615 = vpop.permute.xlu0 %1614
        %v1624 = vmul.f32 %v1448, %v1601
        %v1625 = vmul.f32 %v1449, %v1603
        %v1626 = vmul.f32 %v1450, %v1605
        %v1627 = vmul.f32 %v1451, %v1607
        %v1628 = vmul.f32 %v1452, %v1609
        %v1629 = vmul.f32 %v1453, %v1611
        %v1630 = vmul.f32 %v1454, %v1613
        %v1631 = vmul.f32 %v1455, %v1615
        %1640 = vrot.lane.b32.xlu0 %v1624, 112
        %v1641 = vpop.permute.xlu0 %1640
        %1642 = vrot.lane.b32.xlu0 %v1625, 112
        %v1643 = vpop.permute.xlu0 %1642
        %1644 = vrot.lane.b32.xlu0 %v1626, 112
        %v1645 = vpop.permute.xlu0 %1644
        %1646 = vrot.lane.b32.xlu0 %v1627, 112
        %v1647 = vpop.permute.xlu0 %1646
        %1648 = vrot.lane.b32.xlu0 %v1628, 112
        %v1649 = vpop.permute.xlu0 %1648
        %1650 = vrot.lane.b32.xlu0 %v1629, 112
        %v1651 = vpop.permute.xlu0 %1650
        %1652 = vrot.lane.b32.xlu0 %v1630, 112
        %v1653 = vpop.permute.xlu0 %1652
        %1654 = vrot.lane.b32.xlu0 %v1631, 112
        %v1655 = vpop.permute.xlu0 %1654
        %v1664 = vadd.f32 %v1592, %v1641
        %v1665 = vadd.f32 %v1593, %v1643
        %v1666 = vadd.f32 %v1594, %v1645
        %v1667 = vadd.f32 %v1595, %v1647
        %v1668 = vadd.f32 %v1596, %v1649
        %v1669 = vadd.f32 %v1597, %v1651
        %v1670 = vadd.f32 %v1598, %v1653
        %v1671 = vadd.f32 %v1599, %v1655
        %1680 = vrot.lane.b32.xlu0 %v1552, 64
        %v1681 = vpop.permute.xlu0 %1680
        %1682 = vrot.lane.b32.xlu0 %v1553, 64
        %v1683 = vpop.permute.xlu0 %1682
        %1684 = vrot.lane.b32.xlu0 %v1554, 64
        %v1685 = vpop.permute.xlu0 %1684
        %1686 = vrot.lane.b32.xlu0 %v1555, 64
        %v1687 = vpop.permute.xlu0 %1686
        %1688 = vrot.lane.b32.xlu0 %v1556, 64
        %v1689 = vpop.permute.xlu0 %1688
        %1690 = vrot.lane.b32.xlu0 %v1557, 64
        %v1691 = vpop.permute.xlu0 %1690
        %1692 = vrot.lane.b32.xlu0 %v1558, 64
        %v1693 = vpop.permute.xlu0 %1692
        %1694 = vrot.lane.b32.xlu0 %v1559, 64
        %v1695 = vpop.permute.xlu0 %1694
        %1712 = vrot.lane.b32.xlu0 %v1664, 80
        %v1713 = vpop.permute.xlu0 %1712
        %1714 = vrot.lane.b32.xlu0 %v1665, 80
        %v1715 = vpop.permute.xlu0 %1714
        %1716 = vrot.lane.b32.xlu0 %v1666, 80
        %v1717 = vpop.permute.xlu0 %1716
        %1718 = vrot.lane.b32.xlu0 %v1667, 80
        %v1719 = vpop.permute.xlu0 %1718
        %1720 = vrot.lane.b32.xlu0 %v1668, 80
        %v1721 = vpop.permute.xlu0 %1720
        %1722 = vrot.lane.b32.xlu0 %v1669, 80
        %v1723 = vpop.permute.xlu0 %1722
        %1724 = vrot.lane.b32.xlu0 %v1670, 80
        %v1725 = vpop.permute.xlu0 %1724
        %1726 = vrot.lane.b32.xlu0 %v1671, 80
        %v1727 = vpop.permute.xlu0 %1726
        %v1736 = vsel %vm893, %v1681, %v1713
        %v1737 = vsel %vm893, %v1683, %v1715
        %v1738 = vsel %vm893, %v1685, %v1717
        %v1739 = vsel %vm893, %v1687, %v1719
        %v1740 = vsel %vm893, %v1689, %v1721
        %v1741 = vsel %vm893, %v1691, %v1723
        %v1742 = vsel %vm893, %v1693, %v1725
        %v1743 = vsel %vm893, %v1695, %v1727
        %v1744 = vmul.f32 %v1736, 0.17677669
        %v1745 = vmul.f32 %v1737, 0.17677669
        %v1746 = vmul.f32 %v1738, 0.17677669
        %v1747 = vmul.f32 %v1739, 0.17677669
        %v1748 = vmul.f32 %v1740, 0.17677669
        %v1749 = vmul.f32 %v1741, 0.17677669
        %v1750 = vmul.f32 %v1742, 0.17677669
        %v1751 = vmul.f32 %v1743, 0.17677669
        %v1752 = vpack.c.bf16 %v1745, %v1744
        %v1753 = vpack.c.bf16 %v1747, %v1746
        %v1754 = vpack.c.bf16 %v1749, %v1748
        %v1755 = vpack.c.bf16 %v1751, %v1750
        %v1760 = vunpack.c.l.b16 %v1752
        %v1761 = vunpack.c.h.b16 %v1752
        %v1762 = vunpack.c.l.b16 %v1753
        %v1763 = vunpack.c.h.b16 %v1753
        %v1764 = vunpack.c.l.b16 %v1754
        %v1765 = vunpack.c.h.b16 %v1754
        %v1766 = vunpack.c.l.b16 %v1755
        %v1767 = vunpack.c.h.b16 %v1755
        %v1768 = vpack.c.b16 %v1760, %v1760
        %v1769 = vpack.c.b16 %v1761, %v1761
        %v1770 = vpack.c.b16 %v1762, %v1762
        %v1771 = vpack.c.b16 %v1763, %v1763
        %v1772 = vpack.c.b16 %v1764, %v1764
        %v1773 = vpack.c.b16 %v1765, %v1765
        %v1774 = vpack.c.b16 %v1766, %v1766
        %v1775 = vpack.c.b16 %v1767, %v1767
        %s1784 = scalar_lea.vmem [#allocation5], 64
        %1785 = vst.msk [vmem:[%s1784] sm:$0xf] %vm942, %v1768
        %1786 = vst.msk [vmem:[%s1784 + $0x4] sm:$0xf] %vm942, %v1769
        %1787 = vst.msk [vmem:[%s1784 + $0x8] sm:$0xf] %vm942, %v1770
        %1788 = vst.msk [vmem:[%s1784 + $0xc] sm:$0xf] %vm942, %v1771
        %1789 = vst.msk [vmem:[%s1784 + $0x10] sm:$0xf] %vm942, %v1772
        %1790 = vst.msk [vmem:[%s1784 + $0x14] sm:$0xf] %vm942, %v1773
        %1791 = vst.msk [vmem:[%s1784 + $0x18] sm:$0xf] %vm942, %v1774
        %1792 = vst.msk [vmem:[%s1784 + $0x1c] sm:$0xf] %vm942, %v1775
        %1793 = vrot.lane.b32.xlu0 %v612, 32
        %v1794 = vpop.permute.xlu0 %1793
        %1795 = vrot.lane.b32.xlu0 %v613, 32
        %v1796 = vpop.permute.xlu0 %1795
        %1797 = vrot.lane.b32.xlu0 %v614, 32
        %v1798 = vpop.permute.xlu0 %1797
        %1799 = vrot.lane.b32.xlu0 %v615, 32
        %v1800 = vpop.permute.xlu0 %1799
        %1801 = vrot.lane.b32.xlu0 %v616, 32
        %v1802 = vpop.permute.xlu0 %1801
        %1803 = vrot.lane.b32.xlu0 %v617, 32
        %v1804 = vpop.permute.xlu0 %1803
        %1805 = vrot.lane.b32.xlu0 %v618, 32
        %v1806 = vpop.permute.xlu0 %1805
        %1807 = vrot.lane.b32.xlu0 %v619, 32
        %v1808 = vpop.permute.xlu0 %1807
        %v1817 = vsel %vm555, %v1794, 0.0
        %1818 = vadd.xlane.f32.xlu0 %v1817
        %v1819 = vpop.xlane.xlu0 %1818
        %v1820 = vsel %vm555, %v1796, 0.0
        %1821 = vadd.xlane.f32.xlu0 %v1820
        %v1822 = vpop.xlane.xlu0 %1821
        %v1823 = vsel %vm555, %v1798, 0.0
        %1824 = vadd.xlane.f32.xlu0 %v1823
        %v1825 = vpop.xlane.xlu0 %1824
        %v1826 = vsel %vm555, %v1800, 0.0
        %1827 = vadd.xlane.f32.xlu0 %v1826
        %v1828 = vpop.xlane.xlu0 %1827
        %v1829 = vsel %vm555, %v1802, 0.0
        %1830 = vadd.xlane.f32.xlu0 %v1829
        %v1831 = vpop.xlane.xlu0 %1830
        %v1832 = vsel %vm555, %v1804, 0.0
        %1833 = vadd.xlane.f32.xlu0 %v1832
        %v1834 = vpop.xlane.xlu0 %1833
        %v1835 = vsel %vm555, %v1806, 0.0
        %1836 = vadd.xlane.f32.xlu0 %v1835
        %v1837 = vpop.xlane.xlu0 %1836
        %v1838 = vsel %vm555, %v1808, 0.0
        %1839 = vadd.xlane.f32.xlu0 %v1838
        %v1840 = vpop.xlane.xlu0 %1839
        %v1841 = vmul.f32 %v1819, %v644
        %v1842 = vmul.f32 %v1822, %v644
        %v1843 = vmul.f32 %v1825, %v644
        %v1844 = vmul.f32 %v1828, %v644
        %v1845 = vmul.f32 %v1831, %v644
        %v1846 = vmul.f32 %v1834, %v644
        %v1847 = vmul.f32 %v1837, %v644
        %v1848 = vmul.f32 %v1840, %v644
        %v1849 = vadd.f32 %v1841, 1.1920929e-07
        %v1850 = vadd.f32 %v1842, 1.1920929e-07
        %v1851 = vadd.f32 %v1843, 1.1920929e-07
        %v1852 = vadd.f32 %v1844, 1.1920929e-07
        %v1853 = vadd.f32 %v1845, 1.1920929e-07
        %v1854 = vadd.f32 %v1846, 1.1920929e-07
        %v1855 = vadd.f32 %v1847, 1.1920929e-07
        %v1856 = vadd.f32 %v1848, 1.1920929e-07
        %v1857 = vrsqrt.pop %v1849
        %v1858 = vrsqrt.pop %v1850
        %v1859 = vrsqrt.pop %v1851
        %v1860 = vrsqrt.pop %v1852
        %v1861 = vrsqrt.pop %v1853
        %v1862 = vrsqrt.pop %v1854
        %v1863 = vrsqrt.pop %v1855
        %v1864 = vrsqrt.pop %v1856
        %v1865 = vmul.f32 %v588, %v1857
        %v1866 = vmul.f32 %v589, %v1858
        %v1867 = vmul.f32 %v590, %v1859
        %v1868 = vmul.f32 %v591, %v1860
        %v1869 = vmul.f32 %v592, %v1861
        %v1870 = vmul.f32 %v593, %v1862
        %v1871 = vmul.f32 %v594, %v1863
        %v1872 = vmul.f32 %v595, %v1864
        %1873 = vrot.lane.b32.xlu0 %v596, 96
        %v1874 = vpop.permute.xlu0 %1873
        %1875 = vrot.lane.b32.xlu0 %v597, 96
        %v1876 = vpop.permute.xlu0 %1875
        %1877 = vrot.lane.b32.xlu0 %v598, 96
        %v1878 = vpop.permute.xlu0 %1877
        %1879 = vrot.lane.b32.xlu0 %v599, 96
        %v1880 = vpop.permute.xlu0 %1879
        %1881 = vrot.lane.b32.xlu0 %v600, 96
        %v1882 = vpop.permute.xlu0 %1881
        %1883 = vrot.lane.b32.xlu0 %v601, 96
        %v1884 = vpop.permute.xlu0 %1883
        %1885 = vrot.lane.b32.xlu0 %v602, 96
        %v1886 = vpop.permute.xlu0 %1885
        %1887 = vrot.lane.b32.xlu0 %v603, 96
        %v1888 = vpop.permute.xlu0 %1887
        %v1897 = vmul.f32 %v1865, %v1874
        %v1898 = vmul.f32 %v1866, %v1876
        %v1899 = vmul.f32 %v1867, %v1878
        %v1900 = vmul.f32 %v1868, %v1880
        %v1901 = vmul.f32 %v1869, %v1882
        %v1902 = vmul.f32 %v1870, %v1884
        %v1903 = vmul.f32 %v1871, %v1886
        %v1904 = vmul.f32 %v1872, %v1888
        %1905 = vrot.lane.b32.xlu0 %v604, 112
        %v1906 = vpop.permute.xlu0 %1905
        %1907 = vrot.lane.b32.xlu0 %v605, 112
        %v1908 = vpop.permute.xlu0 %1907
        %1909 = vrot.lane.b32.xlu0 %v606, 112
        %v1910 = vpop.permute.xlu0 %1909
        %1911 = vrot.lane.b32.xlu0 %v607, 112
        %v1912 = vpop.permute.xlu0 %1911
        %1913 = vrot.lane.b32.xlu0 %v608, 112
        %v1914 = vpop.permute.xlu0 %1913
        %1915 = vrot.lane.b32.xlu0 %v609, 112
        %v1916 = vpop.permute.xlu0 %1915
        %1917 = vrot.lane.b32.xlu0 %v610, 112
        %v1918 = vpop.permute.xlu0 %1917
        %1919 = vrot.lane.b32.xlu0 %v611, 112
        %v1920 = vpop.permute.xlu0 %1919
        %v1929 = vmul.f32 %v1865, %v1906
        %v1930 = vmul.f32 %v1866, %v1908
        %v1931 = vmul.f32 %v1867, %v1910
        %v1932 = vmul.f32 %v1868, %v1912
        %v1933 = vmul.f32 %v1869, %v1914
        %v1934 = vmul.f32 %v1870, %v1916
        %v1935 = vmul.f32 %v1871, %v1918
        %v1936 = vmul.f32 %v1872, %v1920
        %1945 = vrot.lane.b32.xlu0 %v1929, 112
        %v1946 = vpop.permute.xlu0 %1945
        %1947 = vrot.lane.b32.xlu0 %v1930, 112
        %v1948 = vpop.permute.xlu0 %1947
        %1949 = vrot.lane.b32.xlu0 %v1931, 112
        %v1950 = vpop.permute.xlu0 %1949
        %1951 = vrot.lane.b32.xlu0 %v1932, 112
        %v1952 = vpop.permute.xlu0 %1951
        %1953 = vrot.lane.b32.xlu0 %v1933, 112
        %v1954 = vpop.permute.xlu0 %1953
        %1955 = vrot.lane.b32.xlu0 %v1934, 112
        %v1956 = vpop.permute.xlu0 %1955
        %1957 = vrot.lane.b32.xlu0 %v1935, 112
        %v1958 = vpop.permute.xlu0 %1957
        %1959 = vrot.lane.b32.xlu0 %v1936, 112
        %v1960 = vpop.permute.xlu0 %1959
        %v1969 = vadd.f32 %v1897, %v1946
        %v1970 = vadd.f32 %v1898, %v1948
        %v1971 = vadd.f32 %v1899, %v1950
        %v1972 = vadd.f32 %v1900, %v1952
        %v1973 = vadd.f32 %v1901, %v1954
        %v1974 = vadd.f32 %v1902, %v1956
        %v1975 = vadd.f32 %v1903, %v1958
        %v1976 = vadd.f32 %v1904, %v1960
        %v1977 = vsub.f32 0.0, %v1865
        %v1978 = vsub.f32 0.0, %v1866
        %v1979 = vsub.f32 0.0, %v1867
        %v1980 = vsub.f32 0.0, %v1868
        %v1981 = vsub.f32 0.0, %v1869
        %v1982 = vsub.f32 0.0, %v1870
        %v1983 = vsub.f32 0.0, %v1871
        %v1984 = vsub.f32 0.0, %v1872
        %1985 = vrot.lane.b32.xlu0 %v604, 96
        %v1986 = vpop.permute.xlu0 %1985
        %1987 = vrot.lane.b32.xlu0 %v605, 96
        %v1988 = vpop.permute.xlu0 %1987
        %1989 = vrot.lane.b32.xlu0 %v606, 96
        %v1990 = vpop.permute.xlu0 %1989
        %1991 = vrot.lane.b32.xlu0 %v607, 96
        %v1992 = vpop.permute.xlu0 %1991
        %1993 = vrot.lane.b32.xlu0 %v608, 96
        %v1994 = vpop.permute.xlu0 %1993
        %1995 = vrot.lane.b32.xlu0 %v609, 96
        %v1996 = vpop.permute.xlu0 %1995
        %1997 = vrot.lane.b32.xlu0 %v610, 96
        %v1998 = vpop.permute.xlu0 %1997
        %1999 = vrot.lane.b32.xlu0 %v611, 96
        %v2000 = vpop.permute.xlu0 %1999
        %v2009 = vmul.f32 %v1977, %v1986
        %v2010 = vmul.f32 %v1978, %v1988
        %v2011 = vmul.f32 %v1979, %v1990
        %v2012 = vmul.f32 %v1980, %v1992
        %v2013 = vmul.f32 %v1981, %v1994
        %v2014 = vmul.f32 %v1982, %v1996
        %v2015 = vmul.f32 %v1983, %v1998
        %v2016 = vmul.f32 %v1984, %v2000
        %2017 = vrot.lane.b32.xlu0 %v596, 112
        %v2018 = vpop.permute.xlu0 %2017
        %2019 = vrot.lane.b32.xlu0 %v597, 112
        %v2020 = vpop.permute.xlu0 %2019
        %2021 = vrot.lane.b32.xlu0 %v598, 112
        %v2022 = vpop.permute.xlu0 %2021
        %2023 = vrot.lane.b32.xlu0 %v599, 112
        %v2024 = vpop.permute.xlu0 %2023
        %2025 = vrot.lane.b32.xlu0 %v600, 112
        %v2026 = vpop.permute.xlu0 %2025
        %2027 = vrot.lane.b32.xlu0 %v601, 112
        %v2028 = vpop.permute.xlu0 %2027
        %2029 = vrot.lane.b32.xlu0 %v602, 112
        %v2030 = vpop.permute.xlu0 %2029
        %2031 = vrot.lane.b32.xlu0 %v603, 112
        %v2032 = vpop.permute.xlu0 %2031
        %v2041 = vmul.f32 %v1865, %v2018
        %v2042 = vmul.f32 %v1866, %v2020
        %v2043 = vmul.f32 %v1867, %v2022
        %v2044 = vmul.f32 %v1868, %v2024
        %v2045 = vmul.f32 %v1869, %v2026
        %v2046 = vmul.f32 %v1870, %v2028
        %v2047 = vmul.f32 %v1871, %v2030
        %v2048 = vmul.f32 %v1872, %v2032
        %2057 = vrot.lane.b32.xlu0 %v2041, 112
        %v2058 = vpop.permute.xlu0 %2057
        %2059 = vrot.lane.b32.xlu0 %v2042, 112
        %v2060 = vpop.permute.xlu0 %2059
        %2061 = vrot.lane.b32.xlu0 %v2043, 112
        %v2062 = vpop.permute.xlu0 %2061
        %2063 = vrot.lane.b32.xlu0 %v2044, 112
        %v2064 = vpop.permute.xlu0 %2063
        %2065 = vrot.lane.b32.xlu0 %v2045, 112
        %v2066 = vpop.permute.xlu0 %2065
        %2067 = vrot.lane.b32.xlu0 %v2046, 112
        %v2068 = vpop.permute.xlu0 %2067
        %2069 = vrot.lane.b32.xlu0 %v2047, 112
        %v2070 = vpop.permute.xlu0 %2069
        %2071 = vrot.lane.b32.xlu0 %v2048, 112
        %v2072 = vpop.permute.xlu0 %2071
        %v2081 = vadd.f32 %v2009, %v2058
        %v2082 = vadd.f32 %v2010, %v2060
        %v2083 = vadd.f32 %v2011, %v2062
        %v2084 = vadd.f32 %v2012, %v2064
        %v2085 = vadd.f32 %v2013, %v2066
        %v2086 = vadd.f32 %v2014, %v2068
        %v2087 = vadd.f32 %v2015, %v2070
        %v2088 = vadd.f32 %v2016, %v2072
        %2097 = vrot.lane.b32.xlu0 %v1969, 32
        %v2098 = vpop.permute.xlu0 %2097
        %2099 = vrot.lane.b32.xlu0 %v1970, 32
        %v2100 = vpop.permute.xlu0 %2099
        %2101 = vrot.lane.b32.xlu0 %v1971, 32
        %v2102 = vpop.permute.xlu0 %2101
        %2103 = vrot.lane.b32.xlu0 %v1972, 32
        %v2104 = vpop.permute.xlu0 %2103
        %2105 = vrot.lane.b32.xlu0 %v1973, 32
        %v2106 = vpop.permute.xlu0 %2105
        %2107 = vrot.lane.b32.xlu0 %v1974, 32
        %v2108 = vpop.permute.xlu0 %2107
        %2109 = vrot.lane.b32.xlu0 %v1975, 32
        %v2110 = vpop.permute.xlu0 %2109
        %2111 = vrot.lane.b32.xlu0 %v1976, 32
        %v2112 = vpop.permute.xlu0 %2111
        %2129 = vrot.lane.b32.xlu0 %v2081, 48
        %v2130 = vpop.permute.xlu0 %2129
        %2131 = vrot.lane.b32.xlu0 %v2082, 48
        %v2132 = vpop.permute.xlu0 %2131
        %2133 = vrot.lane.b32.xlu0 %v2083, 48
        %v2134 = vpop.permute.xlu0 %2133
        %2135 = vrot.lane.b32.xlu0 %v2084, 48
        %v2136 = vpop.permute.xlu0 %2135
        %2137 = vrot.lane.b32.xlu0 %v2085, 48
        %v2138 = vpop.permute.xlu0 %2137
        %2139 = vrot.lane.b32.xlu0 %v2086, 48
        %v2140 = vpop.permute.xlu0 %2139
        %2141 = vrot.lane.b32.xlu0 %v2087, 48
        %v2142 = vpop.permute.xlu0 %2141
        %2143 = vrot.lane.b32.xlu0 %v2088, 48
        %v2144 = vpop.permute.xlu0 %2143
        %v2153 = vsel %vm893, %v2098, %v2130
        %v2154 = vsel %vm893, %v2100, %v2132
        %v2155 = vsel %vm893, %v2102, %v2134
        %v2156 = vsel %vm893, %v2104, %v2136
        %v2157 = vsel %vm893, %v2106, %v2138
        %v2158 = vsel %vm893, %v2108, %v2140
        %v2159 = vsel %vm893, %v2110, %v2142
        %v2160 = vsel %vm893, %v2112, %v2144
        %v2161 = vmul.f32 %v2153, 0.17677669
        %v2162 = vmul.f32 %v2154, 0.17677669
        %v2163 = vmul.f32 %v2155, 0.17677669
        %v2164 = vmul.f32 %v2156, 0.17677669
        %v2165 = vmul.f32 %v2157, 0.17677669
        %v2166 = vmul.f32 %v2158, 0.17677669
        %v2167 = vmul.f32 %v2159, 0.17677669
        %v2168 = vmul.f32 %v2160, 0.17677669
        %v2169 = vpack.c.bf16 %v2162, %v2161
        %v2170 = vpack.c.bf16 %v2164, %v2163
        %v2171 = vpack.c.bf16 %v2166, %v2165
        %v2172 = vpack.c.bf16 %v2168, %v2167
        %v2177 = vunpack.c.l.b16 %v2169
        %v2178 = vunpack.c.h.b16 %v2169
        %v2179 = vunpack.c.l.b16 %v2170
        %v2180 = vunpack.c.h.b16 %v2170
        %v2181 = vunpack.c.l.b16 %v2171
        %v2182 = vunpack.c.h.b16 %v2171
        %v2183 = vunpack.c.l.b16 %v2172
        %v2184 = vunpack.c.h.b16 %v2172
        %v2185 = vpack.c.b16 %v2177, %v2177
        %v2186 = vpack.c.b16 %v2178, %v2178
        %v2187 = vpack.c.b16 %v2179, %v2179
        %v2188 = vpack.c.b16 %v2180, %v2180
        %v2189 = vpack.c.b16 %v2181, %v2181
        %v2190 = vpack.c.b16 %v2182, %v2182
        %v2191 = vpack.c.b16 %v2183, %v2183
        %v2192 = vpack.c.b16 %v2184, %v2184
        %s2201 = scalar_lea.vmem [#allocation5], 96
        %2202 = vst.msk [vmem:[%s2201] sm:$0xf] %vm942, %v2185
        %2203 = vst.msk [vmem:[%s2201 + $0x4] sm:$0xf] %vm942, %v2186
        %2204 = vst.msk [vmem:[%s2201 + $0x8] sm:$0xf] %vm942, %v2187
        %2205 = vst.msk [vmem:[%s2201 + $0xc] sm:$0xf] %vm942, %v2188
        %2206 = vst.msk [vmem:[%s2201 + $0x10] sm:$0xf] %vm942, %v2189
        %2207 = vst.msk [vmem:[%s2201 + $0x14] sm:$0xf] %vm942, %v2190
        %2208 = vst.msk [vmem:[%s2201 + $0x18] sm:$0xf] %vm942, %v2191
        %2209 = vst.msk [vmem:[%s2201 + $0x1c] sm:$0xf] %vm942, %v2192
      $region52: #{causal_self_attention.4} parent=47 // pred_fallthru
        _
      %s2210 = smul.u32 %s24, 64
      %s2211 = smul.u32 %s25, 64
      %s2212 = sadd.s32 %s2210, 63
      %p2213 = scmp.le.s32.totalorder %s2211, %s2212
      // Predicated region
      $region53: #{causal_self_attention.4} parent=47 // pred_check
        %p2214 = pneg %p2213
      $region54: #{causal_self_attention.4} parent=47 // pred_check_branch
        %2216 = sbr.rel (%p2214) target = $region56
      $region55: #{causal_self_attention.4} parent=47 // pred_region
        %v2217 = vld [vmem:[%s463] sm:$0xff]
        %v2218 = vld [vmem:[%s463 + $0x8] sm:$0xff]
        %v2219 = vld [vmem:[%s463 + $0x10] sm:$0xff]
        %v2220 = vld [vmem:[%s463 + $0x18] sm:$0xff]
        %v2221 = vld [vmem:[%s463 + $0x20] sm:$0xff]
        %v2222 = vld [vmem:[%s463 + $0x28] sm:$0xff]
        %v2223 = vld [vmem:[%s463 + $0x30] sm:$0xff]
        %v2224 = vld [vmem:[%s463 + $0x38] sm:$0xff]
        %v2225 = vld [vmem:[%s473] sm:$0xff]
        %v2226 = vld [vmem:[%s473 + $0x8] sm:$0xff]
        %v2227 = vld [vmem:[%s473 + $0x10] sm:$0xff]
        %v2228 = vld [vmem:[%s473 + $0x18] sm:$0xff]
        %v2229 = vld [vmem:[%s473 + $0x20] sm:$0xff]
        %v2230 = vld [vmem:[%s473 + $0x28] sm:$0xff]
        %v2231 = vld [vmem:[%s473 + $0x30] sm:$0xff]
        %v2232 = vld [vmem:[%s473 + $0x38] sm:$0xff]
        %v2233 = vld [vmem:[%s437] sm:$0xff]
        %v2234 = vld [vmem:[%s437 + $0x8] sm:$0xff]
        %v2235 = vld [vmem:[%s437 + $0x10] sm:$0xff]
        %v2236 = vld [vmem:[%s437 + $0x18] sm:$0xff]
        %v2237 = vld [vmem:[%s437 + $0x20] sm:$0xff]
        %v2238 = vld [vmem:[%s437 + $0x28] sm:$0xff]
        %v2239 = vld [vmem:[%s437 + $0x30] sm:$0xff]
        %v2240 = vld [vmem:[%s437 + $0x38] sm:$0xff]
        %v2241 = vld [vmem:[%s443] sm:$0xff]
        %v2242 = vld [vmem:[%s443 + $0x8] sm:$0xff]
        %v2243 = vld [vmem:[%s443 + $0x10] sm:$0xff]
        %v2244 = vld [vmem:[%s443 + $0x18] sm:$0xff]
        %v2245 = vld [vmem:[%s443 + $0x20] sm:$0xff]
        %v2246 = vld [vmem:[%s443 + $0x28] sm:$0xff]
        %v2247 = vld [vmem:[%s443 + $0x30] sm:$0xff]
        %v2248 = vld [vmem:[%s443 + $0x38] sm:$0xff]
        %v2249 = vlaneseq
        %v2250 = vshrl.u32 %v2249, 7
        %v2251 = vadd.s32 %v2250, 8
        %v2252 = vadd.s32 %v2250, 16
        %v2253 = vadd.s32 %v2250, 24
        %v2254 = vadd.s32 %v2250, 32
        %v2255 = vadd.s32 %v2250, 40
        %v2256 = vadd.s32 %v2250, 48
        %v2257 = vadd.s32 %v2250, 56
        %v2258 = vstv %s2210
        %v2259 = vadd.s32 %v2258, %v2250
        %v2260 = vadd.s32 %v2258, %v2251
        %v2261 = vadd.s32 %v2258, %v2252
        %v2262 = vadd.s32 %v2258, %v2253
        %v2263 = vadd.s32 %v2258, %v2254
        %v2264 = vadd.s32 %v2258, %v2255
        %v2265 = vadd.s32 %v2258, %v2256
        %v2266 = vadd.s32 %v2258, %v2257
        %v2267 = vlaneseq
        %v2268 = vand.u32 %v2267, 127
        %v2269 = vstv %s2211
        %v2270 = vadd.s32 %v2269, %v2268
        %vm2271 = vcmp.le.s32.totalorder %v2270, %v2259
        %vm2272 = vcmp.le.s32.totalorder %v2270, %v2260
        %vm2273 = vcmp.le.s32.totalorder %v2270, %v2261
        %vm2274 = vcmp.le.s32.totalorder %v2270, %v2262
        %vm2275 = vcmp.le.s32.totalorder %v2270, %v2263
        %vm2276 = vcmp.le.s32.totalorder %v2270, %v2264
        %vm2277 = vcmp.le.s32.totalorder %v2270, %v2265
        %vm2278 = vcmp.le.s32.totalorder %v2270, %v2266
        %v2279 = vmul.f32 %v2217, %v2217
        %v2280 = vmul.f32 %v2218, %v2218
        %v2281 = vmul.f32 %v2219, %v2219
        %v2282 = vmul.f32 %v2220, %v2220
        %v2283 = vmul.f32 %v2221, %v2221
        %v2284 = vmul.f32 %v2222, %v2222
        %v2285 = vmul.f32 %v2223, %v2223
        %v2286 = vmul.f32 %v2224, %v2224
        %vm2287 = vcmask 261120
        %v2288 = vsel %vm2287, %v2279, 0.0
        %2289 = vadd.xlane.f32.xlu0 %v2288
        %v2290 = vpop.xlane.xlu0 %2289
        %v2291 = vsel %vm2287, %v2280, 0.0
        %2292 = vadd.xlane.f32.xlu0 %v2291
        %v2293 = vpop.xlane.xlu0 %2292
        %v2294 = vsel %vm2287, %v2281, 0.0
        %2295 = vadd.xlane.f32.xlu0 %v2294
        %v2296 = vpop.xlane.xlu0 %2295
        %v2297 = vsel %vm2287, %v2282, 0.0
        %2298 = vadd.xlane.f32.xlu0 %v2297
        %v2299 = vpop.xlane.xlu0 %2298
        %v2300 = vsel %vm2287, %v2283, 0.0
        %2301 = vadd.xlane.f32.xlu0 %v2300
        %v2302 = vpop.xlane.xlu0 %2301
        %v2303 = vsel %vm2287, %v2284, 0.0
        %2304 = vadd.xlane.f32.xlu0 %v2303
        %v2305 = vpop.xlane.xlu0 %2304
        %v2306 = vsel %vm2287, %v2285, 0.0
        %2307 = vadd.xlane.f32.xlu0 %v2306
        %v2308 = vpop.xlane.xlu0 %2307
        %v2309 = vsel %vm2287, %v2286, 0.0
        %2310 = vadd.xlane.f32.xlu0 %v2309
        %v2311 = vpop.xlane.xlu0 %2310
        %v2312 = vrcp.pop 32.0
        %v2313 = vmul.f32 %v2290, %v2312
        %v2314 = vmul.f32 %v2293, %v2312
        %v2315 = vmul.f32 %v2296, %v2312
        %v2316 = vmul.f32 %v2299, %v2312
        %v2317 = vmul.f32 %v2302, %v2312
        %v2318 = vmul.f32 %v2305, %v2312
        %v2319 = vmul.f32 %v2308, %v2312
        %v2320 = vmul.f32 %v2311, %v2312
        %v2321 = vadd.f32 %v2313, 1.1920929e-07
        %v2322 = vadd.f32 %v2314, 1.1920929e-07
        %v2323 = vadd.f32 %v2315, 1.1920929e-07
        %v2324 = vadd.f32 %v2316, 1.1920929e-07
        %v2325 = vadd.f32 %v2317, 1.1920929e-07
        %v2326 = vadd.f32 %v2318, 1.1920929e-07
        %v2327 = vadd.f32 %v2319, 1.1920929e-07
        %v2328 = vadd.f32 %v2320, 1.1920929e-07
        %v2329 = vrsqrt.pop %v2321
        %v2330 = vrsqrt.pop %v2322
        %v2331 = vrsqrt.pop %v2323
        %v2332 = vrsqrt.pop %v2324
        %v2333 = vrsqrt.pop %v2325
        %v2334 = vrsqrt.pop %v2326
        %v2335 = vrsqrt.pop %v2327
        %v2336 = vrsqrt.pop %v2328
        %v2337 = vmul.f32 %v2217, %v2329
        %v2338 = vmul.f32 %v2218, %v2330
        %v2339 = vmul.f32 %v2219, %v2331
        %v2340 = vmul.f32 %v2220, %v2332
        %v2341 = vmul.f32 %v2221, %v2333
        %v2342 = vmul.f32 %v2222, %v2334
        %v2343 = vmul.f32 %v2223, %v2335
        %v2344 = vmul.f32 %v2224, %v2336
        %v2345 = vmul.f32 %v2337, %v2233
        %v2346 = vmul.f32 %v2338, %v2234
        %v2347 = vmul.f32 %v2339, %v2235
        %v2348 = vmul.f32 %v2340, %v2236
        %v2349 = vmul.f32 %v2341, %v2237
        %v2350 = vmul.f32 %v2342, %v2238
        %v2351 = vmul.f32 %v2343, %v2239
        %v2352 = vmul.f32 %v2344, %v2240
        %2361 = vrot.lane.b32.xlu0 %v2241, 16
        %v2362 = vpop.permute.xlu0 %2361
        %2363 = vrot.lane.b32.xlu0 %v2242, 16
        %v2364 = vpop.permute.xlu0 %2363
        %2365 = vrot.lane.b32.xlu0 %v2243, 16
        %v2366 = vpop.permute.xlu0 %2365
        %2367 = vrot.lane.b32.xlu0 %v2244, 16
        %v2368 = vpop.permute.xlu0 %2367
        %2369 = vrot.lane.b32.xlu0 %v2245, 16
        %v2370 = vpop.permute.xlu0 %2369
        %2371 = vrot.lane.b32.xlu0 %v2246, 16
        %v2372 = vpop.permute.xlu0 %2371
        %2373 = vrot.lane.b32.xlu0 %v2247, 16
        %v2374 = vpop.permute.xlu0 %2373
        %2375 = vrot.lane.b32.xlu0 %v2248, 16
        %v2376 = vpop.permute.xlu0 %2375
        %v2385 = vmul.f32 %v2337, %v2362
        %v2386 = vmul.f32 %v2338, %v2364
        %v2387 = vmul.f32 %v2339, %v2366
        %v2388 = vmul.f32 %v2340, %v2368
        %v2389 = vmul.f32 %v2341, %v2370
        %v2390 = vmul.f32 %v2342, %v2372
        %v2391 = vmul.f32 %v2343, %v2374
        %v2392 = vmul.f32 %v2344, %v2376
        %2401 = vrot.lane.b32.xlu0 %v2385, 112
        %v2402 = vpop.permute.xlu0 %2401
        %2403 = vrot.lane.b32.xlu0 %v2386, 112
        %v2404 = vpop.permute.xlu0 %2403
        %2405 = vrot.lane.b32.xlu0 %v2387, 112
        %v2406 = vpop.permute.xlu0 %2405
        %2407 = vrot.lane.b32.xlu0 %v2388, 112
        %v2408 = vpop.permute.xlu0 %2407
        %2409 = vrot.lane.b32.xlu0 %v2389, 112
        %v2410 = vpop.permute.xlu0 %2409
        %2411 = vrot.lane.b32.xlu0 %v2390, 112
        %v2412 = vpop.permute.xlu0 %2411
        %2413 = vrot.lane.b32.xlu0 %v2391, 112
        %v2414 = vpop.permute.xlu0 %2413
        %2415 = vrot.lane.b32.xlu0 %v2392, 112
        %v2416 = vpop.permute.xlu0 %2415
        %v2425 = vadd.f32 %v2345, %v2402
        %v2426 = vadd.f32 %v2346, %v2404
        %v2427 = vadd.f32 %v2347, %v2406
        %v2428 = vadd.f32 %v2348, %v2408
        %v2429 = vadd.f32 %v2349, %v2410
        %v2430 = vadd.f32 %v2350, %v2412
        %v2431 = vadd.f32 %v2351, %v2414
        %v2432 = vadd.f32 %v2352, %v2416
        %v2433 = vsub.f32 0.0, %v2337
        %v2434 = vsub.f32 0.0, %v2338
        %v2435 = vsub.f32 0.0, %v2339
        %v2436 = vsub.f32 0.0, %v2340
        %v2437 = vsub.f32 0.0, %v2341
        %v2438 = vsub.f32 0.0, %v2342
        %v2439 = vsub.f32 0.0, %v2343
        %v2440 = vsub.f32 0.0, %v2344
        %v2441 = vmul.f32 %v2433, %v2241
        %v2442 = vmul.f32 %v2434, %v2242
        %v2443 = vmul.f32 %v2435, %v2243
        %v2444 = vmul.f32 %v2436, %v2244
        %v2445 = vmul.f32 %v2437, %v2245
        %v2446 = vmul.f32 %v2438, %v2246
        %v2447 = vmul.f32 %v2439, %v2247
        %v2448 = vmul.f32 %v2440, %v2248
        %2457 = vrot.lane.b32.xlu0 %v2233, 16
        %v2458 = vpop.permute.xlu0 %2457
        %2459 = vrot.lane.b32.xlu0 %v2234, 16
        %v2460 = vpop.permute.xlu0 %2459
        %2461 = vrot.lane.b32.xlu0 %v2235, 16
        %v2462 = vpop.permute.xlu0 %2461
        %2463 = vrot.lane.b32.xlu0 %v2236, 16
        %v2464 = vpop.permute.xlu0 %2463
        %2465 = vrot.lane.b32.xlu0 %v2237, 16
        %v2466 = vpop.permute.xlu0 %2465
        %2467 = vrot.lane.b32.xlu0 %v2238, 16
        %v2468 = vpop.permute.xlu0 %2467
        %2469 = vrot.lane.b32.xlu0 %v2239, 16
        %v2470 = vpop.permute.xlu0 %2469
        %2471 = vrot.lane.b32.xlu0 %v2240, 16
        %v2472 = vpop.permute.xlu0 %2471
        %v2481 = vmul.f32 %v2337, %v2458
        %v2482 = vmul.f32 %v2338, %v2460
        %v2483 = vmul.f32 %v2339, %v2462
        %v2484 = vmul.f32 %v2340, %v2464
        %v2485 = vmul.f32 %v2341, %v2466
        %v2486 = vmul.f32 %v2342, %v2468
        %v2487 = vmul.f32 %v2343, %v2470
        %v2488 = vmul.f32 %v2344, %v2472
        %2497 = vrot.lane.b32.xlu0 %v2481, 112
        %v2498 = vpop.permute.xlu0 %2497
        %2499 = vrot.lane.b32.xlu0 %v2482, 112
        %v2500 = vpop.permute.xlu0 %2499
        %2501 = vrot.lane.b32.xlu0 %v2483, 112
        %v2502 = vpop.permute.xlu0 %2501
        %2503 = vrot.lane.b32.xlu0 %v2484, 112
        %v2504 = vpop.permute.xlu0 %2503
        %2505 = vrot.lane.b32.xlu0 %v2485, 112
        %v2506 = vpop.permute.xlu0 %2505
        %2507 = vrot.lane.b32.xlu0 %v2486, 112
        %v2508 = vpop.permute.xlu0 %2507
        %2509 = vrot.lane.b32.xlu0 %v2487, 112
        %v2510 = vpop.permute.xlu0 %2509
        %2511 = vrot.lane.b32.xlu0 %v2488, 112
        %v2512 = vpop.permute.xlu0 %2511
        %v2521 = vadd.f32 %v2441, %v2498
        %v2522 = vadd.f32 %v2442, %v2500
        %v2523 = vadd.f32 %v2443, %v2502
        %v2524 = vadd.f32 %v2444, %v2504
        %v2525 = vadd.f32 %v2445, %v2506
        %v2526 = vadd.f32 %v2446, %v2508
        %v2527 = vadd.f32 %v2447, %v2510
        %v2528 = vadd.f32 %v2448, %v2512
        %2537 = vrot.lane.b32.xlu0 %v2521, 16
        %v2538 = vpop.permute.xlu0 %2537
        %2539 = vrot.lane.b32.xlu0 %v2522, 16
        %v2540 = vpop.permute.xlu0 %2539
        %2541 = vrot.lane.b32.xlu0 %v2523, 16
        %v2542 = vpop.permute.xlu0 %2541
        %2543 = vrot.lane.b32.xlu0 %v2524, 16
        %v2544 = vpop.permute.xlu0 %2543
        %2545 = vrot.lane.b32.xlu0 %v2525, 16
        %v2546 = vpop.permute.xlu0 %2545
        %2547 = vrot.lane.b32.xlu0 %v2526, 16
        %v2548 = vpop.permute.xlu0 %2547
        %2549 = vrot.lane.b32.xlu0 %v2527, 16
        %v2550 = vpop.permute.xlu0 %2549
        %2551 = vrot.lane.b32.xlu0 %v2528, 16
        %v2552 = vpop.permute.xlu0 %2551
        %vm2561 = vcmask 130048
        %v2562 = vsel %vm2561, %v2425, %v2538
        %v2563 = vsel %vm2561, %v2426, %v2540
        %v2564 = vsel %vm2561, %v2427, %v2542
        %v2565 = vsel %vm2561, %v2428, %v2544
        %v2566 = vsel %vm2561, %v2429, %v2546
        %v2567 = vsel %vm2561, %v2430, %v2548
        %v2568 = vsel %vm2561, %v2431, %v2550
        %v2569 = vsel %vm2561, %v2432, %v2552
        %v2570 = vld [vmem:[#allocation5] sm:$0xf]
        %v2571 = vld [vmem:[#allocation5 + $0x4] sm:$0xf]
        %v2572 = vld [vmem:[#allocation5 + $0x8] sm:$0xf]
        %v2573 = vld [vmem:[#allocation5 + $0xc] sm:$0xf]
        %v2574 = vld [vmem:[#allocation5 + $0x10] sm:$0xf]
        %v2575 = vld [vmem:[#allocation5 + $0x14] sm:$0xf]
        %v2576 = vld [vmem:[#allocation5 + $0x18] sm:$0xf]
        %v2577 = vld [vmem:[#allocation5 + $0x1c] sm:$0xf]
        %v2578 = vpack.c.bf16 %v2563, %v2562
        %v2579 = vpack.c.bf16 %v2565, %v2564
        %v2580 = vpack.c.bf16 %v2567, %v2566
        %v2581 = vpack.c.bf16 %v2569, %v2568
        %v2590 = vunpack.c.l.b16 %v2570
        %v2591 = vunpack.c.l.b16 %v2571
        %v2592 = vunpack.c.l.b16 %v2572
        %v2593 = vunpack.c.l.b16 %v2573
        %v2594 = vunpack.c.l.b16 %v2574
        %v2595 = vunpack.c.l.b16 %v2575
        %v2596 = vunpack.c.l.b16 %v2576
        %v2597 = vunpack.c.l.b16 %v2577
        %v2598 = vpack.c.b16 %v2591, %v2590
        %v2599 = vpack.c.b16 %v2593, %v2592
        %v2600 = vpack.c.b16 %v2595, %v2594
        %v2601 = vpack.c.b16 %v2597, %v2596
        %v2603 = vsel %vm2287, %v2598, 0
        %v2606 = vsel %vm2287, %v2599, 0
        %v2609 = vsel %vm2287, %v2600, 0
        %v2612 = vsel %vm2287, %v2601, 0
        %v2615 = vsel %vm2287, %v2578, 0
        %v2618 = vsel %vm2287, %v2579, 0
        %v2621 = vsel %vm2287, %v2580, 0
        %v2624 = vsel %vm2287, %v2581, 0
        %2626 = vmatprep.subr.bf16.mxu0 0
        %2627 = vmatpush1.bf16.xpose.msra.mxu0 0
        %2628 = vmatprep.subr.bf16.mxu0 0
        %2629 = vmatpush1.bf16.xpose.msra.mxu0 0
        %2630 = vmatprep.subr.bf16.mxu0 0
        %2631 = vmatpush1.bf16.xpose.msra.mxu0 0
        %2632 = vmatprep.subr.bf16.mxu0 0
        %2633 = vmatpush1.bf16.xpose.msra.mxu0 0
        %2634 = vmatprep.subr.bf16.mxu0 0
        %2635 = vmatpush1.bf16.xpose.msra.mxu0 %v2624
        %2636 = vmatprep.subr.bf16.mxu0 0
        %2637 = vmatpush1.bf16.xpose.msra.mxu0 %v2621
        %2638 = vmatprep.subr.bf16.mxu0 0
        %2639 = vmatpush1.bf16.xpose.msra.mxu0 %v2618
        %2640 = vmatprep.subr.bf16.mxu0 0
        %2641 = vmatpush1.bf16.xpose.msra.mxu0 %v2615
        %2642 = vmatprep.subr.bf16.mxu0 0
        %2643 = vmatpush2.bf16.xpose.msra.mxu0 0
        %2644 = vmatprep.subr.bf16.mxu0 0
        %2645 = vmatpush2.bf16.xpose.msra.mxu0 0
        %2646 = vmatprep.subr.bf16.mxu0 0
        %2647 = vmatpush2.bf16.xpose.msra.mxu0 0
        %2648 = vmatprep.subr.bf16.mxu0 0
        %2649 = vmatpush2.bf16.xpose.msra.mxu0 0
        %2650 = vmatprep.subr.bf16.mxu0 0
        %2651 = vmatpush2.bf16.xpose.msra.mxu0 0
        %2652 = vmatprep.subr.bf16.mxu0 0
        %2653 = vmatpush2.bf16.xpose.msra.mxu0 0
        %2654 = vmatprep.subr.bf16.mxu0 0
        %2655 = vmatpush2.bf16.xpose.msra.mxu0 0
        %2656 = vmatprep.subr.bf16.mxu0 0
        %2657 = vmatpush2.bf16.xpose.msra.mxu0 0
        %2658 = vmatprep.mubr.bf16.mxu0 0
        %2659 = vmatmul.mubr.bf16.gmra.mxu0 %v2603
        %v2660 = vpop.f32.mrf.mxu0
        %v2661 = vadd.f32 0.0, %v2660
        %v2662 = vpop.f32.mrf.mxu0
        %v2663 = vpop.f32.mrf.mxu0
        %v2664 = vadd.f32 0.0, %v2663
        %v2665 = vpop.f32.mrf.mxu0
        %2666 = vmatprep.mubr.bf16.mxu0 0
        %2667 = vmatmul.mubr.bf16.gmra.mxu0 %v2606
        %v2668 = vpop.f32.mrf.mxu0
        %v2669 = vadd.f32 0.0, %v2668
        %v2670 = vpop.f32.mrf.mxu0
        %v2671 = vpop.f32.mrf.mxu0
        %v2672 = vadd.f32 0.0, %v2671
        %v2673 = vpop.f32.mrf.mxu0
        %2674 = vmatprep.mubr.bf16.mxu0 0
        %2675 = vmatmul.mubr.bf16.gmra.mxu0 %v2609
        %v2676 = vpop.f32.mrf.mxu0
        %v2677 = vadd.f32 0.0, %v2676
        %v2678 = vpop.f32.mrf.mxu0
        %v2679 = vpop.f32.mrf.mxu0
        %v2680 = vadd.f32 0.0, %v2679
        %v2681 = vpop.f32.mrf.mxu0
        %2682 = vmatprep.mubr.bf16.mxu0 0
        %2683 = vmatmul.mubr.bf16.gmra.mxu0 %v2612
        %v2684 = vpop.f32.mrf.mxu0
        %v2685 = vadd.f32 0.0, %v2684
        %v2686 = vpop.f32.mrf.mxu0
        %v2687 = vpop.f32.mrf.mxu0
        %v2688 = vadd.f32 0.0, %v2687
        %v2689 = vpop.f32.mrf.mxu0
        %2690 = vdwg.mxu0
        %v2691 = vsel %vm2271, %v2661, -1e+30
        %v2692 = vsel %vm2272, %v2664, -1e+30
        %v2693 = vsel %vm2273, %v2669, -1e+30
        %v2694 = vsel %vm2274, %v2672, -1e+30
        %v2695 = vsel %vm2275, %v2677, -1e+30
        %v2696 = vsel %vm2276, %v2680, -1e+30
        %v2697 = vsel %vm2277, %v2685, -1e+30
        %v2698 = vsel %vm2278, %v2688, -1e+30
        %v2699 = vld [vmem:[#allocation2] sm:$0xff]
        %v2700 = vld [vmem:[#allocation2 + $0x8] sm:$0xff]
        %v2701 = vld [vmem:[#allocation2 + $0x10] sm:$0xff]
        %v2702 = vld [vmem:[#allocation2 + $0x18] sm:$0xff]
        %v2703 = vld [vmem:[#allocation2 + $0x20] sm:$0xff]
        %v2704 = vld [vmem:[#allocation2 + $0x28] sm:$0xff]
        %v2705 = vld [vmem:[#allocation2 + $0x30] sm:$0xff]
        %v2706 = vld [vmem:[#allocation2 + $0x38] sm:$0xff]
        %vm2707 = vcmask 523264
        %v2708 = vsel %vm2707, %v2691, -inf
        %2709 = vmax.xlane.f32.xlu0 %v2708
        %v2710 = vpop.xlane.xlu0 %2709
        %v2711 = vsel %vm2707, %v2692, -inf
        %2712 = vmax.xlane.f32.xlu0 %v2711
        %v2713 = vpop.xlane.xlu0 %2712
        %v2714 = vsel %vm2707, %v2693, -inf
        %2715 = vmax.xlane.f32.xlu0 %v2714
        %v2716 = vpop.xlane.xlu0 %2715
        %v2717 = vsel %vm2707, %v2694, -inf
        %2718 = vmax.xlane.f32.xlu0 %v2717
        %v2719 = vpop.xlane.xlu0 %2718
        %v2720 = vsel %vm2707, %v2695, -inf
        %2721 = vmax.xlane.f32.xlu0 %v2720
        %v2722 = vpop.xlane.xlu0 %2721
        %v2723 = vsel %vm2707, %v2696, -inf
        %2724 = vmax.xlane.f32.xlu0 %v2723
        %v2725 = vpop.xlane.xlu0 %2724
        %v2726 = vsel %vm2707, %v2697, -inf
        %2727 = vmax.xlane.f32.xlu0 %v2726
        %v2728 = vpop.xlane.xlu0 %2727
        %v2729 = vsel %vm2707, %v2698, -inf
        %2730 = vmax.xlane.f32.xlu0 %v2729
        %v2731 = vpop.xlane.xlu0 %2730
        %v2732 = vmax.f32 %v2699, %v2710
        %v2733 = vmax.f32 %v2700, %v2713
        %v2734 = vmax.f32 %v2701, %v2716
        %v2735 = vmax.f32 %v2702, %v2719
        %v2736 = vmax.f32 %v2703, %v2722
        %v2737 = vmax.f32 %v2704, %v2725
        %v2738 = vmax.f32 %v2705, %v2728
        %v2739 = vmax.f32 %v2706, %v2731
        %v2740 = vsub.f32 %v2699, %v2732
        %v2741 = vsub.f32 %v2700, %v2733
        %v2742 = vsub.f32 %v2701, %v2734
        %v2743 = vsub.f32 %v2702, %v2735
        %v2744 = vsub.f32 %v2703, %v2736
        %v2745 = vsub.f32 %v2704, %v2737
        %v2746 = vsub.f32 %v2705, %v2738
        %v2747 = vsub.f32 %v2706, %v2739
        %v2748 = vmul.f32 %v2740, 1.442695
        %v2749 = vpow.pop %v2748
        %v2750 = vmul.f32 %v2741, 1.442695
        %v2751 = vpow.pop %v2750
        %v2752 = vmul.f32 %v2742, 1.442695
        %v2753 = vpow.pop %v2752
        %v2754 = vmul.f32 %v2743, 1.442695
        %v2755 = vpow.pop %v2754
        %v2756 = vmul.f32 %v2744, 1.442695
        %v2757 = vpow.pop %v2756
        %v2758 = vmul.f32 %v2745, 1.442695
        %v2759 = vpow.pop %v2758
        %v2760 = vmul.f32 %v2746, 1.442695
        %v2761 = vpow.pop %v2760
        %v2762 = vmul.f32 %v2747, 1.442695
        %v2763 = vpow.pop %v2762
        %2765 = vset.pattern.permute.xlu0 0
        %2766 = vperm.xlu0 %2765, %v2732
        %v2767 = vpop.permute.xlu0 %2766
        %2770 = vset.pattern.permute.xlu0 0
        %2771 = vperm.xlu0 %2770, %v2733
        %v2772 = vpop.permute.xlu0 %2771
        %2775 = vset.pattern.permute.xlu0 0
        %2776 = vperm.xlu0 %2775, %v2734
        %v2777 = vpop.permute.xlu0 %2776
        %2780 = vset.pattern.permute.xlu0 0
        %2781 = vperm.xlu0 %2780, %v2735
        %v2782 = vpop.permute.xlu0 %2781
        %2785 = vset.pattern.permute.xlu0 0
        %2786 = vperm.xlu0 %2785, %v2736
        %v2787 = vpop.permute.xlu0 %2786
        %2790 = vset.pattern.permute.xlu0 0
        %2791 = vperm.xlu0 %2790, %v2737
        %v2792 = vpop.permute.xlu0 %2791
        %2795 = vset.pattern.permute.xlu0 0
        %2796 = vperm.xlu0 %2795, %v2738
        %v2797 = vpop.permute.xlu0 %2796
        %2800 = vset.pattern.permute.xlu0 0
        %2801 = vperm.xlu0 %2800, %v2739
        %v2802 = vpop.permute.xlu0 %2801
        %v2804 = vsub.f32 %v2691, %v2767
        %v2805 = vsub.f32 %v2692, %v2772
        %v2806 = vsub.f32 %v2693, %v2777
        %v2807 = vsub.f32 %v2694, %v2782
        %v2808 = vsub.f32 %v2695, %v2787
        %v2809 = vsub.f32 %v2696, %v2792
        %v2810 = vsub.f32 %v2697, %v2797
        %v2811 = vsub.f32 %v2698, %v2802
        %v2812 = vmul.f32 %v2804, 1.442695
        %v2813 = vpow.pop %v2812
        %v2814 = vmul.f32 %v2805, 1.442695
        %v2815 = vpow.pop %v2814
        %v2816 = vmul.f32 %v2806, 1.442695
        %v2817 = vpow.pop %v2816
        %v2818 = vmul.f32 %v2807, 1.442695
        %v2819 = vpow.pop %v2818
        %v2820 = vmul.f32 %v2808, 1.442695
        %v2821 = vpow.pop %v2820
        %v2822 = vmul.f32 %v2809, 1.442695
        %v2823 = vpow.pop %v2822
        %v2824 = vmul.f32 %v2810, 1.442695
        %v2825 = vpow.pop %v2824
        %v2826 = vmul.f32 %v2811, 1.442695
        %v2827 = vpow.pop %v2826
        %v2828 = vld [vmem:[#allocation3] sm:$0xff]
        %v2829 = vld [vmem:[#allocation3 + $0x8] sm:$0xff]
        %v2830 = vld [vmem:[#allocation3 + $0x10] sm:$0xff]
        %v2831 = vld [vmem:[#allocation3 + $0x18] sm:$0xff]
        %v2832 = vld [vmem:[#allocation3 + $0x20] sm:$0xff]
        %v2833 = vld [vmem:[#allocation3 + $0x28] sm:$0xff]
        %v2834 = vld [vmem:[#allocation3 + $0x30] sm:$0xff]
        %v2835 = vld [vmem:[#allocation3 + $0x38] sm:$0xff]
        %v2836 = vmul.f32 %v2749, %v2828
        %v2837 = vmul.f32 %v2751, %v2829
        %v2838 = vmul.f32 %v2753, %v2830
        %v2839 = vmul.f32 %v2755, %v2831
        %v2840 = vmul.f32 %v2757, %v2832
        %v2841 = vmul.f32 %v2759, %v2833
        %v2842 = vmul.f32 %v2761, %v2834
        %v2843 = vmul.f32 %v2763, %v2835
        %v2844 = vsel %vm2707, %v2813, 0.0
        %2845 = vadd.xlane.f32.xlu0 %v2844
        %v2846 = vpop.xlane.xlu0 %2845
        %v2847 = vsel %vm2707, %v2815, 0.0
        %2848 = vadd.xlane.f32.xlu0 %v2847
        %v2849 = vpop.xlane.xlu0 %2848
        %v2850 = vsel %vm2707, %v2817, 0.0
        %2851 = vadd.xlane.f32.xlu0 %v2850
        %v2852 = vpop.xlane.xlu0 %2851
        %v2853 = vsel %vm2707, %v2819, 0.0
        %2854 = vadd.xlane.f32.xlu0 %v2853
        %v2855 = vpop.xlane.xlu0 %2854
        %v2856 = vsel %vm2707, %v2821, 0.0
        %2857 = vadd.xlane.f32.xlu0 %v2856
        %v2858 = vpop.xlane.xlu0 %2857
        %v2859 = vsel %vm2707, %v2823, 0.0
        %2860 = vadd.xlane.f32.xlu0 %v2859
        %v2861 = vpop.xlane.xlu0 %2860
        %v2862 = vsel %vm2707, %v2825, 0.0
        %2863 = vadd.xlane.f32.xlu0 %v2862
        %v2864 = vpop.xlane.xlu0 %2863
        %v2865 = vsel %vm2707, %v2827, 0.0
        %2866 = vadd.xlane.f32.xlu0 %v2865
        %v2867 = vpop.xlane.xlu0 %2866
        %v2868 = vadd.f32 %v2836, %v2846
        %v2869 = vadd.f32 %v2837, %v2849
        %v2870 = vadd.f32 %v2838, %v2852
        %v2871 = vadd.f32 %v2839, %v2855
        %v2872 = vadd.f32 %v2840, %v2858
        %v2873 = vadd.f32 %v2841, %v2861
        %v2874 = vadd.f32 %v2842, %v2864
        %v2875 = vadd.f32 %v2843, %v2867
        %vm2876 = vcmask 7168
        %2877 = vst.msk [vmem:[#allocation3] sm:$0xff] %vm2876, %v2868
        %2878 = vst.msk [vmem:[#allocation3 + $0x8] sm:$0xff] %vm2876, %v2869
        %2879 = vst.msk [vmem:[#allocation3 + $0x10] sm:$0xff] %vm2876, %v2870
        %2880 = vst.msk [vmem:[#allocation3 + $0x18] sm:$0xff] %vm2876, %v2871
        %2881 = vst.msk [vmem:[#allocation3 + $0x20] sm:$0xff] %vm2876, %v2872
        %2882 = vst.msk [vmem:[#allocation3 + $0x28] sm:$0xff] %vm2876, %v2873
        %2883 = vst.msk [vmem:[#allocation3 + $0x30] sm:$0xff] %vm2876, %v2874
        %2884 = vst.msk [vmem:[#allocation3 + $0x38] sm:$0xff] %vm2876, %v2875
        %v2885 = vld [vmem:[#allocation4] sm:$0xff]
        %v2886 = vld [vmem:[#allocation4 + $0x8] sm:$0xff]
        %v2887 = vld [vmem:[#allocation4 + $0x10] sm:$0xff]
        %v2888 = vld [vmem:[#allocation4 + $0x18] sm:$0xff]
        %v2889 = vld [vmem:[#allocation4 + $0x20] sm:$0xff]
        %v2890 = vld [vmem:[#allocation4 + $0x28] sm:$0xff]
        %v2891 = vld [vmem:[#allocation4 + $0x30] sm:$0xff]
        %v2892 = vld [vmem:[#allocation4 + $0x38] sm:$0xff]
        %2894 = vset.pattern.permute.xlu0 0
        %2895 = vperm.xlu0 %2894, %v2749
        %v2896 = vpop.permute.xlu0 %2895
        %2899 = vset.pattern.permute.xlu0 0
        %2900 = vperm.xlu0 %2899, %v2751
        %v2901 = vpop.permute.xlu0 %2900
        %2904 = vset.pattern.permute.xlu0 0
        %2905 = vperm.xlu0 %2904, %v2753
        %v2906 = vpop.permute.xlu0 %2905
        %2909 = vset.pattern.permute.xlu0 0
        %2910 = vperm.xlu0 %2909, %v2755
        %v2911 = vpop.permute.xlu0 %2910
        %2914 = vset.pattern.permute.xlu0 0
        %2915 = vperm.xlu0 %2914, %v2757
        %v2916 = vpop.permute.xlu0 %2915
        %2919 = vset.pattern.permute.xlu0 0
        %2920 = vperm.xlu0 %2919, %v2759
        %v2921 = vpop.permute.xlu0 %2920
        %2924 = vset.pattern.permute.xlu0 0
        %2925 = vperm.xlu0 %2924, %v2761
        %v2926 = vpop.permute.xlu0 %2925
        %2929 = vset.pattern.permute.xlu0 0
        %2930 = vperm.xlu0 %2929, %v2763
        %v2931 = vpop.permute.xlu0 %2930
        %v2933 = vmul.f32 %v2896, %v2885
        %v2934 = vmul.f32 %v2901, %v2886
        %v2935 = vmul.f32 %v2906, %v2887
        %v2936 = vmul.f32 %v2911, %v2888
        %v2937 = vmul.f32 %v2916, %v2889
        %v2938 = vmul.f32 %v2921, %v2890
        %v2939 = vmul.f32 %v2926, %v2891
        %v2940 = vmul.f32 %v2931, %v2892
        %v2941 = vpack.c.bf16 %v2815, %v2813
        %v2942 = vpack.c.bf16 %v2819, %v2817
        %v2943 = vpack.c.bf16 %v2823, %v2821
        %v2944 = vpack.c.bf16 %v2827, %v2825
        %v2945 = vpack.c.bf16 %v2226, %v2225
        %v2946 = vpack.c.bf16 %v2228, %v2227
        %v2947 = vpack.c.bf16 %v2230, %v2229
        %v2948 = vpack.c.bf16 %v2232, %v2231
        %v2950 = vsel %vm2707, %v2941, 0
        %v2953 = vsel %vm2707, %v2942, 0
        %v2956 = vsel %vm2707, %v2943, 0
        %v2959 = vsel %vm2707, %v2944, 0
        %2961 = vmatprep.subr.bf16.mxu0 0
        %2962 = vmatpush1.bf16.msra.mxu0 0
        %2963 = vmatprep.subr.bf16.mxu0 0
        %2964 = vmatpush1.bf16.msra.mxu0 0
        %2965 = vmatprep.subr.bf16.mxu0 0
        %2966 = vmatpush1.bf16.msra.mxu0 0
        %2967 = vmatprep.subr.bf16.mxu0 0
        %2968 = vmatpush1.bf16.msra.mxu0 0
        %2969 = vmatprep.subr.bf16.mxu0 0
        %2970 = vmatpush1.bf16.msra.mxu0 %v2948
        %2971 = vmatprep.subr.bf16.mxu0 0
        %2972 = vmatpush1.bf16.msra.mxu0 %v2947
        %2973 = vmatprep.subr.bf16.mxu0 0
        %2974 = vmatpush1.bf16.msra.mxu0 %v2946
        %2975 = vmatprep.subr.bf16.mxu0 0
        %2976 = vmatpush1.bf16.msra.mxu0 %v2945
        %2977 = vmatprep.subr.bf16.mxu0 0
        %2978 = vmatpush2.bf16.msra.mxu0 0
        %2979 = vmatprep.subr.bf16.mxu0 0
        %2980 = vmatpush2.bf16.msra.mxu0 0
        %2981 = vmatprep.subr.bf16.mxu0 0
        %2982 = vmatpush2.bf16.msra.mxu0 0
        %2983 = vmatprep.subr.bf16.mxu0 0
        %2984 = vmatpush2.bf16.msra.mxu0 0
        %2985 = vmatprep.subr.bf16.mxu0 0
        %2986 = vmatpush2.bf16.msra.mxu0 0
        %2987 = vmatprep.subr.bf16.mxu0 0
        %2988 = vmatpush2.bf16.msra.mxu0 0
        %2989 = vmatprep.subr.bf16.mxu0 0
        %2990 = vmatpush2.bf16.msra.mxu0 0
        %2991 = vmatprep.subr.bf16.mxu0 0
        %2992 = vmatpush2.bf16.msra.mxu0 0
        %2993 = vmatprep.mubr.bf16.mxu0 0
        %2994 = vmatmul.mubr.bf16.gmra.mxu0 %v2950
        %v2995 = vpop.f32.mrf.mxu0
        %v2996 = vadd.f32 0.0, %v2995
        %v2997 = vpop.f32.mrf.mxu0
        %v2998 = vpop.f32.mrf.mxu0
        %v2999 = vadd.f32 0.0, %v2998
        %v3000 = vpop.f32.mrf.mxu0
        %3001 = vmatprep.mubr.bf16.mxu0 0
        %3002 = vmatmul.mubr.bf16.gmra.mxu0 %v2953
        %v3003 = vpop.f32.mrf.mxu0
        %v3004 = vadd.f32 0.0, %v3003
        %v3005 = vpop.f32.mrf.mxu0
        %v3006 = vpop.f32.mrf.mxu0
        %v3007 = vadd.f32 0.0, %v3006
        %v3008 = vpop.f32.mrf.mxu0
        %3009 = vmatprep.mubr.bf16.mxu0 0
        %3010 = vmatmul.mubr.bf16.gmra.mxu0 %v2956
        %v3011 = vpop.f32.mrf.mxu0
        %v3012 = vadd.f32 0.0, %v3011
        %v3013 = vpop.f32.mrf.mxu0
        %v3014 = vpop.f32.mrf.mxu0
        %v3015 = vadd.f32 0.0, %v3014
        %v3016 = vpop.f32.mrf.mxu0
        %3017 = vmatprep.mubr.bf16.mxu0 0
        %3018 = vmatmul.mubr.bf16.gmra.mxu0 %v2959
        %v3019 = vpop.f32.mrf.mxu0
        %v3020 = vadd.f32 0.0, %v3019
        %v3021 = vpop.f32.mrf.mxu0
        %v3022 = vpop.f32.mrf.mxu0
        %v3023 = vadd.f32 0.0, %v3022
        %v3024 = vpop.f32.mrf.mxu0
        %3025 = vdwg.mxu0
        %v3026 = vadd.f32 %v2933, %v2996
        %v3027 = vadd.f32 %v2934, %v2999
        %v3028 = vadd.f32 %v2935, %v3004
        %v3029 = vadd.f32 %v2936, %v3007
        %v3030 = vadd.f32 %v2937, %v3012
        %v3031 = vadd.f32 %v2938, %v3015
        %v3032 = vadd.f32 %v2939, %v3020
        %v3033 = vadd.f32 %v2940, %v3023
        %3034 = vst.msk [vmem:[#allocation4] sm:$0xff] %vm2287, %v3026
        %3035 = vst.msk [vmem:[#allocation4 + $0x8] sm:$0xff] %vm2287, %v3027
        %3036 = vst.msk [vmem:[#allocation4 + $0x10] sm:$0xff] %vm2287, %v3028
        %3037 = vst.msk [vmem:[#allocation4 + $0x18] sm:$0xff] %vm2287, %v3029
        %3038 = vst.msk [vmem:[#allocation4 + $0x20] sm:$0xff] %vm2287, %v3030
        %3039 = vst.msk [vmem:[#allocation4 + $0x28] sm:$0xff] %vm2287, %v3031
        %3040 = vst.msk [vmem:[#allocation4 + $0x30] sm:$0xff] %vm2287, %v3032
        %3041 = vst.msk [vmem:[#allocation4 + $0x38] sm:$0xff] %vm2287, %v3033
        %3042 = vst.msk [vmem:[#allocation2] sm:$0xff] %vm2876, %v2732
        %3043 = vst.msk [vmem:[#allocation2 + $0x8] sm:$0xff] %vm2876, %v2733
        %3044 = vst.msk [vmem:[#allocation2 + $0x10] sm:$0xff] %vm2876, %v2734
        %3045 = vst.msk [vmem:[#allocation2 + $0x18] sm:$0xff] %vm2876, %v2735
        %3046 = vst.msk [vmem:[#allocation2 + $0x20] sm:$0xff] %vm2876, %v2736
        %3047 = vst.msk [vmem:[#allocation2 + $0x28] sm:$0xff] %vm2876, %v2737
        %3048 = vst.msk [vmem:[#allocation2 + $0x30] sm:$0xff] %vm2876, %v2738
        %3049 = vst.msk [vmem:[#allocation2 + $0x38] sm:$0xff] %vm2876, %v2739
        %3058 = vrot.lane.b32.xlu0 %v2279, 96
        %v3059 = vpop.permute.xlu0 %3058
        %3060 = vrot.lane.b32.xlu0 %v2280, 96
        %v3061 = vpop.permute.xlu0 %3060
        %3062 = vrot.lane.b32.xlu0 %v2281, 96
        %v3063 = vpop.permute.xlu0 %3062
        %3064 = vrot.lane.b32.xlu0 %v2282, 96
        %v3065 = vpop.permute.xlu0 %3064
        %3066 = vrot.lane.b32.xlu0 %v2283, 96
        %v3067 = vpop.permute.xlu0 %3066
        %3068 = vrot.lane.b32.xlu0 %v2284, 96
        %v3069 = vpop.permute.xlu0 %3068
        %3070 = vrot.lane.b32.xlu0 %v2285, 96
        %v3071 = vpop.permute.xlu0 %3070
        %3072 = vrot.lane.b32.xlu0 %v2286, 96
        %v3073 = vpop.permute.xlu0 %3072
        %v3082 = vsel %vm2287, %v3059, 0.0
        %3083 = vadd.xlane.f32.xlu0 %v3082
        %v3084 = vpop.xlane.xlu0 %3083
        %v3085 = vsel %vm2287, %v3061, 0.0
        %3086 = vadd.xlane.f32.xlu0 %v3085
        %v3087 = vpop.xlane.xlu0 %3086
        %v3088 = vsel %vm2287, %v3063, 0.0
        %3089 = vadd.xlane.f32.xlu0 %v3088
        %v3090 = vpop.xlane.xlu0 %3089
        %v3091 = vsel %vm2287, %v3065, 0.0
        %3092 = vadd.xlane.f32.xlu0 %v3091
        %v3093 = vpop.xlane.xlu0 %3092
        %v3094 = vsel %vm2287, %v3067, 0.0
        %3095 = vadd.xlane.f32.xlu0 %v3094
        %v3096 = vpop.xlane.xlu0 %3095
        %v3097 = vsel %vm2287, %v3069, 0.0
        %3098 = vadd.xlane.f32.xlu0 %v3097
        %v3099 = vpop.xlane.xlu0 %3098
        %v3100 = vsel %vm2287, %v3071, 0.0
        %3101 = vadd.xlane.f32.xlu0 %v3100
        %v3102 = vpop.xlane.xlu0 %3101
        %v3103 = vsel %vm2287, %v3073, 0.0
        %3104 = vadd.xlane.f32.xlu0 %v3103
        %v3105 = vpop.xlane.xlu0 %3104
        %v3106 = vmul.f32 %v3084, %v2312
        %v3107 = vmul.f32 %v3087, %v2312
        %v3108 = vmul.f32 %v3090, %v2312
        %v3109 = vmul.f32 %v3093, %v2312
        %v3110 = vmul.f32 %v3096, %v2312
        %v3111 = vmul.f32 %v3099, %v2312
        %v3112 = vmul.f32 %v3102, %v2312
        %v3113 = vmul.f32 %v3105, %v2312
        %v3114 = vadd.f32 %v3106, 1.1920929e-07
        %v3115 = vadd.f32 %v3107, 1.1920929e-07
        %v3116 = vadd.f32 %v3108, 1.1920929e-07
        %v3117 = vadd.f32 %v3109, 1.1920929e-07
        %v3118 = vadd.f32 %v3110, 1.1920929e-07
        %v3119 = vadd.f32 %v3111, 1.1920929e-07
        %v3120 = vadd.f32 %v3112, 1.1920929e-07
        %v3121 = vadd.f32 %v3113, 1.1920929e-07
        %v3122 = vrsqrt.pop %v3114
        %v3123 = vrsqrt.pop %v3115
        %v3124 = vrsqrt.pop %v3116
        %v3125 = vrsqrt.pop %v3117
        %v3126 = vrsqrt.pop %v3118
        %v3127 = vrsqrt.pop %v3119
        %v3128 = vrsqrt.pop %v3120
        %v3129 = vrsqrt.pop %v3121
        %v3130 = vmul.f32 %v2217, %v3122
        %v3131 = vmul.f32 %v2218, %v3123
        %v3132 = vmul.f32 %v2219, %v3124
        %v3133 = vmul.f32 %v2220, %v3125
        %v3134 = vmul.f32 %v2221, %v3126
        %v3135 = vmul.f32 %v2222, %v3127
        %v3136 = vmul.f32 %v2223, %v3128
        %v3137 = vmul.f32 %v2224, %v3129
        %3138 = vrot.lane.b32.xlu0 %v2233, 32
        %v3139 = vpop.permute.xlu0 %3138
        %3140 = vrot.lane.b32.xlu0 %v2234, 32
        %v3141 = vpop.permute.xlu0 %3140
        %3142 = vrot.lane.b32.xlu0 %v2235, 32
        %v3143 = vpop.permute.xlu0 %3142
        %3144 = vrot.lane.b32.xlu0 %v2236, 32
        %v3145 = vpop.permute.xlu0 %3144
        %3146 = vrot.lane.b32.xlu0 %v2237, 32
        %v3147 = vpop.permute.xlu0 %3146
        %3148 = vrot.lane.b32.xlu0 %v2238, 32
        %v3149 = vpop.permute.xlu0 %3148
        %3150 = vrot.lane.b32.xlu0 %v2239, 32
        %v3151 = vpop.permute.xlu0 %3150
        %3152 = vrot.lane.b32.xlu0 %v2240, 32
        %v3153 = vpop.permute.xlu0 %3152
        %v3162 = vmul.f32 %v3130, %v3139
        %v3163 = vmul.f32 %v3131, %v3141
        %v3164 = vmul.f32 %v3132, %v3143
        %v3165 = vmul.f32 %v3133, %v3145
        %v3166 = vmul.f32 %v3134, %v3147
        %v3167 = vmul.f32 %v3135, %v3149
        %v3168 = vmul.f32 %v3136, %v3151
        %v3169 = vmul.f32 %v3137, %v3153
        %3170 = vrot.lane.b32.xlu0 %v2241, 48
        %v3171 = vpop.permute.xlu0 %3170
        %3172 = vrot.lane.b32.xlu0 %v2242, 48
        %v3173 = vpop.permute.xlu0 %3172
        %3174 = vrot.lane.b32.xlu0 %v2243, 48
        %v3175 = vpop.permute.xlu0 %3174
        %3176 = vrot.lane.b32.xlu0 %v2244, 48
        %v3177 = vpop.permute.xlu0 %3176
        %3178 = vrot.lane.b32.xlu0 %v2245, 48
        %v3179 = vpop.permute.xlu0 %3178
        %3180 = vrot.lane.b32.xlu0 %v2246, 48
        %v3181 = vpop.permute.xlu0 %3180
        %3182 = vrot.lane.b32.xlu0 %v2247, 48
        %v3183 = vpop.permute.xlu0 %3182
        %3184 = vrot.lane.b32.xlu0 %v2248, 48
        %v3185 = vpop.permute.xlu0 %3184
        %v3194 = vmul.f32 %v3130, %v3171
        %v3195 = vmul.f32 %v3131, %v3173
        %v3196 = vmul.f32 %v3132, %v3175
        %v3197 = vmul.f32 %v3133, %v3177
        %v3198 = vmul.f32 %v3134, %v3179
        %v3199 = vmul.f32 %v3135, %v3181
        %v3200 = vmul.f32 %v3136, %v3183
        %v3201 = vmul.f32 %v3137, %v3185
        %3210 = vrot.lane.b32.xlu0 %v3194, 112
        %v3211 = vpop.permute.xlu0 %3210
        %3212 = vrot.lane.b32.xlu0 %v3195, 112
        %v3213 = vpop.permute.xlu0 %3212
        %3214 = vrot.lane.b32.xlu0 %v3196, 112
        %v3215 = vpop.permute.xlu0 %3214
        %3216 = vrot.lane.b32.xlu0 %v3197, 112
        %v3217 = vpop.permute.xlu0 %3216
        %3218 = vrot.lane.b32.xlu0 %v3198, 112
        %v3219 = vpop.permute.xlu0 %3218
        %3220 = vrot.lane.b32.xlu0 %v3199, 112
        %v3221 = vpop.permute.xlu0 %3220
        %3222 = vrot.lane.b32.xlu0 %v3200, 112
        %v3223 = vpop.permute.xlu0 %3222
        %3224 = vrot.lane.b32.xlu0 %v3201, 112
        %v3225 = vpop.permute.xlu0 %3224
        %v3234 = vadd.f32 %v3162, %v3211
        %v3235 = vadd.f32 %v3163, %v3213
        %v3236 = vadd.f32 %v3164, %v3215
        %v3237 = vadd.f32 %v3165, %v3217
        %v3238 = vadd.f32 %v3166, %v3219
        %v3239 = vadd.f32 %v3167, %v3221
        %v3240 = vadd.f32 %v3168, %v3223
        %v3241 = vadd.f32 %v3169, %v3225
        %v3242 = vsub.f32 0.0, %v3130
        %v3243 = vsub.f32 0.0, %v3131
        %v3244 = vsub.f32 0.0, %v3132
        %v3245 = vsub.f32 0.0, %v3133
        %v3246 = vsub.f32 0.0, %v3134
        %v3247 = vsub.f32 0.0, %v3135
        %v3248 = vsub.f32 0.0, %v3136
        %v3249 = vsub.f32 0.0, %v3137
        %3250 = vrot.lane.b32.xlu0 %v2241, 32
        %v3251 = vpop.permute.xlu0 %3250
        %3252 = vrot.lane.b32.xlu0 %v2242, 32
        %v3253 = vpop.permute.xlu0 %3252
        %3254 = vrot.lane.b32.xlu0 %v2243, 32
        %v3255 = vpop.permute.xlu0 %3254
        %3256 = vrot.lane.b32.xlu0 %v2244, 32
        %v3257 = vpop.permute.xlu0 %3256
        %3258 = vrot.lane.b32.xlu0 %v2245, 32
        %v3259 = vpop.permute.xlu0 %3258
        %3260 = vrot.lane.b32.xlu0 %v2246, 32
        %v3261 = vpop.permute.xlu0 %3260
        %3262 = vrot.lane.b32.xlu0 %v2247, 32
        %v3263 = vpop.permute.xlu0 %3262
        %3264 = vrot.lane.b32.xlu0 %v2248, 32
        %v3265 = vpop.permute.xlu0 %3264
        %v3274 = vmul.f32 %v3242, %v3251
        %v3275 = vmul.f32 %v3243, %v3253
        %v3276 = vmul.f32 %v3244, %v3255
        %v3277 = vmul.f32 %v3245, %v3257
        %v3278 = vmul.f32 %v3246, %v3259
        %v3279 = vmul.f32 %v3247, %v3261
        %v3280 = vmul.f32 %v3248, %v3263
        %v3281 = vmul.f32 %v3249, %v3265
        %3282 = vrot.lane.b32.xlu0 %v2233, 48
        %v3283 = vpop.permute.xlu0 %3282
        %3284 = vrot.lane.b32.xlu0 %v2234, 48
        %v3285 = vpop.permute.xlu0 %3284
        %3286 = vrot.lane.b32.xlu0 %v2235, 48
        %v3287 = vpop.permute.xlu0 %3286
        %3288 = vrot.lane.b32.xlu0 %v2236, 48
        %v3289 = vpop.permute.xlu0 %3288
        %3290 = vrot.lane.b32.xlu0 %v2237, 48
        %v3291 = vpop.permute.xlu0 %3290
        %3292 = vrot.lane.b32.xlu0 %v2238, 48
        %v3293 = vpop.permute.xlu0 %3292
        %3294 = vrot.lane.b32.xlu0 %v2239, 48
        %v3295 = vpop.permute.xlu0 %3294
        %3296 = vrot.lane.b32.xlu0 %v2240, 48
        %v3297 = vpop.permute.xlu0 %3296
        %v3306 = vmul.f32 %v3130, %v3283
        %v3307 = vmul.f32 %v3131, %v3285
        %v3308 = vmul.f32 %v3132, %v3287
        %v3309 = vmul.f32 %v3133, %v3289
        %v3310 = vmul.f32 %v3134, %v3291
        %v3311 = vmul.f32 %v3135, %v3293
        %v3312 = vmul.f32 %v3136, %v3295
        %v3313 = vmul.f32 %v3137, %v3297
        %3322 = vrot.lane.b32.xlu0 %v3306, 112
        %v3323 = vpop.permute.xlu0 %3322
        %3324 = vrot.lane.b32.xlu0 %v3307, 112
        %v3325 = vpop.permute.xlu0 %3324
        %3326 = vrot.lane.b32.xlu0 %v3308, 112
        %v3327 = vpop.permute.xlu0 %3326
        %3328 = vrot.lane.b32.xlu0 %v3309, 112
        %v3329 = vpop.permute.xlu0 %3328
        %3330 = vrot.lane.b32.xlu0 %v3310, 112
        %v3331 = vpop.permute.xlu0 %3330
        %3332 = vrot.lane.b32.xlu0 %v3311, 112
        %v3333 = vpop.permute.xlu0 %3332
        %3334 = vrot.lane.b32.xlu0 %v3312, 112
        %v3335 = vpop.permute.xlu0 %3334
        %3336 = vrot.lane.b32.xlu0 %v3313, 112
        %v3337 = vpop.permute.xlu0 %3336
        %v3346 = vadd.f32 %v3274, %v3323
        %v3347 = vadd.f32 %v3275, %v3325
        %v3348 = vadd.f32 %v3276, %v3327
        %v3349 = vadd.f32 %v3277, %v3329
        %v3350 = vadd.f32 %v3278, %v3331
        %v3351 = vadd.f32 %v3279, %v3333
        %v3352 = vadd.f32 %v3280, %v3335
        %v3353 = vadd.f32 %v3281, %v3337
        %3362 = vrot.lane.b32.xlu0 %v3234, 96
        %v3363 = vpop.permute.xlu0 %3362
        %3364 = vrot.lane.b32.xlu0 %v3235, 96
        %v3365 = vpop.permute.xlu0 %3364
        %3366 = vrot.lane.b32.xlu0 %v3236, 96
        %v3367 = vpop.permute.xlu0 %3366
        %3368 = vrot.lane.b32.xlu0 %v3237, 96
        %v3369 = vpop.permute.xlu0 %3368
        %3370 = vrot.lane.b32.xlu0 %v3238, 96
        %v3371 = vpop.permute.xlu0 %3370
        %3372 = vrot.lane.b32.xlu0 %v3239, 96
        %v3373 = vpop.permute.xlu0 %3372
        %3374 = vrot.lane.b32.xlu0 %v3240, 96
        %v3375 = vpop.permute.xlu0 %3374
        %3376 = vrot.lane.b32.xlu0 %v3241, 96
        %v3377 = vpop.permute.xlu0 %3376
        %3394 = vrot.lane.b32.xlu0 %v3346, 112
        %v3395 = vpop.permute.xlu0 %3394
        %3396 = vrot.lane.b32.xlu0 %v3347, 112
        %v3397 = vpop.permute.xlu0 %3396
        %3398 = vrot.lane.b32.xlu0 %v3348, 112
        %v3399 = vpop.permute.xlu0 %3398
        %3400 = vrot.lane.b32.xlu0 %v3349, 112
        %v3401 = vpop.permute.xlu0 %3400
        %3402 = vrot.lane.b32.xlu0 %v3350, 112
        %v3403 = vpop.permute.xlu0 %3402
        %3404 = vrot.lane.b32.xlu0 %v3351, 112
        %v3405 = vpop.permute.xlu0 %3404
        %3406 = vrot.lane.b32.xlu0 %v3352, 112
        %v3407 = vpop.permute.xlu0 %3406
        %3408 = vrot.lane.b32.xlu0 %v3353, 112
        %v3409 = vpop.permute.xlu0 %3408
        %v3418 = vsel %vm2561, %v3363, %v3395
        %v3419 = vsel %vm2561, %v3365, %v3397
        %v3420 = vsel %vm2561, %v3367, %v3399
        %v3421 = vsel %vm2561, %v3369, %v3401
        %v3422 = vsel %vm2561, %v3371, %v3403
        %v3423 = vsel %vm2561, %v3373, %v3405
        %v3424 = vsel %vm2561, %v3375, %v3407
        %v3425 = vsel %vm2561, %v3377, %v3409
        %s3426 = scalar_lea.vmem [#allocation5], 32
        %v3427 = vld [vmem:[%s3426] sm:$0xf]
        %v3428 = vld [vmem:[%s3426 + $0x4] sm:$0xf]
        %v3429 = vld [vmem:[%s3426 + $0x8] sm:$0xf]
        %v3430 = vld [vmem:[%s3426 + $0xc] sm:$0xf]
        %v3431 = vld [vmem:[%s3426 + $0x10] sm:$0xf]
        %v3432 = vld [vmem:[%s3426 + $0x14] sm:$0xf]
        %v3433 = vld [vmem:[%s3426 + $0x18] sm:$0xf]
        %v3434 = vld [vmem:[%s3426 + $0x1c] sm:$0xf]
        %v3435 = vpack.c.bf16 %v3419, %v3418
        %v3436 = vpack.c.bf16 %v3421, %v3420
        %v3437 = vpack.c.bf16 %v3423, %v3422
        %v3438 = vpack.c.bf16 %v3425, %v3424
        %v3447 = vunpack.c.l.b16 %v3427
        %v3448 = vunpack.c.l.b16 %v3428
        %v3449 = vunpack.c.l.b16 %v3429
        %v3450 = vunpack.c.l.b16 %v3430
        %v3451 = vunpack.c.l.b16 %v3431
        %v3452 = vunpack.c.l.b16 %v3432
        %v3453 = vunpack.c.l.b16 %v3433
        %v3454 = vunpack.c.l.b16 %v3434
        %v3455 = vpack.c.b16 %v3448, %v3447
        %v3456 = vpack.c.b16 %v3450, %v3449
        %v3457 = vpack.c.b16 %v3452, %v3451
        %v3458 = vpack.c.b16 %v3454, %v3453
        %v3460 = vsel %vm2287, %v3455, 0
        %v3463 = vsel %vm2287, %v3456, 0
        %v3466 = vsel %vm2287, %v3457, 0
        %v3469 = vsel %vm2287, %v3458, 0
        %v3472 = vsel %vm2287, %v3435, 0
        %v3475 = vsel %vm2287, %v3436, 0
        %v3478 = vsel %vm2287, %v3437, 0
        %v3481 = vsel %vm2287, %v3438, 0
        %3483 = vmatprep.subr.bf16.mxu0 0
        %3484 = vmatpush1.bf16.xpose.msra.mxu0 0
        %3485 = vmatprep.subr.bf16.mxu0 0
        %3486 = vmatpush1.bf16.xpose.msra.mxu0 0
        %3487 = vmatprep.subr.bf16.mxu0 0
        %3488 = vmatpush1.bf16.xpose.msra.mxu0 0
        %3489 = vmatprep.subr.bf16.mxu0 0
        %3490 = vmatpush1.bf16.xpose.msra.mxu0 0
        %3491 = vmatprep.subr.bf16.mxu0 0
        %3492 = vmatpush1.bf16.xpose.msra.mxu0 %v3481
        %3493 = vmatprep.subr.bf16.mxu0 0
        %3494 = vmatpush1.bf16.xpose.msra.mxu0 %v3478
        %3495 = vmatprep.subr.bf16.mxu0 0
        %3496 = vmatpush1.bf16.xpose.msra.mxu0 %v3475
        %3497 = vmatprep.subr.bf16.mxu0 0
        %3498 = vmatpush1.bf16.xpose.msra.mxu0 %v3472
        %3499 = vmatprep.subr.bf16.mxu0 0
        %3500 = vmatpush2.bf16.xpose.msra.mxu0 0
        %3501 = vmatprep.subr.bf16.mxu0 0
        %3502 = vmatpush2.bf16.xpose.msra.mxu0 0
        %3503 = vmatprep.subr.bf16.mxu0 0
        %3504 = vmatpush2.bf16.xpose.msra.mxu0 0
        %3505 = vmatprep.subr.bf16.mxu0 0
        %3506 = vmatpush2.bf16.xpose.msra.mxu0 0
        %3507 = vmatprep.subr.bf16.mxu0 0
        %3508 = vmatpush2.bf16.xpose.msra.mxu0 0
        %3509 = vmatprep.subr.bf16.mxu0 0
        %3510 = vmatpush2.bf16.xpose.msra.mxu0 0
        %3511 = vmatprep.subr.bf16.mxu0 0
        %3512 = vmatpush2.bf16.xpose.msra.mxu0 0
        %3513 = vmatprep.subr.bf16.mxu0 0
        %3514 = vmatpush2.bf16.xpose.msra.mxu0 0
        %3515 = vmatprep.mubr.bf16.mxu0 0
        %3516 = vmatmul.mubr.bf16.gmra.mxu0 %v3460
        %v3517 = vpop.f32.mrf.mxu0
        %v3518 = vadd.f32 0.0, %v3517
        %v3519 = vpop.f32.mrf.mxu0
        %v3520 = vpop.f32.mrf.mxu0
        %v3521 = vadd.f32 0.0, %v3520
        %v3522 = vpop.f32.mrf.mxu0
        %3523 = vmatprep.mubr.bf16.mxu0 0
        %3524 = vmatmul.mubr.bf16.gmra.mxu0 %v3463
        %v3525 = vpop.f32.mrf.mxu0
        %v3526 = vadd.f32 0.0, %v3525
        %v3527 = vpop.f32.mrf.mxu0
        %v3528 = vpop.f32.mrf.mxu0
        %v3529 = vadd.f32 0.0, %v3528
        %v3530 = vpop.f32.mrf.mxu0
        %3531 = vmatprep.mubr.bf16.mxu0 0
        %3532 = vmatmul.mubr.bf16.gmra.mxu0 %v3466
        %v3533 = vpop.f32.mrf.mxu0
        %v3534 = vadd.f32 0.0, %v3533
        %v3535 = vpop.f32.mrf.mxu0
        %v3536 = vpop.f32.mrf.mxu0
        %v3537 = vadd.f32 0.0, %v3536
        %v3538 = vpop.f32.mrf.mxu0
        %3539 = vmatprep.mubr.bf16.mxu0 0
        %3540 = vmatmul.mubr.bf16.gmra.mxu0 %v3469
        %v3541 = vpop.f32.mrf.mxu0
        %v3542 = vadd.f32 0.0, %v3541
        %v3543 = vpop.f32.mrf.mxu0
        %v3544 = vpop.f32.mrf.mxu0
        %v3545 = vadd.f32 0.0, %v3544
        %v3546 = vpop.f32.mrf.mxu0
        %3547 = vdwg.mxu0
        %v3548 = vsel %vm2271, %v3518, -1e+30
        %v3549 = vsel %vm2272, %v3521, -1e+30
        %v3550 = vsel %vm2273, %v3526, -1e+30
        %v3551 = vsel %vm2274, %v3529, -1e+30
        %v3552 = vsel %vm2275, %v3534, -1e+30
        %v3553 = vsel %vm2276, %v3537, -1e+30
        %v3554 = vsel %vm2277, %v3542, -1e+30
        %v3555 = vsel %vm2278, %v3545, -1e+30
        %s3556 = scalar_lea.vmem [#allocation2], 64
        %v3557 = vld [vmem:[%s3556] sm:$0xff]
        %v3558 = vld [vmem:[%s3556 + $0x8] sm:$0xff]
        %v3559 = vld [vmem:[%s3556 + $0x10] sm:$0xff]
        %v3560 = vld [vmem:[%s3556 + $0x18] sm:$0xff]
        %v3561 = vld [vmem:[%s3556 + $0x20] sm:$0xff]
        %v3562 = vld [vmem:[%s3556 + $0x28] sm:$0xff]
        %v3563 = vld [vmem:[%s3556 + $0x30] sm:$0xff]
        %v3564 = vld [vmem:[%s3556 + $0x38] sm:$0xff]
        %v3565 = vsel %vm2707, %v3548, -inf
        %3566 = vmax.xlane.f32.xlu0 %v3565
        %v3567 = vpop.xlane.xlu0 %3566
        %v3568 = vsel %vm2707, %v3549, -inf
        %3569 = vmax.xlane.f32.xlu0 %v3568
        %v3570 = vpop.xlane.xlu0 %3569
        %v3571 = vsel %vm2707, %v3550, -inf
        %3572 = vmax.xlane.f32.xlu0 %v3571
        %v3573 = vpop.xlane.xlu0 %3572
        %v3574 = vsel %vm2707, %v3551, -inf
        %3575 = vmax.xlane.f32.xlu0 %v3574
        %v3576 = vpop.xlane.xlu0 %3575
        %v3577 = vsel %vm2707, %v3552, -inf
        %3578 = vmax.xlane.f32.xlu0 %v3577
        %v3579 = vpop.xlane.xlu0 %3578
        %v3580 = vsel %vm2707, %v3553, -inf
        %3581 = vmax.xlane.f32.xlu0 %v3580
        %v3582 = vpop.xlane.xlu0 %3581
        %v3583 = vsel %vm2707, %v3554, -inf
        %3584 = vmax.xlane.f32.xlu0 %v3583
        %v3585 = vpop.xlane.xlu0 %3584
        %v3586 = vsel %vm2707, %v3555, -inf
        %3587 = vmax.xlane.f32.xlu0 %v3586
        %v3588 = vpop.xlane.xlu0 %3587
        %v3589 = vmax.f32 %v3557, %v3567
        %v3590 = vmax.f32 %v3558, %v3570
        %v3591 = vmax.f32 %v3559, %v3573
        %v3592 = vmax.f32 %v3560, %v3576
        %v3593 = vmax.f32 %v3561, %v3579
        %v3594 = vmax.f32 %v3562, %v3582
        %v3595 = vmax.f32 %v3563, %v3585
        %v3596 = vmax.f32 %v3564, %v3588
        %v3597 = vsub.f32 %v3557, %v3589
        %v3598 = vsub.f32 %v3558, %v3590
        %v3599 = vsub.f32 %v3559, %v3591
        %v3600 = vsub.f32 %v3560, %v3592
        %v3601 = vsub.f32 %v3561, %v3593
        %v3602 = vsub.f32 %v3562, %v3594
        %v3603 = vsub.f32 %v3563, %v3595
        %v3604 = vsub.f32 %v3564, %v3596
        %v3605 = vmul.f32 %v3597, 1.442695
        %v3606 = vpow.pop %v3605
        %v3607 = vmul.f32 %v3598, 1.442695
        %v3608 = vpow.pop %v3607
        %v3609 = vmul.f32 %v3599, 1.442695
        %v3610 = vpow.pop %v3609
        %v3611 = vmul.f32 %v3600, 1.442695
        %v3612 = vpow.pop %v3611
        %v3613 = vmul.f32 %v3601, 1.442695
        %v3614 = vpow.pop %v3613
        %v3615 = vmul.f32 %v3602, 1.442695
        %v3616 = vpow.pop %v3615
        %v3617 = vmul.f32 %v3603, 1.442695
        %v3618 = vpow.pop %v3617
        %v3619 = vmul.f32 %v3604, 1.442695
        %v3620 = vpow.pop %v3619
        %3622 = vset.pattern.permute.xlu0 0
        %3623 = vperm.xlu0 %3622, %v3589
        %v3624 = vpop.permute.xlu0 %3623
        %3627 = vset.pattern.permute.xlu0 0
        %3628 = vperm.xlu0 %3627, %v3590
        %v3629 = vpop.permute.xlu0 %3628
        %3632 = vset.pattern.permute.xlu0 0
        %3633 = vperm.xlu0 %3632, %v3591
        %v3634 = vpop.permute.xlu0 %3633
        %3637 = vset.pattern.permute.xlu0 0
        %3638 = vperm.xlu0 %3637, %v3592
        %v3639 = vpop.permute.xlu0 %3638
        %3642 = vset.pattern.permute.xlu0 0
        %3643 = vperm.xlu0 %3642, %v3593
        %v3644 = vpop.permute.xlu0 %3643
        %3647 = vset.pattern.permute.xlu0 0
        %3648 = vperm.xlu0 %3647, %v3594
        %v3649 = vpop.permute.xlu0 %3648
        %3652 = vset.pattern.permute.xlu0 0
        %3653 = vperm.xlu0 %3652, %v3595
        %v3654 = vpop.permute.xlu0 %3653
        %3657 = vset.pattern.permute.xlu0 0
        %3658 = vperm.xlu0 %3657, %v3596
        %v3659 = vpop.permute.xlu0 %3658
        %v3661 = vsub.f32 %v3548, %v3624
        %v3662 = vsub.f32 %v3549, %v3629
        %v3663 = vsub.f32 %v3550, %v3634
        %v3664 = vsub.f32 %v3551, %v3639
        %v3665 = vsub.f32 %v3552, %v3644
        %v3666 = vsub.f32 %v3553, %v3649
        %v3667 = vsub.f32 %v3554, %v3654
        %v3668 = vsub.f32 %v3555, %v3659
        %v3669 = vmul.f32 %v3661, 1.442695
        %v3670 = vpow.pop %v3669
        %v3671 = vmul.f32 %v3662, 1.442695
        %v3672 = vpow.pop %v3671
        %v3673 = vmul.f32 %v3663, 1.442695
        %v3674 = vpow.pop %v3673
        %v3675 = vmul.f32 %v3664, 1.442695
        %v3676 = vpow.pop %v3675
        %v3677 = vmul.f32 %v3665, 1.442695
        %v3678 = vpow.pop %v3677
        %v3679 = vmul.f32 %v3666, 1.442695
        %v3680 = vpow.pop %v3679
        %v3681 = vmul.f32 %v3667, 1.442695
        %v3682 = vpow.pop %v3681
        %v3683 = vmul.f32 %v3668, 1.442695
        %v3684 = vpow.pop %v3683
        %s3685 = scalar_lea.vmem [#allocation3], 64
        %v3686 = vld [vmem:[%s3685] sm:$0xff]
        %v3687 = vld [vmem:[%s3685 + $0x8] sm:$0xff]
        %v3688 = vld [vmem:[%s3685 + $0x10] sm:$0xff]
        %v3689 = vld [vmem:[%s3685 + $0x18] sm:$0xff]
        %v3690 = vld [vmem:[%s3685 + $0x20] sm:$0xff]
        %v3691 = vld [vmem:[%s3685 + $0x28] sm:$0xff]
        %v3692 = vld [vmem:[%s3685 + $0x30] sm:$0xff]
        %v3693 = vld [vmem:[%s3685 + $0x38] sm:$0xff]
        %v3694 = vmul.f32 %v3606, %v3686
        %v3695 = vmul.f32 %v3608, %v3687
        %v3696 = vmul.f32 %v3610, %v3688
        %v3697 = vmul.f32 %v3612, %v3689
        %v3698 = vmul.f32 %v3614, %v3690
        %v3699 = vmul.f32 %v3616, %v3691
        %v3700 = vmul.f32 %v3618, %v3692
        %v3701 = vmul.f32 %v3620, %v3693
        %v3702 = vsel %vm2707, %v3670, 0.0
        %3703 = vadd.xlane.f32.xlu0 %v3702
        %v3704 = vpop.xlane.xlu0 %3703
        %v3705 = vsel %vm2707, %v3672, 0.0
        %3706 = vadd.xlane.f32.xlu0 %v3705
        %v3707 = vpop.xlane.xlu0 %3706
        %v3708 = vsel %vm2707, %v3674, 0.0
        %3709 = vadd.xlane.f32.xlu0 %v3708
        %v3710 = vpop.xlane.xlu0 %3709
        %v3711 = vsel %vm2707, %v3676, 0.0
        %3712 = vadd.xlane.f32.xlu0 %v3711
        %v3713 = vpop.xlane.xlu0 %3712
        %v3714 = vsel %vm2707, %v3678, 0.0
        %3715 = vadd.xlane.f32.xlu0 %v3714
        %v3716 = vpop.xlane.xlu0 %3715
        %v3717 = vsel %vm2707, %v3680, 0.0
        %3718 = vadd.xlane.f32.xlu0 %v3717
        %v3719 = vpop.xlane.xlu0 %3718
        %v3720 = vsel %vm2707, %v3682, 0.0
        %3721 = vadd.xlane.f32.xlu0 %v3720
        %v3722 = vpop.xlane.xlu0 %3721
        %v3723 = vsel %vm2707, %v3684, 0.0
        %3724 = vadd.xlane.f32.xlu0 %v3723
        %v3725 = vpop.xlane.xlu0 %3724
        %v3726 = vadd.f32 %v3694, %v3704
        %v3727 = vadd.f32 %v3695, %v3707
        %v3728 = vadd.f32 %v3696, %v3710
        %v3729 = vadd.f32 %v3697, %v3713
        %v3730 = vadd.f32 %v3698, %v3716
        %v3731 = vadd.f32 %v3699, %v3719
        %v3732 = vadd.f32 %v3700, %v3722
        %v3733 = vadd.f32 %v3701, %v3725
        %3734 = vst.msk [vmem:[%s3685] sm:$0xff] %vm2876, %v3726
        %3735 = vst.msk [vmem:[%s3685 + $0x8] sm:$0xff] %vm2876, %v3727
        %3736 = vst.msk [vmem:[%s3685 + $0x10] sm:$0xff] %vm2876, %v3728
        %3737 = vst.msk [vmem:[%s3685 + $0x18] sm:$0xff] %vm2876, %v3729
        %3738 = vst.msk [vmem:[%s3685 + $0x20] sm:$0xff] %vm2876, %v3730
        %3739 = vst.msk [vmem:[%s3685 + $0x28] sm:$0xff] %vm2876, %v3731
        %3740 = vst.msk [vmem:[%s3685 + $0x30] sm:$0xff] %vm2876, %v3732
        %3741 = vst.msk [vmem:[%s3685 + $0x38] sm:$0xff] %vm2876, %v3733
        %s3742 = scalar_lea.vmem [#allocation4], 64
        %v3743 = vld [vmem:[%s3742] sm:$0xff]
        %v3744 = vld [vmem:[%s3742 + $0x8] sm:$0xff]
        %v3745 = vld [vmem:[%s3742 + $0x10] sm:$0xff]
        %v3746 = vld [vmem:[%s3742 + $0x18] sm:$0xff]
        %v3747 = vld [vmem:[%s3742 + $0x20] sm:$0xff]
        %v3748 = vld [vmem:[%s3742 + $0x28] sm:$0xff]
        %v3749 = vld [vmem:[%s3742 + $0x30] sm:$0xff]
        %v3750 = vld [vmem:[%s3742 + $0x38] sm:$0xff]
        %3752 = vset.pattern.permute.xlu0 0
        %3753 = vperm.xlu0 %3752, %v3606
        %v3754 = vpop.permute.xlu0 %3753
        %3757 = vset.pattern.permute.xlu0 0
        %3758 = vperm.xlu0 %3757, %v3608
        %v3759 = vpop.permute.xlu0 %3758
        %3762 = vset.pattern.permute.xlu0 0
        %3763 = vperm.xlu0 %3762, %v3610
        %v3764 = vpop.permute.xlu0 %3763
        %3767 = vset.pattern.permute.xlu0 0
        %3768 = vperm.xlu0 %3767, %v3612
        %v3769 = vpop.permute.xlu0 %3768
        %3772 = vset.pattern.permute.xlu0 0
        %3773 = vperm.xlu0 %3772, %v3614
        %v3774 = vpop.permute.xlu0 %3773
        %3777 = vset.pattern.permute.xlu0 0
        %3778 = vperm.xlu0 %3777, %v3616
        %v3779 = vpop.permute.xlu0 %3778
        %3782 = vset.pattern.permute.xlu0 0
        %3783 = vperm.xlu0 %3782, %v3618
        %v3784 = vpop.permute.xlu0 %3783
        %3787 = vset.pattern.permute.xlu0 0
        %3788 = vperm.xlu0 %3787, %v3620
        %v3789 = vpop.permute.xlu0 %3788
        %v3791 = vmul.f32 %v3754, %v3743
        %v3792 = vmul.f32 %v3759, %v3744
        %v3793 = vmul.f32 %v3764, %v3745
        %v3794 = vmul.f32 %v3769, %v3746
        %v3795 = vmul.f32 %v3774, %v3747
        %v3796 = vmul.f32 %v3779, %v3748
        %v3797 = vmul.f32 %v3784, %v3749
        %v3798 = vmul.f32 %v3789, %v3750
        %v3799 = vpack.c.bf16 %v3672, %v3670
        %v3800 = vpack.c.bf16 %v3676, %v3674
        %v3801 = vpack.c.bf16 %v3680, %v3678
        %v3802 = vpack.c.bf16 %v3684, %v3682
        %3807 = vrot.lane.b32.xlu0 %v2945, 96
        %v3808 = vpop.permute.xlu0 %3807
        %3809 = vrot.lane.b32.xlu0 %v2946, 96
        %v3810 = vpop.permute.xlu0 %3809
        %3811 = vrot.lane.b32.xlu0 %v2947, 96
        %v3812 = vpop.permute.xlu0 %3811
        %3813 = vrot.lane.b32.xlu0 %v2948, 96
        %v3814 = vpop.permute.xlu0 %3813
        %v3820 = vsel %vm2707, %v3799, 0
        %v3823 = vsel %vm2707, %v3800, 0
        %v3826 = vsel %vm2707, %v3801, 0
        %v3829 = vsel %vm2707, %v3802, 0
        %3831 = vmatprep.subr.bf16.mxu0 0
        %3832 = vmatpush1.bf16.msra.mxu0 0
        %3833 = vmatprep.subr.bf16.mxu0 0
        %3834 = vmatpush1.bf16.msra.mxu0 0
        %3835 = vmatprep.subr.bf16.mxu0 0
        %3836 = vmatpush1.bf16.msra.mxu0 0
        %3837 = vmatprep.subr.bf16.mxu0 0
        %3838 = vmatpush1.bf16.msra.mxu0 0
        %3839 = vmatprep.subr.bf16.mxu0 0
        %3840 = vmatpush1.bf16.msra.mxu0 %v3814
        %3841 = vmatprep.subr.bf16.mxu0 0
        %3842 = vmatpush1.bf16.msra.mxu0 %v3812
        %3843 = vmatprep.subr.bf16.mxu0 0
        %3844 = vmatpush1.bf16.msra.mxu0 %v3810
        %3845 = vmatprep.subr.bf16.mxu0 0
        %3846 = vmatpush1.bf16.msra.mxu0 %v3808
        %3847 = vmatprep.subr.bf16.mxu0 0
        %3848 = vmatpush2.bf16.msra.mxu0 0
        %3849 = vmatprep.subr.bf16.mxu0 0
        %3850 = vmatpush2.bf16.msra.mxu0 0
        %3851 = vmatprep.subr.bf16.mxu0 0
        %3852 = vmatpush2.bf16.msra.mxu0 0
        %3853 = vmatprep.subr.bf16.mxu0 0
        %3854 = vmatpush2.bf16.msra.mxu0 0
        %3855 = vmatprep.subr.bf16.mxu0 0
        %3856 = vmatpush2.bf16.msra.mxu0 0
        %3857 = vmatprep.subr.bf16.mxu0 0
        %3858 = vmatpush2.bf16.msra.mxu0 0
        %3859 = vmatprep.subr.bf16.mxu0 0
        %3860 = vmatpush2.bf16.msra.mxu0 0
        %3861 = vmatprep.subr.bf16.mxu0 0
        %3862 = vmatpush2.bf16.msra.mxu0 0
        %3863 = vmatprep.mubr.bf16.mxu0 0
        %3864 = vmatmul.mubr.bf16.gmra.mxu0 %v3820
        %v3865 = vpop.f32.mrf.mxu0
        %v3866 = vadd.f32 0.0, %v3865
        %v3867 = vpop.f32.mrf.mxu0
        %v3868 = vpop.f32.mrf.mxu0
        %v3869 = vadd.f32 0.0, %v3868
        %v3870 = vpop.f32.mrf.mxu0
        %3871 = vmatprep.mubr.bf16.mxu0 0
        %3872 = vmatmul.mubr.bf16.gmra.mxu0 %v3823
        %v3873 = vpop.f32.mrf.mxu0
        %v3874 = vadd.f32 0.0, %v3873
        %v3875 = vpop.f32.mrf.mxu0
        %v3876 = vpop.f32.mrf.mxu0
        %v3877 = vadd.f32 0.0, %v3876
        %v3878 = vpop.f32.mrf.mxu0
        %3879 = vmatprep.mubr.bf16.mxu0 0
        %3880 = vmatmul.mubr.bf16.gmra.mxu0 %v3826
        %v3881 = vpop.f32.mrf.mxu0
        %v3882 = vadd.f32 0.0, %v3881
        %v3883 = vpop.f32.mrf.mxu0
        %v3884 = vpop.f32.mrf.mxu0
        %v3885 = vadd.f32 0.0, %v3884
        %v3886 = vpop.f32.mrf.mxu0
        %3887 = vmatprep.mubr.bf16.mxu0 0
        %3888 = vmatmul.mubr.bf16.gmra.mxu0 %v3829
        %v3889 = vpop.f32.mrf.mxu0
        %v3890 = vadd.f32 0.0, %v3889
        %v3891 = vpop.f32.mrf.mxu0
        %v3892 = vpop.f32.mrf.mxu0
        %v3893 = vadd.f32 0.0, %v3892
        %v3894 = vpop.f32.mrf.mxu0
        %3895 = vdwg.mxu0
        %v3896 = vadd.f32 %v3791, %v3866
        %v3897 = vadd.f32 %v3792, %v3869
        %v3898 = vadd.f32 %v3793, %v3874
        %v3899 = vadd.f32 %v3794, %v3877
        %v3900 = vadd.f32 %v3795, %v3882
        %v3901 = vadd.f32 %v3796, %v3885
        %v3902 = vadd.f32 %v3797, %v3890
        %v3903 = vadd.f32 %v3798, %v3893
        %3904 = vst.msk [vmem:[%s3742] sm:$0xff] %vm2287, %v3896
        %3905 = vst.msk [vmem:[%s3742 + $0x8] sm:$0xff] %vm2287, %v3897
        %3906 = vst.msk [vmem:[%s3742 + $0x10] sm:$0xff] %vm2287, %v3898
        %3907 = vst.msk [vmem:[%s3742 + $0x18] sm:$0xff] %vm2287, %v3899
        %3908 = vst.msk [vmem:[%s3742 + $0x20] sm:$0xff] %vm2287, %v3900
        %3909 = vst.msk [vmem:[%s3742 + $0x28] sm:$0xff] %vm2287, %v3901
        %3910 = vst.msk [vmem:[%s3742 + $0x30] sm:$0xff] %vm2287, %v3902
        %3911 = vst.msk [vmem:[%s3742 + $0x38] sm:$0xff] %vm2287, %v3903
        %3912 = vst.msk [vmem:[%s3556] sm:$0xff] %vm2876, %v3589
        %3913 = vst.msk [vmem:[%s3556 + $0x8] sm:$0xff] %vm2876, %v3590
        %3914 = vst.msk [vmem:[%s3556 + $0x10] sm:$0xff] %vm2876, %v3591
        %3915 = vst.msk [vmem:[%s3556 + $0x18] sm:$0xff] %vm2876, %v3592
        %3916 = vst.msk [vmem:[%s3556 + $0x20] sm:$0xff] %vm2876, %v3593
        %3917 = vst.msk [vmem:[%s3556 + $0x28] sm:$0xff] %vm2876, %v3594
        %3918 = vst.msk [vmem:[%s3556 + $0x30] sm:$0xff] %vm2876, %v3595
        %3919 = vst.msk [vmem:[%s3556 + $0x38] sm:$0xff] %vm2876, %v3596
        %3920 = vrot.lane.b32.xlu0 %v2279, 64
        %v3921 = vpop.permute.xlu0 %3920
        %3922 = vrot.lane.b32.xlu0 %v2280, 64
        %v3923 = vpop.permute.xlu0 %3922
        %3924 = vrot.lane.b32.xlu0 %v2281, 64
        %v3925 = vpop.permute.xlu0 %3924
        %3926 = vrot.lane.b32.xlu0 %v2282, 64
        %v3927 = vpop.permute.xlu0 %3926
        %3928 = vrot.lane.b32.xlu0 %v2283, 64
        %v3929 = vpop.permute.xlu0 %3928
        %3930 = vrot.lane.b32.xlu0 %v2284, 64
        %v3931 = vpop.permute.xlu0 %3930
        %3932 = vrot.lane.b32.xlu0 %v2285, 64
        %v3933 = vpop.permute.xlu0 %3932
        %3934 = vrot.lane.b32.xlu0 %v2286, 64
        %v3935 = vpop.permute.xlu0 %3934
        %v3944 = vsel %vm2287, %v3921, 0.0
        %3945 = vadd.xlane.f32.xlu0 %v3944
        %v3946 = vpop.xlane.xlu0 %3945
        %v3947 = vsel %vm2287, %v3923, 0.0
        %3948 = vadd.xlane.f32.xlu0 %v3947
        %v3949 = vpop.xlane.xlu0 %3948
        %v3950 = vsel %vm2287, %v3925, 0.0
        %3951 = vadd.xlane.f32.xlu0 %v3950
        %v3952 = vpop.xlane.xlu0 %3951
        %v3953 = vsel %vm2287, %v3927, 0.0
        %3954 = vadd.xlane.f32.xlu0 %v3953
        %v3955 = vpop.xlane.xlu0 %3954
        %v3956 = vsel %vm2287, %v3929, 0.0
        %3957 = vadd.xlane.f32.xlu0 %v3956
        %v3958 = vpop.xlane.xlu0 %3957
        %v3959 = vsel %vm2287, %v3931, 0.0
        %3960 = vadd.xlane.f32.xlu0 %v3959
        %v3961 = vpop.xlane.xlu0 %3960
        %v3962 = vsel %vm2287, %v3933, 0.0
        %3963 = vadd.xlane.f32.xlu0 %v3962
        %v3964 = vpop.xlane.xlu0 %3963
        %v3965 = vsel %vm2287, %v3935, 0.0
        %3966 = vadd.xlane.f32.xlu0 %v3965
        %v3967 = vpop.xlane.xlu0 %3966
        %v3968 = vmul.f32 %v3946, %v2312
        %v3969 = vmul.f32 %v3949, %v2312
        %v3970 = vmul.f32 %v3952, %v2312
        %v3971 = vmul.f32 %v3955, %v2312
        %v3972 = vmul.f32 %v3958, %v2312
        %v3973 = vmul.f32 %v3961, %v2312
        %v3974 = vmul.f32 %v3964, %v2312
        %v3975 = vmul.f32 %v3967, %v2312
        %v3976 = vadd.f32 %v3968, 1.1920929e-07
        %v3977 = vadd.f32 %v3969, 1.1920929e-07
        %v3978 = vadd.f32 %v3970, 1.1920929e-07
        %v3979 = vadd.f32 %v3971, 1.1920929e-07
        %v3980 = vadd.f32 %v3972, 1.1920929e-07
        %v3981 = vadd.f32 %v3973, 1.1920929e-07
        %v3982 = vadd.f32 %v3974, 1.1920929e-07
        %v3983 = vadd.f32 %v3975, 1.1920929e-07
        %v3984 = vrsqrt.pop %v3976
        %v3985 = vrsqrt.pop %v3977
        %v3986 = vrsqrt.pop %v3978
        %v3987 = vrsqrt.pop %v3979
        %v3988 = vrsqrt.pop %v3980
        %v3989 = vrsqrt.pop %v3981
        %v3990 = vrsqrt.pop %v3982
        %v3991 = vrsqrt.pop %v3983
        %v3992 = vmul.f32 %v2217, %v3984
        %v3993 = vmul.f32 %v2218, %v3985
        %v3994 = vmul.f32 %v2219, %v3986
        %v3995 = vmul.f32 %v2220, %v3987
        %v3996 = vmul.f32 %v2221, %v3988
        %v3997 = vmul.f32 %v2222, %v3989
        %v3998 = vmul.f32 %v2223, %v3990
        %v3999 = vmul.f32 %v2224, %v3991
        %4000 = vrot.lane.b32.xlu0 %v2233, 64
        %v4001 = vpop.permute.xlu0 %4000
        %4002 = vrot.lane.b32.xlu0 %v2234, 64
        %v4003 = vpop.permute.xlu0 %4002
        %4004 = vrot.lane.b32.xlu0 %v2235, 64
        %v4005 = vpop.permute.xlu0 %4004
        %4006 = vrot.lane.b32.xlu0 %v2236, 64
        %v4007 = vpop.permute.xlu0 %4006
        %4008 = vrot.lane.b32.xlu0 %v2237, 64
        %v4009 = vpop.permute.xlu0 %4008
        %4010 = vrot.lane.b32.xlu0 %v2238, 64
        %v4011 = vpop.permute.xlu0 %4010
        %4012 = vrot.lane.b32.xlu0 %v2239, 64
        %v4013 = vpop.permute.xlu0 %4012
        %4014 = vrot.lane.b32.xlu0 %v2240, 64
        %v4015 = vpop.permute.xlu0 %4014
        %v4024 = vmul.f32 %v3992, %v4001
        %v4025 = vmul.f32 %v3993, %v4003
        %v4026 = vmul.f32 %v3994, %v4005
        %v4027 = vmul.f32 %v3995, %v4007
        %v4028 = vmul.f32 %v3996, %v4009
        %v4029 = vmul.f32 %v3997, %v4011
        %v4030 = vmul.f32 %v3998, %v4013
        %v4031 = vmul.f32 %v3999, %v4015
        %4032 = vrot.lane.b32.xlu0 %v2241, 80
        %v4033 = vpop.permute.xlu0 %4032
        %4034 = vrot.lane.b32.xlu0 %v2242, 80
        %v4035 = vpop.permute.xlu0 %4034
        %4036 = vrot.lane.b32.xlu0 %v2243, 80
        %v4037 = vpop.permute.xlu0 %4036
        %4038 = vrot.lane.b32.xlu0 %v2244, 80
        %v4039 = vpop.permute.xlu0 %4038
        %4040 = vrot.lane.b32.xlu0 %v2245, 80
        %v4041 = vpop.permute.xlu0 %4040
        %4042 = vrot.lane.b32.xlu0 %v2246, 80
        %v4043 = vpop.permute.xlu0 %4042
        %4044 = vrot.lane.b32.xlu0 %v2247, 80
        %v4045 = vpop.permute.xlu0 %4044
        %4046 = vrot.lane.b32.xlu0 %v2248, 80
        %v4047 = vpop.permute.xlu0 %4046
        %v4056 = vmul.f32 %v3992, %v4033
        %v4057 = vmul.f32 %v3993, %v4035
        %v4058 = vmul.f32 %v3994, %v4037
        %v4059 = vmul.f32 %v3995, %v4039
        %v4060 = vmul.f32 %v3996, %v4041
        %v4061 = vmul.f32 %v3997, %v4043
        %v4062 = vmul.f32 %v3998, %v4045
        %v4063 = vmul.f32 %v3999, %v4047
        %4072 = vrot.lane.b32.xlu0 %v4056, 112
        %v4073 = vpop.permute.xlu0 %4072
        %4074 = vrot.lane.b32.xlu0 %v4057, 112
        %v4075 = vpop.permute.xlu0 %4074
        %4076 = vrot.lane.b32.xlu0 %v4058, 112
        %v4077 = vpop.permute.xlu0 %4076
        %4078 = vrot.lane.b32.xlu0 %v4059, 112
        %v4079 = vpop.permute.xlu0 %4078
        %4080 = vrot.lane.b32.xlu0 %v4060, 112
        %v4081 = vpop.permute.xlu0 %4080
        %4082 = vrot.lane.b32.xlu0 %v4061, 112
        %v4083 = vpop.permute.xlu0 %4082
        %4084 = vrot.lane.b32.xlu0 %v4062, 112
        %v4085 = vpop.permute.xlu0 %4084
        %4086 = vrot.lane.b32.xlu0 %v4063, 112
        %v4087 = vpop.permute.xlu0 %4086
        %v4096 = vadd.f32 %v4024, %v4073
        %v4097 = vadd.f32 %v4025, %v4075
        %v4098 = vadd.f32 %v4026, %v4077
        %v4099 = vadd.f32 %v4027, %v4079
        %v4100 = vadd.f32 %v4028, %v4081
        %v4101 = vadd.f32 %v4029, %v4083
        %v4102 = vadd.f32 %v4030, %v4085
        %v4103 = vadd.f32 %v4031, %v4087
        %v4104 = vsub.f32 0.0, %v3992
        %v4105 = vsub.f32 0.0, %v3993
        %v4106 = vsub.f32 0.0, %v3994
        %v4107 = vsub.f32 0.0, %v3995
        %v4108 = vsub.f32 0.0, %v3996
        %v4109 = vsub.f32 0.0, %v3997
        %v4110 = vsub.f32 0.0, %v3998
        %v4111 = vsub.f32 0.0, %v3999
        %4112 = vrot.lane.b32.xlu0 %v2241, 64
        %v4113 = vpop.permute.xlu0 %4112
        %4114 = vrot.lane.b32.xlu0 %v2242, 64
        %v4115 = vpop.permute.xlu0 %4114
        %4116 = vrot.lane.b32.xlu0 %v2243, 64
        %v4117 = vpop.permute.xlu0 %4116
        %4118 = vrot.lane.b32.xlu0 %v2244, 64
        %v4119 = vpop.permute.xlu0 %4118
        %4120 = vrot.lane.b32.xlu0 %v2245, 64
        %v4121 = vpop.permute.xlu0 %4120
        %4122 = vrot.lane.b32.xlu0 %v2246, 64
        %v4123 = vpop.permute.xlu0 %4122
        %4124 = vrot.lane.b32.xlu0 %v2247, 64
        %v4125 = vpop.permute.xlu0 %4124
        %4126 = vrot.lane.b32.xlu0 %v2248, 64
        %v4127 = vpop.permute.xlu0 %4126
        %v4136 = vmul.f32 %v4104, %v4113
        %v4137 = vmul.f32 %v4105, %v4115
        %v4138 = vmul.f32 %v4106, %v4117
        %v4139 = vmul.f32 %v4107, %v4119
        %v4140 = vmul.f32 %v4108, %v4121
        %v4141 = vmul.f32 %v4109, %v4123
        %v4142 = vmul.f32 %v4110, %v4125
        %v4143 = vmul.f32 %v4111, %v4127
        %4144 = vrot.lane.b32.xlu0 %v2233, 80
        %v4145 = vpop.permute.xlu0 %4144
        %4146 = vrot.lane.b32.xlu0 %v2234, 80
        %v4147 = vpop.permute.xlu0 %4146
        %4148 = vrot.lane.b32.xlu0 %v2235, 80
        %v4149 = vpop.permute.xlu0 %4148
        %4150 = vrot.lane.b32.xlu0 %v2236, 80
        %v4151 = vpop.permute.xlu0 %4150
        %4152 = vrot.lane.b32.xlu0 %v2237, 80
        %v4153 = vpop.permute.xlu0 %4152
        %4154 = vrot.lane.b32.xlu0 %v2238, 80
        %v4155 = vpop.permute.xlu0 %4154
        %4156 = vrot.lane.b32.xlu0 %v2239, 80
        %v4157 = vpop.permute.xlu0 %4156
        %4158 = vrot.lane.b32.xlu0 %v2240, 80
        %v4159 = vpop.permute.xlu0 %4158
        %v4168 = vmul.f32 %v3992, %v4145
        %v4169 = vmul.f32 %v3993, %v4147
        %v4170 = vmul.f32 %v3994, %v4149
        %v4171 = vmul.f32 %v3995, %v4151
        %v4172 = vmul.f32 %v3996, %v4153
        %v4173 = vmul.f32 %v3997, %v4155
        %v4174 = vmul.f32 %v3998, %v4157
        %v4175 = vmul.f32 %v3999, %v4159
        %4184 = vrot.lane.b32.xlu0 %v4168, 112
        %v4185 = vpop.permute.xlu0 %4184
        %4186 = vrot.lane.b32.xlu0 %v4169, 112
        %v4187 = vpop.permute.xlu0 %4186
        %4188 = vrot.lane.b32.xlu0 %v4170, 112
        %v4189 = vpop.permute.xlu0 %4188
        %4190 = vrot.lane.b32.xlu0 %v4171, 112
        %v4191 = vpop.permute.xlu0 %4190
        %4192 = vrot.lane.b32.xlu0 %v4172, 112
        %v4193 = vpop.permute.xlu0 %4192
        %4194 = vrot.lane.b32.xlu0 %v4173, 112
        %v4195 = vpop.permute.xlu0 %4194
        %4196 = vrot.lane.b32.xlu0 %v4174, 112
        %v4197 = vpop.permute.xlu0 %4196
        %4198 = vrot.lane.b32.xlu0 %v4175, 112
        %v4199 = vpop.permute.xlu0 %4198
        %v4208 = vadd.f32 %v4136, %v4185
        %v4209 = vadd.f32 %v4137, %v4187
        %v4210 = vadd.f32 %v4138, %v4189
        %v4211 = vadd.f32 %v4139, %v4191
        %v4212 = vadd.f32 %v4140, %v4193
        %v4213 = vadd.f32 %v4141, %v4195
        %v4214 = vadd.f32 %v4142, %v4197
        %v4215 = vadd.f32 %v4143, %v4199
        %4224 = vrot.lane.b32.xlu0 %v4096, 64
        %v4225 = vpop.permute.xlu0 %4224
        %4226 = vrot.lane.b32.xlu0 %v4097, 64
        %v4227 = vpop.permute.xlu0 %4226
        %4228 = vrot.lane.b32.xlu0 %v4098, 64
        %v4229 = vpop.permute.xlu0 %4228
        %4230 = vrot.lane.b32.xlu0 %v4099, 64
        %v4231 = vpop.permute.xlu0 %4230
        %4232 = vrot.lane.b32.xlu0 %v4100, 64
        %v4233 = vpop.permute.xlu0 %4232
        %4234 = vrot.lane.b32.xlu0 %v4101, 64
        %v4235 = vpop.permute.xlu0 %4234
        %4236 = vrot.lane.b32.xlu0 %v4102, 64
        %v4237 = vpop.permute.xlu0 %4236
        %4238 = vrot.lane.b32.xlu0 %v4103, 64
        %v4239 = vpop.permute.xlu0 %4238
        %4256 = vrot.lane.b32.xlu0 %v4208, 80
        %v4257 = vpop.permute.xlu0 %4256
        %4258 = vrot.lane.b32.xlu0 %v4209, 80
        %v4259 = vpop.permute.xlu0 %4258
        %4260 = vrot.lane.b32.xlu0 %v4210, 80
        %v4261 = vpop.permute.xlu0 %4260
        %4262 = vrot.lane.b32.xlu0 %v4211, 80
        %v4263 = vpop.permute.xlu0 %4262
        %4264 = vrot.lane.b32.xlu0 %v4212, 80
        %v4265 = vpop.permute.xlu0 %4264
        %4266 = vrot.lane.b32.xlu0 %v4213, 80
        %v4267 = vpop.permute.xlu0 %4266
        %4268 = vrot.lane.b32.xlu0 %v4214, 80
        %v4269 = vpop.permute.xlu0 %4268
        %4270 = vrot.lane.b32.xlu0 %v4215, 80
        %v4271 = vpop.permute.xlu0 %4270
        %v4280 = vsel %vm2561, %v4225, %v4257
        %v4281 = vsel %vm2561, %v4227, %v4259
        %v4282 = vsel %vm2561, %v4229, %v4261
        %v4283 = vsel %vm2561, %v4231, %v4263
        %v4284 = vsel %vm2561, %v4233, %v4265
        %v4285 = vsel %vm2561, %v4235, %v4267
        %v4286 = vsel %vm2561, %v4237, %v4269
        %v4287 = vsel %vm2561, %v4239, %v4271
        %s4288 = scalar_lea.vmem [#allocation5], 64
        %v4289 = vld [vmem:[%s4288] sm:$0xf]
        %v4290 = vld [vmem:[%s4288 + $0x4] sm:$0xf]
        %v4291 = vld [vmem:[%s4288 + $0x8] sm:$0xf]
        %v4292 = vld [vmem:[%s4288 + $0xc] sm:$0xf]
        %v4293 = vld [vmem:[%s4288 + $0x10] sm:$0xf]
        %v4294 = vld [vmem:[%s4288 + $0x14] sm:$0xf]
        %v4295 = vld [vmem:[%s4288 + $0x18] sm:$0xf]
        %v4296 = vld [vmem:[%s4288 + $0x1c] sm:$0xf]
        %v4297 = vpack.c.bf16 %v4281, %v4280
        %v4298 = vpack.c.bf16 %v4283, %v4282
        %v4299 = vpack.c.bf16 %v4285, %v4284
        %v4300 = vpack.c.bf16 %v4287, %v4286
        %v4309 = vunpack.c.l.b16 %v4289
        %v4310 = vunpack.c.l.b16 %v4290
        %v4311 = vunpack.c.l.b16 %v4291
        %v4312 = vunpack.c.l.b16 %v4292
        %v4313 = vunpack.c.l.b16 %v4293
        %v4314 = vunpack.c.l.b16 %v4294
        %v4315 = vunpack.c.l.b16 %v4295
        %v4316 = vunpack.c.l.b16 %v4296
        %v4317 = vpack.c.b16 %v4310, %v4309
        %v4318 = vpack.c.b16 %v4312, %v4311
        %v4319 = vpack.c.b16 %v4314, %v4313
        %v4320 = vpack.c.b16 %v4316, %v4315
        %v4322 = vsel %vm2287, %v4317, 0
        %v4325 = vsel %vm2287, %v4318, 0
        %v4328 = vsel %vm2287, %v4319, 0
        %v4331 = vsel %vm2287, %v4320, 0
        %v4334 = vsel %vm2287, %v4297, 0
        %v4337 = vsel %vm2287, %v4298, 0
        %v4340 = vsel %vm2287, %v4299, 0
        %v4343 = vsel %vm2287, %v4300, 0
        %4345 = vmatprep.subr.bf16.mxu0 0
        %4346 = vmatpush1.bf16.xpose.msra.mxu0 0
        %4347 = vmatprep.subr.bf16.mxu0 0
        %4348 = vmatpush1.bf16.xpose.msra.mxu0 0
        %4349 = vmatprep.subr.bf16.mxu0 0
        %4350 = vmatpush1.bf16.xpose.msra.mxu0 0
        %4351 = vmatprep.subr.bf16.mxu0 0
        %4352 = vmatpush1.bf16.xpose.msra.mxu0 0
        %4353 = vmatprep.subr.bf16.mxu0 0
        %4354 = vmatpush1.bf16.xpose.msra.mxu0 %v4343
        %4355 = vmatprep.subr.bf16.mxu0 0
        %4356 = vmatpush1.bf16.xpose.msra.mxu0 %v4340
        %4357 = vmatprep.subr.bf16.mxu0 0
        %4358 = vmatpush1.bf16.xpose.msra.mxu0 %v4337
        %4359 = vmatprep.subr.bf16.mxu0 0
        %4360 = vmatpush1.bf16.xpose.msra.mxu0 %v4334
        %4361 = vmatprep.subr.bf16.mxu0 0
        %4362 = vmatpush2.bf16.xpose.msra.mxu0 0
        %4363 = vmatprep.subr.bf16.mxu0 0
        %4364 = vmatpush2.bf16.xpose.msra.mxu0 0
        %4365 = vmatprep.subr.bf16.mxu0 0
        %4366 = vmatpush2.bf16.xpose.msra.mxu0 0
        %4367 = vmatprep.subr.bf16.mxu0 0
        %4368 = vmatpush2.bf16.xpose.msra.mxu0 0
        %4369 = vmatprep.subr.bf16.mxu0 0
        %4370 = vmatpush2.bf16.xpose.msra.mxu0 0
        %4371 = vmatprep.subr.bf16.mxu0 0
        %4372 = vmatpush2.bf16.xpose.msra.mxu0 0
        %4373 = vmatprep.subr.bf16.mxu0 0
        %4374 = vmatpush2.bf16.xpose.msra.mxu0 0
        %4375 = vmatprep.subr.bf16.mxu0 0
        %4376 = vmatpush2.bf16.xpose.msra.mxu0 0
        %4377 = vmatprep.mubr.bf16.mxu0 0
        %4378 = vmatmul.mubr.bf16.gmra.mxu0 %v4322
        %v4379 = vpop.f32.mrf.mxu0
        %v4380 = vadd.f32 0.0, %v4379
        %v4381 = vpop.f32.mrf.mxu0
        %v4382 = vpop.f32.mrf.mxu0
        %v4383 = vadd.f32 0.0, %v4382
        %v4384 = vpop.f32.mrf.mxu0
        %4385 = vmatprep.mubr.bf16.mxu0 0
        %4386 = vmatmul.mubr.bf16.gmra.mxu0 %v4325
        %v4387 = vpop.f32.mrf.mxu0
        %v4388 = vadd.f32 0.0, %v4387
        %v4389 = vpop.f32.mrf.mxu0
        %v4390 = vpop.f32.mrf.mxu0
        %v4391 = vadd.f32 0.0, %v4390
        %v4392 = vpop.f32.mrf.mxu0
        %4393 = vmatprep.mubr.bf16.mxu0 0
        %4394 = vmatmul.mubr.bf16.gmra.mxu0 %v4328
        %v4395 = vpop.f32.mrf.mxu0
        %v4396 = vadd.f32 0.0, %v4395
        %v4397 = vpop.f32.mrf.mxu0
        %v4398 = vpop.f32.mrf.mxu0
        %v4399 = vadd.f32 0.0, %v4398
        %v4400 = vpop.f32.mrf.mxu0
        %4401 = vmatprep.mubr.bf16.mxu0 0
        %4402 = vmatmul.mubr.bf16.gmra.mxu0 %v4331
        %v4403 = vpop.f32.mrf.mxu0
        %v4404 = vadd.f32 0.0, %v4403
        %v4405 = vpop.f32.mrf.mxu0
        %v4406 = vpop.f32.mrf.mxu0
        %v4407 = vadd.f32 0.0, %v4406
        %v4408 = vpop.f32.mrf.mxu0
        %4409 = vdwg.mxu0
        %v4410 = vsel %vm2271, %v4380, -1e+30
        %v4411 = vsel %vm2272, %v4383, -1e+30
        %v4412 = vsel %vm2273, %v4388, -1e+30
        %v4413 = vsel %vm2274, %v4391, -1e+30
        %v4414 = vsel %vm2275, %v4396, -1e+30
        %v4415 = vsel %vm2276, %v4399, -1e+30
        %v4416 = vsel %vm2277, %v4404, -1e+30
        %v4417 = vsel %vm2278, %v4407, -1e+30
        %s4418 = scalar_lea.vmem [#allocation2], 128
        %v4419 = vld [vmem:[%s4418] sm:$0xff]
        %v4420 = vld [vmem:[%s4418 + $0x8] sm:$0xff]
        %v4421 = vld [vmem:[%s4418 + $0x10] sm:$0xff]
        %v4422 = vld [vmem:[%s4418 + $0x18] sm:$0xff]
        %v4423 = vld [vmem:[%s4418 + $0x20] sm:$0xff]
        %v4424 = vld [vmem:[%s4418 + $0x28] sm:$0xff]
        %v4425 = vld [vmem:[%s4418 + $0x30] sm:$0xff]
        %v4426 = vld [vmem:[%s4418 + $0x38] sm:$0xff]
        %v4427 = vsel %vm2707, %v4410, -inf
        %4428 = vmax.xlane.f32.xlu0 %v4427
        %v4429 = vpop.xlane.xlu0 %4428
        %v4430 = vsel %vm2707, %v4411, -inf
        %4431 = vmax.xlane.f32.xlu0 %v4430
        %v4432 = vpop.xlane.xlu0 %4431
        %v4433 = vsel %vm2707, %v4412, -inf
        %4434 = vmax.xlane.f32.xlu0 %v4433
        %v4435 = vpop.xlane.xlu0 %4434
        %v4436 = vsel %vm2707, %v4413, -inf
        %4437 = vmax.xlane.f32.xlu0 %v4436
        %v4438 = vpop.xlane.xlu0 %4437
        %v4439 = vsel %vm2707, %v4414, -inf
        %4440 = vmax.xlane.f32.xlu0 %v4439
        %v4441 = vpop.xlane.xlu0 %4440
        %v4442 = vsel %vm2707, %v4415, -inf
        %4443 = vmax.xlane.f32.xlu0 %v4442
        %v4444 = vpop.xlane.xlu0 %4443
        %v4445 = vsel %vm2707, %v4416, -inf
        %4446 = vmax.xlane.f32.xlu0 %v4445
        %v4447 = vpop.xlane.xlu0 %4446
        %v4448 = vsel %vm2707, %v4417, -inf
        %4449 = vmax.xlane.f32.xlu0 %v4448
        %v4450 = vpop.xlane.xlu0 %4449
        %v4451 = vmax.f32 %v4419, %v4429
        %v4452 = vmax.f32 %v4420, %v4432
        %v4453 = vmax.f32 %v4421, %v4435
        %v4454 = vmax.f32 %v4422, %v4438
        %v4455 = vmax.f32 %v4423, %v4441
        %v4456 = vmax.f32 %v4424, %v4444
        %v4457 = vmax.f32 %v4425, %v4447
        %v4458 = vmax.f32 %v4426, %v4450
        %v4459 = vsub.f32 %v4419, %v4451
        %v4460 = vsub.f32 %v4420, %v4452
        %v4461 = vsub.f32 %v4421, %v4453
        %v4462 = vsub.f32 %v4422, %v4454
        %v4463 = vsub.f32 %v4423, %v4455
        %v4464 = vsub.f32 %v4424, %v4456
        %v4465 = vsub.f32 %v4425, %v4457
        %v4466 = vsub.f32 %v4426, %v4458
        %v4467 = vmul.f32 %v4459, 1.442695
        %v4468 = vpow.pop %v4467
        %v4469 = vmul.f32 %v4460, 1.442695
        %v4470 = vpow.pop %v4469
        %v4471 = vmul.f32 %v4461, 1.442695
        %v4472 = vpow.pop %v4471
        %v4473 = vmul.f32 %v4462, 1.442695
        %v4474 = vpow.pop %v4473
        %v4475 = vmul.f32 %v4463, 1.442695
        %v4476 = vpow.pop %v4475
        %v4477 = vmul.f32 %v4464, 1.442695
        %v4478 = vpow.pop %v4477
        %v4479 = vmul.f32 %v4465, 1.442695
        %v4480 = vpow.pop %v4479
        %v4481 = vmul.f32 %v4466, 1.442695
        %v4482 = vpow.pop %v4481
        %4484 = vset.pattern.permute.xlu0 0
        %4485 = vperm.xlu0 %4484, %v4451
        %v4486 = vpop.permute.xlu0 %4485
        %4489 = vset.pattern.permute.xlu0 0
        %4490 = vperm.xlu0 %4489, %v4452
        %v4491 = vpop.permute.xlu0 %4490
        %4494 = vset.pattern.permute.xlu0 0
        %4495 = vperm.xlu0 %4494, %v4453
        %v4496 = vpop.permute.xlu0 %4495
        %4499 = vset.pattern.permute.xlu0 0
        %4500 = vperm.xlu0 %4499, %v4454
        %v4501 = vpop.permute.xlu0 %4500
        %4504 = vset.pattern.permute.xlu0 0
        %4505 = vperm.xlu0 %4504, %v4455
        %v4506 = vpop.permute.xlu0 %4505
        %4509 = vset.pattern.permute.xlu0 0
        %4510 = vperm.xlu0 %4509, %v4456
        %v4511 = vpop.permute.xlu0 %4510
        %4514 = vset.pattern.permute.xlu0 0
        %4515 = vperm.xlu0 %4514, %v4457
        %v4516 = vpop.permute.xlu0 %4515
        %4519 = vset.pattern.permute.xlu0 0
        %4520 = vperm.xlu0 %4519, %v4458
        %v4521 = vpop.permute.xlu0 %4520
        %v4523 = vsub.f32 %v4410, %v4486
        %v4524 = vsub.f32 %v4411, %v4491
        %v4525 = vsub.f32 %v4412, %v4496
        %v4526 = vsub.f32 %v4413, %v4501
        %v4527 = vsub.f32 %v4414, %v4506
        %v4528 = vsub.f32 %v4415, %v4511
        %v4529 = vsub.f32 %v4416, %v4516
        %v4530 = vsub.f32 %v4417, %v4521
        %v4531 = vmul.f32 %v4523, 1.442695
        %v4532 = vpow.pop %v4531
        %v4533 = vmul.f32 %v4524, 1.442695
        %v4534 = vpow.pop %v4533
        %v4535 = vmul.f32 %v4525, 1.442695
        %v4536 = vpow.pop %v4535
        %v4537 = vmul.f32 %v4526, 1.442695
        %v4538 = vpow.pop %v4537
        %v4539 = vmul.f32 %v4527, 1.442695
        %v4540 = vpow.pop %v4539
        %v4541 = vmul.f32 %v4528, 1.442695
        %v4542 = vpow.pop %v4541
        %v4543 = vmul.f32 %v4529, 1.442695
        %v4544 = vpow.pop %v4543
        %v4545 = vmul.f32 %v4530, 1.442695
        %v4546 = vpow.pop %v4545
        %s4547 = scalar_lea.vmem [#allocation3], 128
        %v4548 = vld [vmem:[%s4547] sm:$0xff]
        %v4549 = vld [vmem:[%s4547 + $0x8] sm:$0xff]
        %v4550 = vld [vmem:[%s4547 + $0x10] sm:$0xff]
        %v4551 = vld [vmem:[%s4547 + $0x18] sm:$0xff]
        %v4552 = vld [vmem:[%s4547 + $0x20] sm:$0xff]
        %v4553 = vld [vmem:[%s4547 + $0x28] sm:$0xff]
        %v4554 = vld [vmem:[%s4547 + $0x30] sm:$0xff]
        %v4555 = vld [vmem:[%s4547 + $0x38] sm:$0xff]
        %v4556 = vmul.f32 %v4468, %v4548
        %v4557 = vmul.f32 %v4470, %v4549
        %v4558 = vmul.f32 %v4472, %v4550
        %v4559 = vmul.f32 %v4474, %v4551
        %v4560 = vmul.f32 %v4476, %v4552
        %v4561 = vmul.f32 %v4478, %v4553
        %v4562 = vmul.f32 %v4480, %v4554
        %v4563 = vmul.f32 %v4482, %v4555
        %v4564 = vsel %vm2707, %v4532, 0.0
        %4565 = vadd.xlane.f32.xlu0 %v4564
        %v4566 = vpop.xlane.xlu0 %4565
        %v4567 = vsel %vm2707, %v4534, 0.0
        %4568 = vadd.xlane.f32.xlu0 %v4567
        %v4569 = vpop.xlane.xlu0 %4568
        %v4570 = vsel %vm2707, %v4536, 0.0
        %4571 = vadd.xlane.f32.xlu0 %v4570
        %v4572 = vpop.xlane.xlu0 %4571
        %v4573 = vsel %vm2707, %v4538, 0.0
        %4574 = vadd.xlane.f32.xlu0 %v4573
        %v4575 = vpop.xlane.xlu0 %4574
        %v4576 = vsel %vm2707, %v4540, 0.0
        %4577 = vadd.xlane.f32.xlu0 %v4576
        %v4578 = vpop.xlane.xlu0 %4577
        %v4579 = vsel %vm2707, %v4542, 0.0
        %4580 = vadd.xlane.f32.xlu0 %v4579
        %v4581 = vpop.xlane.xlu0 %4580
        %v4582 = vsel %vm2707, %v4544, 0.0
        %4583 = vadd.xlane.f32.xlu0 %v4582
        %v4584 = vpop.xlane.xlu0 %4583
        %v4585 = vsel %vm2707, %v4546, 0.0
        %4586 = vadd.xlane.f32.xlu0 %v4585
        %v4587 = vpop.xlane.xlu0 %4586
        %v4588 = vadd.f32 %v4556, %v4566
        %v4589 = vadd.f32 %v4557, %v4569
        %v4590 = vadd.f32 %v4558, %v4572
        %v4591 = vadd.f32 %v4559, %v4575
        %v4592 = vadd.f32 %v4560, %v4578
        %v4593 = vadd.f32 %v4561, %v4581
        %v4594 = vadd.f32 %v4562, %v4584
        %v4595 = vadd.f32 %v4563, %v4587
        %4596 = vst.msk [vmem:[%s4547] sm:$0xff] %vm2876, %v4588
        %4597 = vst.msk [vmem:[%s4547 + $0x8] sm:$0xff] %vm2876, %v4589
        %4598 = vst.msk [vmem:[%s4547 + $0x10] sm:$0xff] %vm2876, %v4590
        %4599 = vst.msk [vmem:[%s4547 + $0x18] sm:$0xff] %vm2876, %v4591
        %4600 = vst.msk [vmem:[%s4547 + $0x20] sm:$0xff] %vm2876, %v4592
        %4601 = vst.msk [vmem:[%s4547 + $0x28] sm:$0xff] %vm2876, %v4593
        %4602 = vst.msk [vmem:[%s4547 + $0x30] sm:$0xff] %vm2876, %v4594
        %4603 = vst.msk [vmem:[%s4547 + $0x38] sm:$0xff] %vm2876, %v4595
        %s4604 = scalar_lea.vmem [#allocation4], 128
        %v4605 = vld [vmem:[%s4604] sm:$0xff]
        %v4606 = vld [vmem:[%s4604 + $0x8] sm:$0xff]
        %v4607 = vld [vmem:[%s4604 + $0x10] sm:$0xff]
        %v4608 = vld [vmem:[%s4604 + $0x18] sm:$0xff]
        %v4609 = vld [vmem:[%s4604 + $0x20] sm:$0xff]
        %v4610 = vld [vmem:[%s4604 + $0x28] sm:$0xff]
        %v4611 = vld [vmem:[%s4604 + $0x30] sm:$0xff]
        %v4612 = vld [vmem:[%s4604 + $0x38] sm:$0xff]
        %4614 = vset.pattern.permute.xlu0 0
        %4615 = vperm.xlu0 %4614, %v4468
        %v4616 = vpop.permute.xlu0 %4615
        %4619 = vset.pattern.permute.xlu0 0
        %4620 = vperm.xlu0 %4619, %v4470
        %v4621 = vpop.permute.xlu0 %4620
        %4624 = vset.pattern.permute.xlu0 0
        %4625 = vperm.xlu0 %4624, %v4472
        %v4626 = vpop.permute.xlu0 %4625
        %4629 = vset.pattern.permute.xlu0 0
        %4630 = vperm.xlu0 %4629, %v4474
        %v4631 = vpop.permute.xlu0 %4630
        %4634 = vset.pattern.permute.xlu0 0
        %4635 = vperm.xlu0 %4634, %v4476
        %v4636 = vpop.permute.xlu0 %4635
        %4639 = vset.pattern.permute.xlu0 0
        %4640 = vperm.xlu0 %4639, %v4478
        %v4641 = vpop.permute.xlu0 %4640
        %4644 = vset.pattern.permute.xlu0 0
        %4645 = vperm.xlu0 %4644, %v4480
        %v4646 = vpop.permute.xlu0 %4645
        %4649 = vset.pattern.permute.xlu0 0
        %4650 = vperm.xlu0 %4649, %v4482
        %v4651 = vpop.permute.xlu0 %4650
        %v4653 = vmul.f32 %v4616, %v4605
        %v4654 = vmul.f32 %v4621, %v4606
        %v4655 = vmul.f32 %v4626, %v4607
        %v4656 = vmul.f32 %v4631, %v4608
        %v4657 = vmul.f32 %v4636, %v4609
        %v4658 = vmul.f32 %v4641, %v4610
        %v4659 = vmul.f32 %v4646, %v4611
        %v4660 = vmul.f32 %v4651, %v4612
        %v4661 = vpack.c.bf16 %v4534, %v4532
        %v4662 = vpack.c.bf16 %v4538, %v4536
        %v4663 = vpack.c.bf16 %v4542, %v4540
        %v4664 = vpack.c.bf16 %v4546, %v4544
        %4665 = vrot.lane.b32.xlu0 %v2945, 64
        %v4666 = vpop.permute.xlu0 %4665
        %4667 = vrot.lane.b32.xlu0 %v2946, 64
        %v4668 = vpop.permute.xlu0 %4667
        %4669 = vrot.lane.b32.xlu0 %v2947, 64
        %v4670 = vpop.permute.xlu0 %4669
        %4671 = vrot.lane.b32.xlu0 %v2948, 64
        %v4672 = vpop.permute.xlu0 %4671
        %v4678 = vsel %vm2707, %v4661, 0
        %v4681 = vsel %vm2707, %v4662, 0
        %v4684 = vsel %vm2707, %v4663, 0
        %v4687 = vsel %vm2707, %v4664, 0
        %4689 = vmatprep.subr.bf16.mxu0 0
        %4690 = vmatpush1.bf16.msra.mxu0 0
        %4691 = vmatprep.subr.bf16.mxu0 0
        %4692 = vmatpush1.bf16.msra.mxu0 0
        %4693 = vmatprep.subr.bf16.mxu0 0
        %4694 = vmatpush1.bf16.msra.mxu0 0
        %4695 = vmatprep.subr.bf16.mxu0 0
        %4696 = vmatpush1.bf16.msra.mxu0 0
        %4697 = vmatprep.subr.bf16.mxu0 0
        %4698 = vmatpush1.bf16.msra.mxu0 %v4672
        %4699 = vmatprep.subr.bf16.mxu0 0
        %4700 = vmatpush1.bf16.msra.mxu0 %v4670
        %4701 = vmatprep.subr.bf16.mxu0 0
        %4702 = vmatpush1.bf16.msra.mxu0 %v4668
        %4703 = vmatprep.subr.bf16.mxu0 0
        %4704 = vmatpush1.bf16.msra.mxu0 %v4666
        %4705 = vmatprep.subr.bf16.mxu0 0
        %4706 = vmatpush2.bf16.msra.mxu0 0
        %4707 = vmatprep.subr.bf16.mxu0 0
        %4708 = vmatpush2.bf16.msra.mxu0 0
        %4709 = vmatprep.subr.bf16.mxu0 0
        %4710 = vmatpush2.bf16.msra.mxu0 0
        %4711 = vmatprep.subr.bf16.mxu0 0
        %4712 = vmatpush2.bf16.msra.mxu0 0
        %4713 = vmatprep.subr.bf16.mxu0 0
        %4714 = vmatpush2.bf16.msra.mxu0 0
        %4715 = vmatprep.subr.bf16.mxu0 0
        %4716 = vmatpush2.bf16.msra.mxu0 0
        %4717 = vmatprep.subr.bf16.mxu0 0
        %4718 = vmatpush2.bf16.msra.mxu0 0
        %4719 = vmatprep.subr.bf16.mxu0 0
        %4720 = vmatpush2.bf16.msra.mxu0 0
        %4721 = vmatprep.mubr.bf16.mxu0 0
        %4722 = vmatmul.mubr.bf16.gmra.mxu0 %v4678
        %v4723 = vpop.f32.mrf.mxu0
        %v4724 = vadd.f32 0.0, %v4723
        %v4725 = vpop.f32.mrf.mxu0
        %v4726 = vpop.f32.mrf.mxu0
        %v4727 = vadd.f32 0.0, %v4726
        %v4728 = vpop.f32.mrf.mxu0
        %4729 = vmatprep.mubr.bf16.mxu0 0
        %4730 = vmatmul.mubr.bf16.gmra.mxu0 %v4681
        %v4731 = vpop.f32.mrf.mxu0
        %v4732 = vadd.f32 0.0, %v4731
        %v4733 = vpop.f32.mrf.mxu0
        %v4734 = vpop.f32.mrf.mxu0
        %v4735 = vadd.f32 0.0, %v4734
        %v4736 = vpop.f32.mrf.mxu0
        %4737 = vmatprep.mubr.bf16.mxu0 0
        %4738 = vmatmul.mubr.bf16.gmra.mxu0 %v4684
        %v4739 = vpop.f32.mrf.mxu0
        %v4740 = vadd.f32 0.0, %v4739
        %v4741 = vpop.f32.mrf.mxu0
        %v4742 = vpop.f32.mrf.mxu0
        %v4743 = vadd.f32 0.0, %v4742
        %v4744 = vpop.f32.mrf.mxu0
        %4745 = vmatprep.mubr.bf16.mxu0 0
        %4746 = vmatmul.mubr.bf16.gmra.mxu0 %v4687
        %v4747 = vpop.f32.mrf.mxu0
        %v4748 = vadd.f32 0.0, %v4747
        %v4749 = vpop.f32.mrf.mxu0
        %v4750 = vpop.f32.mrf.mxu0
        %v4751 = vadd.f32 0.0, %v4750
        %v4752 = vpop.f32.mrf.mxu0
        %4753 = vdwg.mxu0
        %v4754 = vadd.f32 %v4653, %v4724
        %v4755 = vadd.f32 %v4654, %v4727
        %v4756 = vadd.f32 %v4655, %v4732
        %v4757 = vadd.f32 %v4656, %v4735
        %v4758 = vadd.f32 %v4657, %v4740
        %v4759 = vadd.f32 %v4658, %v4743
        %v4760 = vadd.f32 %v4659, %v4748
        %v4761 = vadd.f32 %v4660, %v4751
        %4762 = vst.msk [vmem:[%s4604] sm:$0xff] %vm2287, %v4754
        %4763 = vst.msk [vmem:[%s4604 + $0x8] sm:$0xff] %vm2287, %v4755
        %4764 = vst.msk [vmem:[%s4604 + $0x10] sm:$0xff] %vm2287, %v4756
        %4765 = vst.msk [vmem:[%s4604 + $0x18] sm:$0xff] %vm2287, %v4757
        %4766 = vst.msk [vmem:[%s4604 + $0x20] sm:$0xff] %vm2287, %v4758
        %4767 = vst.msk [vmem:[%s4604 + $0x28] sm:$0xff] %vm2287, %v4759
        %4768 = vst.msk [vmem:[%s4604 + $0x30] sm:$0xff] %vm2287, %v4760
        %4769 = vst.msk [vmem:[%s4604 + $0x38] sm:$0xff] %vm2287, %v4761
        %4770 = vst.msk [vmem:[%s4418] sm:$0xff] %vm2876, %v4451
        %4771 = vst.msk [vmem:[%s4418 + $0x8] sm:$0xff] %vm2876, %v4452
        %4772 = vst.msk [vmem:[%s4418 + $0x10] sm:$0xff] %vm2876, %v4453
        %4773 = vst.msk [vmem:[%s4418 + $0x18] sm:$0xff] %vm2876, %v4454
        %4774 = vst.msk [vmem:[%s4418 + $0x20] sm:$0xff] %vm2876, %v4455
        %4775 = vst.msk [vmem:[%s4418 + $0x28] sm:$0xff] %vm2876, %v4456
        %4776 = vst.msk [vmem:[%s4418 + $0x30] sm:$0xff] %vm2876, %v4457
        %4777 = vst.msk [vmem:[%s4418 + $0x38] sm:$0xff] %vm2876, %v4458
        %4778 = vrot.lane.b32.xlu0 %v2279, 32
        %v4779 = vpop.permute.xlu0 %4778
        %4780 = vrot.lane.b32.xlu0 %v2280, 32
        %v4781 = vpop.permute.xlu0 %4780
        %4782 = vrot.lane.b32.xlu0 %v2281, 32
        %v4783 = vpop.permute.xlu0 %4782
        %4784 = vrot.lane.b32.xlu0 %v2282, 32
        %v4785 = vpop.permute.xlu0 %4784
        %4786 = vrot.lane.b32.xlu0 %v2283, 32
        %v4787 = vpop.permute.xlu0 %4786
        %4788 = vrot.lane.b32.xlu0 %v2284, 32
        %v4789 = vpop.permute.xlu0 %4788
        %4790 = vrot.lane.b32.xlu0 %v2285, 32
        %v4791 = vpop.permute.xlu0 %4790
        %4792 = vrot.lane.b32.xlu0 %v2286, 32
        %v4793 = vpop.permute.xlu0 %4792
        %v4802 = vsel %vm2287, %v4779, 0.0
        %4803 = vadd.xlane.f32.xlu0 %v4802
        %v4804 = vpop.xlane.xlu0 %4803
        %v4805 = vsel %vm2287, %v4781, 0.0
        %4806 = vadd.xlane.f32.xlu0 %v4805
        %v4807 = vpop.xlane.xlu0 %4806
        %v4808 = vsel %vm2287, %v4783, 0.0
        %4809 = vadd.xlane.f32.xlu0 %v4808
        %v4810 = vpop.xlane.xlu0 %4809
        %v4811 = vsel %vm2287, %v4785, 0.0
        %4812 = vadd.xlane.f32.xlu0 %v4811
        %v4813 = vpop.xlane.xlu0 %4812
        %v4814 = vsel %vm2287, %v4787, 0.0
        %4815 = vadd.xlane.f32.xlu0 %v4814
        %v4816 = vpop.xlane.xlu0 %4815
        %v4817 = vsel %vm2287, %v4789, 0.0
        %4818 = vadd.xlane.f32.xlu0 %v4817
        %v4819 = vpop.xlane.xlu0 %4818
        %v4820 = vsel %vm2287, %v4791, 0.0
        %4821 = vadd.xlane.f32.xlu0 %v4820
        %v4822 = vpop.xlane.xlu0 %4821
        %v4823 = vsel %vm2287, %v4793, 0.0
        %4824 = vadd.xlane.f32.xlu0 %v4823
        %v4825 = vpop.xlane.xlu0 %4824
        %v4826 = vmul.f32 %v4804, %v2312
        %v4827 = vmul.f32 %v4807, %v2312
        %v4828 = vmul.f32 %v4810, %v2312
        %v4829 = vmul.f32 %v4813, %v2312
        %v4830 = vmul.f32 %v4816, %v2312
        %v4831 = vmul.f32 %v4819, %v2312
        %v4832 = vmul.f32 %v4822, %v2312
        %v4833 = vmul.f32 %v4825, %v2312
        %v4834 = vadd.f32 %v4826, 1.1920929e-07
        %v4835 = vadd.f32 %v4827, 1.1920929e-07
        %v4836 = vadd.f32 %v4828, 1.1920929e-07
        %v4837 = vadd.f32 %v4829, 1.1920929e-07
        %v4838 = vadd.f32 %v4830, 1.1920929e-07
        %v4839 = vadd.f32 %v4831, 1.1920929e-07
        %v4840 = vadd.f32 %v4832, 1.1920929e-07
        %v4841 = vadd.f32 %v4833, 1.1920929e-07
        %v4842 = vrsqrt.pop %v4834
        %v4843 = vrsqrt.pop %v4835
        %v4844 = vrsqrt.pop %v4836
        %v4845 = vrsqrt.pop %v4837
        %v4846 = vrsqrt.pop %v4838
        %v4847 = vrsqrt.pop %v4839
        %v4848 = vrsqrt.pop %v4840
        %v4849 = vrsqrt.pop %v4841
        %v4850 = vmul.f32 %v2217, %v4842
        %v4851 = vmul.f32 %v2218, %v4843
        %v4852 = vmul.f32 %v2219, %v4844
        %v4853 = vmul.f32 %v2220, %v4845
        %v4854 = vmul.f32 %v2221, %v4846
        %v4855 = vmul.f32 %v2222, %v4847
        %v4856 = vmul.f32 %v2223, %v4848
        %v4857 = vmul.f32 %v2224, %v4849
        %4858 = vrot.lane.b32.xlu0 %v2233, 96
        %v4859 = vpop.permute.xlu0 %4858
        %4860 = vrot.lane.b32.xlu0 %v2234, 96
        %v4861 = vpop.permute.xlu0 %4860
        %4862 = vrot.lane.b32.xlu0 %v2235, 96
        %v4863 = vpop.permute.xlu0 %4862
        %4864 = vrot.lane.b32.xlu0 %v2236, 96
        %v4865 = vpop.permute.xlu0 %4864
        %4866 = vrot.lane.b32.xlu0 %v2237, 96
        %v4867 = vpop.permute.xlu0 %4866
        %4868 = vrot.lane.b32.xlu0 %v2238, 96
        %v4869 = vpop.permute.xlu0 %4868
        %4870 = vrot.lane.b32.xlu0 %v2239, 96
        %v4871 = vpop.permute.xlu0 %4870
        %4872 = vrot.lane.b32.xlu0 %v2240, 96
        %v4873 = vpop.permute.xlu0 %4872
        %v4882 = vmul.f32 %v4850, %v4859
        %v4883 = vmul.f32 %v4851, %v4861
        %v4884 = vmul.f32 %v4852, %v4863
        %v4885 = vmul.f32 %v4853, %v4865
        %v4886 = vmul.f32 %v4854, %v4867
        %v4887 = vmul.f32 %v4855, %v4869
        %v4888 = vmul.f32 %v4856, %v4871
        %v4889 = vmul.f32 %v4857, %v4873
        %4890 = vrot.lane.b32.xlu0 %v2241, 112
        %v4891 = vpop.permute.xlu0 %4890
        %4892 = vrot.lane.b32.xlu0 %v2242, 112
        %v4893 = vpop.permute.xlu0 %4892
        %4894 = vrot.lane.b32.xlu0 %v2243, 112
        %v4895 = vpop.permute.xlu0 %4894
        %4896 = vrot.lane.b32.xlu0 %v2244, 112
        %v4897 = vpop.permute.xlu0 %4896
        %4898 = vrot.lane.b32.xlu0 %v2245, 112
        %v4899 = vpop.permute.xlu0 %4898
        %4900 = vrot.lane.b32.xlu0 %v2246, 112
        %v4901 = vpop.permute.xlu0 %4900
        %4902 = vrot.lane.b32.xlu0 %v2247, 112
        %v4903 = vpop.permute.xlu0 %4902
        %4904 = vrot.lane.b32.xlu0 %v2248, 112
        %v4905 = vpop.permute.xlu0 %4904
        %v4914 = vmul.f32 %v4850, %v4891
        %v4915 = vmul.f32 %v4851, %v4893
        %v4916 = vmul.f32 %v4852, %v4895
        %v4917 = vmul.f32 %v4853, %v4897
        %v4918 = vmul.f32 %v4854, %v4899
        %v4919 = vmul.f32 %v4855, %v4901
        %v4920 = vmul.f32 %v4856, %v4903
        %v4921 = vmul.f32 %v4857, %v4905
        %4930 = vrot.lane.b32.xlu0 %v4914, 112
        %v4931 = vpop.permute.xlu0 %4930
        %4932 = vrot.lane.b32.xlu0 %v4915, 112
        %v4933 = vpop.permute.xlu0 %4932
        %4934 = vrot.lane.b32.xlu0 %v4916, 112
        %v4935 = vpop.permute.xlu0 %4934
        %4936 = vrot.lane.b32.xlu0 %v4917, 112
        %v4937 = vpop.permute.xlu0 %4936
        %4938 = vrot.lane.b32.xlu0 %v4918, 112
        %v4939 = vpop.permute.xlu0 %4938
        %4940 = vrot.lane.b32.xlu0 %v4919, 112
        %v4941 = vpop.permute.xlu0 %4940
        %4942 = vrot.lane.b32.xlu0 %v4920, 112
        %v4943 = vpop.permute.xlu0 %4942
        %4944 = vrot.lane.b32.xlu0 %v4921, 112
        %v4945 = vpop.permute.xlu0 %4944
        %v4954 = vadd.f32 %v4882, %v4931
        %v4955 = vadd.f32 %v4883, %v4933
        %v4956 = vadd.f32 %v4884, %v4935
        %v4957 = vadd.f32 %v4885, %v4937
        %v4958 = vadd.f32 %v4886, %v4939
        %v4959 = vadd.f32 %v4887, %v4941
        %v4960 = vadd.f32 %v4888, %v4943
        %v4961 = vadd.f32 %v4889, %v4945
        %v4962 = vsub.f32 0.0, %v4850
        %v4963 = vsub.f32 0.0, %v4851
        %v4964 = vsub.f32 0.0, %v4852
        %v4965 = vsub.f32 0.0, %v4853
        %v4966 = vsub.f32 0.0, %v4854
        %v4967 = vsub.f32 0.0, %v4855
        %v4968 = vsub.f32 0.0, %v4856
        %v4969 = vsub.f32 0.0, %v4857
        %4970 = vrot.lane.b32.xlu0 %v2241, 96
        %v4971 = vpop.permute.xlu0 %4970
        %4972 = vrot.lane.b32.xlu0 %v2242, 96
        %v4973 = vpop.permute.xlu0 %4972
        %4974 = vrot.lane.b32.xlu0 %v2243, 96
        %v4975 = vpop.permute.xlu0 %4974
        %4976 = vrot.lane.b32.xlu0 %v2244, 96
        %v4977 = vpop.permute.xlu0 %4976
        %4978 = vrot.lane.b32.xlu0 %v2245, 96
        %v4979 = vpop.permute.xlu0 %4978
        %4980 = vrot.lane.b32.xlu0 %v2246, 96
        %v4981 = vpop.permute.xlu0 %4980
        %4982 = vrot.lane.b32.xlu0 %v2247, 96
        %v4983 = vpop.permute.xlu0 %4982
        %4984 = vrot.lane.b32.xlu0 %v2248, 96
        %v4985 = vpop.permute.xlu0 %4984
        %v4994 = vmul.f32 %v4962, %v4971
        %v4995 = vmul.f32 %v4963, %v4973
        %v4996 = vmul.f32 %v4964, %v4975
        %v4997 = vmul.f32 %v4965, %v4977
        %v4998 = vmul.f32 %v4966, %v4979
        %v4999 = vmul.f32 %v4967, %v4981
        %v5000 = vmul.f32 %v4968, %v4983
        %v5001 = vmul.f32 %v4969, %v4985
        %5002 = vrot.lane.b32.xlu0 %v2233, 112
        %v5003 = vpop.permute.xlu0 %5002
        %5004 = vrot.lane.b32.xlu0 %v2234, 112
        %v5005 = vpop.permute.xlu0 %5004
        %5006 = vrot.lane.b32.xlu0 %v2235, 112
        %v5007 = vpop.permute.xlu0 %5006
        %5008 = vrot.lane.b32.xlu0 %v2236, 112
        %v5009 = vpop.permute.xlu0 %5008
        %5010 = vrot.lane.b32.xlu0 %v2237, 112
        %v5011 = vpop.permute.xlu0 %5010
        %5012 = vrot.lane.b32.xlu0 %v2238, 112
        %v5013 = vpop.permute.xlu0 %5012
        %5014 = vrot.lane.b32.xlu0 %v2239, 112
        %v5015 = vpop.permute.xlu0 %5014
        %5016 = vrot.lane.b32.xlu0 %v2240, 112
        %v5017 = vpop.permute.xlu0 %5016
        %v5026 = vmul.f32 %v4850, %v5003
        %v5027 = vmul.f32 %v4851, %v5005
        %v5028 = vmul.f32 %v4852, %v5007
        %v5029 = vmul.f32 %v4853, %v5009
        %v5030 = vmul.f32 %v4854, %v5011
        %v5031 = vmul.f32 %v4855, %v5013
        %v5032 = vmul.f32 %v4856, %v5015
        %v5033 = vmul.f32 %v4857, %v5017
        %5042 = vrot.lane.b32.xlu0 %v5026, 112
        %v5043 = vpop.permute.xlu0 %5042
        %5044 = vrot.lane.b32.xlu0 %v5027, 112
        %v5045 = vpop.permute.xlu0 %5044
        %5046 = vrot.lane.b32.xlu0 %v5028, 112
        %v5047 = vpop.permute.xlu0 %5046
        %5048 = vrot.lane.b32.xlu0 %v5029, 112
        %v5049 = vpop.permute.xlu0 %5048
        %5050 = vrot.lane.b32.xlu0 %v5030, 112
        %v5051 = vpop.permute.xlu0 %5050
        %5052 = vrot.lane.b32.xlu0 %v5031, 112
        %v5053 = vpop.permute.xlu0 %5052
        %5054 = vrot.lane.b32.xlu0 %v5032, 112
        %v5055 = vpop.permute.xlu0 %5054
        %5056 = vrot.lane.b32.xlu0 %v5033, 112
        %v5057 = vpop.permute.xlu0 %5056
        %v5066 = vadd.f32 %v4994, %v5043
        %v5067 = vadd.f32 %v4995, %v5045
        %v5068 = vadd.f32 %v4996, %v5047
        %v5069 = vadd.f32 %v4997, %v5049
        %v5070 = vadd.f32 %v4998, %v5051
        %v5071 = vadd.f32 %v4999, %v5053
        %v5072 = vadd.f32 %v5000, %v5055
        %v5073 = vadd.f32 %v5001, %v5057
        %5082 = vrot.lane.b32.xlu0 %v4954, 32
        %v5083 = vpop.permute.xlu0 %5082
        %5084 = vrot.lane.b32.xlu0 %v4955, 32
        %v5085 = vpop.permute.xlu0 %5084
        %5086 = vrot.lane.b32.xlu0 %v4956, 32
        %v5087 = vpop.permute.xlu0 %5086
        %5088 = vrot.lane.b32.xlu0 %v4957, 32
        %v5089 = vpop.permute.xlu0 %5088
        %5090 = vrot.lane.b32.xlu0 %v4958, 32
        %v5091 = vpop.permute.xlu0 %5090
        %5092 = vrot.lane.b32.xlu0 %v4959, 32
        %v5093 = vpop.permute.xlu0 %5092
        %5094 = vrot.lane.b32.xlu0 %v4960, 32
        %v5095 = vpop.permute.xlu0 %5094
        %5096 = vrot.lane.b32.xlu0 %v4961, 32
        %v5097 = vpop.permute.xlu0 %5096
        %5114 = vrot.lane.b32.xlu0 %v5066, 48
        %v5115 = vpop.permute.xlu0 %5114
        %5116 = vrot.lane.b32.xlu0 %v5067, 48
        %v5117 = vpop.permute.xlu0 %5116
        %5118 = vrot.lane.b32.xlu0 %v5068, 48
        %v5119 = vpop.permute.xlu0 %5118
        %5120 = vrot.lane.b32.xlu0 %v5069, 48
        %v5121 = vpop.permute.xlu0 %5120
        %5122 = vrot.lane.b32.xlu0 %v5070, 48
        %v5123 = vpop.permute.xlu0 %5122
        %5124 = vrot.lane.b32.xlu0 %v5071, 48
        %v5125 = vpop.permute.xlu0 %5124
        %5126 = vrot.lane.b32.xlu0 %v5072, 48
        %v5127 = vpop.permute.xlu0 %5126
        %5128 = vrot.lane.b32.xlu0 %v5073, 48
        %v5129 = vpop.permute.xlu0 %5128
        %v5138 = vsel %vm2561, %v5083, %v5115
        %v5139 = vsel %vm2561, %v5085, %v5117
        %v5140 = vsel %vm2561, %v5087, %v5119
        %v5141 = vsel %vm2561, %v5089, %v5121
        %v5142 = vsel %vm2561, %v5091, %v5123
        %v5143 = vsel %vm2561, %v5093, %v5125
        %v5144 = vsel %vm2561, %v5095, %v5127
        %v5145 = vsel %vm2561, %v5097, %v5129
        %s5146 = scalar_lea.vmem [#allocation5], 96
        %v5147 = vld [vmem:[%s5146] sm:$0xf]
        %v5148 = vld [vmem:[%s5146 + $0x4] sm:$0xf]
        %v5149 = vld [vmem:[%s5146 + $0x8] sm:$0xf]
        %v5150 = vld [vmem:[%s5146 + $0xc] sm:$0xf]
        %v5151 = vld [vmem:[%s5146 + $0x10] sm:$0xf]
        %v5152 = vld [vmem:[%s5146 + $0x14] sm:$0xf]
        %v5153 = vld [vmem:[%s5146 + $0x18] sm:$0xf]
        %v5154 = vld [vmem:[%s5146 + $0x1c] sm:$0xf]
        %v5155 = vpack.c.bf16 %v5139, %v5138
        %v5156 = vpack.c.bf16 %v5141, %v5140
        %v5157 = vpack.c.bf16 %v5143, %v5142
        %v5158 = vpack.c.bf16 %v5145, %v5144
        %v5167 = vunpack.c.l.b16 %v5147
        %v5168 = vunpack.c.l.b16 %v5148
        %v5169 = vunpack.c.l.b16 %v5149
        %v5170 = vunpack.c.l.b16 %v5150
        %v5171 = vunpack.c.l.b16 %v5151
        %v5172 = vunpack.c.l.b16 %v5152
        %v5173 = vunpack.c.l.b16 %v5153
        %v5174 = vunpack.c.l.b16 %v5154
        %v5175 = vpack.c.b16 %v5168, %v5167
        %v5176 = vpack.c.b16 %v5170, %v5169
        %v5177 = vpack.c.b16 %v5172, %v5171
        %v5178 = vpack.c.b16 %v5174, %v5173
        %v5180 = vsel %vm2287, %v5175, 0
        %v5183 = vsel %vm2287, %v5176, 0
        %v5186 = vsel %vm2287, %v5177, 0
        %v5189 = vsel %vm2287, %v5178, 0
        %v5192 = vsel %vm2287, %v5155, 0
        %v5195 = vsel %vm2287, %v5156, 0
        %v5198 = vsel %vm2287, %v5157, 0
        %v5201 = vsel %vm2287, %v5158, 0
        %5203 = vmatprep.subr.bf16.mxu0 0
        %5204 = vmatpush1.bf16.xpose.msra.mxu0 0
        %5205 = vmatprep.subr.bf16.mxu0 0
        %5206 = vmatpush1.bf16.xpose.msra.mxu0 0
        %5207 = vmatprep.subr.bf16.mxu0 0
        %5208 = vmatpush1.bf16.xpose.msra.mxu0 0
        %5209 = vmatprep.subr.bf16.mxu0 0
        %5210 = vmatpush1.bf16.xpose.msra.mxu0 0
        %5211 = vmatprep.subr.bf16.mxu0 0
        %5212 = vmatpush1.bf16.xpose.msra.mxu0 %v5201
        %5213 = vmatprep.subr.bf16.mxu0 0
        %5214 = vmatpush1.bf16.xpose.msra.mxu0 %v5198
        %5215 = vmatprep.subr.bf16.mxu0 0
        %5216 = vmatpush1.bf16.xpose.msra.mxu0 %v5195
        %5217 = vmatprep.subr.bf16.mxu0 0
        %5218 = vmatpush1.bf16.xpose.msra.mxu0 %v5192
        %5219 = vmatprep.subr.bf16.mxu0 0
        %5220 = vmatpush2.bf16.xpose.msra.mxu0 0
        %5221 = vmatprep.subr.bf16.mxu0 0
        %5222 = vmatpush2.bf16.xpose.msra.mxu0 0
        %5223 = vmatprep.subr.bf16.mxu0 0
        %5224 = vmatpush2.bf16.xpose.msra.mxu0 0
        %5225 = vmatprep.subr.bf16.mxu0 0
        %5226 = vmatpush2.bf16.xpose.msra.mxu0 0
        %5227 = vmatprep.subr.bf16.mxu0 0
        %5228 = vmatpush2.bf16.xpose.msra.mxu0 0
        %5229 = vmatprep.subr.bf16.mxu0 0
        %5230 = vmatpush2.bf16.xpose.msra.mxu0 0
        %5231 = vmatprep.subr.bf16.mxu0 0
        %5232 = vmatpush2.bf16.xpose.msra.mxu0 0
        %5233 = vmatprep.subr.bf16.mxu0 0
        %5234 = vmatpush2.bf16.xpose.msra.mxu0 0
        %5235 = vmatprep.mubr.bf16.mxu0 0
        %5236 = vmatmul.mubr.bf16.gmra.mxu0 %v5180
        %v5237 = vpop.f32.mrf.mxu0
        %v5238 = vadd.f32 0.0, %v5237
        %v5239 = vpop.f32.mrf.mxu0
        %v5240 = vpop.f32.mrf.mxu0
        %v5241 = vadd.f32 0.0, %v5240
        %v5242 = vpop.f32.mrf.mxu0
        %5243 = vmatprep.mubr.bf16.mxu0 0
        %5244 = vmatmul.mubr.bf16.gmra.mxu0 %v5183
        %v5245 = vpop.f32.mrf.mxu0
        %v5246 = vadd.f32 0.0, %v5245
        %v5247 = vpop.f32.mrf.mxu0
        %v5248 = vpop.f32.mrf.mxu0
        %v5249 = vadd.f32 0.0, %v5248
        %v5250 = vpop.f32.mrf.mxu0
        %5251 = vmatprep.mubr.bf16.mxu0 0
        %5252 = vmatmul.mubr.bf16.gmra.mxu0 %v5186
        %v5253 = vpop.f32.mrf.mxu0
        %v5254 = vadd.f32 0.0, %v5253
        %v5255 = vpop.f32.mrf.mxu0
        %v5256 = vpop.f32.mrf.mxu0
        %v5257 = vadd.f32 0.0, %v5256
        %v5258 = vpop.f32.mrf.mxu0
        %5259 = vmatprep.mubr.bf16.mxu0 0
        %5260 = vmatmul.mubr.bf16.gmra.mxu0 %v5189
        %v5261 = vpop.f32.mrf.mxu0
        %v5262 = vadd.f32 0.0, %v5261
        %v5263 = vpop.f32.mrf.mxu0
        %v5264 = vpop.f32.mrf.mxu0
        %v5265 = vadd.f32 0.0, %v5264
        %v5266 = vpop.f32.mrf.mxu0
        %5267 = vdwg.mxu0
        %v5268 = vsel %vm2271, %v5238, -1e+30
        %v5269 = vsel %vm2272, %v5241, -1e+30
        %v5270 = vsel %vm2273, %v5246, -1e+30
        %v5271 = vsel %vm2274, %v5249, -1e+30
        %v5272 = vsel %vm2275, %v5254, -1e+30
        %v5273 = vsel %vm2276, %v5257, -1e+30
        %v5274 = vsel %vm2277, %v5262, -1e+30
        %v5275 = vsel %vm2278, %v5265, -1e+30
        %s5276 = scalar_lea.vmem [#allocation2], 192
        %v5277 = vld [vmem:[%s5276] sm:$0xff]
        %v5278 = vld [vmem:[%s5276 + $0x8] sm:$0xff]
        %v5279 = vld [vmem:[%s5276 + $0x10] sm:$0xff]
        %v5280 = vld [vmem:[%s5276 + $0x18] sm:$0xff]
        %v5281 = vld [vmem:[%s5276 + $0x20] sm:$0xff]
        %v5282 = vld [vmem:[%s5276 + $0x28] sm:$0xff]
        %v5283 = vld [vmem:[%s5276 + $0x30] sm:$0xff]
        %v5284 = vld [vmem:[%s5276 + $0x38] sm:$0xff]
        %v5285 = vsel %vm2707, %v5268, -inf
        %5286 = vmax.xlane.f32.xlu0 %v5285
        %v5287 = vpop.xlane.xlu0 %5286
        %v5288 = vsel %vm2707, %v5269, -inf
        %5289 = vmax.xlane.f32.xlu0 %v5288
        %v5290 = vpop.xlane.xlu0 %5289
        %v5291 = vsel %vm2707, %v5270, -inf
        %5292 = vmax.xlane.f32.xlu0 %v5291
        %v5293 = vpop.xlane.xlu0 %5292
        %v5294 = vsel %vm2707, %v5271, -inf
        %5295 = vmax.xlane.f32.xlu0 %v5294
        %v5296 = vpop.xlane.xlu0 %5295
        %v5297 = vsel %vm2707, %v5272, -inf
        %5298 = vmax.xlane.f32.xlu0 %v5297
        %v5299 = vpop.xlane.xlu0 %5298
        %v5300 = vsel %vm2707, %v5273, -inf
        %5301 = vmax.xlane.f32.xlu0 %v5300
        %v5302 = vpop.xlane.xlu0 %5301
        %v5303 = vsel %vm2707, %v5274, -inf
        %5304 = vmax.xlane.f32.xlu0 %v5303
        %v5305 = vpop.xlane.xlu0 %5304
        %v5306 = vsel %vm2707, %v5275, -inf
        %5307 = vmax.xlane.f32.xlu0 %v5306
        %v5308 = vpop.xlane.xlu0 %5307
        %v5309 = vmax.f32 %v5277, %v5287
        %v5310 = vmax.f32 %v5278, %v5290
        %v5311 = vmax.f32 %v5279, %v5293
        %v5312 = vmax.f32 %v5280, %v5296
        %v5313 = vmax.f32 %v5281, %v5299
        %v5314 = vmax.f32 %v5282, %v5302
        %v5315 = vmax.f32 %v5283, %v5305
        %v5316 = vmax.f32 %v5284, %v5308
        %v5317 = vsub.f32 %v5277, %v5309
        %v5318 = vsub.f32 %v5278, %v5310
        %v5319 = vsub.f32 %v5279, %v5311
        %v5320 = vsub.f32 %v5280, %v5312
        %v5321 = vsub.f32 %v5281, %v5313
        %v5322 = vsub.f32 %v5282, %v5314
        %v5323 = vsub.f32 %v5283, %v5315
        %v5324 = vsub.f32 %v5284, %v5316
        %v5325 = vmul.f32 %v5317, 1.442695
        %v5326 = vpow.pop %v5325
        %v5327 = vmul.f32 %v5318, 1.442695
        %v5328 = vpow.pop %v5327
        %v5329 = vmul.f32 %v5319, 1.442695
        %v5330 = vpow.pop %v5329
        %v5331 = vmul.f32 %v5320, 1.442695
        %v5332 = vpow.pop %v5331
        %v5333 = vmul.f32 %v5321, 1.442695
        %v5334 = vpow.pop %v5333
        %v5335 = vmul.f32 %v5322, 1.442695
        %v5336 = vpow.pop %v5335
        %v5337 = vmul.f32 %v5323, 1.442695
        %v5338 = vpow.pop %v5337
        %v5339 = vmul.f32 %v5324, 1.442695
        %v5340 = vpow.pop %v5339
        %5342 = vset.pattern.permute.xlu0 0
        %5343 = vperm.xlu0 %5342, %v5309
        %v5344 = vpop.permute.xlu0 %5343
        %5347 = vset.pattern.permute.xlu0 0
        %5348 = vperm.xlu0 %5347, %v5310
        %v5349 = vpop.permute.xlu0 %5348
        %5352 = vset.pattern.permute.xlu0 0
        %5353 = vperm.xlu0 %5352, %v5311
        %v5354 = vpop.permute.xlu0 %5353
        %5357 = vset.pattern.permute.xlu0 0
        %5358 = vperm.xlu0 %5357, %v5312
        %v5359 = vpop.permute.xlu0 %5358
        %5362 = vset.pattern.permute.xlu0 0
        %5363 = vperm.xlu0 %5362, %v5313
        %v5364 = vpop.permute.xlu0 %5363
        %5367 = vset.pattern.permute.xlu0 0
        %5368 = vperm.xlu0 %5367, %v5314
        %v5369 = vpop.permute.xlu0 %5368
        %5372 = vset.pattern.permute.xlu0 0
        %5373 = vperm.xlu0 %5372, %v5315
        %v5374 = vpop.permute.xlu0 %5373
        %5377 = vset.pattern.permute.xlu0 0
        %5378 = vperm.xlu0 %5377, %v5316
        %v5379 = vpop.permute.xlu0 %5378
        %v5381 = vsub.f32 %v5268, %v5344
        %v5382 = vsub.f32 %v5269, %v5349
        %v5383 = vsub.f32 %v5270, %v5354
        %v5384 = vsub.f32 %v5271, %v5359
        %v5385 = vsub.f32 %v5272, %v5364
        %v5386 = vsub.f32 %v5273, %v5369
        %v5387 = vsub.f32 %v5274, %v5374
        %v5388 = vsub.f32 %v5275, %v5379
        %v5389 = vmul.f32 %v5381, 1.442695
        %v5390 = vpow.pop %v5389
        %v5391 = vmul.f32 %v5382, 1.442695
        %v5392 = vpow.pop %v5391
        %v5393 = vmul.f32 %v5383, 1.442695
        %v5394 = vpow.pop %v5393
        %v5395 = vmul.f32 %v5384, 1.442695
        %v5396 = vpow.pop %v5395
        %v5397 = vmul.f32 %v5385, 1.442695
        %v5398 = vpow.pop %v5397
        %v5399 = vmul.f32 %v5386, 1.442695
        %v5400 = vpow.pop %v5399
        %v5401 = vmul.f32 %v5387, 1.442695
        %v5402 = vpow.pop %v5401
        %v5403 = vmul.f32 %v5388, 1.442695
        %v5404 = vpow.pop %v5403
        %s5405 = scalar_lea.vmem [#allocation3], 192
        %v5406 = vld [vmem:[%s5405] sm:$0xff]
        %v5407 = vld [vmem:[%s5405 + $0x8] sm:$0xff]
        %v5408 = vld [vmem:[%s5405 + $0x10] sm:$0xff]
        %v5409 = vld [vmem:[%s5405 + $0x18] sm:$0xff]
        %v5410 = vld [vmem:[%s5405 + $0x20] sm:$0xff]
        %v5411 = vld [vmem:[%s5405 + $0x28] sm:$0xff]
        %v5412 = vld [vmem:[%s5405 + $0x30] sm:$0xff]
        %v5413 = vld [vmem:[%s5405 + $0x38] sm:$0xff]
        %v5414 = vmul.f32 %v5326, %v5406
        %v5415 = vmul.f32 %v5328, %v5407
        %v5416 = vmul.f32 %v5330, %v5408
        %v5417 = vmul.f32 %v5332, %v5409
        %v5418 = vmul.f32 %v5334, %v5410
        %v5419 = vmul.f32 %v5336, %v5411
        %v5420 = vmul.f32 %v5338, %v5412
        %v5421 = vmul.f32 %v5340, %v5413
        %v5422 = vsel %vm2707, %v5390, 0.0
        %5423 = vadd.xlane.f32.xlu0 %v5422
        %v5424 = vpop.xlane.xlu0 %5423
        %v5425 = vsel %vm2707, %v5392, 0.0
        %5426 = vadd.xlane.f32.xlu0 %v5425
        %v5427 = vpop.xlane.xlu0 %5426
        %v5428 = vsel %vm2707, %v5394, 0.0
        %5429 = vadd.xlane.f32.xlu0 %v5428
        %v5430 = vpop.xlane.xlu0 %5429
        %v5431 = vsel %vm2707, %v5396, 0.0
        %5432 = vadd.xlane.f32.xlu0 %v5431
        %v5433 = vpop.xlane.xlu0 %5432
        %v5434 = vsel %vm2707, %v5398, 0.0
        %5435 = vadd.xlane.f32.xlu0 %v5434
        %v5436 = vpop.xlane.xlu0 %5435
        %v5437 = vsel %vm2707, %v5400, 0.0
        %5438 = vadd.xlane.f32.xlu0 %v5437
        %v5439 = vpop.xlane.xlu0 %5438
        %v5440 = vsel %vm2707, %v5402, 0.0
        %5441 = vadd.xlane.f32.xlu0 %v5440
        %v5442 = vpop.xlane.xlu0 %5441
        %v5443 = vsel %vm2707, %v5404, 0.0
        %5444 = vadd.xlane.f32.xlu0 %v5443
        %v5445 = vpop.xlane.xlu0 %5444
        %v5446 = vadd.f32 %v5414, %v5424
        %v5447 = vadd.f32 %v5415, %v5427
        %v5448 = vadd.f32 %v5416, %v5430
        %v5449 = vadd.f32 %v5417, %v5433
        %v5450 = vadd.f32 %v5418, %v5436
        %v5451 = vadd.f32 %v5419, %v5439
        %v5452 = vadd.f32 %v5420, %v5442
        %v5453 = vadd.f32 %v5421, %v5445
        %5454 = vst.msk [vmem:[%s5405] sm:$0xff] %vm2876, %v5446
        %5455 = vst.msk [vmem:[%s5405 + $0x8] sm:$0xff] %vm2876, %v5447
        %5456 = vst.msk [vmem:[%s5405 + $0x10] sm:$0xff] %vm2876, %v5448
        %5457 = vst.msk [vmem:[%s5405 + $0x18] sm:$0xff] %vm2876, %v5449
        %5458 = vst.msk [vmem:[%s5405 + $0x20] sm:$0xff] %vm2876, %v5450
        %5459 = vst.msk [vmem:[%s5405 + $0x28] sm:$0xff] %vm2876, %v5451
        %5460 = vst.msk [vmem:[%s5405 + $0x30] sm:$0xff] %vm2876, %v5452
        %5461 = vst.msk [vmem:[%s5405 + $0x38] sm:$0xff] %vm2876, %v5453
        %s5462 = scalar_lea.vmem [#allocation4], 192
        %v5463 = vld [vmem:[%s5462] sm:$0xff]
        %v5464 = vld [vmem:[%s5462 + $0x8] sm:$0xff]
        %v5465 = vld [vmem:[%s5462 + $0x10] sm:$0xff]
        %v5466 = vld [vmem:[%s5462 + $0x18] sm:$0xff]
        %v5467 = vld [vmem:[%s5462 + $0x20] sm:$0xff]
        %v5468 = vld [vmem:[%s5462 + $0x28] sm:$0xff]
        %v5469 = vld [vmem:[%s5462 + $0x30] sm:$0xff]
        %v5470 = vld [vmem:[%s5462 + $0x38] sm:$0xff]
        %5472 = vset.pattern.permute.xlu0 0
        %5473 = vperm.xlu0 %5472, %v5326
        %v5474 = vpop.permute.xlu0 %5473
        %5477 = vset.pattern.permute.xlu0 0
        %5478 = vperm.xlu0 %5477, %v5328
        %v5479 = vpop.permute.xlu0 %5478
        %5482 = vset.pattern.permute.xlu0 0
        %5483 = vperm.xlu0 %5482, %v5330
        %v5484 = vpop.permute.xlu0 %5483
        %5487 = vset.pattern.permute.xlu0 0
        %5488 = vperm.xlu0 %5487, %v5332
        %v5489 = vpop.permute.xlu0 %5488
        %5492 = vset.pattern.permute.xlu0 0
        %5493 = vperm.xlu0 %5492, %v5334
        %v5494 = vpop.permute.xlu0 %5493
        %5497 = vset.pattern.permute.xlu0 0
        %5498 = vperm.xlu0 %5497, %v5336
        %v5499 = vpop.permute.xlu0 %5498
        %5502 = vset.pattern.permute.xlu0 0
        %5503 = vperm.xlu0 %5502, %v5338
        %v5504 = vpop.permute.xlu0 %5503
        %5507 = vset.pattern.permute.xlu0 0
        %5508 = vperm.xlu0 %5507, %v5340
        %v5509 = vpop.permute.xlu0 %5508
        %v5511 = vmul.f32 %v5474, %v5463
        %v5512 = vmul.f32 %v5479, %v5464
        %v5513 = vmul.f32 %v5484, %v5465
        %v5514 = vmul.f32 %v5489, %v5466
        %v5515 = vmul.f32 %v5494, %v5467
        %v5516 = vmul.f32 %v5499, %v5468
        %v5517 = vmul.f32 %v5504, %v5469
        %v5518 = vmul.f32 %v5509, %v5470
        %v5519 = vpack.c.bf16 %v5392, %v5390
        %v5520 = vpack.c.bf16 %v5396, %v5394
        %v5521 = vpack.c.bf16 %v5400, %v5398
        %v5522 = vpack.c.bf16 %v5404, %v5402
        %5523 = vrot.lane.b32.xlu0 %v2945, 32
        %v5524 = vpop.permute.xlu0 %5523
        %5525 = vrot.lane.b32.xlu0 %v2946, 32
        %v5526 = vpop.permute.xlu0 %5525
        %5527 = vrot.lane.b32.xlu0 %v2947, 32
        %v5528 = vpop.permute.xlu0 %5527
        %5529 = vrot.lane.b32.xlu0 %v2948, 32
        %v5530 = vpop.permute.xlu0 %5529
        %v5536 = vsel %vm2707, %v5519, 0
        %v5539 = vsel %vm2707, %v5520, 0
        %v5542 = vsel %vm2707, %v5521, 0
        %v5545 = vsel %vm2707, %v5522, 0
        %5547 = vmatprep.subr.bf16.mxu0 0
        %5548 = vmatpush1.bf16.msra.mxu0 0
        %5549 = vmatprep.subr.bf16.mxu0 0
        %5550 = vmatpush1.bf16.msra.mxu0 0
        %5551 = vmatprep.subr.bf16.mxu0 0
        %5552 = vmatpush1.bf16.msra.mxu0 0
        %5553 = vmatprep.subr.bf16.mxu0 0
        %5554 = vmatpush1.bf16.msra.mxu0 0
        %5555 = vmatprep.subr.bf16.mxu0 0
        %5556 = vmatpush1.bf16.msra.mxu0 %v5530
        %5557 = vmatprep.subr.bf16.mxu0 0
        %5558 = vmatpush1.bf16.msra.mxu0 %v5528
        %5559 = vmatprep.subr.bf16.mxu0 0
        %5560 = vmatpush1.bf16.msra.mxu0 %v5526
        %5561 = vmatprep.subr.bf16.mxu0 0
        %5562 = vmatpush1.bf16.msra.mxu0 %v5524
        %5563 = vmatprep.subr.bf16.mxu0 0
        %5564 = vmatpush2.bf16.msra.mxu0 0
        %5565 = vmatprep.subr.bf16.mxu0 0
        %5566 = vmatpush2.bf16.msra.mxu0 0
        %5567 = vmatprep.subr.bf16.mxu0 0
        %5568 = vmatpush2.bf16.msra.mxu0 0
        %5569 = vmatprep.subr.bf16.mxu0 0
        %5570 = vmatpush2.bf16.msra.mxu0 0
        %5571 = vmatprep.subr.bf16.mxu0 0
        %5572 = vmatpush2.bf16.msra.mxu0 0
        %5573 = vmatprep.subr.bf16.mxu0 0
        %5574 = vmatpush2.bf16.msra.mxu0 0
        %5575 = vmatprep.subr.bf16.mxu0 0
        %5576 = vmatpush2.bf16.msra.mxu0 0
        %5577 = vmatprep.subr.bf16.mxu0 0
        %5578 = vmatpush2.bf16.msra.mxu0 0
        %5579 = vmatprep.mubr.bf16.mxu0 0
        %5580 = vmatmul.mubr.bf16.gmra.mxu0 %v5536
        %v5581 = vpop.f32.mrf.mxu0
        %v5582 = vadd.f32 0.0, %v5581
        %v5583 = vpop.f32.mrf.mxu0
        %v5584 = vpop.f32.mrf.mxu0
        %v5585 = vadd.f32 0.0, %v5584
        %v5586 = vpop.f32.mrf.mxu0
        %5587 = vmatprep.mubr.bf16.mxu0 0
        %5588 = vmatmul.mubr.bf16.gmra.mxu0 %v5539
        %v5589 = vpop.f32.mrf.mxu0
        %v5590 = vadd.f32 0.0, %v5589
        %v5591 = vpop.f32.mrf.mxu0
        %v5592 = vpop.f32.mrf.mxu0
        %v5593 = vadd.f32 0.0, %v5592
        %v5594 = vpop.f32.mrf.mxu0
        %5595 = vmatprep.mubr.bf16.mxu0 0
        %5596 = vmatmul.mubr.bf16.gmra.mxu0 %v5542
        %v5597 = vpop.f32.mrf.mxu0
        %v5598 = vadd.f32 0.0, %v5597
        %v5599 = vpop.f32.mrf.mxu0
        %v5600 = vpop.f32.mrf.mxu0
        %v5601 = vadd.f32 0.0, %v5600
        %v5602 = vpop.f32.mrf.mxu0
        %5603 = vmatprep.mubr.bf16.mxu0 0
        %5604 = vmatmul.mubr.bf16.gmra.mxu0 %v5545
        %v5605 = vpop.f32.mrf.mxu0
        %v5606 = vadd.f32 0.0, %v5605
        %v5607 = vpop.f32.mrf.mxu0
        %v5608 = vpop.f32.mrf.mxu0
        %v5609 = vadd.f32 0.0, %v5608
        %v5610 = vpop.f32.mrf.mxu0
        %5611 = vdwg.mxu0
        %v5612 = vadd.f32 %v5511, %v5582
        %v5613 = vadd.f32 %v5512, %v5585
        %v5614 = vadd.f32 %v5513, %v5590
        %v5615 = vadd.f32 %v5514, %v5593
        %v5616 = vadd.f32 %v5515, %v5598
        %v5617 = vadd.f32 %v5516, %v5601
        %v5618 = vadd.f32 %v5517, %v5606
        %v5619 = vadd.f32 %v5518, %v5609
        %5620 = vst.msk [vmem:[%s5462] sm:$0xff] %vm2287, %v5612
        %5621 = vst.msk [vmem:[%s5462 + $0x8] sm:$0xff] %vm2287, %v5613
        %5622 = vst.msk [vmem:[%s5462 + $0x10] sm:$0xff] %vm2287, %v5614
        %5623 = vst.msk [vmem:[%s5462 + $0x18] sm:$0xff] %vm2287, %v5615
        %5624 = vst.msk [vmem:[%s5462 + $0x20] sm:$0xff] %vm2287, %v5616
        %5625 = vst.msk [vmem:[%s5462 + $0x28] sm:$0xff] %vm2287, %v5617
        %5626 = vst.msk [vmem:[%s5462 + $0x30] sm:$0xff] %vm2287, %v5618
        %5627 = vst.msk [vmem:[%s5462 + $0x38] sm:$0xff] %vm2287, %v5619
        %5628 = vst.msk [vmem:[%s5276] sm:$0xff] %vm2876, %v5309
        %5629 = vst.msk [vmem:[%s5276 + $0x8] sm:$0xff] %vm2876, %v5310
        %5630 = vst.msk [vmem:[%s5276 + $0x10] sm:$0xff] %vm2876, %v5311
        %5631 = vst.msk [vmem:[%s5276 + $0x18] sm:$0xff] %vm2876, %v5312
        %5632 = vst.msk [vmem:[%s5276 + $0x20] sm:$0xff] %vm2876, %v5313
        %5633 = vst.msk [vmem:[%s5276 + $0x28] sm:$0xff] %vm2876, %v5314
        %5634 = vst.msk [vmem:[%s5276 + $0x30] sm:$0xff] %vm2876, %v5315
        %5635 = vst.msk [vmem:[%s5276 + $0x38] sm:$0xff] %vm2876, %v5316
      $region56: #{causal_self_attention.4} parent=47 // pred_fallthru
        _
      %p5636 = scmp.eq.s32.totalorder %s25, 1
      // Predicated region
      $region57: #{causal_self_attention.4} parent=47 // pred_check
        %p5637 = pneg %p5636
      $region58: #{causal_self_attention.4} parent=47 // pred_check_branch
        %5639 = sbr.rel (%p5637) target = $region60
      $region59: #{causal_self_attention.4} parent=47 // pred_region
        %v5640 = vld [vmem:[#allocation3] sm:$0xff]
        %v5641 = vld [vmem:[#allocation3 + $0x8] sm:$0xff]
        %v5642 = vld [vmem:[#allocation3 + $0x10] sm:$0xff]
        %v5643 = vld [vmem:[#allocation3 + $0x18] sm:$0xff]
        %v5644 = vld [vmem:[#allocation3 + $0x20] sm:$0xff]
        %v5645 = vld [vmem:[#allocation3 + $0x28] sm:$0xff]
        %v5646 = vld [vmem:[#allocation3 + $0x30] sm:$0xff]
        %v5647 = vld [vmem:[#allocation3 + $0x38] sm:$0xff]
        %v5648 = vrcp.pop %v5640
        %v5649 = vrcp.pop %v5641
        %v5650 = vrcp.pop %v5642
        %v5651 = vrcp.pop %v5643
        %v5652 = vrcp.pop %v5644
        %v5653 = vrcp.pop %v5645
        %v5654 = vrcp.pop %v5646
        %v5655 = vrcp.pop %v5647
        %v5656 = vld [vmem:[#allocation4] sm:$0xff]
        %v5657 = vld [vmem:[#allocation4 + $0x8] sm:$0xff]
        %v5658 = vld [vmem:[#allocation4 + $0x10] sm:$0xff]
        %v5659 = vld [vmem:[#allocation4 + $0x18] sm:$0xff]
        %v5660 = vld [vmem:[#allocation4 + $0x20] sm:$0xff]
        %v5661 = vld [vmem:[#allocation4 + $0x28] sm:$0xff]
        %v5662 = vld [vmem:[#allocation4 + $0x30] sm:$0xff]
        %v5663 = vld [vmem:[#allocation4 + $0x38] sm:$0xff]
        %5665 = vset.pattern.permute.xlu0 0
        %5666 = vperm.xlu0 %5665, %v5648
        %v5667 = vpop.permute.xlu0 %5666
        %5670 = vset.pattern.permute.xlu0 0
        %5671 = vperm.xlu0 %5670, %v5649
        %v5672 = vpop.permute.xlu0 %5671
        %5675 = vset.pattern.permute.xlu0 0
        %5676 = vperm.xlu0 %5675, %v5650
        %v5677 = vpop.permute.xlu0 %5676
        %5680 = vset.pattern.permute.xlu0 0
        %5681 = vperm.xlu0 %5680, %v5651
        %v5682 = vpop.permute.xlu0 %5681
        %5685 = vset.pattern.permute.xlu0 0
        %5686 = vperm.xlu0 %5685, %v5652
        %v5687 = vpop.permute.xlu0 %5686
        %5690 = vset.pattern.permute.xlu0 0
        %5691 = vperm.xlu0 %5690, %v5653
        %v5692 = vpop.permute.xlu0 %5691
        %5695 = vset.pattern.permute.xlu0 0
        %5696 = vperm.xlu0 %5695, %v5654
        %v5697 = vpop.permute.xlu0 %5696
        %5700 = vset.pattern.permute.xlu0 0
        %5701 = vperm.xlu0 %5700, %v5655
        %v5702 = vpop.permute.xlu0 %5701
        %v5704 = vmul.f32 %v5656, %v5667
        %v5705 = vmul.f32 %v5657, %v5672
        %v5706 = vmul.f32 %v5658, %v5677
        %v5707 = vmul.f32 %v5659, %v5682
        %v5708 = vmul.f32 %v5660, %v5687
        %v5709 = vmul.f32 %v5661, %v5692
        %v5710 = vmul.f32 %v5662, %v5697
        %v5711 = vmul.f32 %v5663, %v5702
        %vm5712 = vcmask 261120
        %5713 = vst.msk [vmem:[%s483] sm:$0xff] %vm5712, %v5704
        %5714 = vst.msk [vmem:[%s483 + $0x8] sm:$0xff] %vm5712, %v5705
        %5715 = vst.msk [vmem:[%s483 + $0x10] sm:$0xff] %vm5712, %v5706
        %5716 = vst.msk [vmem:[%s483 + $0x18] sm:$0xff] %vm5712, %v5707
        %5717 = vst.msk [vmem:[%s483 + $0x20] sm:$0xff] %vm5712, %v5708
        %5718 = vst.msk [vmem:[%s483 + $0x28] sm:$0xff] %vm5712, %v5709
        %5719 = vst.msk [vmem:[%s483 + $0x30] sm:$0xff] %vm5712, %v5710
        %5720 = vst.msk [vmem:[%s483 + $0x38] sm:$0xff] %vm5712, %v5711
        %s5721 = scalar_lea.vmem [#allocation3], 64
        %v5722 = vld [vmem:[%s5721] sm:$0xff]
        %v5723 = vld [vmem:[%s5721 + $0x8] sm:$0xff]
        %v5724 = vld [vmem:[%s5721 + $0x10] sm:$0xff]
        %v5725 = vld [vmem:[%s5721 + $0x18] sm:$0xff]
        %v5726 = vld [vmem:[%s5721 + $0x20] sm:$0xff]
        %v5727 = vld [vmem:[%s5721 + $0x28] sm:$0xff]
        %v5728 = vld [vmem:[%s5721 + $0x30] sm:$0xff]
        %v5729 = vld [vmem:[%s5721 + $0x38] sm:$0xff]
        %v5730 = vrcp.pop %v5722
        %v5731 = vrcp.pop %v5723
        %v5732 = vrcp.pop %v5724
        %v5733 = vrcp.pop %v5725
        %v5734 = vrcp.pop %v5726
        %v5735 = vrcp.pop %v5727
        %v5736 = vrcp.pop %v5728
        %v5737 = vrcp.pop %v5729
        %s5738 = scalar_lea.vmem [#allocation4], 64
        %v5739 = vld [vmem:[%s5738] sm:$0xff]
        %v5740 = vld [vmem:[%s5738 + $0x8] sm:$0xff]
        %v5741 = vld [vmem:[%s5738 + $0x10] sm:$0xff]
        %v5742 = vld [vmem:[%s5738 + $0x18] sm:$0xff]
        %v5743 = vld [vmem:[%s5738 + $0x20] sm:$0xff]
        %v5744 = vld [vmem:[%s5738 + $0x28] sm:$0xff]
        %v5745 = vld [vmem:[%s5738 + $0x30] sm:$0xff]
        %v5746 = vld [vmem:[%s5738 + $0x38] sm:$0xff]
        %5748 = vset.pattern.permute.xlu0 0
        %5749 = vperm.xlu0 %5748, %v5730
        %v5750 = vpop.permute.xlu0 %5749
        %5753 = vset.pattern.permute.xlu0 0
        %5754 = vperm.xlu0 %5753, %v5731
        %v5755 = vpop.permute.xlu0 %5754
        %5758 = vset.pattern.permute.xlu0 0
        %5759 = vperm.xlu0 %5758, %v5732
        %v5760 = vpop.permute.xlu0 %5759
        %5763 = vset.pattern.permute.xlu0 0
        %5764 = vperm.xlu0 %5763, %v5733
        %v5765 = vpop.permute.xlu0 %5764
        %5768 = vset.pattern.permute.xlu0 0
        %5769 = vperm.xlu0 %5768, %v5734
        %v5770 = vpop.permute.xlu0 %5769
        %5773 = vset.pattern.permute.xlu0 0
        %5774 = vperm.xlu0 %5773, %v5735
        %v5775 = vpop.permute.xlu0 %5774
        %5778 = vset.pattern.permute.xlu0 0
        %5779 = vperm.xlu0 %5778, %v5736
        %v5780 = vpop.permute.xlu0 %5779
        %5783 = vset.pattern.permute.xlu0 0
        %5784 = vperm.xlu0 %5783, %v5737
        %v5785 = vpop.permute.xlu0 %5784
        %v5787 = vmul.f32 %v5739, %v5750
        %v5788 = vmul.f32 %v5740, %v5755
        %v5789 = vmul.f32 %v5741, %v5760
        %v5790 = vmul.f32 %v5742, %v5765
        %v5791 = vmul.f32 %v5743, %v5770
        %v5792 = vmul.f32 %v5744, %v5775
        %v5793 = vmul.f32 %v5745, %v5780
        %v5794 = vmul.f32 %v5746, %v5785
        %5803 = vrot.lane.b32.xlu0 %v5787, 32
        %v5804 = vpop.permute.xlu0 %5803
        %5805 = vrot.lane.b32.xlu0 %v5788, 32
        %v5806 = vpop.permute.xlu0 %5805
        %5807 = vrot.lane.b32.xlu0 %v5789, 32
        %v5808 = vpop.permute.xlu0 %5807
        %5809 = vrot.lane.b32.xlu0 %v5790, 32
        %v5810 = vpop.permute.xlu0 %5809
        %5811 = vrot.lane.b32.xlu0 %v5791, 32
        %v5812 = vpop.permute.xlu0 %5811
        %5813 = vrot.lane.b32.xlu0 %v5792, 32
        %v5814 = vpop.permute.xlu0 %5813
        %5815 = vrot.lane.b32.xlu0 %v5793, 32
        %v5816 = vpop.permute.xlu0 %5815
        %5817 = vrot.lane.b32.xlu0 %v5794, 32
        %v5818 = vpop.permute.xlu0 %5817
        %vm5827 = vcmask 523520
        %5828 = vst.msk [vmem:[%s483] sm:$0xff] %vm5827, %v5804
        %5829 = vst.msk [vmem:[%s483 + $0x8] sm:$0xff] %vm5827, %v5806
        %5830 = vst.msk [vmem:[%s483 + $0x10] sm:$0xff] %vm5827, %v5808
        %5831 = vst.msk [vmem:[%s483 + $0x18] sm:$0xff] %vm5827, %v5810
        %5832 = vst.msk [vmem:[%s483 + $0x20] sm:$0xff] %vm5827, %v5812
        %5833 = vst.msk [vmem:[%s483 + $0x28] sm:$0xff] %vm5827, %v5814
        %5834 = vst.msk [vmem:[%s483 + $0x30] sm:$0xff] %vm5827, %v5816
        %5835 = vst.msk [vmem:[%s483 + $0x38] sm:$0xff] %vm5827, %v5818
        %s5836 = scalar_lea.vmem [#allocation3], 128
        %v5837 = vld [vmem:[%s5836] sm:$0xff]
        %v5838 = vld [vmem:[%s5836 + $0x8] sm:$0xff]
        %v5839 = vld [vmem:[%s5836 + $0x10] sm:$0xff]
        %v5840 = vld [vmem:[%s5836 + $0x18] sm:$0xff]
        %v5841 = vld [vmem:[%s5836 + $0x20] sm:$0xff]
        %v5842 = vld [vmem:[%s5836 + $0x28] sm:$0xff]
        %v5843 = vld [vmem:[%s5836 + $0x30] sm:$0xff]
        %v5844 = vld [vmem:[%s5836 + $0x38] sm:$0xff]
        %v5845 = vrcp.pop %v5837
        %v5846 = vrcp.pop %v5838
        %v5847 = vrcp.pop %v5839
        %v5848 = vrcp.pop %v5840
        %v5849 = vrcp.pop %v5841
        %v5850 = vrcp.pop %v5842
        %v5851 = vrcp.pop %v5843
        %v5852 = vrcp.pop %v5844
        %s5853 = scalar_lea.vmem [#allocation4], 128
        %v5854 = vld [vmem:[%s5853] sm:$0xff]
        %v5855 = vld [vmem:[%s5853 + $0x8] sm:$0xff]
        %v5856 = vld [vmem:[%s5853 + $0x10] sm:$0xff]
        %v5857 = vld [vmem:[%s5853 + $0x18] sm:$0xff]
        %v5858 = vld [vmem:[%s5853 + $0x20] sm:$0xff]
        %v5859 = vld [vmem:[%s5853 + $0x28] sm:$0xff]
        %v5860 = vld [vmem:[%s5853 + $0x30] sm:$0xff]
        %v5861 = vld [vmem:[%s5853 + $0x38] sm:$0xff]
        %5863 = vset.pattern.permute.xlu0 0
        %5864 = vperm.xlu0 %5863, %v5845
        %v5865 = vpop.permute.xlu0 %5864
        %5868 = vset.pattern.permute.xlu0 0
        %5869 = vperm.xlu0 %5868, %v5846
        %v5870 = vpop.permute.xlu0 %5869
        %5873 = vset.pattern.permute.xlu0 0
        %5874 = vperm.xlu0 %5873, %v5847
        %v5875 = vpop.permute.xlu0 %5874
        %5878 = vset.pattern.permute.xlu0 0
        %5879 = vperm.xlu0 %5878, %v5848
        %v5880 = vpop.permute.xlu0 %5879
        %5883 = vset.pattern.permute.xlu0 0
        %5884 = vperm.xlu0 %5883, %v5849
        %v5885 = vpop.permute.xlu0 %5884
        %5888 = vset.pattern.permute.xlu0 0
        %5889 = vperm.xlu0 %5888, %v5850
        %v5890 = vpop.permute.xlu0 %5889
        %5893 = vset.pattern.permute.xlu0 0
        %5894 = vperm.xlu0 %5893, %v5851
        %v5895 = vpop.permute.xlu0 %5894
        %5898 = vset.pattern.permute.xlu0 0
        %5899 = vperm.xlu0 %5898, %v5852
        %v5900 = vpop.permute.xlu0 %5899
        %v5902 = vmul.f32 %v5854, %v5865
        %v5903 = vmul.f32 %v5855, %v5870
        %v5904 = vmul.f32 %v5856, %v5875
        %v5905 = vmul.f32 %v5857, %v5880
        %v5906 = vmul.f32 %v5858, %v5885
        %v5907 = vmul.f32 %v5859, %v5890
        %v5908 = vmul.f32 %v5860, %v5895
        %v5909 = vmul.f32 %v5861, %v5900
        %5918 = vrot.lane.b32.xlu0 %v5902, 64
        %v5919 = vpop.permute.xlu0 %5918
        %5920 = vrot.lane.b32.xlu0 %v5903, 64
        %v5921 = vpop.permute.xlu0 %5920
        %5922 = vrot.lane.b32.xlu0 %v5904, 64
        %v5923 = vpop.permute.xlu0 %5922
        %5924 = vrot.lane.b32.xlu0 %v5905, 64
        %v5925 = vpop.permute.xlu0 %5924
        %5926 = vrot.lane.b32.xlu0 %v5906, 64
        %v5927 = vpop.permute.xlu0 %5926
        %5928 = vrot.lane.b32.xlu0 %v5907, 64
        %v5929 = vpop.permute.xlu0 %5928
        %5930 = vrot.lane.b32.xlu0 %v5908, 64
        %v5931 = vpop.permute.xlu0 %5930
        %5932 = vrot.lane.b32.xlu0 %v5909, 64
        %v5933 = vpop.permute.xlu0 %5932
        %vm5942 = vcmask 785920
        %5943 = vst.msk [vmem:[%s483] sm:$0xff] %vm5942, %v5919
        %5944 = vst.msk [vmem:[%s483 + $0x8] sm:$0xff] %vm5942, %v5921
        %5945 = vst.msk [vmem:[%s483 + $0x10] sm:$0xff] %vm5942, %v5923
        %5946 = vst.msk [vmem:[%s483 + $0x18] sm:$0xff] %vm5942, %v5925
        %5947 = vst.msk [vmem:[%s483 + $0x20] sm:$0xff] %vm5942, %v5927
        %5948 = vst.msk [vmem:[%s483 + $0x28] sm:$0xff] %vm5942, %v5929
        %5949 = vst.msk [vmem:[%s483 + $0x30] sm:$0xff] %vm5942, %v5931
        %5950 = vst.msk [vmem:[%s483 + $0x38] sm:$0xff] %vm5942, %v5933
        %s5951 = scalar_lea.vmem [#allocation3], 192
        %v5952 = vld [vmem:[%s5951] sm:$0xff]
        %v5953 = vld [vmem:[%s5951 + $0x8] sm:$0xff]
        %v5954 = vld [vmem:[%s5951 + $0x10] sm:$0xff]
        %v5955 = vld [vmem:[%s5951 + $0x18] sm:$0xff]
        %v5956 = vld [vmem:[%s5951 + $0x20] sm:$0xff]
        %v5957 = vld [vmem:[%s5951 + $0x28] sm:$0xff]
        %v5958 = vld [vmem:[%s5951 + $0x30] sm:$0xff]
        %v5959 = vld [vmem:[%s5951 + $0x38] sm:$0xff]
        %v5960 = vrcp.pop %v5952
        %v5961 = vrcp.pop %v5953
        %v5962 = vrcp.pop %v5954
        %v5963 = vrcp.pop %v5955
        %v5964 = vrcp.pop %v5956
        %v5965 = vrcp.pop %v5957
        %v5966 = vrcp.pop %v5958
        %v5967 = vrcp.pop %v5959
        %s5968 = scalar_lea.vmem [#allocation4], 192
        %v5969 = vld [vmem:[%s5968] sm:$0xff]
        %v5970 = vld [vmem:[%s5968 + $0x8] sm:$0xff]
        %v5971 = vld [vmem:[%s5968 + $0x10] sm:$0xff]
        %v5972 = vld [vmem:[%s5968 + $0x18] sm:$0xff]
        %v5973 = vld [vmem:[%s5968 + $0x20] sm:$0xff]
        %v5974 = vld [vmem:[%s5968 + $0x28] sm:$0xff]
        %v5975 = vld [vmem:[%s5968 + $0x30] sm:$0xff]
        %v5976 = vld [vmem:[%s5968 + $0x38] sm:$0xff]
        %5978 = vset.pattern.permute.xlu0 0
        %5979 = vperm.xlu0 %5978, %v5960
        %v5980 = vpop.permute.xlu0 %5979
        %5983 = vset.pattern.permute.xlu0 0
        %5984 = vperm.xlu0 %5983, %v5961
        %v5985 = vpop.permute.xlu0 %5984
        %5988 = vset.pattern.permute.xlu0 0
        %5989 = vperm.xlu0 %5988, %v5962
        %v5990 = vpop.permute.xlu0 %5989
        %5993 = vset.pattern.permute.xlu0 0
        %5994 = vperm.xlu0 %5993, %v5963
        %v5995 = vpop.permute.xlu0 %5994
        %5998 = vset.pattern.permute.xlu0 0
        %5999 = vperm.xlu0 %5998, %v5964
        %v6000 = vpop.permute.xlu0 %5999
        %6003 = vset.pattern.permute.xlu0 0
        %6004 = vperm.xlu0 %6003, %v5965
        %v6005 = vpop.permute.xlu0 %6004
        %6008 = vset.pattern.permute.xlu0 0
        %6009 = vperm.xlu0 %6008, %v5966
        %v6010 = vpop.permute.xlu0 %6009
        %6013 = vset.pattern.permute.xlu0 0
        %6014 = vperm.xlu0 %6013, %v5967
        %v6015 = vpop.permute.xlu0 %6014
        %v6017 = vmul.f32 %v5969, %v5980
        %v6018 = vmul.f32 %v5970, %v5985
        %v6019 = vmul.f32 %v5971, %v5990
        %v6020 = vmul.f32 %v5972, %v5995
        %v6021 = vmul.f32 %v5973, %v6000
        %v6022 = vmul.f32 %v5974, %v6005
        %v6023 = vmul.f32 %v5975, %v6010
        %v6024 = vmul.f32 %v5976, %v6015
        %6033 = vrot.lane.b32.xlu0 %v6017, 96
        %v6034 = vpop.permute.xlu0 %6033
        %6035 = vrot.lane.b32.xlu0 %v6018, 96
        %v6036 = vpop.permute.xlu0 %6035
        %6037 = vrot.lane.b32.xlu0 %v6019, 96
        %v6038 = vpop.permute.xlu0 %6037
        %6039 = vrot.lane.b32.xlu0 %v6020, 96
        %v6040 = vpop.permute.xlu0 %6039
        %6041 = vrot.lane.b32.xlu0 %v6021, 96
        %v6042 = vpop.permute.xlu0 %6041
        %6043 = vrot.lane.b32.xlu0 %v6022, 96
        %v6044 = vpop.permute.xlu0 %6043
        %6045 = vrot.lane.b32.xlu0 %v6023, 96
        %v6046 = vpop.permute.xlu0 %6045
        %6047 = vrot.lane.b32.xlu0 %v6024, 96
        %v6048 = vpop.permute.xlu0 %6047
        %vm6057 = vcmask 1048320
        %6058 = vst.msk [vmem:[%s483] sm:$0xff] %vm6057, %v6034
        %6059 = vst.msk [vmem:[%s483 + $0x8] sm:$0xff] %vm6057, %v6036
        %6060 = vst.msk [vmem:[%s483 + $0x10] sm:$0xff] %vm6057, %v6038
        %6061 = vst.msk [vmem:[%s483 + $0x18] sm:$0xff] %vm6057, %v6040
        %6062 = vst.msk [vmem:[%s483 + $0x20] sm:$0xff] %vm6057, %v6042
        %6063 = vst.msk [vmem:[%s483 + $0x28] sm:$0xff] %vm6057, %v6044
        %6064 = vst.msk [vmem:[%s483 + $0x30] sm:$0xff] %vm6057, %v6046
        %6065 = vst.msk [vmem:[%s483 + $0x38] sm:$0xff] %vm6057, %v6048
      $region60: #{causal_self_attention.4} parent=47 // pred_fallthru
        _
      %s6066 = smul.u32 8, %s24
      %p6067 = scmp.lt.s32.totalorder %s23, 1
      %s6068 = scalar_select %p6067, %s23, 1
      %p6069 = scmp.lt.s32.totalorder %s6066, 15
      %s6070 = scalar_select %p6069, %s6066, 15
      %s6071 = smul.addr %s6068, 16
      %s6072 = sadd.s32 %s6070, %s6071
      %s6073 = smul.addr %s6072, 8
      %s6074 = scalar_lea.vmem %s7, %s6073
      // Predicated region
      $region61: #{causal_self_attention.4} parent=47 // pred_check
        %p6075 = pneg %p245
      $region62: #{causal_self_attention.4} parent=47 // pred_check_branch
        %6077 = sbr.rel (%p6075) target = $region64
      $region63: #{causal_self_attention.4} parent=47 // pred_region
        %s6078 = smul.u32 8, %s24
      $region64: #{causal_self_attention.4} parent=47 // pred_fallthru
        _
    $region48: #{causal_self_attention.4} parent=5 // pred_fallthru
      _
    %p6079 = scmp.le.s32.totalorder 2, %s13
    // Predicated region
    $region65: #{causal_self_attention.4} parent=5 // pred_check
      %p6080 = pneg %p6079
    $region66: #{causal_self_attention.4} parent=5 // pred_check_branch
      %6082 = sbr.rel (%p6080) target = $region68
    $region67: #{causal_self_attention.4} parent=5 // pred_region
      %s6083 = ssub.s32 %s13, 2
      // Predicated region
      $region69: #{causal_self_attention.4} parent=67 // pred_check
        %p6084 = pneg %p251
      $region70: #{causal_self_attention.4} parent=67 // pred_check_branch
        %6086 = sbr.rel (%p6084) target = $region72
      $region71: #{causal_self_attention.4} parent=67 // pred_region
        %s6087 = smul.u32 8, %s27
        %p6088 = scmp.lt.s32.totalorder %s26, 1
        %s6089 = scalar_select %p6088, %s26, 1
        %p6090 = scmp.lt.s32.totalorder %s6087, 15
        %s6091 = scalar_select %p6090, %s6087, 15
        %s6092 = smul.addr %s6089, 16
        %s6093 = sadd.s32 %s6091, %s6092
        %s6094 = smul.addr %s6093, 8
        %s6095 = scalar_lea.vmem %s7, %s6094
      $region72: #{causal_self_attention.4} parent=67 // pred_fallthru
        _
    $region68: #{causal_self_attention.4} parent=5 // pred_fallthru
      _
  $region6: #{causal_self_attention.4} parent=0 // loop_footer
    %s17 = sadd.s32 1, %s13
  $region7: #{causal_self_attention.4} parent=0 // loop_footer_branch
    %12 = sbr.rel target = $region3
  $region8: #{causal_self_attention.4} parent=0 // loop_exit
    _

</llo_original>
